<compile_context>
chip_gen: v5e
topology: v5e:2x2
jax: 0.10.0
libtpu: 0.0.40
codegen_flags: <defaults>
</compile_context>

<pallas_src>
import functools

import jax
import jax.numpy as jnp
from jax.experimental import pallas as pl
from jax.experimental.pallas import tpu as pltpu


def _round_up(x, m):
    return (x + m - 1) // m * m


# ----------------------- Pallas kernel: matmul+bias(+ReLU) ----------------------- #
def _matmul_bias_kernel(x_ref, w_ref, b_ref, o_ref, *, relu):
    acc = jnp.dot(x_ref[...], w_ref[...], preferred_element_type=jnp.float32)
    acc = acc + b_ref[...]                 # b is (1, N) f32 -> broadcast over rows
    if relu:
        acc = jnp.maximum(acc, 0.0)
    o_ref[...] = acc.astype(o_ref.dtype)


def matmul_bias(x, w, b, *, relu, block_m=256, out_dtype=jnp.float32):
    """out = relu?(x @ w + b). x:(M,K), w:(K,N) bf16, b:(N,) f32 -> (M,N) out_dtype.

    Tiles M with a parallel grid; weight/bias stay resident across the grid.
    """
    M, K = x.shape
    K2, N = w.shape
    assert K == K2
    xb = x.astype(jnp.bfloat16)
    wb = w.astype(jnp.bfloat16)
    b2 = b.reshape(1, N).astype(jnp.float32)

    if M > block_m:
        tm = block_m
        Mp = _round_up(M, tm)
        if Mp != M:
            xb = jnp.pad(xb, ((0, Mp - M), (0, 0)))
    else:
        tm = M
        Mp = M
    grid = (Mp // tm,)

    out = pl.pallas_call(
        functools.partial(_matmul_bias_kernel, relu=relu),
        out_shape=jax.ShapeDtypeStruct((Mp, N), out_dtype),
        grid=grid,
        in_specs=[
            pl.BlockSpec((tm, K), lambda i: (i, 0)),
            pl.BlockSpec((K, N), lambda i: (0, 0)),   # weight resident across M grid
            pl.BlockSpec((1, N), lambda i: (0, 0)),   # bias resident across M grid
        ],
        out_specs=pl.BlockSpec((tm, N), lambda i: (i, 0)),
        compiler_params=pltpu.CompilerParams(
            dimension_semantics=("parallel",),
            vmem_limit_bytes=32 << 20,                # fits v5e/v6e/v7x
        ),
    )(xb, wb, b2)
    return out[:M] if Mp != M else out


# --------------------- Pallas kernel: fused fc1+ReLU+fc2 ------------------------- #
def _fc_fused_kernel(x_ref, w1_ref, b1_ref, w2_ref, b2_ref, o_ref):
    h = jnp.dot(x_ref[...], w1_ref[...], preferred_element_type=jnp.float32)
    h = jnp.maximum(h + b1_ref[...], 0.0)             # fc1 bias + ReLU in f32
    o = jnp.dot(h.astype(w2_ref.dtype), w2_ref[...],
                preferred_element_type=jnp.float32)
    o_ref[...] = (o + b2_ref[...]).astype(o_ref.dtype)


def fc_fused(x, w1, b1, w2, b2):
    """ReLU(x @ w1 + b1) @ w2 + b2, all in one kernel (hidden stays on-chip)."""
    M, K = x.shape
    K1, H = w1.shape
    H2, N = w2.shape
    assert K == K1 and H == H2
    return pl.pallas_call(
        _fc_fused_kernel,
        out_shape=jax.ShapeDtypeStruct((M, N), jnp.float32),
        grid=(1,),
        in_specs=[
            pl.BlockSpec((M, K), lambda i: (0, 0)),
            pl.BlockSpec((K, H), lambda i: (0, 0)),
            pl.BlockSpec((1, H), lambda i: (0, 0)),
            pl.BlockSpec((H, N), lambda i: (0, 0)),
            pl.BlockSpec((1, N), lambda i: (0, 0)),
        ],
        out_specs=pl.BlockSpec((M, N), lambda i: (0, 0)),
        compiler_params=pltpu.CompilerParams(vmem_limit_bytes=32 << 20),
    )(x.astype(jnp.bfloat16), w1, b1.reshape(1, H), w2, b2.reshape(1, N))


# --------------------------------- CNN2 model ------------------------------------ #
def init_params(key, input_shape, num_labels):
    """PyTorch-equivalent init, then preprocessed once into kernel-ready layouts."""
    _, C, H, W = input_shape
    div = 4
    kh1, kh2 = H // div, div
    OH1 = H - kh1 + 1
    OH2 = OH1 - kh2 + 1
    assert 128 * OH2 == 4608, "CNN2's fc1 expects 4608 flat features (H must be 50)"

    def u(k, shape, fan_in):
        bound = float(fan_in) ** -0.5
        return jax.random.uniform(k, shape, jnp.float32, -bound, bound)

    ks = jax.random.split(key, 8)
    w1 = u(ks[0], (64, C, kh1, 1), C * kh1)            # conv1 (OC,IC,KH,KW)
    b1 = u(ks[1], (64,), C * kh1)
    w2 = u(ks[2], (128, 64, kh2, W), 64 * kh2 * W)     # conv2 (OC,IC,KH,KW)
    b2 = u(ks[3], (128,), 64 * kh2 * W)
    fc1_w = u(ks[4], (4608, 500), 4608)                # (in, out), PyTorch flatten order
    fc1_b = u(ks[5], (500,), 4608)
    fc2_w = u(ks[6], (500, num_labels), 500)
    fc2_b = u(ks[7], (num_labels,), 500)

    # Conv weights reordered to (KH, KW, IC) columns so patches stay channel-last.
    w1m = jnp.transpose(w1, (0, 2, 3, 1)).reshape(64, kh1 * 1 * C).T.astype(jnp.bfloat16)
    w2m = jnp.transpose(w2, (0, 2, 3, 1)).reshape(128, kh2 * W * 64).T.astype(jnp.bfloat16)

    # fc1: fold PyTorch's channel-major flatten into the weight rows, pad 500 -> 512.
    fc1_wp = fc1_w.reshape(128, OH2, 500).transpose(1, 0, 2).reshape(OH2 * 128, 500)
    fc1_wp = jnp.pad(fc1_wp, ((0, 0), (0, 512 - 500))).astype(jnp.bfloat16)
    fc1_bp = jnp.pad(fc1_b, (0, 512 - 500))

    # fc2: pad rows 500 -> 512 (padded hidden is exactly 0) and cols num_labels -> 128.
    fc2_wp = jnp.pad(fc2_w, ((0, 512 - 500), (0, 128 - num_labels))).astype(jnp.bfloat16)
    fc2_bp = jnp.pad(fc2_b, (0, 128 - num_labels))

    return {
        "w1m": w1m, "b1": b1,
        "w2m": w2m, "b2": b2,
        "fc1_w": fc1_wp, "fc1_b": fc1_bp,
        "fc2_w": fc2_wp, "fc2_b": fc2_bp,
    }


@functools.partial(jax.jit, static_argnames=("num_labels",))
def cnn2_forward(params, x, *, num_labels):
    N, C, H, W = x.shape
    div = 4
    kh1, kh2 = H // div, div
    OH1 = H - kh1 + 1
    OH2 = OH1 - kh2 + 1

    # conv1 (kernel (H//4, 1)) + ReLU  — channel-last activations throughout.
    x_nhwc = jnp.transpose(x, (0, 2, 3, 1))                                 # (N,H,W,C)
    p1 = jnp.stack([x_nhwc[:, i:i + OH1] for i in range(kh1)], axis=3)      # (N,OH1,W,kh1,C)
    p1 = p1.reshape(N * OH1 * W, kh1 * C)
    y1 = matmul_bias(p1, params["w1m"], params["b1"], relu=True,
                     out_dtype=jnp.bfloat16)                                # (N*OH1*W, 64)
    a1 = y1.reshape(N, OH1, W, 64)                                          # NHWC, no transpose

    # conv2 (kernel (4, W)) + ReLU.
    p2 = jnp.stack([a1[:, i:i + OH2] for i in range(kh2)], axis=2)          # (N,OH2,kh2,W,64)
    p2 = p2.reshape(N * OH2, kh2 * W * 64)
    y2 = matmul_bias(p2, params["w2m"], params["b2"], relu=True,
                     out_dtype=jnp.bfloat16)                                # (N*OH2, 128)

    # PyTorch's channel-major flatten is folded into fc1's weight rows at init.
    flat = y2.reshape(N, OH2 * 128)                                         # (N, 4608)

    # fc1 + ReLU + fc2 fused in one kernel (padded to 512 / 128 lanes).
    # TODO(synk): dropout treated as identity (inference/eval mode); stochastic
    # training-mode masking intentionally omitted.
    logits = fc_fused(flat, params["fc1_w"], params["fc1_b"],
                      params["fc2_w"], params["fc2_b"])                     # (N, 128) f32
    return logits[:, :num_labels]


if __name__ == "__main__":
    # H must be 50 so that 128 * (H - H//4 - 2) == 4608, matching fc1's in-dim.
    N, C, H, W = 2, 4, 50, 16
    num_labels = 10

    key = jax.random.PRNGKey(0)
    kx, kp = jax.random.split(key)
    x = jax.random.normal(kx, (N, C, H, W), dtype=jnp.float32)
    params = init_params(kp, (N, C, H, W), num_labels)

    out = cnn2_forward(params, x, num_labels=num_labels)
    out = jax.block_until_ready(out)
    assert out.shape == (N, num_labels), out.shape
    assert out.dtype == jnp.float32
    print("KERNEL_OK")
</pallas_src>

<mosaic_0001>
module attributes {stable_mosaic.version = 11 : i64} {
  func.func @_matmul_bias_kernel(%arg0: i32, %arg1: memref<256x48xbf16, #tpu.memory_space<vmem>>, %arg2: memref<48x64xbf16, #tpu.memory_space<vmem>>, %arg3: memref<1x64xf32, #tpu.memory_space<vmem>>, %arg4: memref<256x64xbf16, #tpu.memory_space<vmem>>) attributes {dimension_semantics = [#tpu.dimension_semantics<parallel>], iteration_bounds = array<i64: 5>, scalar_prefetch = 0 : i64, scratch_operands = 0 : i64, tpu.core_type = #tpu.core_type<tc>, window_params = [{transform_indices = @transform_0, window_bounds = array<i64: 256, 48>}, {pipeline_mode = #tpu.pipeline_mode<synchronous>, transform_indices = @transform_1, window_bounds = array<i64: 48, 64>}, {pipeline_mode = #tpu.pipeline_mode<synchronous>, transform_indices = @transform_2, window_bounds = array<i64: 1, 64>}, {transform_indices = @transform_3, window_bounds = array<i64: 256, 64>}]} {
    %c0 = arith.constant 0 : index
    %c0_0 = arith.constant 0 : index
    %0 = vector.load %arg1[%c0, %c0_0] : memref<256x48xbf16, #tpu.memory_space<vmem>>, vector<256x48xbf16>
    %c0_1 = arith.constant 0 : index
    %c0_2 = arith.constant 0 : index
    %1 = vector.load %arg2[%c0_1, %c0_2] : memref<48x64xbf16, #tpu.memory_space<vmem>>, vector<48x64xbf16>
    %cst = arith.constant dense<0.000000e+00> : vector<256x64xf32>
    %2 = tpu.matmul %0, %1, %cst {dimension_numbers = #tpu.dot_dimension_numbers<[1], [0], [0], [1], [0, 0, 1, 1], [], []>} : vector<256x48xbf16>, vector<48x64xbf16>, vector<256x64xf32> -> vector<256x64xf32>
    %c0_3 = arith.constant 0 : index
    %c0_4 = arith.constant 0 : index
    %3 = vector.load %arg3[%c0_3, %c0_4] : memref<1x64xf32, #tpu.memory_space<vmem>>, vector<1x64xf32>
    %4 = vector.broadcast %3 : vector<1x64xf32> to vector<256x64xf32>
    %5 = arith.addf %2, %4 : vector<256x64xf32>
    %cst_5 = arith.constant 0.000000e+00 : f32
    %6 = vector.broadcast %cst_5 : f32 to vector<256x64xf32>
    %7 = arith.maximumf %5, %6 : vector<256x64xf32>
    %8 = arith.truncf %7 : vector<256x64xf32> to vector<256x64xbf16>
    %c0_6 = arith.constant 0 : index
    %c0_7 = arith.constant 0 : index
    %9 = vector.load %arg4[%c0_6, %c0_7] : memref<256x64xbf16, #tpu.memory_space<vmem>>, vector<256x64xbf16>
    tpu.vector_store %arg4[%c0_6, %c0_7], %8 {strides = array<i32>} : memref<256x64xbf16, #tpu.memory_space<vmem>>, vector<256x64xbf16>,
    return
  }
  func.func @transform_0(%arg0: i32) -> (i32, i32) {
    %c0_i32 = arith.constant 0 : i32
    %c0_i32_0 = arith.constant 0 : i32
    return %arg0, %c0_i32 : i32, i32
  }
  func.func @transform_1(%arg0: i32) -> (i32, i32) {
    %c0_i32 = arith.constant 0 : i32
    %c0_i32_0 = arith.constant 0 : i32
    %c0_i32_1 = arith.constant 0 : i32
    return %c0_i32, %c0_i32_0 : i32, i32
  }
  func.func @transform_2(%arg0: i32) -> (i32, i32) {
    %c0_i32 = arith.constant 0 : i32
    %c0_i32_0 = arith.constant 0 : i32
    %c0_i32_1 = arith.constant 0 : i32
    return %c0_i32, %c0_i32_0 : i32, i32
  }
  func.func @transform_3(%arg0: i32) -> (i32, i32) {
    %c0_i32 = arith.constant 0 : i32
    %c0_i32_0 = arith.constant 0 : i32
    return %arg0, %c0_i32 : i32, i32
  }
}

module attributes {stable_mosaic.version = 11 : i64} {
  func.func @_matmul_bias_kernel(%arg0: i32, %arg1: memref<72x4096xbf16, #tpu.memory_space<vmem>>, %arg2: memref<4096x128xbf16, #tpu.memory_space<vmem>>, %arg3: memref<1x128xf32, #tpu.memory_space<vmem>>, %arg4: memref<72x128xbf16, #tpu.memory_space<vmem>>) attributes {dimension_semantics = [#tpu.dimension_semantics<parallel>], iteration_bounds = array<i64: 1>, scalar_prefetch = 0 : i64, scratch_operands = 0 : i64, tpu.core_type = #tpu.core_type<tc>, window_params = [{transform_indices = @transform_0, window_bounds = array<i64: 72, 4096>}, {pipeline_mode = #tpu.pipeline_mode<synchronous>, transform_indices = @transform_1, window_bounds = array<i64: 4096, 128>}, {pipeline_mode = #tpu.pipeline_mode<synchronous>, transform_indices = @transform_2, window_bounds = array<i64: 1, 128>}, {transform_indices = @transform_3, window_bounds = array<i64: 72, 128>}]} {
    %c0 = arith.constant 0 : index
    %c0_0 = arith.constant 0 : index
    %0 = vector.load %arg1[%c0, %c0_0] : memref<72x4096xbf16, #tpu.memory_space<vmem>>, vector<72x4096xbf16>
    %c0_1 = arith.constant 0 : index
    %c0_2 = arith.constant 0 : index
    %1 = vector.load %arg2[%c0_1, %c0_2] : memref<4096x128xbf16, #tpu.memory_space<vmem>>, vector<4096x128xbf16>
    %cst = arith.constant dense<0.000000e+00> : vector<72x128xf32>
    %2 = tpu.matmul %0, %1, %cst {dimension_numbers = #tpu.dot_dimension_numbers<[1], [0], [0], [1], [0, 0, 1, 1], [], []>} : vector<72x4096xbf16>, vector<4096x128xbf16>, vector<72x128xf32> -> vector<72x128xf32>
    %c0_3 = arith.constant 0 : index
    %c0_4 = arith.constant 0 : index
    %3 = vector.load %arg3[%c0_3, %c0_4] : memref<1x128xf32, #tpu.memory_space<vmem>>, vector<1x128xf32>
    %4 = vector.broadcast %3 : vector<1x128xf32> to vector<72x128xf32>
    %5 = arith.addf %2, %4 : vector<72x128xf32>
    %cst_5 = arith.constant 0.000000e+00 : f32
    %6 = vector.broadcast %cst_5 : f32 to vector<72x128xf32>
    %7 = arith.maximumf %5, %6 : vector<72x128xf32>
    %8 = arith.truncf %7 : vector<72x128xf32> to vector<72x128xbf16>
    %c0_6 = arith.constant 0 : index
    %c0_7 = arith.constant 0 : index
    %9 = vector.load %arg4[%c0_6, %c0_7] : memref<72x128xbf16, #tpu.memory_space<vmem>>, vector<72x128xbf16>
    tpu.vector_store %arg4[%c0_6, %c0_7], %8 {strides = array<i32>} : memref<72x128xbf16, #tpu.memory_space<vmem>>, vector<72x128xbf16>,
    return
  }
  func.func @transform_0(%arg0: i32) -> (i32, i32) {
    %c0_i32 = arith.constant 0 : i32
    %c0_i32_0 = arith.constant 0 : i32
    return %arg0, %c0_i32 : i32, i32
  }
  func.func @transform_1(%arg0: i32) -> (i32, i32) {
    %c0_i32 = arith.constant 0 : i32
    %c0_i32_0 = arith.constant 0 : i32
    %c0_i32_1 = arith.constant 0 : i32
    return %c0_i32, %c0_i32_0 : i32, i32
  }
  func.func @transform_2(%arg0: i32) -> (i32, i32) {
    %c0_i32 = arith.constant 0 : i32
    %c0_i32_0 = arith.constant 0 : i32
    %c0_i32_1 = arith.constant 0 : i32
    return %c0_i32, %c0_i32_0 : i32, i32
  }
  func.func @transform_3(%arg0: i32) -> (i32, i32) {
    %c0_i32 = arith.constant 0 : i32
    %c0_i32_0 = arith.constant 0 : i32
    return %arg0, %c0_i32 : i32, i32
  }
}

module attributes {stable_mosaic.version = 11 : i64} {
  func.func @_fc_fused_kernel(%arg0: i32, %arg1: memref<2x4608xbf16, #tpu.memory_space<vmem>>, %arg2: memref<4608x512xbf16, #tpu.memory_space<vmem>>, %arg3: memref<1x512xf32, #tpu.memory_space<vmem>>, %arg4: memref<512x128xbf16, #tpu.memory_space<vmem>>, %arg5: memref<1x128xf32, #tpu.memory_space<vmem>>, %arg6: memref<2x128xf32, #tpu.memory_space<vmem>>) attributes {dimension_semantics = [#tpu.dimension_semantics<arbitrary>], iteration_bounds = array<i64: 1>, scalar_prefetch = 0 : i64, scratch_operands = 0 : i64, tpu.core_type = #tpu.core_type<tc>, window_params = [{pipeline_mode = #tpu.pipeline_mode<synchronous>, transform_indices = @transform_0, window_bounds = array<i64: 2, 4608>}, {pipeline_mode = #tpu.pipeline_mode<synchronous>, transform_indices = @transform_1, window_bounds = array<i64: 4608, 512>}, {pipeline_mode = #tpu.pipeline_mode<synchronous>, transform_indices = @transform_2, window_bounds = array<i64: 1, 512>}, {pipeline_mode = #tpu.pipeline_mode<synchronous>, transform_indices = @transform_3, window_bounds = array<i64: 512, 128>}, {pipeline_mode = #tpu.pipeline_mode<synchronous>, transform_indices = @transform_4, window_bounds = array<i64: 1, 128>}, {pipeline_mode = #tpu.pipeline_mode<synchronous>, transform_indices = @transform_5, window_bounds = array<i64: 2, 128>}]} {
    %c0 = arith.constant 0 : index
    %c0_0 = arith.constant 0 : index
    %0 = vector.load %arg1[%c0, %c0_0] : memref<2x4608xbf16, #tpu.memory_space<vmem>>, vector<2x4608xbf16>
    %c0_1 = arith.constant 0 : index
    %c0_2 = arith.constant 0 : index
    %1 = vector.load %arg2[%c0_1, %c0_2] : memref<4608x512xbf16, #tpu.memory_space<vmem>>, vector<4608x512xbf16>
    %cst = arith.constant dense<0.000000e+00> : vector<2x512xf32>
    %2 = tpu.matmul %0, %1, %cst {dimension_numbers = #tpu.dot_dimension_numbers<[1], [0], [0], [1], [0, 0, 1, 1], [], []>} : vector<2x4608xbf16>, vector<4608x512xbf16>, vector<2x512xf32> -> vector<2x512xf32>
    %c0_3 = arith.constant 0 : index
    %c0_4 = arith.constant 0 : index
    %3 = vector.load %arg3[%c0_3, %c0_4] : memref<1x512xf32, #tpu.memory_space<vmem>>, vector<1x512xf32>
    %4 = vector.broadcast %3 : vector<1x512xf32> to vector<2x512xf32>
    %5 = arith.addf %2, %4 : vector<2x512xf32>
    %cst_5 = arith.constant 0.000000e+00 : f32
    %6 = vector.broadcast %cst_5 : f32 to vector<2x512xf32>
    %7 = arith.maximumf %5, %6 : vector<2x512xf32>
    %8 = arith.truncf %7 : vector<2x512xf32> to vector<2x512xbf16>
    %c0_6 = arith.constant 0 : index
    %c0_7 = arith.constant 0 : index
    %9 = vector.load %arg4[%c0_6, %c0_7] : memref<512x128xbf16, #tpu.memory_space<vmem>>, vector<512x128xbf16>
    %cst_8 = arith.constant dense<0.000000e+00> : vector<2x128xf32>
    %10 = tpu.matmul %8, %9, %cst_8 {dimension_numbers = #tpu.dot_dimension_numbers<[1], [0], [0], [1], [0, 0, 1, 1], [], []>} : vector<2x512xbf16>, vector<512x128xbf16>, vector<2x128xf32> -> vector<2x128xf32>
    %c0_9 = arith.constant 0 : index
    %c0_10 = arith.constant 0 : index
    %11 = vector.load %arg5[%c0_9, %c0_10] : memref<1x128xf32, #tpu.memory_space<vmem>>, vector<1x128xf32>
    %12 = vector.broadcast %11 : vector<1x128xf32> to vector<2x128xf32>
    %13 = arith.addf %10, %12 : vector<2x128xf32>
    %c0_11 = arith.constant 0 : index
    %c0_12 = arith.constant 0 : index
    %14 = vector.load %arg6[%c0_11, %c0_12] : memref<2x128xf32, #tpu.memory_space<vmem>>, vector<2x128xf32>
    tpu.vector_store %arg6[%c0_11, %c0_12], %13 {strides = array<i32>} : memref<2x128xf32, #tpu.memory_space<vmem>>, vector<2x128xf32>,
    return
  }
  func.func @transform_0(%arg0: i32) -> (i32, i32) {
    %c0_i32 = arith.constant 0 : i32
    %c0_i32_0 = arith.constant 0 : i32
    %c0_i32_1 = arith.constant 0 : i32
    return %c0_i32, %c0_i32_0 : i32, i32
  }
  func.func @transform_1(%arg0: i32) -> (i32, i32) {
    %c0_i32 = arith.constant 0 : i32
    %c0_i32_0 = arith.constant 0 : i32
    %c0_i32_1 = arith.constant 0 : i32
    return %c0_i32, %c0_i32_0 : i32, i32
  }
  func.func @transform_2(%arg0: i32) -> (i32, i32) {
    %c0_i32 = arith.constant 0 : i32
    %c0_i32_0 = arith.constant 0 : i32
    %c0_i32_1 = arith.constant 0 : i32
    return %c0_i32, %c0_i32_0 : i32, i32
  }
  func.func @transform_3(%arg0: i32) -> (i32, i32) {
    %c0_i32 = arith.constant 0 : i32
    %c0_i32_0 = arith.constant 0 : i32
    %c0_i32_1 = arith.constant 0 : i32
    return %c0_i32, %c0_i32_0 : i32, i32
  }
  func.func @transform_4(%arg0: i32) -> (i32, i32) {
    %c0_i32 = arith.constant 0 : i32
    %c0_i32_0 = arith.constant 0 : i32
    %c0_i32_1 = arith.constant 0 : i32
    return %c0_i32, %c0_i32_0 : i32, i32
  }
  func.func @transform_5(%arg0: i32) -> (i32, i32) {
    %c0_i32 = arith.constant 0 : i32
    %c0_i32_0 = arith.constant 0 : i32
    %c0_i32_1 = arith.constant 0 : i32
    return %c0_i32, %c0_i32_0 : i32, i32
  }
}

</mosaic_0001>

<llo_original>
// kernel: cnn2_forward.3
$region0: #{cnn2_forward.3}
  #allocation0 [shape = 'u32[]', space=smem, size = 0x4, offset = 0x4, fixed_abs, tag = 'smem constant byte address 0x4 - core index']
  #allocation1 [shape = 'u32[72,128]{1,0:T(1,128)}', space=vmem, size = 0x9000, scoped, tag = 'internal scratch']
  %s0 = inlined_call_operand.vmem [shape: bf16[1280,48], index: 0, kind: input, shape index: {}]
  %s1 = inlined_call_operand.vmem [shape: bf16[48,64], index: 1, kind: input, shape index: {}]
  %s2 = inlined_call_operand.vmem [shape: f32[1,64], index: 2, kind: input, shape index: {}]
  %s3 = inlined_call_operand.vmem [shape: bf16[1280,64], index: 3, kind: output, shape index: {}]
  %s4 = sld [smem:[#allocation0]]
  $region45: #{cnn2_forward.3} parent=0
    _
  %s6 = ssub.s32 1, %s4
  %s7 = scalar_select 0, %s6, %s4
  loop: start=0, step=1, limit=7
  $region2: #{cnn2_forward.3} parent=0 // loop_pre_header
    _
  $region3: #{cnn2_forward.3} parent=0 // loop_header
    %s9 = sphi 0, %s13
    %p10 = scmp.ge.s32.totalorder %s9, 7
    %s19 = sphi 0, %s21
    %s22 = sphi 0, %s19
    %s23 = sphi 0, %s22
    %s39 = sphi 0, %s23
    %s43 = sphi 0, %s43
    %s45 = sphi 0, %s43
    %s46 = sphi 0, %s45
    %s60 = sphi 0, %s46
    %s64 = sphi 0, %s64
    %s66 = sphi 0, %s64
    %s67 = sphi 0, %s66
    %s81 = sphi 0, %s67
    %s87 = sphi 0, %s89
    %s90 = sphi 0, %s87
    %s91 = sphi 0, %s90
    %s107 = sphi 0, %s91
  $region4: #{cnn2_forward.3} parent=0 // loop_header_branch
    %12 = sbr.rel (%p10) target = $region8
  $region5: #{cnn2_forward.3} parent=0 // loop_body
    %s14 = ssub.s32 %s9, 1
    %s15 = ssub.s32 %s9, 2
    %s16 = sadd.s32 %s9, 1
    %s17 = ssub.s32 %s9, %s16
    %p18 = scmp.eq.s32.totalorder %s17, 0
    %s20 = sadd.s32 %s19, 1
    %s21 = scalar_select %p18, %s19, %s20
    %p24 = pneg %p18
    %p25 = scmp.eq.s32.totalorder %s9, 4
    %p26 = por %p24, %p25
    %p27 = scmp.ne.s32.totalorder %s19, %s22
    %p28 = scmp.eq.s32.totalorder %s9, 0
    %p29 = por %p27, %p28
    %p30 = scmp.ne.s32.totalorder %s19, %s22
    %p31 = scmp.eq.s32.totalorder %s14, 4
    %p32 = por %p30, %p31
    %p33 = scmp.ne.s32.totalorder %s22, %s23
    %p34 = scmp.eq.s32.totalorder %s14, 0
    %p35 = por %p33, %p34
    %p36 = scmp.ne.s32.totalorder %s22, %s23
    %p37 = scmp.eq.s32.totalorder %s15, 4
    %p38 = por %p36, %p37
    %p40 = scmp.ne.s32.totalorder %s23, %s39
    %p41 = scmp.eq.s32.totalorder %s15, 0
    %p42 = por %p40, %p41
    %s44 = sadd.s32 %s43, 1
    %p47 = scmp.eq.s32.totalorder %s9, 4
    %p48 = scmp.ne.s32.totalorder %s43, %s45
    %p49 = scmp.eq.s32.totalorder %s9, 0
    %p50 = por %p48, %p49
    %p51 = scmp.ne.s32.totalorder %s43, %s45
    %p52 = scmp.eq.s32.totalorder %s14, 4
    %p53 = por %p51, %p52
    %p54 = scmp.ne.s32.totalorder %s45, %s46
    %p55 = scmp.eq.s32.totalorder %s14, 0
    %p56 = por %p54, %p55
    %p57 = scmp.ne.s32.totalorder %s45, %s46
    %p58 = scmp.eq.s32.totalorder %s15, 4
    %p59 = por %p57, %p58
    %p61 = scmp.ne.s32.totalorder %s46, %s60
    %p62 = scmp.eq.s32.totalorder %s15, 0
    %p63 = por %p61, %p62
    %s65 = sadd.s32 %s64, 1
    %p68 = scmp.eq.s32.totalorder %s9, 4
    %p69 = scmp.ne.s32.totalorder %s64, %s66
    %p70 = scmp.eq.s32.totalorder %s9, 0
    %p71 = por %p69, %p70
    %p72 = scmp.ne.s32.totalorder %s64, %s66
    %p73 = scmp.eq.s32.totalorder %s14, 4
    %p74 = por %p72, %p73
    %p75 = scmp.ne.s32.totalorder %s66, %s67
    %p76 = scmp.eq.s32.totalorder %s14, 0
    %p77 = por %p75, %p76
    %p78 = scmp.ne.s32.totalorder %s66, %s67
    %p79 = scmp.eq.s32.totalorder %s15, 4
    %p80 = por %p78, %p79
    %p82 = scmp.ne.s32.totalorder %s67, %s81
    %p83 = scmp.eq.s32.totalorder %s15, 0
    %p84 = por %p82, %p83
    %s85 = ssub.s32 %s9, %s16
    %p86 = scmp.eq.s32.totalorder %s85, 0
    %s88 = sadd.s32 %s87, 1
    %s89 = scalar_select %p86, %s87, %s88
    %p92 = pneg %p86
    %p93 = scmp.eq.s32.totalorder %s9, 4
    %p94 = por %p92, %p93
    %p95 = scmp.ne.s32.totalorder %s87, %s90
    %p96 = scmp.eq.s32.totalorder %s9, 0
    %p97 = por %p95, %p96
    %p98 = scmp.ne.s32.totalorder %s87, %s90
    %p99 = scmp.eq.s32.totalorder %s14, 4
    %p100 = por %p98, %p99
    %p101 = scmp.ne.s32.totalorder %s90, %s91
    %p102 = scmp.eq.s32.totalorder %s14, 0
    %p103 = por %p101, %p102
    %p104 = scmp.ne.s32.totalorder %s90, %s91
    %p105 = scmp.eq.s32.totalorder %s15, 4
    %p106 = por %p104, %p105
    %p108 = scmp.ne.s32.totalorder %s91, %s107
    %p109 = scmp.eq.s32.totalorder %s15, 0
    %p110 = por %p108, %p109
    %p111 = scmp.le.s32.totalorder 1, %s9
    %p112 = scmp.lt.s32.totalorder %s9, 6
    %p113 = pnand %p111, %p112
    %p114 = pneg %p113
    // Predicated region
    $region9: #{cnn2_forward.3} parent=5 // pred_check
      _
    $region10: #{cnn2_forward.3} parent=5 // pred_check_branch
      %116 = sbr.rel (%p113) target = $region12
    $region11: #{cnn2_forward.3} parent=5 // pred_region
      %s117 = ssub.s32 %s9, 1
      // Predicated region
      $region13: #{cnn2_forward.3} parent=11 // pred_check
        %p118 = pneg %p56
      $region14: #{cnn2_forward.3} parent=11 // pred_check_branch
        %120 = sbr.rel (%p118) target = $region16
      $region15: #{cnn2_forward.3} parent=11 // pred_region
        _
      $region16: #{cnn2_forward.3} parent=11 // pred_fallthru
        _
      // Predicated region
      $region17: #{cnn2_forward.3} parent=11 // pred_check
        %p121 = pneg %p77
      $region18: #{cnn2_forward.3} parent=11 // pred_check_branch
        %123 = sbr.rel (%p121) target = $region20
      $region19: #{cnn2_forward.3} parent=11 // pred_region
        _
      $region20: #{cnn2_forward.3} parent=11 // pred_fallthru
        _
    $region12: #{cnn2_forward.3} parent=5 // pred_fallthru
      _
    %p124 = scmp.lt.s32.totalorder %s9, 5
    // Predicated region
    $region21: #{cnn2_forward.3} parent=5 // pred_check
      %p125 = pneg %p124
    $region22: #{cnn2_forward.3} parent=5 // pred_check_branch
      %127 = sbr.rel (%p125) target = $region24
    $region23: #{cnn2_forward.3} parent=5 // pred_region
      // Predicated region
      $region25: #{cnn2_forward.3} parent=23 // pred_check
        %p128 = pneg %p29
      $region26: #{cnn2_forward.3} parent=23 // pred_check_branch
        %130 = sbr.rel (%p128) target = $region28
      $region27: #{cnn2_forward.3} parent=23 // pred_region
        %s131 = smul.u32 32, %s9
        %p132 = scmp.lt.s32.totalorder %s131, 159
        %s133 = scalar_select %p132, %s131, 159
        %s134 = smul.addr %s133, 4
        %s135 = scalar_lea.vmem %s0, %s134
        %s136 = smul.u32 32, %s9
      $region28: #{cnn2_forward.3} parent=23 // pred_fallthru
        _
    $region24: #{cnn2_forward.3} parent=5 // pred_fallthru
      _
    %p137 = scmp.le.s32.totalorder 1, %s9
    %p138 = scmp.lt.s32.totalorder %s9, 6
    %p139 = pnand %p137, %p138
    %p140 = pneg %p139
    // Predicated region
    $region29: #{cnn2_forward.3} parent=5 // pred_check
      _
    $region30: #{cnn2_forward.3} parent=5 // pred_check_branch
      %142 = sbr.rel (%p139) target = $region32
    $region31: #{cnn2_forward.3} parent=5 // pred_region
      %s143 = ssub.s32 %s9, 1
      %s144 = smul.u32 32, %s14
      %p145 = scmp.lt.s32.totalorder %s144, 159
      %s146 = scalar_select %p145, %s144, 159
      %s147 = smul.addr %s146, 4
      %s148 = scalar_lea.vmem %s0, %s147
      %p149 = pneg %p35
      %p150 = pneg %p32
      %p151 = pneg %p56
      %p152 = pneg %p53
      %p153 = pneg %p77
      %p154 = pneg %p74
      %p155 = pneg %p103
      %p156 = pneg %p100
      %s157 = smul.u32 32, %s14
      %p158 = scmp.lt.s32.totalorder %s157, 159
      %s159 = scalar_select %p158, %s157, 159
      %s160 = smul.addr %s159, 4
      %s161 = scalar_lea.vmem %s3, %s160
      %s162 = smul.u32 32, %s14
      %p163 = scmp.lt.s32.totalorder %s162, 159
      %s164 = scalar_select %p163, %s162, 159
      %s165 = smul.addr %s164, 4
      %s166 = scalar_lea.vmem %s0, %s165
      %s167 = smul.u32 32, %s14
      %s168 = smul.u32 32, %s14
      %p169 = scmp.lt.s32.totalorder %s168, 159
      %s170 = scalar_select %p169, %s168, 159
      %s171 = smul.addr %s170, 4
      %s172 = scalar_lea.vmem %s3, %s171
      %s173 = smul.u32 32, %s14
      %v175 = vld [vmem:[%s166] sm:$0xf]
      %v176 = vld [vmem:[%s166 + $0x4] sm:$0xf]
      %v177 = vld [vmem:[%s166 + $0x8] sm:$0xf]
      %v178 = vld [vmem:[%s166 + $0xc] sm:$0xf]
      %v179 = vld [vmem:[%s166 + $0x10] sm:$0xf]
      %v180 = vld [vmem:[%s166 + $0x14] sm:$0xf]
      %v181 = vld [vmem:[%s166 + $0x18] sm:$0xf]
      %v182 = vld [vmem:[%s166 + $0x1c] sm:$0xf]
      %v183 = vld [vmem:[%s166 + $0x20] sm:$0xf]
      %v184 = vld [vmem:[%s166 + $0x24] sm:$0xf]
      %v185 = vld [vmem:[%s166 + $0x28] sm:$0xf]
      %v186 = vld [vmem:[%s166 + $0x2c] sm:$0xf]
      %v187 = vld [vmem:[%s166 + $0x30] sm:$0xf]
      %v188 = vld [vmem:[%s166 + $0x34] sm:$0xf]
      %v189 = vld [vmem:[%s166 + $0x38] sm:$0xf]
      %v190 = vld [vmem:[%s166 + $0x3c] sm:$0xf]
      %v191 = vld [vmem:[%s166 + $0x40] sm:$0xf]
      %v192 = vld [vmem:[%s166 + $0x44] sm:$0xf]
      %v193 = vld [vmem:[%s166 + $0x48] sm:$0xf]
      %v194 = vld [vmem:[%s166 + $0x4c] sm:$0xf]
      %v195 = vld [vmem:[%s166 + $0x50] sm:$0xf]
      %v196 = vld [vmem:[%s166 + $0x54] sm:$0xf]
      %v197 = vld [vmem:[%s166 + $0x58] sm:$0xf]
      %v198 = vld [vmem:[%s166 + $0x5c] sm:$0xf]
      %v199 = vld [vmem:[%s166 + $0x60] sm:$0xf]
      %v200 = vld [vmem:[%s166 + $0x64] sm:$0xf]
      %v201 = vld [vmem:[%s166 + $0x68] sm:$0xf]
      %v202 = vld [vmem:[%s166 + $0x6c] sm:$0xf]
      %v203 = vld [vmem:[%s166 + $0x70] sm:$0xf]
      %v204 = vld [vmem:[%s166 + $0x74] sm:$0xf]
      %v205 = vld [vmem:[%s166 + $0x78] sm:$0xf]
      %v206 = vld [vmem:[%s166 + $0x7c] sm:$0xf]
      %v207 = vld [vmem:[%s1] sm:$0xf]
      %v208 = vld [vmem:[%s1 + $0x4] sm:$0xf]
      %v209 = vld [vmem:[%s1 + $0x8] sm:$0xf]
      %v210 = vld [vmem:[%s1 + $0xc] sm:$0xf]
      %v211 = vld [vmem:[%s1 + $0x10] sm:$0xf]
      %v212 = vld [vmem:[%s1 + $0x14] sm:$0xf]
      %v213 = vld [vmem:[%s2] sm:$0x1]
      %v215 = vperm.slane %v213, 0
      %v249 = vunpack.c.l.b16 %v175
      %v250 = vunpack.c.l.b16 %v176
      %v251 = vunpack.c.l.b16 %v177
      %v252 = vunpack.c.l.b16 %v178
      %v253 = vunpack.c.l.b16 %v179
      %v254 = vunpack.c.l.b16 %v180
      %v255 = vunpack.c.l.b16 %v181
      %v256 = vunpack.c.l.b16 %v182
      %v257 = vunpack.c.l.b16 %v183
      %v258 = vunpack.c.l.b16 %v184
      %v259 = vunpack.c.l.b16 %v185
      %v260 = vunpack.c.l.b16 %v186
      %v261 = vunpack.c.l.b16 %v187
      %v262 = vunpack.c.l.b16 %v188
      %v263 = vunpack.c.l.b16 %v189
      %v264 = vunpack.c.l.b16 %v190
      %v265 = vunpack.c.l.b16 %v191
      %v266 = vunpack.c.l.b16 %v192
      %v267 = vunpack.c.l.b16 %v193
      %v268 = vunpack.c.l.b16 %v194
      %v269 = vunpack.c.l.b16 %v195
      %v270 = vunpack.c.l.b16 %v196
      %v271 = vunpack.c.l.b16 %v197
      %v272 = vunpack.c.l.b16 %v198
      %v273 = vunpack.c.l.b16 %v199
      %v274 = vunpack.c.l.b16 %v200
      %v275 = vunpack.c.l.b16 %v201
      %v276 = vunpack.c.l.b16 %v202
      %v277 = vunpack.c.l.b16 %v203
      %v278 = vunpack.c.l.b16 %v204
      %v279 = vunpack.c.l.b16 %v205
      %v280 = vunpack.c.l.b16 %v206
      %v281 = vpack.c.b16 %v250, %v249
      %v282 = vpack.c.b16 %v252, %v251
      %v283 = vpack.c.b16 %v254, %v253
      %v284 = vpack.c.b16 %v256, %v255
      %v285 = vpack.c.b16 %v258, %v257
      %v286 = vpack.c.b16 %v260, %v259
      %v287 = vpack.c.b16 %v262, %v261
      %v288 = vpack.c.b16 %v264, %v263
      %v289 = vpack.c.b16 %v266, %v265
      %v290 = vpack.c.b16 %v268, %v267
      %v291 = vpack.c.b16 %v270, %v269
      %v292 = vpack.c.b16 %v272, %v271
      %v293 = vpack.c.b16 %v274, %v273
      %v294 = vpack.c.b16 %v276, %v275
      %v295 = vpack.c.b16 %v278, %v277
      %v296 = vpack.c.b16 %v280, %v279
      %v303 = vunpack.c.l.b16 %v207
      %v304 = vunpack.c.l.b16 %v208
      %v305 = vunpack.c.l.b16 %v209
      %v306 = vunpack.c.l.b16 %v210
      %v307 = vunpack.c.l.b16 %v211
      %v308 = vunpack.c.l.b16 %v212
      %v309 = vpack.c.b16 %v304, %v303
      %v310 = vpack.c.b16 %v306, %v305
      %v311 = vpack.c.b16 %v308, %v307
      %vm315 = vcmask 392192
      %v317 = vsel %vm315, %v281, 0
      %v320 = vsel %vm315, %v282, 0
      %v323 = vsel %vm315, %v283, 0
      %v326 = vsel %vm315, %v284, 0
      %v329 = vsel %vm315, %v285, 0
      %v332 = vsel %vm315, %v286, 0
      %v335 = vsel %vm315, %v287, 0
      %v338 = vsel %vm315, %v288, 0
      %v341 = vsel %vm315, %v289, 0
      %v344 = vsel %vm315, %v290, 0
      %v347 = vsel %vm315, %v291, 0
      %v350 = vsel %vm315, %v292, 0
      %v353 = vsel %vm315, %v293, 0
      %v356 = vsel %vm315, %v294, 0
      %v359 = vsel %vm315, %v295, 0
      %v362 = vsel %vm315, %v296, 0
      %364 = vmatpush.bf16.msra.mxu0 0
      %365 = vmatpush.bf16.msra.mxu0 0
      %366 = vmatpush.bf16.msra.mxu0 0
      %367 = vmatpush.bf16.msra.mxu0 0
      %368 = vmatpush.bf16.msra.mxu0 0
      %369 = vmatpush.bf16.msra.mxu0 %v311
      %370 = vmatpush.bf16.msra.mxu0 %v310
      %371 = vmatpush.bf16.msra.mxu0 %v309
      %372 = vmatmul.bf16.gmra.mxu0 %v317
      %v373 = vpop.f32.mrf.mxu0
      %v374 = vadd.f32 %v215, %v373
      %v375 = vpop.f32.mrf.mxu0
      %v376 = vadd.f32 %v215, %v375
      %377 = vmatmul.bf16.gmra.mxu0 %v320
      %v378 = vpop.f32.mrf.mxu0
      %v379 = vadd.f32 %v215, %v378
      %v380 = vpop.f32.mrf.mxu0
      %v381 = vadd.f32 %v215, %v380
      %382 = vmatmul.bf16.gmra.mxu0 %v323
      %v383 = vpop.f32.mrf.mxu0
      %v384 = vadd.f32 %v215, %v383
      %v385 = vpop.f32.mrf.mxu0
      %v386 = vadd.f32 %v215, %v385
      %387 = vmatmul.bf16.gmra.mxu0 %v326
      %v388 = vpop.f32.mrf.mxu0
      %v389 = vadd.f32 %v215, %v388
      %v390 = vpop.f32.mrf.mxu0
      %v391 = vadd.f32 %v215, %v390
      %392 = vmatmul.bf16.gmra.mxu0 %v329
      %v393 = vpop.f32.mrf.mxu0
      %v394 = vadd.f32 %v215, %v393
      %v395 = vpop.f32.mrf.mxu0
      %v396 = vadd.f32 %v215, %v395
      %397 = vmatmul.bf16.gmra.mxu0 %v332
      %v398 = vpop.f32.mrf.mxu0
      %v399 = vadd.f32 %v215, %v398
      %v400 = vpop.f32.mrf.mxu0
      %v401 = vadd.f32 %v215, %v400
      %402 = vmatmul.bf16.gmra.mxu0 %v335
      %v403 = vpop.f32.mrf.mxu0
      %v404 = vadd.f32 %v215, %v403
      %v405 = vpop.f32.mrf.mxu0
      %v406 = vadd.f32 %v215, %v405
      %407 = vmatmul.bf16.gmra.mxu0 %v338
      %v408 = vpop.f32.mrf.mxu0
      %v409 = vadd.f32 %v215, %v408
      %v410 = vpop.f32.mrf.mxu0
      %v411 = vadd.f32 %v215, %v410
      %412 = vmatmul.bf16.gmra.mxu0 %v341
      %v413 = vpop.f32.mrf.mxu0
      %v414 = vadd.f32 %v215, %v413
      %v415 = vpop.f32.mrf.mxu0
      %v416 = vadd.f32 %v215, %v415
      %417 = vmatmul.bf16.gmra.mxu0 %v344
      %v418 = vpop.f32.mrf.mxu0
      %v419 = vadd.f32 %v215, %v418
      %v420 = vpop.f32.mrf.mxu0
      %v421 = vadd.f32 %v215, %v420
      %422 = vmatmul.bf16.gmra.mxu0 %v347
      %v423 = vpop.f32.mrf.mxu0
      %v424 = vadd.f32 %v215, %v423
      %v425 = vpop.f32.mrf.mxu0
      %v426 = vadd.f32 %v215, %v425
      %427 = vmatmul.bf16.gmra.mxu0 %v350
      %v428 = vpop.f32.mrf.mxu0
      %v429 = vadd.f32 %v215, %v428
      %v430 = vpop.f32.mrf.mxu0
      %v431 = vadd.f32 %v215, %v430
      %432 = vmatmul.bf16.gmra.mxu0 %v353
      %v433 = vpop.f32.mrf.mxu0
      %v434 = vadd.f32 %v215, %v433
      %v435 = vpop.f32.mrf.mxu0
      %v436 = vadd.f32 %v215, %v435
      %437 = vmatmul.bf16.gmra.mxu0 %v356
      %v438 = vpop.f32.mrf.mxu0
      %v439 = vadd.f32 %v215, %v438
      %v440 = vpop.f32.mrf.mxu0
      %v441 = vadd.f32 %v215, %v440
      %442 = vmatmul.bf16.gmra.mxu0 %v359
      %v443 = vpop.f32.mrf.mxu0
      %v444 = vadd.f32 %v215, %v443
      %v445 = vpop.f32.mrf.mxu0
      %v446 = vadd.f32 %v215, %v445
      %447 = vmatmul.bf16.gmra.mxu0 %v362
      %v448 = vpop.f32.mrf.mxu0
      %v449 = vadd.f32 %v215, %v448
      %v450 = vpop.f32.mrf.mxu0
      %v451 = vadd.f32 %v215, %v450
      %452 = vdwg.mxu0
      %v453 = vmax.f32 %v374, 0.0
      %v454 = vmax.f32 %v376, 0.0
      %v455 = vmax.f32 %v379, 0.0
      %v456 = vmax.f32 %v381, 0.0
      %v457 = vmax.f32 %v384, 0.0
      %v458 = vmax.f32 %v386, 0.0
      %v459 = vmax.f32 %v389, 0.0
      %v460 = vmax.f32 %v391, 0.0
      %v461 = vmax.f32 %v394, 0.0
      %v462 = vmax.f32 %v396, 0.0
      %v463 = vmax.f32 %v399, 0.0
      %v464 = vmax.f32 %v401, 0.0
      %v465 = vmax.f32 %v404, 0.0
      %v466 = vmax.f32 %v406, 0.0
      %v467 = vmax.f32 %v409, 0.0
      %v468 = vmax.f32 %v411, 0.0
      %v469 = vmax.f32 %v414, 0.0
      %v470 = vmax.f32 %v416, 0.0
      %v471 = vmax.f32 %v419, 0.0
      %v472 = vmax.f32 %v421, 0.0
      %v473 = vmax.f32 %v424, 0.0
      %v474 = vmax.f32 %v426, 0.0
      %v475 = vmax.f32 %v429, 0.0
      %v476 = vmax.f32 %v431, 0.0
      %v477 = vmax.f32 %v434, 0.0
      %v478 = vmax.f32 %v436, 0.0
      %v479 = vmax.f32 %v439, 0.0
      %v480 = vmax.f32 %v441, 0.0
      %v481 = vmax.f32 %v444, 0.0
      %v482 = vmax.f32 %v446, 0.0
      %v483 = vmax.f32 %v449, 0.0
      %v484 = vmax.f32 %v451, 0.0
      %v485 = vpack.c.bf16 %v453, %v453
      %v486 = vpack.c.bf16 %v454, %v454
      %v487 = vpack.c.bf16 %v455, %v455
      %v488 = vpack.c.bf16 %v456, %v456
      %v489 = vpack.c.bf16 %v457, %v457
      %v490 = vpack.c.bf16 %v458, %v458
      %v491 = vpack.c.bf16 %v459, %v459
      %v492 = vpack.c.bf16 %v460, %v460
      %v493 = vpack.c.bf16 %v461, %v461
      %v494 = vpack.c.bf16 %v462, %v462
      %v495 = vpack.c.bf16 %v463, %v463
      %v496 = vpack.c.bf16 %v464, %v464
      %v497 = vpack.c.bf16 %v465, %v465
      %v498 = vpack.c.bf16 %v466, %v466
      %v499 = vpack.c.bf16 %v467, %v467
      %v500 = vpack.c.bf16 %v468, %v468
      %v501 = vpack.c.bf16 %v469, %v469
      %v502 = vpack.c.bf16 %v470, %v470
      %v503 = vpack.c.bf16 %v471, %v471
      %v504 = vpack.c.bf16 %v472, %v472
      %v505 = vpack.c.bf16 %v473, %v473
      %v506 = vpack.c.bf16 %v474, %v474
      %v507 = vpack.c.bf16 %v475, %v475
      %v508 = vpack.c.bf16 %v476, %v476
      %v509 = vpack.c.bf16 %v477, %v477
      %v510 = vpack.c.bf16 %v478, %v478
      %v511 = vpack.c.bf16 %v479, %v479
      %v512 = vpack.c.bf16 %v480, %v480
      %v513 = vpack.c.bf16 %v481, %v481
      %v514 = vpack.c.bf16 %v482, %v482
      %v515 = vpack.c.bf16 %v483, %v483
      %v516 = vpack.c.bf16 %v484, %v484
      %vm517 = vcmask 519168
      %518 = vst.msk [vmem:[%s172] sm:$0xf] %vm517, %v485
      %519 = vst.msk [vmem:[%s172 + $0x4] sm:$0xf] %vm517, %v486
      %520 = vst.msk [vmem:[%s172 + $0x8] sm:$0xf] %vm517, %v487
      %521 = vst.msk [vmem:[%s172 + $0xc] sm:$0xf] %vm517, %v488
      %522 = vst.msk [vmem:[%s172 + $0x10] sm:$0xf] %vm517, %v489
      %523 = vst.msk [vmem:[%s172 + $0x14] sm:$0xf] %vm517, %v490
      %524 = vst.msk [vmem:[%s172 + $0x18] sm:$0xf] %vm517, %v491
      %525 = vst.msk [vmem:[%s172 + $0x1c] sm:$0xf] %vm517, %v492
      %526 = vst.msk [vmem:[%s172 + $0x20] sm:$0xf] %vm517, %v493
      %527 = vst.msk [vmem:[%s172 + $0x24] sm:$0xf] %vm517, %v494
      %528 = vst.msk [vmem:[%s172 + $0x28] sm:$0xf] %vm517, %v495
      %529 = vst.msk [vmem:[%s172 + $0x2c] sm:$0xf] %vm517, %v496
      %530 = vst.msk [vmem:[%s172 + $0x30] sm:$0xf] %vm517, %v497
      %531 = vst.msk [vmem:[%s172 + $0x34] sm:$0xf] %vm517, %v498
      %532 = vst.msk [vmem:[%s172 + $0x38] sm:$0xf] %vm517, %v499
      %533 = vst.msk [vmem:[%s172 + $0x3c] sm:$0xf] %vm517, %v500
      %534 = vst.msk [vmem:[%s172 + $0x40] sm:$0xf] %vm517, %v501
      %535 = vst.msk [vmem:[%s172 + $0x44] sm:$0xf] %vm517, %v502
      %536 = vst.msk [vmem:[%s172 + $0x48] sm:$0xf] %vm517, %v503
      %537 = vst.msk [vmem:[%s172 + $0x4c] sm:$0xf] %vm517, %v504
      %538 = vst.msk [vmem:[%s172 + $0x50] sm:$0xf] %vm517, %v505
      %539 = vst.msk [vmem:[%s172 + $0x54] sm:$0xf] %vm517, %v506
      %540 = vst.msk [vmem:[%s172 + $0x58] sm:$0xf] %vm517, %v507
      %541 = vst.msk [vmem:[%s172 + $0x5c] sm:$0xf] %vm517, %v508
      %542 = vst.msk [vmem:[%s172 + $0x60] sm:$0xf] %vm517, %v509
      %543 = vst.msk [vmem:[%s172 + $0x64] sm:$0xf] %vm517, %v510
      %544 = vst.msk [vmem:[%s172 + $0x68] sm:$0xf] %vm517, %v511
      %545 = vst.msk [vmem:[%s172 + $0x6c] sm:$0xf] %vm517, %v512
      %546 = vst.msk [vmem:[%s172 + $0x70] sm:$0xf] %vm517, %v513
      %547 = vst.msk [vmem:[%s172 + $0x74] sm:$0xf] %vm517, %v514
      %548 = vst.msk [vmem:[%s172 + $0x78] sm:$0xf] %vm517, %v515
      %549 = vst.msk [vmem:[%s172 + $0x7c] sm:$0xf] %vm517, %v516
      %s550 = smul.u32 32, %s14
      %p551 = scmp.lt.s32.totalorder %s550, 159
      %s552 = scalar_select %p551, %s550, 159
      %s553 = smul.addr %s552, 4
      %s554 = scalar_lea.vmem %s3, %s553
      // Predicated region
      $region33: #{cnn2_forward.3} parent=31 // pred_check
        %p555 = pneg %p100
      $region34: #{cnn2_forward.3} parent=31 // pred_check_branch
        %557 = sbr.rel (%p555) target = $region36
      $region35: #{cnn2_forward.3} parent=31 // pred_region
        %s558 = smul.u32 32, %s14
      $region36: #{cnn2_forward.3} parent=31 // pred_fallthru
        _
    $region32: #{cnn2_forward.3} parent=5 // pred_fallthru
      _
    %p559 = scmp.le.s32.totalorder 2, %s9
    // Predicated region
    $region37: #{cnn2_forward.3} parent=5 // pred_check
      %p560 = pneg %p559
    $region38: #{cnn2_forward.3} parent=5 // pred_check_branch
      %562 = sbr.rel (%p560) target = $region40
    $region39: #{cnn2_forward.3} parent=5 // pred_region
      %s563 = ssub.s32 %s9, 2
      // Predicated region
      $region41: #{cnn2_forward.3} parent=39 // pred_check
        %p564 = pneg %p106
      $region42: #{cnn2_forward.3} parent=39 // pred_check_branch
        %566 = sbr.rel (%p564) target = $region44
      $region43: #{cnn2_forward.3} parent=39 // pred_region
        %s567 = smul.u32 32, %s15
        %p568 = scmp.lt.s32.totalorder %s567, 159
        %s569 = scalar_select %p568, %s567, 159
        %s570 = smul.addr %s569, 4
        %s571 = scalar_lea.vmem %s3, %s570
      $region44: #{cnn2_forward.3} parent=39 // pred_fallthru
        _
    $region40: #{cnn2_forward.3} parent=5 // pred_fallthru
      _
  $region6: #{cnn2_forward.3} parent=0 // loop_footer
    %s13 = sadd.s32 1, %s9
  $region7: #{cnn2_forward.3} parent=0 // loop_footer_branch
    %8 = sbr.rel target = $region3
  $region8: #{cnn2_forward.3} parent=0 // loop_exit
    _

// kernel: cnn2_forward.4
$region0: #{cnn2_forward.4}
  #allocation0 [shape = 'u32[]', space=smem, size = 0x4, offset = 0x4, fixed_abs, tag = 'smem constant byte address 0x4 - core index']
  #allocation1 [shape = 'u32[72,128]{1,0:T(1,128)}', space=vmem, size = 0x9000, scoped, tag = 'internal scratch']
  %s0 = inlined_call_operand.vmem [shape: bf16[72,4096], index: 0, kind: input, shape index: {}]
  %s1 = inlined_call_operand.vmem [shape: bf16[4096,128], index: 1, kind: input, shape index: {}]
  %s2 = inlined_call_operand.vmem [shape: f32[1,128], index: 2, kind: input, shape index: {}]
  %s3 = inlined_call_operand.vmem [shape: bf16[72,128], index: 3, kind: output, shape index: {}]
  %s4 = sld [smem:[#allocation0]]
  $region22: #{cnn2_forward.4} parent=0
    _
  %s6 = ssub.s32 1, %s4
  %s7 = scalar_select 0, %s6, %s4
  // Predicated region
  $region2: #{cnn2_forward.4} parent=0 // pred_check
    _
  $region3: #{cnn2_forward.4} parent=0 // pred_check_branch
    %9 = sbr.rel (0) target = $region5
  $region4: #{cnn2_forward.4} parent=0 // pred_region
    _
  $region5: #{cnn2_forward.4} parent=0 // pred_fallthru
    _
  // Predicated region
  $region6: #{cnn2_forward.4} parent=0 // pred_check
    _
  $region7: #{cnn2_forward.4} parent=0 // pred_check_branch
    %11 = sbr.rel (0) target = $region9
  $region8: #{cnn2_forward.4} parent=0 // pred_region
    _
  $region9: #{cnn2_forward.4} parent=0 // pred_fallthru
    _
  // Predicated region
  $region10: #{cnn2_forward.4} parent=0 // pred_check
    _
  $region11: #{cnn2_forward.4} parent=0 // pred_check_branch
    %13 = sbr.rel (0) target = $region13
  $region12: #{cnn2_forward.4} parent=0 // pred_region
    _
  $region13: #{cnn2_forward.4} parent=0 // pred_fallthru
    _
  %v14 = vld [vmem:[%s0] sm:$0xff]
  %v15 = vld [vmem:[%s0 + $0x8] sm:$0xff]
  %v16 = vld [vmem:[%s0 + $0x10] sm:$0xff]
  %v17 = vld [vmem:[%s0 + $0x18] sm:$0xff]
  %v18 = vld [vmem:[%s0 + $0x20] sm:$0xff]
  %v19 = vld [vmem:[%s0 + $0x28] sm:$0xff]
  %v20 = vld [vmem:[%s0 + $0x30] sm:$0xff]
  %v21 = vld [vmem:[%s0 + $0x38] sm:$0xff]
  %v22 = vld [vmem:[%s0 + $0x40] sm:$0xff]
  %v23 = vld [vmem:[%s0 + $0x48] sm:$0xff]
  %v24 = vld [vmem:[%s0 + $0x50] sm:$0xff]
  %v25 = vld [vmem:[%s0 + $0x58] sm:$0xff]
  %v26 = vld [vmem:[%s0 + $0x60] sm:$0xff]
  %v27 = vld [vmem:[%s0 + $0x68] sm:$0xff]
  %v28 = vld [vmem:[%s0 + $0x70] sm:$0xff]
  %v29 = vld [vmem:[%s0 + $0x78] sm:$0xff]
  %v30 = vld [vmem:[%s0 + $0x80] sm:$0xff]
  %v31 = vld [vmem:[%s0 + $0x88] sm:$0xff]
  %v32 = vld [vmem:[%s0 + $0x90] sm:$0xff]
  %v33 = vld [vmem:[%s0 + $0x98] sm:$0xff]
  %v34 = vld [vmem:[%s0 + $0xa0] sm:$0xff]
  %v35 = vld [vmem:[%s0 + $0xa8] sm:$0xff]
  %v36 = vld [vmem:[%s0 + $0xb0] sm:$0xff]
  %v37 = vld [vmem:[%s0 + $0xb8] sm:$0xff]
  %v38 = vld [vmem:[%s0 + $0xc0] sm:$0xff]
  %v39 = vld [vmem:[%s0 + $0xc8] sm:$0xff]
  %v40 = vld [vmem:[%s0 + $0xd0] sm:$0xff]
  %v41 = vld [vmem:[%s0 + $0xd8] sm:$0xff]
  %v42 = vld [vmem:[%s0 + $0xe0] sm:$0xff]
  %v43 = vld [vmem:[%s0 + $0xe8] sm:$0xff]
  %v44 = vld [vmem:[%s0 + $0xf0] sm:$0xff]
  %v45 = vld [vmem:[%s0 + $0xf8] sm:$0xff]
  %v46 = vld [vmem:[%s0 + $0x100] sm:$0xff]
  %v47 = vld [vmem:[%s0 + $0x108] sm:$0xff]
  %v48 = vld [vmem:[%s0 + $0x110] sm:$0xff]
  %v49 = vld [vmem:[%s0 + $0x118] sm:$0xff]
  %v50 = vld [vmem:[%s0 + $0x120] sm:$0xff]
  %v51 = vld [vmem:[%s0 + $0x128] sm:$0xff]
  %v52 = vld [vmem:[%s0 + $0x130] sm:$0xff]
  %v53 = vld [vmem:[%s0 + $0x138] sm:$0xff]
  %v54 = vld [vmem:[%s0 + $0x140] sm:$0xff]
  %v55 = vld [vmem:[%s0 + $0x148] sm:$0xff]
  %v56 = vld [vmem:[%s0 + $0x150] sm:$0xff]
  %v57 = vld [vmem:[%s0 + $0x158] sm:$0xff]
  %v58 = vld [vmem:[%s0 + $0x160] sm:$0xff]
  %v59 = vld [vmem:[%s0 + $0x168] sm:$0xff]
  %v60 = vld [vmem:[%s0 + $0x170] sm:$0xff]
  %v61 = vld [vmem:[%s0 + $0x178] sm:$0xff]
  %v62 = vld [vmem:[%s0 + $0x180] sm:$0xff]
  %v63 = vld [vmem:[%s0 + $0x188] sm:$0xff]
  %v64 = vld [vmem:[%s0 + $0x190] sm:$0xff]
  %v65 = vld [vmem:[%s0 + $0x198] sm:$0xff]
  %v66 = vld [vmem:[%s0 + $0x1a0] sm:$0xff]
  %v67 = vld [vmem:[%s0 + $0x1a8] sm:$0xff]
  %v68 = vld [vmem:[%s0 + $0x1b0] sm:$0xff]
  %v69 = vld [vmem:[%s0 + $0x1b8] sm:$0xff]
  %v70 = vld [vmem:[%s0 + $0x1c0] sm:$0xff]
  %v71 = vld [vmem:[%s0 + $0x1c8] sm:$0xff]
  %v72 = vld [vmem:[%s0 + $0x1d0] sm:$0xff]
  %v73 = vld [vmem:[%s0 + $0x1d8] sm:$0xff]
  %v74 = vld [vmem:[%s0 + $0x1e0] sm:$0xff]
  %v75 = vld [vmem:[%s0 + $0x1e8] sm:$0xff]
  %v76 = vld [vmem:[%s0 + $0x1f0] sm:$0xff]
  %v77 = vld [vmem:[%s0 + $0x1f8] sm:$0xff]
  %v78 = vld [vmem:[%s0 + $0x200] sm:$0xff]
  %v79 = vld [vmem:[%s0 + $0x208] sm:$0xff]
  %v80 = vld [vmem:[%s0 + $0x210] sm:$0xff]
  %v81 = vld [vmem:[%s0 + $0x218] sm:$0xff]
  %v82 = vld [vmem:[%s0 + $0x220] sm:$0xff]
  %v83 = vld [vmem:[%s0 + $0x228] sm:$0xff]
  %v84 = vld [vmem:[%s0 + $0x230] sm:$0xff]
  %v85 = vld [vmem:[%s0 + $0x238] sm:$0xff]
  %v86 = vld [vmem:[%s0 + $0x240] sm:$0xff]
  %v87 = vld [vmem:[%s0 + $0x248] sm:$0xff]
  %v88 = vld [vmem:[%s0 + $0x250] sm:$0xff]
  %v89 = vld [vmem:[%s0 + $0x258] sm:$0xff]
  %v90 = vld [vmem:[%s0 + $0x260] sm:$0xff]
  %v91 = vld [vmem:[%s0 + $0x268] sm:$0xff]
  %v92 = vld [vmem:[%s0 + $0x270] sm:$0xff]
  %v93 = vld [vmem:[%s0 + $0x278] sm:$0xff]
  %v94 = vld [vmem:[%s0 + $0x280] sm:$0xff]
  %v95 = vld [vmem:[%s0 + $0x288] sm:$0xff]
  %v96 = vld [vmem:[%s0 + $0x290] sm:$0xff]
  %v97 = vld [vmem:[%s0 + $0x298] sm:$0xff]
  %v98 = vld [vmem:[%s0 + $0x2a0] sm:$0xff]
  %v99 = vld [vmem:[%s0 + $0x2a8] sm:$0xff]
  %v100 = vld [vmem:[%s0 + $0x2b0] sm:$0xff]
  %v101 = vld [vmem:[%s0 + $0x2b8] sm:$0xff]
  %v102 = vld [vmem:[%s0 + $0x2c0] sm:$0xff]
  %v103 = vld [vmem:[%s0 + $0x2c8] sm:$0xff]
  %v104 = vld [vmem:[%s0 + $0x2d0] sm:$0xff]
  %v105 = vld [vmem:[%s0 + $0x2d8] sm:$0xff]
  %v106 = vld [vmem:[%s0 + $0x2e0] sm:$0xff]
  %v107 = vld [vmem:[%s0 + $0x2e8] sm:$0xff]
  %v108 = vld [vmem:[%s0 + $0x2f0] sm:$0xff]
  %v109 = vld [vmem:[%s0 + $0x2f8] sm:$0xff]
  %v110 = vld [vmem:[%s0 + $0x300] sm:$0xff]
  %v111 = vld [vmem:[%s0 + $0x308] sm:$0xff]
  %v112 = vld [vmem:[%s0 + $0x310] sm:$0xff]
  %v113 = vld [vmem:[%s0 + $0x318] sm:$0xff]
  %v114 = vld [vmem:[%s0 + $0x320] sm:$0xff]
  %v115 = vld [vmem:[%s0 + $0x328] sm:$0xff]
  %v116 = vld [vmem:[%s0 + $0x330] sm:$0xff]
  %v117 = vld [vmem:[%s0 + $0x338] sm:$0xff]
  %v118 = vld [vmem:[%s0 + $0x340] sm:$0xff]
  %v119 = vld [vmem:[%s0 + $0x348] sm:$0xff]
  %v120 = vld [vmem:[%s0 + $0x350] sm:$0xff]
  %v121 = vld [vmem:[%s0 + $0x358] sm:$0xff]
  %v122 = vld [vmem:[%s0 + $0x360] sm:$0xff]
  %v123 = vld [vmem:[%s0 + $0x368] sm:$0xff]
  %v124 = vld [vmem:[%s0 + $0x370] sm:$0xff]
  %v125 = vld [vmem:[%s0 + $0x378] sm:$0xff]
  %v126 = vld [vmem:[%s0 + $0x380] sm:$0xff]
  %v127 = vld [vmem:[%s0 + $0x388] sm:$0xff]
  %v128 = vld [vmem:[%s0 + $0x390] sm:$0xff]
  %v129 = vld [vmem:[%s0 + $0x398] sm:$0xff]
  %v130 = vld [vmem:[%s0 + $0x3a0] sm:$0xff]
  %v131 = vld [vmem:[%s0 + $0x3a8] sm:$0xff]
  %v132 = vld [vmem:[%s0 + $0x3b0] sm:$0xff]
  %v133 = vld [vmem:[%s0 + $0x3b8] sm:$0xff]
  %v134 = vld [vmem:[%s0 + $0x3c0] sm:$0xff]
  %v135 = vld [vmem:[%s0 + $0x3c8] sm:$0xff]
  %v136 = vld [vmem:[%s0 + $0x3d0] sm:$0xff]
  %v137 = vld [vmem:[%s0 + $0x3d8] sm:$0xff]
  %v138 = vld [vmem:[%s0 + $0x3e0] sm:$0xff]
  %v139 = vld [vmem:[%s0 + $0x3e8] sm:$0xff]
  %v140 = vld [vmem:[%s0 + $0x3f0] sm:$0xff]
  %v141 = vld [vmem:[%s0 + $0x3f8] sm:$0xff]
  %v142 = vld [vmem:[%s0 + $0x400] sm:$0xff]
  %v143 = vld [vmem:[%s0 + $0x408] sm:$0xff]
  %v144 = vld [vmem:[%s0 + $0x410] sm:$0xff]
  %v145 = vld [vmem:[%s0 + $0x418] sm:$0xff]
  %v146 = vld [vmem:[%s0 + $0x420] sm:$0xff]
  %v147 = vld [vmem:[%s0 + $0x428] sm:$0xff]
  %v148 = vld [vmem:[%s0 + $0x430] sm:$0xff]
  %v149 = vld [vmem:[%s0 + $0x438] sm:$0xff]
  %v150 = vld [vmem:[%s0 + $0x440] sm:$0xff]
  %v151 = vld [vmem:[%s0 + $0x448] sm:$0xff]
  %v152 = vld [vmem:[%s0 + $0x450] sm:$0xff]
  %v153 = vld [vmem:[%s0 + $0x458] sm:$0xff]
  %v154 = vld [vmem:[%s0 + $0x460] sm:$0xff]
  %v155 = vld [vmem:[%s0 + $0x468] sm:$0xff]
  %v156 = vld [vmem:[%s0 + $0x470] sm:$0xff]
  %v157 = vld [vmem:[%s0 + $0x478] sm:$0xff]
  %v158 = vld [vmem:[%s1] sm:$0xf]
  %v159 = vld [vmem:[%s1 + $0x4] sm:$0xf]
  %v160 = vld [vmem:[%s1 + $0x8] sm:$0xf]
  %v161 = vld [vmem:[%s1 + $0xc] sm:$0xf]
  %v162 = vld [vmem:[%s1 + $0x10] sm:$0xf]
  %v163 = vld [vmem:[%s1 + $0x14] sm:$0xf]
  %v164 = vld [vmem:[%s1 + $0x18] sm:$0xf]
  %v165 = vld [vmem:[%s1 + $0x1c] sm:$0xf]
  %v166 = vld [vmem:[%s1 + $0x20] sm:$0xf]
  %v167 = vld [vmem:[%s1 + $0x24] sm:$0xf]
  %v168 = vld [vmem:[%s1 + $0x28] sm:$0xf]
  %v169 = vld [vmem:[%s1 + $0x2c] sm:$0xf]
  %v170 = vld [vmem:[%s1 + $0x30] sm:$0xf]
  %v171 = vld [vmem:[%s1 + $0x34] sm:$0xf]
  %v172 = vld [vmem:[%s1 + $0x38] sm:$0xf]
  %v173 = vld [vmem:[%s1 + $0x3c] sm:$0xf]
  %v174 = vld [vmem:[%s1 + $0x40] sm:$0xf]
  %v175 = vld [vmem:[%s1 + $0x44] sm:$0xf]
  %v176 = vld [vmem:[%s1 + $0x48] sm:$0xf]
  %v177 = vld [vmem:[%s1 + $0x4c] sm:$0xf]
  %v178 = vld [vmem:[%s1 + $0x50] sm:$0xf]
  %v179 = vld [vmem:[%s1 + $0x54] sm:$0xf]
  %v180 = vld [vmem:[%s1 + $0x58] sm:$0xf]
  %v181 = vld [vmem:[%s1 + $0x5c] sm:$0xf]
  %v182 = vld [vmem:[%s1 + $0x60] sm:$0xf]
  %v183 = vld [vmem:[%s1 + $0x64] sm:$0xf]
  %v184 = vld [vmem:[%s1 + $0x68] sm:$0xf]
  %v185 = vld [vmem:[%s1 + $0x6c] sm:$0xf]
  %v186 = vld [vmem:[%s1 + $0x70] sm:$0xf]
  %v187 = vld [vmem:[%s1 + $0x74] sm:$0xf]
  %v188 = vld [vmem:[%s1 + $0x78] sm:$0xf]
  %v189 = vld [vmem:[%s1 + $0x7c] sm:$0xf]
  %v190 = vld [vmem:[%s1 + $0x80] sm:$0xf]
  %v191 = vld [vmem:[%s1 + $0x84] sm:$0xf]
  %v192 = vld [vmem:[%s1 + $0x88] sm:$0xf]
  %v193 = vld [vmem:[%s1 + $0x8c] sm:$0xf]
  %v194 = vld [vmem:[%s1 + $0x90] sm:$0xf]
  %v195 = vld [vmem:[%s1 + $0x94] sm:$0xf]
  %v196 = vld [vmem:[%s1 + $0x98] sm:$0xf]
  %v197 = vld [vmem:[%s1 + $0x9c] sm:$0xf]
  %v198 = vld [vmem:[%s1 + $0xa0] sm:$0xf]
  %v199 = vld [vmem:[%s1 + $0xa4] sm:$0xf]
  %v200 = vld [vmem:[%s1 + $0xa8] sm:$0xf]
  %v201 = vld [vmem:[%s1 + $0xac] sm:$0xf]
  %v202 = vld [vmem:[%s1 + $0xb0] sm:$0xf]
  %v203 = vld [vmem:[%s1 + $0xb4] sm:$0xf]
  %v204 = vld [vmem:[%s1 + $0xb8] sm:$0xf]
  %v205 = vld [vmem:[%s1 + $0xbc] sm:$0xf]
  %v206 = vld [vmem:[%s1 + $0xc0] sm:$0xf]
  %v207 = vld [vmem:[%s1 + $0xc4] sm:$0xf]
  %v208 = vld [vmem:[%s1 + $0xc8] sm:$0xf]
  %v209 = vld [vmem:[%s1 + $0xcc] sm:$0xf]
  %v210 = vld [vmem:[%s1 + $0xd0] sm:$0xf]
  %v211 = vld [vmem:[%s1 + $0xd4] sm:$0xf]
  %v212 = vld [vmem:[%s1 + $0xd8] sm:$0xf]
  %v213 = vld [vmem:[%s1 + $0xdc] sm:$0xf]
  %v214 = vld [vmem:[%s1 + $0xe0] sm:$0xf]
  %v215 = vld [vmem:[%s1 + $0xe4] sm:$0xf]
  %v216 = vld [vmem:[%s1 + $0xe8] sm:$0xf]
  %v217 = vld [vmem:[%s1 + $0xec] sm:$0xf]
  %v218 = vld [vmem:[%s1 + $0xf0] sm:$0xf]
  %v219 = vld [vmem:[%s1 + $0xf4] sm:$0xf]
  %v220 = vld [vmem:[%s1 + $0xf8] sm:$0xf]
  %v221 = vld [vmem:[%s1 + $0xfc] sm:$0xf]
  %v222 = vld [vmem:[%s1 + $0x100] sm:$0xf]
  %v223 = vld [vmem:[%s1 + $0x104] sm:$0xf]
  %v224 = vld [vmem:[%s1 + $0x108] sm:$0xf]
  %v225 = vld [vmem:[%s1 + $0x10c] sm:$0xf]
  %v226 = vld [vmem:[%s1 + $0x110] sm:$0xf]
  %v227 = vld [vmem:[%s1 + $0x114] sm:$0xf]
  %v228 = vld [vmem:[%s1 + $0x118] sm:$0xf]
  %v229 = vld [vmem:[%s1 + $0x11c] sm:$0xf]
  %v230 = vld [vmem:[%s1 + $0x120] sm:$0xf]
  %v231 = vld [vmem:[%s1 + $0x124] sm:$0xf]
  %v232 = vld [vmem:[%s1 + $0x128] sm:$0xf]
  %v233 = vld [vmem:[%s1 + $0x12c] sm:$0xf]
  %v234 = vld [vmem:[%s1 + $0x130] sm:$0xf]
  %v235 = vld [vmem:[%s1 + $0x134] sm:$0xf]
  %v236 = vld [vmem:[%s1 + $0x138] sm:$0xf]
  %v237 = vld [vmem:[%s1 + $0x13c] sm:$0xf]
  %v238 = vld [vmem:[%s1 + $0x140] sm:$0xf]
  %v239 = vld [vmem:[%s1 + $0x144] sm:$0xf]
  %v240 = vld [vmem:[%s1 + $0x148] sm:$0xf]
  %v241 = vld [vmem:[%s1 + $0x14c] sm:$0xf]
  %v242 = vld [vmem:[%s1 + $0x150] sm:$0xf]
  %v243 = vld [vmem:[%s1 + $0x154] sm:$0xf]
  %v244 = vld [vmem:[%s1 + $0x158] sm:$0xf]
  %v245 = vld [vmem:[%s1 + $0x15c] sm:$0xf]
  %v246 = vld [vmem:[%s1 + $0x160] sm:$0xf]
  %v247 = vld [vmem:[%s1 + $0x164] sm:$0xf]
  %v248 = vld [vmem:[%s1 + $0x168] sm:$0xf]
  %v249 = vld [vmem:[%s1 + $0x16c] sm:$0xf]
  %v250 = vld [vmem:[%s1 + $0x170] sm:$0xf]
  %v251 = vld [vmem:[%s1 + $0x174] sm:$0xf]
  %v252 = vld [vmem:[%s1 + $0x178] sm:$0xf]
  %v253 = vld [vmem:[%s1 + $0x17c] sm:$0xf]
  %v254 = vld [vmem:[%s1 + $0x180] sm:$0xf]
  %v255 = vld [vmem:[%s1 + $0x184] sm:$0xf]
  %v256 = vld [vmem:[%s1 + $0x188] sm:$0xf]
  %v257 = vld [vmem:[%s1 + $0x18c] sm:$0xf]
  %v258 = vld [vmem:[%s1 + $0x190] sm:$0xf]
  %v259 = vld [vmem:[%s1 + $0x194] sm:$0xf]
  %v260 = vld [vmem:[%s1 + $0x198] sm:$0xf]
  %v261 = vld [vmem:[%s1 + $0x19c] sm:$0xf]
  %v262 = vld [vmem:[%s1 + $0x1a0] sm:$0xf]
  %v263 = vld [vmem:[%s1 + $0x1a4] sm:$0xf]
  %v264 = vld [vmem:[%s1 + $0x1a8] sm:$0xf]
  %v265 = vld [vmem:[%s1 + $0x1ac] sm:$0xf]
  %v266 = vld [vmem:[%s1 + $0x1b0] sm:$0xf]
  %v267 = vld [vmem:[%s1 + $0x1b4] sm:$0xf]
  %v268 = vld [vmem:[%s1 + $0x1b8] sm:$0xf]
  %v269 = vld [vmem:[%s1 + $0x1bc] sm:$0xf]
  %v270 = vld [vmem:[%s1 + $0x1c0] sm:$0xf]
  %v271 = vld [vmem:[%s1 + $0x1c4] sm:$0xf]
  %v272 = vld [vmem:[%s1 + $0x1c8] sm:$0xf]
  %v273 = vld [vmem:[%s1 + $0x1cc] sm:$0xf]
  %v274 = vld [vmem:[%s1 + $0x1d0] sm:$0xf]
  %v275 = vld [vmem:[%s1 + $0x1d4] sm:$0xf]
  %v276 = vld [vmem:[%s1 + $0x1d8] sm:$0xf]
  %v277 = vld [vmem:[%s1 + $0x1dc] sm:$0xf]
  %v278 = vld [vmem:[%s1 + $0x1e0] sm:$0xf]
  %v279 = vld [vmem:[%s1 + $0x1e4] sm:$0xf]
  %v280 = vld [vmem:[%s1 + $0x1e8] sm:$0xf]
  %v281 = vld [vmem:[%s1 + $0x1ec] sm:$0xf]
  %v282 = vld [vmem:[%s1 + $0x1f0] sm:$0xf]
  %v283 = vld [vmem:[%s1 + $0x1f4] sm:$0xf]
  %v284 = vld [vmem:[%s1 + $0x1f8] sm:$0xf]
  %v285 = vld [vmem:[%s1 + $0x1fc] sm:$0xf]
  %v286 = vld [vmem:[%s1 + $0x200] sm:$0xf]
  %v287 = vld [vmem:[%s1 + $0x204] sm:$0xf]
  %v288 = vld [vmem:[%s1 + $0x208] sm:$0xf]
  %v289 = vld [vmem:[%s1 + $0x20c] sm:$0xf]
  %v290 = vld [vmem:[%s1 + $0x210] sm:$0xf]
  %v291 = vld [vmem:[%s1 + $0x214] sm:$0xf]
  %v292 = vld [vmem:[%s1 + $0x218] sm:$0xf]
  %v293 = vld [vmem:[%s1 + $0x21c] sm:$0xf]
  %v294 = vld [vmem:[%s1 + $0x220] sm:$0xf]
  %v295 = vld [vmem:[%s1 + $0x224] sm:$0xf]
  %v296 = vld [vmem:[%s1 + $0x228] sm:$0xf]
  %v297 = vld [vmem:[%s1 + $0x22c] sm:$0xf]
  %v298 = vld [vmem:[%s1 + $0x230] sm:$0xf]
  %v299 = vld [vmem:[%s1 + $0x234] sm:$0xf]
  %v300 = vld [vmem:[%s1 + $0x238] sm:$0xf]
  %v301 = vld [vmem:[%s1 + $0x23c] sm:$0xf]
  %v302 = vld [vmem:[%s1 + $0x240] sm:$0xf]
  %v303 = vld [vmem:[%s1 + $0x244] sm:$0xf]
  %v304 = vld [vmem:[%s1 + $0x248] sm:$0xf]
  %v305 = vld [vmem:[%s1 + $0x24c] sm:$0xf]
  %v306 = vld [vmem:[%s1 + $0x250] sm:$0xf]
  %v307 = vld [vmem:[%s1 + $0x254] sm:$0xf]
  %v308 = vld [vmem:[%s1 + $0x258] sm:$0xf]
  %v309 = vld [vmem:[%s1 + $0x25c] sm:$0xf]
  %v310 = vld [vmem:[%s1 + $0x260] sm:$0xf]
  %v311 = vld [vmem:[%s1 + $0x264] sm:$0xf]
  %v312 = vld [vmem:[%s1 + $0x268] sm:$0xf]
  %v313 = vld [vmem:[%s1 + $0x26c] sm:$0xf]
  %v314 = vld [vmem:[%s1 + $0x270] sm:$0xf]
  %v315 = vld [vmem:[%s1 + $0x274] sm:$0xf]
  %v316 = vld [vmem:[%s1 + $0x278] sm:$0xf]
  %v317 = vld [vmem:[%s1 + $0x27c] sm:$0xf]
  %v318 = vld [vmem:[%s1 + $0x280] sm:$0xf]
  %v319 = vld [vmem:[%s1 + $0x284] sm:$0xf]
  %v320 = vld [vmem:[%s1 + $0x288] sm:$0xf]
  %v321 = vld [vmem:[%s1 + $0x28c] sm:$0xf]
  %v322 = vld [vmem:[%s1 + $0x290] sm:$0xf]
  %v323 = vld [vmem:[%s1 + $0x294] sm:$0xf]
  %v324 = vld [vmem:[%s1 + $0x298] sm:$0xf]
  %v325 = vld [vmem:[%s1 + $0x29c] sm:$0xf]
  %v326 = vld [vmem:[%s1 + $0x2a0] sm:$0xf]
  %v327 = vld [vmem:[%s1 + $0x2a4] sm:$0xf]
  %v328 = vld [vmem:[%s1 + $0x2a8] sm:$0xf]
  %v329 = vld [vmem:[%s1 + $0x2ac] sm:$0xf]
  %v330 = vld [vmem:[%s1 + $0x2b0] sm:$0xf]
  %v331 = vld [vmem:[%s1 + $0x2b4] sm:$0xf]
  %v332 = vld [vmem:[%s1 + $0x2b8] sm:$0xf]
  %v333 = vld [vmem:[%s1 + $0x2bc] sm:$0xf]
  %v334 = vld [vmem:[%s1 + $0x2c0] sm:$0xf]
  %v335 = vld [vmem:[%s1 + $0x2c4] sm:$0xf]
  %v336 = vld [vmem:[%s1 + $0x2c8] sm:$0xf]
  %v337 = vld [vmem:[%s1 + $0x2cc] sm:$0xf]
  %v338 = vld [vmem:[%s1 + $0x2d0] sm:$0xf]
  %v339 = vld [vmem:[%s1 + $0x2d4] sm:$0xf]
  %v340 = vld [vmem:[%s1 + $0x2d8] sm:$0xf]
  %v341 = vld [vmem:[%s1 + $0x2dc] sm:$0xf]
  %v342 = vld [vmem:[%s1 + $0x2e0] sm:$0xf]
  %v343 = vld [vmem:[%s1 + $0x2e4] sm:$0xf]
  %v344 = vld [vmem:[%s1 + $0x2e8] sm:$0xf]
  %v345 = vld [vmem:[%s1 + $0x2ec] sm:$0xf]
  %v346 = vld [vmem:[%s1 + $0x2f0] sm:$0xf]
  %v347 = vld [vmem:[%s1 + $0x2f4] sm:$0xf]
  %v348 = vld [vmem:[%s1 + $0x2f8] sm:$0xf]
  %v349 = vld [vmem:[%s1 + $0x2fc] sm:$0xf]
  %v350 = vld [vmem:[%s1 + $0x300] sm:$0xf]
  %v351 = vld [vmem:[%s1 + $0x304] sm:$0xf]
  %v352 = vld [vmem:[%s1 + $0x308] sm:$0xf]
  %v353 = vld [vmem:[%s1 + $0x30c] sm:$0xf]
  %v354 = vld [vmem:[%s1 + $0x310] sm:$0xf]
  %v355 = vld [vmem:[%s1 + $0x314] sm:$0xf]
  %v356 = vld [vmem:[%s1 + $0x318] sm:$0xf]
  %v357 = vld [vmem:[%s1 + $0x31c] sm:$0xf]
  %v358 = vld [vmem:[%s1 + $0x320] sm:$0xf]
  %v359 = vld [vmem:[%s1 + $0x324] sm:$0xf]
  %v360 = vld [vmem:[%s1 + $0x328] sm:$0xf]
  %v361 = vld [vmem:[%s1 + $0x32c] sm:$0xf]
  %v362 = vld [vmem:[%s1 + $0x330] sm:$0xf]
  %v363 = vld [vmem:[%s1 + $0x334] sm:$0xf]
  %v364 = vld [vmem:[%s1 + $0x338] sm:$0xf]
  %v365 = vld [vmem:[%s1 + $0x33c] sm:$0xf]
  %v366 = vld [vmem:[%s1 + $0x340] sm:$0xf]
  %v367 = vld [vmem:[%s1 + $0x344] sm:$0xf]
  %v368 = vld [vmem:[%s1 + $0x348] sm:$0xf]
  %v369 = vld [vmem:[%s1 + $0x34c] sm:$0xf]
  %v370 = vld [vmem:[%s1 + $0x350] sm:$0xf]
  %v371 = vld [vmem:[%s1 + $0x354] sm:$0xf]
  %v372 = vld [vmem:[%s1 + $0x358] sm:$0xf]
  %v373 = vld [vmem:[%s1 + $0x35c] sm:$0xf]
  %v374 = vld [vmem:[%s1 + $0x360] sm:$0xf]
  %v375 = vld [vmem:[%s1 + $0x364] sm:$0xf]
  %v376 = vld [vmem:[%s1 + $0x368] sm:$0xf]
  %v377 = vld [vmem:[%s1 + $0x36c] sm:$0xf]
  %v378 = vld [vmem:[%s1 + $0x370] sm:$0xf]
  %v379 = vld [vmem:[%s1 + $0x374] sm:$0xf]
  %v380 = vld [vmem:[%s1 + $0x378] sm:$0xf]
  %v381 = vld [vmem:[%s1 + $0x37c] sm:$0xf]
  %v382 = vld [vmem:[%s1 + $0x380] sm:$0xf]
  %v383 = vld [vmem:[%s1 + $0x384] sm:$0xf]
  %v384 = vld [vmem:[%s1 + $0x388] sm:$0xf]
  %v385 = vld [vmem:[%s1 + $0x38c] sm:$0xf]
  %v386 = vld [vmem:[%s1 + $0x390] sm:$0xf]
  %v387 = vld [vmem:[%s1 + $0x394] sm:$0xf]
  %v388 = vld [vmem:[%s1 + $0x398] sm:$0xf]
  %v389 = vld [vmem:[%s1 + $0x39c] sm:$0xf]
  %v390 = vld [vmem:[%s1 + $0x3a0] sm:$0xf]
  %v391 = vld [vmem:[%s1 + $0x3a4] sm:$0xf]
  %v392 = vld [vmem:[%s1 + $0x3a8] sm:$0xf]
  %v393 = vld [vmem:[%s1 + $0x3ac] sm:$0xf]
  %v394 = vld [vmem:[%s1 + $0x3b0] sm:$0xf]
  %v395 = vld [vmem:[%s1 + $0x3b4] sm:$0xf]
  %v396 = vld [vmem:[%s1 + $0x3b8] sm:$0xf]
  %v397 = vld [vmem:[%s1 + $0x3bc] sm:$0xf]
  %v398 = vld [vmem:[%s1 + $0x3c0] sm:$0xf]
  %v399 = vld [vmem:[%s1 + $0x3c4] sm:$0xf]
  %v400 = vld [vmem:[%s1 + $0x3c8] sm:$0xf]
  %v401 = vld [vmem:[%s1 + $0x3cc] sm:$0xf]
  %v402 = vld [vmem:[%s1 + $0x3d0] sm:$0xf]
  %v403 = vld [vmem:[%s1 + $0x3d4] sm:$0xf]
  %v404 = vld [vmem:[%s1 + $0x3d8] sm:$0xf]
  %v405 = vld [vmem:[%s1 + $0x3dc] sm:$0xf]
  %v406 = vld [vmem:[%s1 + $0x3e0] sm:$0xf]
  %v407 = vld [vmem:[%s1 + $0x3e4] sm:$0xf]
  %v408 = vld [vmem:[%s1 + $0x3e8] sm:$0xf]
  %v409 = vld [vmem:[%s1 + $0x3ec] sm:$0xf]
  %v410 = vld [vmem:[%s1 + $0x3f0] sm:$0xf]
  %v411 = vld [vmem:[%s1 + $0x3f4] sm:$0xf]
  %v412 = vld [vmem:[%s1 + $0x3f8] sm:$0xf]
  %v413 = vld [vmem:[%s1 + $0x3fc] sm:$0xf]
  %v414 = vld [vmem:[%s1 + $0x400] sm:$0xf]
  %v415 = vld [vmem:[%s1 + $0x404] sm:$0xf]
  %v416 = vld [vmem:[%s1 + $0x408] sm:$0xf]
  %v417 = vld [vmem:[%s1 + $0x40c] sm:$0xf]
  %v418 = vld [vmem:[%s1 + $0x410] sm:$0xf]
  %v419 = vld [vmem:[%s1 + $0x414] sm:$0xf]
  %v420 = vld [vmem:[%s1 + $0x418] sm:$0xf]
  %v421 = vld [vmem:[%s1 + $0x41c] sm:$0xf]
  %v422 = vld [vmem:[%s1 + $0x420] sm:$0xf]
  %v423 = vld [vmem:[%s1 + $0x424] sm:$0xf]
  %v424 = vld [vmem:[%s1 + $0x428] sm:$0xf]
  %v425 = vld [vmem:[%s1 + $0x42c] sm:$0xf]
  %v426 = vld [vmem:[%s1 + $0x430] sm:$0xf]
  %v427 = vld [vmem:[%s1 + $0x434] sm:$0xf]
  %v428 = vld [vmem:[%s1 + $0x438] sm:$0xf]
  %v429 = vld [vmem:[%s1 + $0x43c] sm:$0xf]
  %v430 = vld [vmem:[%s1 + $0x440] sm:$0xf]
  %v431 = vld [vmem:[%s1 + $0x444] sm:$0xf]
  %v432 = vld [vmem:[%s1 + $0x448] sm:$0xf]
  %v433 = vld [vmem:[%s1 + $0x44c] sm:$0xf]
  %v434 = vld [vmem:[%s1 + $0x450] sm:$0xf]
  %v435 = vld [vmem:[%s1 + $0x454] sm:$0xf]
  %v436 = vld [vmem:[%s1 + $0x458] sm:$0xf]
  %v437 = vld [vmem:[%s1 + $0x45c] sm:$0xf]
  %v438 = vld [vmem:[%s1 + $0x460] sm:$0xf]
  %v439 = vld [vmem:[%s1 + $0x464] sm:$0xf]
  %v440 = vld [vmem:[%s1 + $0x468] sm:$0xf]
  %v441 = vld [vmem:[%s1 + $0x46c] sm:$0xf]
  %v442 = vld [vmem:[%s1 + $0x470] sm:$0xf]
  %v443 = vld [vmem:[%s1 + $0x474] sm:$0xf]
  %v444 = vld [vmem:[%s1 + $0x478] sm:$0xf]
  %v445 = vld [vmem:[%s1 + $0x47c] sm:$0xf]
  %v446 = vld [vmem:[%s1 + $0x480] sm:$0xf]
  %v447 = vld [vmem:[%s1 + $0x484] sm:$0xf]
  %v448 = vld [vmem:[%s1 + $0x488] sm:$0xf]
  %v449 = vld [vmem:[%s1 + $0x48c] sm:$0xf]
  %v450 = vld [vmem:[%s1 + $0x490] sm:$0xf]
  %v451 = vld [vmem:[%s1 + $0x494] sm:$0xf]
  %v452 = vld [vmem:[%s1 + $0x498] sm:$0xf]
  %v453 = vld [vmem:[%s1 + $0x49c] sm:$0xf]
  %v454 = vld [vmem:[%s1 + $0x4a0] sm:$0xf]
  %v455 = vld [vmem:[%s1 + $0x4a4] sm:$0xf]
  %v456 = vld [vmem:[%s1 + $0x4a8] sm:$0xf]
  %v457 = vld [vmem:[%s1 + $0x4ac] sm:$0xf]
  %v458 = vld [vmem:[%s1 + $0x4b0] sm:$0xf]
  %v459 = vld [vmem:[%s1 + $0x4b4] sm:$0xf]
  %v460 = vld [vmem:[%s1 + $0x4b8] sm:$0xf]
  %v461 = vld [vmem:[%s1 + $0x4bc] sm:$0xf]
  %v462 = vld [vmem:[%s1 + $0x4c0] sm:$0xf]
  %v463 = vld [vmem:[%s1 + $0x4c4] sm:$0xf]
  %v464 = vld [vmem:[%s1 + $0x4c8] sm:$0xf]
  %v465 = vld [vmem:[%s1 + $0x4cc] sm:$0xf]
  %v466 = vld [vmem:[%s1 + $0x4d0] sm:$0xf]
  %v467 = vld [vmem:[%s1 + $0x4d4] sm:$0xf]
  %v468 = vld [vmem:[%s1 + $0x4d8] sm:$0xf]
  %v469 = vld [vmem:[%s1 + $0x4dc] sm:$0xf]
  %v470 = vld [vmem:[%s1 + $0x4e0] sm:$0xf]
  %v471 = vld [vmem:[%s1 + $0x4e4] sm:$0xf]
  %v472 = vld [vmem:[%s1 + $0x4e8] sm:$0xf]
  %v473 = vld [vmem:[%s1 + $0x4ec] sm:$0xf]
  %v474 = vld [vmem:[%s1 + $0x4f0] sm:$0xf]
  %v475 = vld [vmem:[%s1 + $0x4f4] sm:$0xf]
  %v476 = vld [vmem:[%s1 + $0x4f8] sm:$0xf]
  %v477 = vld [vmem:[%s1 + $0x4fc] sm:$0xf]
  %v478 = vld [vmem:[%s1 + $0x500] sm:$0xf]
  %v479 = vld [vmem:[%s1 + $0x504] sm:$0xf]
  %v480 = vld [vmem:[%s1 + $0x508] sm:$0xf]
  %v481 = vld [vmem:[%s1 + $0x50c] sm:$0xf]
  %v482 = vld [vmem:[%s1 + $0x510] sm:$0xf]
  %v483 = vld [vmem:[%s1 + $0x514] sm:$0xf]
  %v484 = vld [vmem:[%s1 + $0x518] sm:$0xf]
  %v485 = vld [vmem:[%s1 + $0x51c] sm:$0xf]
  %v486 = vld [vmem:[%s1 + $0x520] sm:$0xf]
  %v487 = vld [vmem:[%s1 + $0x524] sm:$0xf]
  %v488 = vld [vmem:[%s1 + $0x528] sm:$0xf]
  %v489 = vld [vmem:[%s1 + $0x52c] sm:$0xf]
  %v490 = vld [vmem:[%s1 + $0x530] sm:$0xf]
  %v491 = vld [vmem:[%s1 + $0x534] sm:$0xf]
  %v492 = vld [vmem:[%s1 + $0x538] sm:$0xf]
  %v493 = vld [vmem:[%s1 + $0x53c] sm:$0xf]
  %v494 = vld [vmem:[%s1 + $0x540] sm:$0xf]
  %v495 = vld [vmem:[%s1 + $0x544] sm:$0xf]
  %v496 = vld [vmem:[%s1 + $0x548] sm:$0xf]
  %v497 = vld [vmem:[%s1 + $0x54c] sm:$0xf]
  %v498 = vld [vmem:[%s1 + $0x550] sm:$0xf]
  %v499 = vld [vmem:[%s1 + $0x554] sm:$0xf]
  %v500 = vld [vmem:[%s1 + $0x558] sm:$0xf]
  %v501 = vld [vmem:[%s1 + $0x55c] sm:$0xf]
  %v502 = vld [vmem:[%s1 + $0x560] sm:$0xf]
  %v503 = vld [vmem:[%s1 + $0x564] sm:$0xf]
  %v504 = vld [vmem:[%s1 + $0x568] sm:$0xf]
  %v505 = vld [vmem:[%s1 + $0x56c] sm:$0xf]
  %v506 = vld [vmem:[%s1 + $0x570] sm:$0xf]
  %v507 = vld [vmem:[%s1 + $0x574] sm:$0xf]
  %v508 = vld [vmem:[%s1 + $0x578] sm:$0xf]
  %v509 = vld [vmem:[%s1 + $0x57c] sm:$0xf]
  %v510 = vld [vmem:[%s1 + $0x580] sm:$0xf]
  %v511 = vld [vmem:[%s1 + $0x584] sm:$0xf]
  %v512 = vld [vmem:[%s1 + $0x588] sm:$0xf]
  %v513 = vld [vmem:[%s1 + $0x58c] sm:$0xf]
  %v514 = vld [vmem:[%s1 + $0x590] sm:$0xf]
  %v515 = vld [vmem:[%s1 + $0x594] sm:$0xf]
  %v516 = vld [vmem:[%s1 + $0x598] sm:$0xf]
  %v517 = vld [vmem:[%s1 + $0x59c] sm:$0xf]
  %v518 = vld [vmem:[%s1 + $0x5a0] sm:$0xf]
  %v519 = vld [vmem:[%s1 + $0x5a4] sm:$0xf]
  %v520 = vld [vmem:[%s1 + $0x5a8] sm:$0xf]
  %v521 = vld [vmem:[%s1 + $0x5ac] sm:$0xf]
  %v522 = vld [vmem:[%s1 + $0x5b0] sm:$0xf]
  %v523 = vld [vmem:[%s1 + $0x5b4] sm:$0xf]
  %v524 = vld [vmem:[%s1 + $0x5b8] sm:$0xf]
  %v525 = vld [vmem:[%s1 + $0x5bc] sm:$0xf]
  %v526 = vld [vmem:[%s1 + $0x5c0] sm:$0xf]
  %v527 = vld [vmem:[%s1 + $0x5c4] sm:$0xf]
  %v528 = vld [vmem:[%s1 + $0x5c8] sm:$0xf]
  %v529 = vld [vmem:[%s1 + $0x5cc] sm:$0xf]
  %v530 = vld [vmem:[%s1 + $0x5d0] sm:$0xf]
  %v531 = vld [vmem:[%s1 + $0x5d4] sm:$0xf]
  %v532 = vld [vmem:[%s1 + $0x5d8] sm:$0xf]
  %v533 = vld [vmem:[%s1 + $0x5dc] sm:$0xf]
  %v534 = vld [vmem:[%s1 + $0x5e0] sm:$0xf]
  %v535 = vld [vmem:[%s1 + $0x5e4] sm:$0xf]
  %v536 = vld [vmem:[%s1 + $0x5e8] sm:$0xf]
  %v537 = vld [vmem:[%s1 + $0x5ec] sm:$0xf]
  %v538 = vld [vmem:[%s1 + $0x5f0] sm:$0xf]
  %v539 = vld [vmem:[%s1 + $0x5f4] sm:$0xf]
  %v540 = vld [vmem:[%s1 + $0x5f8] sm:$0xf]
  %v541 = vld [vmem:[%s1 + $0x5fc] sm:$0xf]
  %v542 = vld [vmem:[%s1 + $0x600] sm:$0xf]
  %v543 = vld [vmem:[%s1 + $0x604] sm:$0xf]
  %v544 = vld [vmem:[%s1 + $0x608] sm:$0xf]
  %v545 = vld [vmem:[%s1 + $0x60c] sm:$0xf]
  %v546 = vld [vmem:[%s1 + $0x610] sm:$0xf]
  %v547 = vld [vmem:[%s1 + $0x614] sm:$0xf]
  %v548 = vld [vmem:[%s1 + $0x618] sm:$0xf]
  %v549 = vld [vmem:[%s1 + $0x61c] sm:$0xf]
  %v550 = vld [vmem:[%s1 + $0x620] sm:$0xf]
  %v551 = vld [vmem:[%s1 + $0x624] sm:$0xf]
  %v552 = vld [vmem:[%s1 + $0x628] sm:$0xf]
  %v553 = vld [vmem:[%s1 + $0x62c] sm:$0xf]
  %v554 = vld [vmem:[%s1 + $0x630] sm:$0xf]
  %v555 = vld [vmem:[%s1 + $0x634] sm:$0xf]
  %v556 = vld [vmem:[%s1 + $0x638] sm:$0xf]
  %v557 = vld [vmem:[%s1 + $0x63c] sm:$0xf]
  %v558 = vld [vmem:[%s1 + $0x640] sm:$0xf]
  %v559 = vld [vmem:[%s1 + $0x644] sm:$0xf]
  %v560 = vld [vmem:[%s1 + $0x648] sm:$0xf]
  %v561 = vld [vmem:[%s1 + $0x64c] sm:$0xf]
  %v562 = vld [vmem:[%s1 + $0x650] sm:$0xf]
  %v563 = vld [vmem:[%s1 + $0x654] sm:$0xf]
  %v564 = vld [vmem:[%s1 + $0x658] sm:$0xf]
  %v565 = vld [vmem:[%s1 + $0x65c] sm:$0xf]
  %v566 = vld [vmem:[%s1 + $0x660] sm:$0xf]
  %v567 = vld [vmem:[%s1 + $0x664] sm:$0xf]
  %v568 = vld [vmem:[%s1 + $0x668] sm:$0xf]
  %v569 = vld [vmem:[%s1 + $0x66c] sm:$0xf]
  %v570 = vld [vmem:[%s1 + $0x670] sm:$0xf]
  %v571 = vld [vmem:[%s1 + $0x674] sm:$0xf]
  %v572 = vld [vmem:[%s1 + $0x678] sm:$0xf]
  %v573 = vld [vmem:[%s1 + $0x67c] sm:$0xf]
  %v574 = vld [vmem:[%s1 + $0x680] sm:$0xf]
  %v575 = vld [vmem:[%s1 + $0x684] sm:$0xf]
  %v576 = vld [vmem:[%s1 + $0x688] sm:$0xf]
  %v577 = vld [vmem:[%s1 + $0x68c] sm:$0xf]
  %v578 = vld [vmem:[%s1 + $0x690] sm:$0xf]
  %v579 = vld [vmem:[%s1 + $0x694] sm:$0xf]
  %v580 = vld [vmem:[%s1 + $0x698] sm:$0xf]
  %v581 = vld [vmem:[%s1 + $0x69c] sm:$0xf]
  %v582 = vld [vmem:[%s1 + $0x6a0] sm:$0xf]
  %v583 = vld [vmem:[%s1 + $0x6a4] sm:$0xf]
  %v584 = vld [vmem:[%s1 + $0x6a8] sm:$0xf]
  %v585 = vld [vmem:[%s1 + $0x6ac] sm:$0xf]
  %v586 = vld [vmem:[%s1 + $0x6b0] sm:$0xf]
  %v587 = vld [vmem:[%s1 + $0x6b4] sm:$0xf]
  %v588 = vld [vmem:[%s1 + $0x6b8] sm:$0xf]
  %v589 = vld [vmem:[%s1 + $0x6bc] sm:$0xf]
  %v590 = vld [vmem:[%s1 + $0x6c0] sm:$0xf]
  %v591 = vld [vmem:[%s1 + $0x6c4] sm:$0xf]
  %v592 = vld [vmem:[%s1 + $0x6c8] sm:$0xf]
  %v593 = vld [vmem:[%s1 + $0x6cc] sm:$0xf]
  %v594 = vld [vmem:[%s1 + $0x6d0] sm:$0xf]
  %v595 = vld [vmem:[%s1 + $0x6d4] sm:$0xf]
  %v596 = vld [vmem:[%s1 + $0x6d8] sm:$0xf]
  %v597 = vld [vmem:[%s1 + $0x6dc] sm:$0xf]
  %v598 = vld [vmem:[%s1 + $0x6e0] sm:$0xf]
  %v599 = vld [vmem:[%s1 + $0x6e4] sm:$0xf]
  %v600 = vld [vmem:[%s1 + $0x6e8] sm:$0xf]
  %v601 = vld [vmem:[%s1 + $0x6ec] sm:$0xf]
  %v602 = vld [vmem:[%s1 + $0x6f0] sm:$0xf]
  %v603 = vld [vmem:[%s1 + $0x6f4] sm:$0xf]
  %v604 = vld [vmem:[%s1 + $0x6f8] sm:$0xf]
  %v605 = vld [vmem:[%s1 + $0x6fc] sm:$0xf]
  %v606 = vld [vmem:[%s1 + $0x700] sm:$0xf]
  %v607 = vld [vmem:[%s1 + $0x704] sm:$0xf]
  %v608 = vld [vmem:[%s1 + $0x708] sm:$0xf]
  %v609 = vld [vmem:[%s1 + $0x70c] sm:$0xf]
  %v610 = vld [vmem:[%s1 + $0x710] sm:$0xf]
  %v611 = vld [vmem:[%s1 + $0x714] sm:$0xf]
  %v612 = vld [vmem:[%s1 + $0x718] sm:$0xf]
  %v613 = vld [vmem:[%s1 + $0x71c] sm:$0xf]
  %v614 = vld [vmem:[%s1 + $0x720] sm:$0xf]
  %v615 = vld [vmem:[%s1 + $0x724] sm:$0xf]
  %v616 = vld [vmem:[%s1 + $0x728] sm:$0xf]
  %v617 = vld [vmem:[%s1 + $0x72c] sm:$0xf]
  %v618 = vld [vmem:[%s1 + $0x730] sm:$0xf]
  %v619 = vld [vmem:[%s1 + $0x734] sm:$0xf]
  %v620 = vld [vmem:[%s1 + $0x738] sm:$0xf]
  %v621 = vld [vmem:[%s1 + $0x73c] sm:$0xf]
  %v622 = vld [vmem:[%s1 + $0x740] sm:$0xf]
  %v623 = vld [vmem:[%s1 + $0x744] sm:$0xf]
  %v624 = vld [vmem:[%s1 + $0x748] sm:$0xf]
  %v625 = vld [vmem:[%s1 + $0x74c] sm:$0xf]
  %v626 = vld [vmem:[%s1 + $0x750] sm:$0xf]
  %v627 = vld [vmem:[%s1 + $0x754] sm:$0xf]
  %v628 = vld [vmem:[%s1 + $0x758] sm:$0xf]
  %v629 = vld [vmem:[%s1 + $0x75c] sm:$0xf]
  %v630 = vld [vmem:[%s1 + $0x760] sm:$0xf]
  %v631 = vld [vmem:[%s1 + $0x764] sm:$0xf]
  %v632 = vld [vmem:[%s1 + $0x768] sm:$0xf]
  %v633 = vld [vmem:[%s1 + $0x76c] sm:$0xf]
  %v634 = vld [vmem:[%s1 + $0x770] sm:$0xf]
  %v635 = vld [vmem:[%s1 + $0x774] sm:$0xf]
  %v636 = vld [vmem:[%s1 + $0x778] sm:$0xf]
  %v637 = vld [vmem:[%s1 + $0x77c] sm:$0xf]
  %v638 = vld [vmem:[%s1 + $0x780] sm:$0xf]
  %v639 = vld [vmem:[%s1 + $0x784] sm:$0xf]
  %v640 = vld [vmem:[%s1 + $0x788] sm:$0xf]
  %v641 = vld [vmem:[%s1 + $0x78c] sm:$0xf]
  %v642 = vld [vmem:[%s1 + $0x790] sm:$0xf]
  %v643 = vld [vmem:[%s1 + $0x794] sm:$0xf]
  %v644 = vld [vmem:[%s1 + $0x798] sm:$0xf]
  %v645 = vld [vmem:[%s1 + $0x79c] sm:$0xf]
  %v646 = vld [vmem:[%s1 + $0x7a0] sm:$0xf]
  %v647 = vld [vmem:[%s1 + $0x7a4] sm:$0xf]
  %v648 = vld [vmem:[%s1 + $0x7a8] sm:$0xf]
  %v649 = vld [vmem:[%s1 + $0x7ac] sm:$0xf]
  %v650 = vld [vmem:[%s1 + $0x7b0] sm:$0xf]
  %v651 = vld [vmem:[%s1 + $0x7b4] sm:$0xf]
  %v652 = vld [vmem:[%s1 + $0x7b8] sm:$0xf]
  %v653 = vld [vmem:[%s1 + $0x7bc] sm:$0xf]
  %v654 = vld [vmem:[%s1 + $0x7c0] sm:$0xf]
  %v655 = vld [vmem:[%s1 + $0x7c4] sm:$0xf]
  %v656 = vld [vmem:[%s1 + $0x7c8] sm:$0xf]
  %v657 = vld [vmem:[%s1 + $0x7cc] sm:$0xf]
  %v658 = vld [vmem:[%s1 + $0x7d0] sm:$0xf]
  %v659 = vld [vmem:[%s1 + $0x7d4] sm:$0xf]
  %v660 = vld [vmem:[%s1 + $0x7d8] sm:$0xf]
  %v661 = vld [vmem:[%s1 + $0x7dc] sm:$0xf]
  %v662 = vld [vmem:[%s1 + $0x7e0] sm:$0xf]
  %v663 = vld [vmem:[%s1 + $0x7e4] sm:$0xf]
  %v664 = vld [vmem:[%s1 + $0x7e8] sm:$0xf]
  %v665 = vld [vmem:[%s1 + $0x7ec] sm:$0xf]
  %v666 = vld [vmem:[%s1 + $0x7f0] sm:$0xf]
  %v667 = vld [vmem:[%s1 + $0x7f4] sm:$0xf]
  %v668 = vld [vmem:[%s1 + $0x7f8] sm:$0xf]
  %v669 = vld [vmem:[%s1 + $0x7fc] sm:$0xf]
  %v670 = vld [vmem:[%s2] sm:$0x1]
  %v672 = vperm.slane %v670, 0
  %v818 = vunpack.c.l.b16 %v14
  %v819 = vunpack.c.h.b16 %v14
  %v820 = vunpack.c.l.b16 %v15
  %v821 = vunpack.c.h.b16 %v15
  %v822 = vunpack.c.l.b16 %v16
  %v823 = vunpack.c.h.b16 %v16
  %v824 = vunpack.c.l.b16 %v17
  %v825 = vunpack.c.h.b16 %v17
  %v826 = vunpack.c.l.b16 %v18
  %v827 = vunpack.c.h.b16 %v18
  %v828 = vunpack.c.l.b16 %v19
  %v829 = vunpack.c.h.b16 %v19
  %v830 = vunpack.c.l.b16 %v20
  %v831 = vunpack.c.h.b16 %v20
  %v832 = vunpack.c.l.b16 %v21
  %v833 = vunpack.c.h.b16 %v21
  %v834 = vunpack.c.l.b16 %v22
  %v835 = vunpack.c.h.b16 %v22
  %v836 = vunpack.c.l.b16 %v23
  %v837 = vunpack.c.h.b16 %v23
  %v838 = vunpack.c.l.b16 %v24
  %v839 = vunpack.c.h.b16 %v24
  %v840 = vunpack.c.l.b16 %v25
  %v841 = vunpack.c.h.b16 %v25
  %v842 = vunpack.c.l.b16 %v26
  %v843 = vunpack.c.h.b16 %v26
  %v844 = vunpack.c.l.b16 %v27
  %v845 = vunpack.c.h.b16 %v27
  %v846 = vunpack.c.l.b16 %v28
  %v847 = vunpack.c.h.b16 %v28
  %v848 = vunpack.c.l.b16 %v29
  %v849 = vunpack.c.h.b16 %v29
  %v850 = vunpack.c.l.b16 %v30
  %v851 = vunpack.c.h.b16 %v30
  %v852 = vunpack.c.l.b16 %v31
  %v853 = vunpack.c.h.b16 %v31
  %v854 = vunpack.c.l.b16 %v32
  %v855 = vunpack.c.h.b16 %v32
  %v856 = vunpack.c.l.b16 %v33
  %v857 = vunpack.c.h.b16 %v33
  %v858 = vunpack.c.l.b16 %v34
  %v859 = vunpack.c.h.b16 %v34
  %v860 = vunpack.c.l.b16 %v35
  %v861 = vunpack.c.h.b16 %v35
  %v862 = vunpack.c.l.b16 %v36
  %v863 = vunpack.c.h.b16 %v36
  %v864 = vunpack.c.l.b16 %v37
  %v865 = vunpack.c.h.b16 %v37
  %v866 = vunpack.c.l.b16 %v38
  %v867 = vunpack.c.h.b16 %v38
  %v868 = vunpack.c.l.b16 %v39
  %v869 = vunpack.c.h.b16 %v39
  %v870 = vunpack.c.l.b16 %v40
  %v871 = vunpack.c.h.b16 %v40
  %v872 = vunpack.c.l.b16 %v41
  %v873 = vunpack.c.h.b16 %v41
  %v874 = vunpack.c.l.b16 %v42
  %v875 = vunpack.c.h.b16 %v42
  %v876 = vunpack.c.l.b16 %v43
  %v877 = vunpack.c.h.b16 %v43
  %v878 = vunpack.c.l.b16 %v44
  %v879 = vunpack.c.h.b16 %v44
  %v880 = vunpack.c.l.b16 %v45
  %v881 = vunpack.c.h.b16 %v45
  %v882 = vunpack.c.l.b16 %v46
  %v883 = vunpack.c.h.b16 %v46
  %v884 = vunpack.c.l.b16 %v47
  %v885 = vunpack.c.h.b16 %v47
  %v886 = vunpack.c.l.b16 %v48
  %v887 = vunpack.c.h.b16 %v48
  %v888 = vunpack.c.l.b16 %v49
  %v889 = vunpack.c.h.b16 %v49
  %v890 = vunpack.c.l.b16 %v50
  %v891 = vunpack.c.h.b16 %v50
  %v892 = vunpack.c.l.b16 %v51
  %v893 = vunpack.c.h.b16 %v51
  %v894 = vunpack.c.l.b16 %v52
  %v895 = vunpack.c.h.b16 %v52
  %v896 = vunpack.c.l.b16 %v53
  %v897 = vunpack.c.h.b16 %v53
  %v898 = vunpack.c.l.b16 %v54
  %v899 = vunpack.c.h.b16 %v54
  %v900 = vunpack.c.l.b16 %v55
  %v901 = vunpack.c.h.b16 %v55
  %v902 = vunpack.c.l.b16 %v56
  %v903 = vunpack.c.h.b16 %v56
  %v904 = vunpack.c.l.b16 %v57
  %v905 = vunpack.c.h.b16 %v57
  %v906 = vunpack.c.l.b16 %v58
  %v907 = vunpack.c.h.b16 %v58
  %v908 = vunpack.c.l.b16 %v59
  %v909 = vunpack.c.h.b16 %v59
  %v910 = vunpack.c.l.b16 %v60
  %v911 = vunpack.c.h.b16 %v60
  %v912 = vunpack.c.l.b16 %v61
  %v913 = vunpack.c.h.b16 %v61
  %v914 = vunpack.c.l.b16 %v62
  %v915 = vunpack.c.h.b16 %v62
  %v916 = vunpack.c.l.b16 %v63
  %v917 = vunpack.c.h.b16 %v63
  %v918 = vunpack.c.l.b16 %v64
  %v919 = vunpack.c.h.b16 %v64
  %v920 = vunpack.c.l.b16 %v65
  %v921 = vunpack.c.h.b16 %v65
  %v922 = vunpack.c.l.b16 %v66
  %v923 = vunpack.c.h.b16 %v66
  %v924 = vunpack.c.l.b16 %v67
  %v925 = vunpack.c.h.b16 %v67
  %v926 = vunpack.c.l.b16 %v68
  %v927 = vunpack.c.h.b16 %v68
  %v928 = vunpack.c.l.b16 %v69
  %v929 = vunpack.c.h.b16 %v69
  %v930 = vunpack.c.l.b16 %v70
  %v931 = vunpack.c.h.b16 %v70
  %v932 = vunpack.c.l.b16 %v71
  %v933 = vunpack.c.h.b16 %v71
  %v934 = vunpack.c.l.b16 %v72
  %v935 = vunpack.c.h.b16 %v72
  %v936 = vunpack.c.l.b16 %v73
  %v937 = vunpack.c.h.b16 %v73
  %v938 = vunpack.c.l.b16 %v74
  %v939 = vunpack.c.h.b16 %v74
  %v940 = vunpack.c.l.b16 %v75
  %v941 = vunpack.c.h.b16 %v75
  %v942 = vunpack.c.l.b16 %v76
  %v943 = vunpack.c.h.b16 %v76
  %v944 = vunpack.c.l.b16 %v77
  %v945 = vunpack.c.h.b16 %v77
  %v946 = vunpack.c.l.b16 %v78
  %v947 = vunpack.c.h.b16 %v78
  %v948 = vunpack.c.l.b16 %v79
  %v949 = vunpack.c.h.b16 %v79
  %v950 = vunpack.c.l.b16 %v80
  %v951 = vunpack.c.h.b16 %v80
  %v952 = vunpack.c.l.b16 %v81
  %v953 = vunpack.c.h.b16 %v81
  %v954 = vunpack.c.l.b16 %v82
  %v955 = vunpack.c.h.b16 %v82
  %v956 = vunpack.c.l.b16 %v83
  %v957 = vunpack.c.h.b16 %v83
  %v958 = vunpack.c.l.b16 %v84
  %v959 = vunpack.c.h.b16 %v84
  %v960 = vunpack.c.l.b16 %v85
  %v961 = vunpack.c.h.b16 %v85
  %v962 = vunpack.c.l.b16 %v86
  %v963 = vunpack.c.h.b16 %v86
  %v964 = vunpack.c.l.b16 %v87
  %v965 = vunpack.c.h.b16 %v87
  %v966 = vunpack.c.l.b16 %v88
  %v967 = vunpack.c.h.b16 %v88
  %v968 = vunpack.c.l.b16 %v89
  %v969 = vunpack.c.h.b16 %v89
  %v970 = vunpack.c.l.b16 %v90
  %v971 = vunpack.c.h.b16 %v90
  %v972 = vunpack.c.l.b16 %v91
  %v973 = vunpack.c.h.b16 %v91
  %v974 = vunpack.c.l.b16 %v92
  %v975 = vunpack.c.h.b16 %v92
  %v976 = vunpack.c.l.b16 %v93
  %v977 = vunpack.c.h.b16 %v93
  %v978 = vunpack.c.l.b16 %v94
  %v979 = vunpack.c.h.b16 %v94
  %v980 = vunpack.c.l.b16 %v95
  %v981 = vunpack.c.h.b16 %v95
  %v982 = vunpack.c.l.b16 %v96
  %v983 = vunpack.c.h.b16 %v96
  %v984 = vunpack.c.l.b16 %v97
  %v985 = vunpack.c.h.b16 %v97
  %v986 = vunpack.c.l.b16 %v98
  %v987 = vunpack.c.h.b16 %v98
  %v988 = vunpack.c.l.b16 %v99
  %v989 = vunpack.c.h.b16 %v99
  %v990 = vunpack.c.l.b16 %v100
  %v991 = vunpack.c.h.b16 %v100
  %v992 = vunpack.c.l.b16 %v101
  %v993 = vunpack.c.h.b16 %v101
  %v994 = vunpack.c.l.b16 %v102
  %v995 = vunpack.c.h.b16 %v102
  %v996 = vunpack.c.l.b16 %v103
  %v997 = vunpack.c.h.b16 %v103
  %v998 = vunpack.c.l.b16 %v104
  %v999 = vunpack.c.h.b16 %v104
  %v1000 = vunpack.c.l.b16 %v105
  %v1001 = vunpack.c.h.b16 %v105
  %v1002 = vunpack.c.l.b16 %v106
  %v1003 = vunpack.c.h.b16 %v106
  %v1004 = vunpack.c.l.b16 %v107
  %v1005 = vunpack.c.h.b16 %v107
  %v1006 = vunpack.c.l.b16 %v108
  %v1007 = vunpack.c.h.b16 %v108
  %v1008 = vunpack.c.l.b16 %v109
  %v1009 = vunpack.c.h.b16 %v109
  %v1010 = vunpack.c.l.b16 %v110
  %v1011 = vunpack.c.h.b16 %v110
  %v1012 = vunpack.c.l.b16 %v111
  %v1013 = vunpack.c.h.b16 %v111
  %v1014 = vunpack.c.l.b16 %v112
  %v1015 = vunpack.c.h.b16 %v112
  %v1016 = vunpack.c.l.b16 %v113
  %v1017 = vunpack.c.h.b16 %v113
  %v1018 = vunpack.c.l.b16 %v114
  %v1019 = vunpack.c.h.b16 %v114
  %v1020 = vunpack.c.l.b16 %v115
  %v1021 = vunpack.c.h.b16 %v115
  %v1022 = vunpack.c.l.b16 %v116
  %v1023 = vunpack.c.h.b16 %v116
  %v1024 = vunpack.c.l.b16 %v117
  %v1025 = vunpack.c.h.b16 %v117
  %v1026 = vunpack.c.l.b16 %v118
  %v1027 = vunpack.c.h.b16 %v118
  %v1028 = vunpack.c.l.b16 %v119
  %v1029 = vunpack.c.h.b16 %v119
  %v1030 = vunpack.c.l.b16 %v120
  %v1031 = vunpack.c.h.b16 %v120
  %v1032 = vunpack.c.l.b16 %v121
  %v1033 = vunpack.c.h.b16 %v121
  %v1034 = vunpack.c.l.b16 %v122
  %v1035 = vunpack.c.h.b16 %v122
  %v1036 = vunpack.c.l.b16 %v123
  %v1037 = vunpack.c.h.b16 %v123
  %v1038 = vunpack.c.l.b16 %v124
  %v1039 = vunpack.c.h.b16 %v124
  %v1040 = vunpack.c.l.b16 %v125
  %v1041 = vunpack.c.h.b16 %v125
  %v1042 = vunpack.c.l.b16 %v126
  %v1043 = vunpack.c.h.b16 %v126
  %v1044 = vunpack.c.l.b16 %v127
  %v1045 = vunpack.c.h.b16 %v127
  %v1046 = vunpack.c.l.b16 %v128
  %v1047 = vunpack.c.h.b16 %v128
  %v1048 = vunpack.c.l.b16 %v129
  %v1049 = vunpack.c.h.b16 %v129
  %v1050 = vunpack.c.l.b16 %v130
  %v1051 = vunpack.c.h.b16 %v130
  %v1052 = vunpack.c.l.b16 %v131
  %v1053 = vunpack.c.h.b16 %v131
  %v1054 = vunpack.c.l.b16 %v132
  %v1055 = vunpack.c.h.b16 %v132
  %v1056 = vunpack.c.l.b16 %v133
  %v1057 = vunpack.c.h.b16 %v133
  %v1058 = vunpack.c.l.b16 %v134
  %v1059 = vunpack.c.h.b16 %v134
  %v1060 = vunpack.c.l.b16 %v135
  %v1061 = vunpack.c.h.b16 %v135
  %v1062 = vunpack.c.l.b16 %v136
  %v1063 = vunpack.c.h.b16 %v136
  %v1064 = vunpack.c.l.b16 %v137
  %v1065 = vunpack.c.h.b16 %v137
  %v1066 = vunpack.c.l.b16 %v138
  %v1067 = vunpack.c.h.b16 %v138
  %v1068 = vunpack.c.l.b16 %v139
  %v1069 = vunpack.c.h.b16 %v139
  %v1070 = vunpack.c.l.b16 %v140
  %v1071 = vunpack.c.h.b16 %v140
  %v1072 = vunpack.c.l.b16 %v141
  %v1073 = vunpack.c.h.b16 %v141
  %v1074 = vunpack.c.l.b16 %v142
  %v1075 = vunpack.c.h.b16 %v142
  %v1076 = vunpack.c.l.b16 %v143
  %v1077 = vunpack.c.h.b16 %v143
  %v1078 = vunpack.c.l.b16 %v144
  %v1079 = vunpack.c.h.b16 %v144
  %v1080 = vunpack.c.l.b16 %v145
  %v1081 = vunpack.c.h.b16 %v145
  %v1082 = vunpack.c.l.b16 %v146
  %v1083 = vunpack.c.h.b16 %v146
  %v1084 = vunpack.c.l.b16 %v147
  %v1085 = vunpack.c.h.b16 %v147
  %v1086 = vunpack.c.l.b16 %v148
  %v1087 = vunpack.c.h.b16 %v148
  %v1088 = vunpack.c.l.b16 %v149
  %v1089 = vunpack.c.h.b16 %v149
  %v1090 = vunpack.c.l.b16 %v150
  %v1091 = vunpack.c.h.b16 %v150
  %v1092 = vunpack.c.l.b16 %v151
  %v1093 = vunpack.c.h.b16 %v151
  %v1094 = vunpack.c.l.b16 %v152
  %v1095 = vunpack.c.h.b16 %v152
  %v1096 = vunpack.c.l.b16 %v153
  %v1097 = vunpack.c.h.b16 %v153
  %v1098 = vunpack.c.l.b16 %v154
  %v1099 = vunpack.c.h.b16 %v154
  %v1100 = vunpack.c.l.b16 %v155
  %v1101 = vunpack.c.h.b16 %v155
  %v1102 = vunpack.c.l.b16 %v156
  %v1103 = vunpack.c.h.b16 %v156
  %v1104 = vunpack.c.l.b16 %v157
  %v1105 = vunpack.c.h.b16 %v157
  %v1106 = vpack.c.b16 %v850, %v818
  %v1107 = vpack.c.b16 %v851, %v819
  %v1108 = vpack.c.b16 %v852, %v820
  %v1109 = vpack.c.b16 %v853, %v821
  %v1110 = vpack.c.b16 %v854, %v822
  %v1111 = vpack.c.b16 %v855, %v823
  %v1112 = vpack.c.b16 %v856, %v824
  %v1113 = vpack.c.b16 %v857, %v825
  %v1114 = vpack.c.b16 %v858, %v826
  %v1115 = vpack.c.b16 %v859, %v827
  %v1116 = vpack.c.b16 %v860, %v828
  %v1117 = vpack.c.b16 %v861, %v829
  %v1118 = vpack.c.b16 %v862, %v830
  %v1119 = vpack.c.b16 %v863, %v831
  %v1120 = vpack.c.b16 %v864, %v832
  %v1121 = vpack.c.b16 %v865, %v833
  %v1122 = vpack.c.b16 %v866, %v834
  %v1123 = vpack.c.b16 %v867, %v835
  %v1124 = vpack.c.b16 %v868, %v836
  %v1125 = vpack.c.b16 %v869, %v837
  %v1126 = vpack.c.b16 %v870, %v838
  %v1127 = vpack.c.b16 %v871, %v839
  %v1128 = vpack.c.b16 %v872, %v840
  %v1129 = vpack.c.b16 %v873, %v841
  %v1130 = vpack.c.b16 %v874, %v842
  %v1131 = vpack.c.b16 %v875, %v843
  %v1132 = vpack.c.b16 %v876, %v844
  %v1133 = vpack.c.b16 %v877, %v845
  %v1134 = vpack.c.b16 %v878, %v846
  %v1135 = vpack.c.b16 %v879, %v847
  %v1136 = vpack.c.b16 %v880, %v848
  %v1137 = vpack.c.b16 %v881, %v849
  %v1138 = vpack.c.b16 %v914, %v882
  %v1139 = vpack.c.b16 %v915, %v883
  %v1140 = vpack.c.b16 %v916, %v884
  %v1141 = vpack.c.b16 %v917, %v885
  %v1142 = vpack.c.b16 %v918, %v886
  %v1143 = vpack.c.b16 %v919, %v887
  %v1144 = vpack.c.b16 %v920, %v888
  %v1145 = vpack.c.b16 %v921, %v889
  %v1146 = vpack.c.b16 %v922, %v890
  %v1147 = vpack.c.b16 %v923, %v891
  %v1148 = vpack.c.b16 %v924, %v892
  %v1149 = vpack.c.b16 %v925, %v893
  %v1150 = vpack.c.b16 %v926, %v894
  %v1151 = vpack.c.b16 %v927, %v895
  %v1152 = vpack.c.b16 %v928, %v896
  %v1153 = vpack.c.b16 %v929, %v897
  %v1154 = vpack.c.b16 %v930, %v898
  %v1155 = vpack.c.b16 %v931, %v899
  %v1156 = vpack.c.b16 %v932, %v900
  %v1157 = vpack.c.b16 %v933, %v901
  %v1158 = vpack.c.b16 %v934, %v902
  %v1159 = vpack.c.b16 %v935, %v903
  %v1160 = vpack.c.b16 %v936, %v904
  %v1161 = vpack.c.b16 %v937, %v905
  %v1162 = vpack.c.b16 %v938, %v906
  %v1163 = vpack.c.b16 %v939, %v907
  %v1164 = vpack.c.b16 %v940, %v908
  %v1165 = vpack.c.b16 %v941, %v909
  %v1166 = vpack.c.b16 %v942, %v910
  %v1167 = vpack.c.b16 %v943, %v911
  %v1168 = vpack.c.b16 %v944, %v912
  %v1169 = vpack.c.b16 %v945, %v913
  %v1170 = vpack.c.b16 %v978, %v946
  %v1171 = vpack.c.b16 %v979, %v947
  %v1172 = vpack.c.b16 %v980, %v948
  %v1173 = vpack.c.b16 %v981, %v949
  %v1174 = vpack.c.b16 %v982, %v950
  %v1175 = vpack.c.b16 %v983, %v951
  %v1176 = vpack.c.b16 %v984, %v952
  %v1177 = vpack.c.b16 %v985, %v953
  %v1178 = vpack.c.b16 %v986, %v954
  %v1179 = vpack.c.b16 %v987, %v955
  %v1180 = vpack.c.b16 %v988, %v956
  %v1181 = vpack.c.b16 %v989, %v957
  %v1182 = vpack.c.b16 %v990, %v958
  %v1183 = vpack.c.b16 %v991, %v959
  %v1184 = vpack.c.b16 %v992, %v960
  %v1185 = vpack.c.b16 %v993, %v961
  %v1186 = vpack.c.b16 %v994, %v962
  %v1187 = vpack.c.b16 %v995, %v963
  %v1188 = vpack.c.b16 %v996, %v964
  %v1189 = vpack.c.b16 %v997, %v965
  %v1190 = vpack.c.b16 %v998, %v966
  %v1191 = vpack.c.b16 %v999, %v967
  %v1192 = vpack.c.b16 %v1000, %v968
  %v1193 = vpack.c.b16 %v1001, %v969
  %v1194 = vpack.c.b16 %v1002, %v970
  %v1195 = vpack.c.b16 %v1003, %v971
  %v1196 = vpack.c.b16 %v1004, %v972
  %v1197 = vpack.c.b16 %v1005, %v973
  %v1198 = vpack.c.b16 %v1006, %v974
  %v1199 = vpack.c.b16 %v1007, %v975
  %v1200 = vpack.c.b16 %v1008, %v976
  %v1201 = vpack.c.b16 %v1009, %v977
  %v1202 = vpack.c.b16 %v1042, %v1010
  %v1203 = vpack.c.b16 %v1043, %v1011
  %v1204 = vpack.c.b16 %v1044, %v1012
  %v1205 = vpack.c.b16 %v1045, %v1013
  %v1206 = vpack.c.b16 %v1046, %v1014
  %v1207 = vpack.c.b16 %v1047, %v1015
  %v1208 = vpack.c.b16 %v1048, %v1016
  %v1209 = vpack.c.b16 %v1049, %v1017
  %v1210 = vpack.c.b16 %v1050, %v1018
  %v1211 = vpack.c.b16 %v1051, %v1019
  %v1212 = vpack.c.b16 %v1052, %v1020
  %v1213 = vpack.c.b16 %v1053, %v1021
  %v1214 = vpack.c.b16 %v1054, %v1022
  %v1215 = vpack.c.b16 %v1055, %v1023
  %v1216 = vpack.c.b16 %v1056, %v1024
  %v1217 = vpack.c.b16 %v1057, %v1025
  %v1218 = vpack.c.b16 %v1058, %v1026
  %v1219 = vpack.c.b16 %v1059, %v1027
  %v1220 = vpack.c.b16 %v1060, %v1028
  %v1221 = vpack.c.b16 %v1061, %v1029
  %v1222 = vpack.c.b16 %v1062, %v1030
  %v1223 = vpack.c.b16 %v1063, %v1031
  %v1224 = vpack.c.b16 %v1064, %v1032
  %v1225 = vpack.c.b16 %v1065, %v1033
  %v1226 = vpack.c.b16 %v1066, %v1034
  %v1227 = vpack.c.b16 %v1067, %v1035
  %v1228 = vpack.c.b16 %v1068, %v1036
  %v1229 = vpack.c.b16 %v1069, %v1037
  %v1230 = vpack.c.b16 %v1070, %v1038
  %v1231 = vpack.c.b16 %v1071, %v1039
  %v1232 = vpack.c.b16 %v1072, %v1040
  %v1233 = vpack.c.b16 %v1073, %v1041
  %v1234 = vpack.c.b16 %v1074, %v1074
  %v1235 = vpack.c.b16 %v1075, %v1075
  %v1236 = vpack.c.b16 %v1076, %v1076
  %v1237 = vpack.c.b16 %v1077, %v1077
  %v1238 = vpack.c.b16 %v1078, %v1078
  %v1239 = vpack.c.b16 %v1079, %v1079
  %v1240 = vpack.c.b16 %v1080, %v1080
  %v1241 = vpack.c.b16 %v1081, %v1081
  %v1242 = vpack.c.b16 %v1082, %v1082
  %v1243 = vpack.c.b16 %v1083, %v1083
  %v1244 = vpack.c.b16 %v1084, %v1084
  %v1245 = vpack.c.b16 %v1085, %v1085
  %v1246 = vpack.c.b16 %v1086, %v1086
  %v1247 = vpack.c.b16 %v1087, %v1087
  %v1248 = vpack.c.b16 %v1088, %v1088
  %v1249 = vpack.c.b16 %v1089, %v1089
  %v1250 = vpack.c.b16 %v1090, %v1090
  %v1251 = vpack.c.b16 %v1091, %v1091
  %v1252 = vpack.c.b16 %v1092, %v1092
  %v1253 = vpack.c.b16 %v1093, %v1093
  %v1254 = vpack.c.b16 %v1094, %v1094
  %v1255 = vpack.c.b16 %v1095, %v1095
  %v1256 = vpack.c.b16 %v1096, %v1096
  %v1257 = vpack.c.b16 %v1097, %v1097
  %v1258 = vpack.c.b16 %v1098, %v1098
  %v1259 = vpack.c.b16 %v1099, %v1099
  %v1260 = vpack.c.b16 %v1100, %v1100
  %v1261 = vpack.c.b16 %v1101, %v1101
  %v1262 = vpack.c.b16 %v1102, %v1102
  %v1263 = vpack.c.b16 %v1103, %v1103
  %v1264 = vpack.c.b16 %v1104, %v1104
  %v1265 = vpack.c.b16 %v1105, %v1105
  %v1938 = vunpack.c.l.b16 %v158
  %v1939 = vunpack.c.l.b16 %v159
  %v1940 = vunpack.c.l.b16 %v160
  %v1941 = vunpack.c.l.b16 %v161
  %v1942 = vunpack.c.l.b16 %v162
  %v1943 = vunpack.c.l.b16 %v163
  %v1944 = vunpack.c.l.b16 %v164
  %v1945 = vunpack.c.l.b16 %v165
  %v1946 = vunpack.c.l.b16 %v166
  %v1947 = vunpack.c.l.b16 %v167
  %v1948 = vunpack.c.l.b16 %v168
  %v1949 = vunpack.c.l.b16 %v169
  %v1950 = vunpack.c.l.b16 %v170
  %v1951 = vunpack.c.l.b16 %v171
  %v1952 = vunpack.c.l.b16 %v172
  %v1953 = vunpack.c.l.b16 %v173
  %v1954 = vunpack.c.l.b16 %v174
  %v1955 = vunpack.c.l.b16 %v175
  %v1956 = vunpack.c.l.b16 %v176
  %v1957 = vunpack.c.l.b16 %v177
  %v1958 = vunpack.c.l.b16 %v178
  %v1959 = vunpack.c.l.b16 %v179
  %v1960 = vunpack.c.l.b16 %v180
  %v1961 = vunpack.c.l.b16 %v181
  %v1962 = vunpack.c.l.b16 %v182
  %v1963 = vunpack.c.l.b16 %v183
  %v1964 = vunpack.c.l.b16 %v184
  %v1965 = vunpack.c.l.b16 %v185
  %v1966 = vunpack.c.l.b16 %v186
  %v1967 = vunpack.c.l.b16 %v187
  %v1968 = vunpack.c.l.b16 %v188
  %v1969 = vunpack.c.l.b16 %v189
  %v1970 = vunpack.c.l.b16 %v190
  %v1971 = vunpack.c.l.b16 %v191
  %v1972 = vunpack.c.l.b16 %v192
  %v1973 = vunpack.c.l.b16 %v193
  %v1974 = vunpack.c.l.b16 %v194
  %v1975 = vunpack.c.l.b16 %v195
  %v1976 = vunpack.c.l.b16 %v196
  %v1977 = vunpack.c.l.b16 %v197
  %v1978 = vunpack.c.l.b16 %v198
  %v1979 = vunpack.c.l.b16 %v199
  %v1980 = vunpack.c.l.b16 %v200
  %v1981 = vunpack.c.l.b16 %v201
  %v1982 = vunpack.c.l.b16 %v202
  %v1983 = vunpack.c.l.b16 %v203
  %v1984 = vunpack.c.l.b16 %v204
  %v1985 = vunpack.c.l.b16 %v205
  %v1986 = vunpack.c.l.b16 %v206
  %v1987 = vunpack.c.l.b16 %v207
  %v1988 = vunpack.c.l.b16 %v208
  %v1989 = vunpack.c.l.b16 %v209
  %v1990 = vunpack.c.l.b16 %v210
  %v1991 = vunpack.c.l.b16 %v211
  %v1992 = vunpack.c.l.b16 %v212
  %v1993 = vunpack.c.l.b16 %v213
  %v1994 = vunpack.c.l.b16 %v214
  %v1995 = vunpack.c.l.b16 %v215
  %v1996 = vunpack.c.l.b16 %v216
  %v1997 = vunpack.c.l.b16 %v217
  %v1998 = vunpack.c.l.b16 %v218
  %v1999 = vunpack.c.l.b16 %v219
  %v2000 = vunpack.c.l.b16 %v220
  %v2001 = vunpack.c.l.b16 %v221
  %v2002 = vunpack.c.l.b16 %v222
  %v2003 = vunpack.c.l.b16 %v223
  %v2004 = vunpack.c.l.b16 %v224
  %v2005 = vunpack.c.l.b16 %v225
  %v2006 = vunpack.c.l.b16 %v226
  %v2007 = vunpack.c.l.b16 %v227
  %v2008 = vunpack.c.l.b16 %v228
  %v2009 = vunpack.c.l.b16 %v229
  %v2010 = vunpack.c.l.b16 %v230
  %v2011 = vunpack.c.l.b16 %v231
  %v2012 = vunpack.c.l.b16 %v232
  %v2013 = vunpack.c.l.b16 %v233
  %v2014 = vunpack.c.l.b16 %v234
  %v2015 = vunpack.c.l.b16 %v235
  %v2016 = vunpack.c.l.b16 %v236
  %v2017 = vunpack.c.l.b16 %v237
  %v2018 = vunpack.c.l.b16 %v238
  %v2019 = vunpack.c.l.b16 %v239
  %v2020 = vunpack.c.l.b16 %v240
  %v2021 = vunpack.c.l.b16 %v241
  %v2022 = vunpack.c.l.b16 %v242
  %v2023 = vunpack.c.l.b16 %v243
  %v2024 = vunpack.c.l.b16 %v244
  %v2025 = vunpack.c.l.b16 %v245
  %v2026 = vunpack.c.l.b16 %v246
  %v2027 = vunpack.c.l.b16 %v247
  %v2028 = vunpack.c.l.b16 %v248
  %v2029 = vunpack.c.l.b16 %v249
  %v2030 = vunpack.c.l.b16 %v250
  %v2031 = vunpack.c.l.b16 %v251
  %v2032 = vunpack.c.l.b16 %v252
  %v2033 = vunpack.c.l.b16 %v253
  %v2034 = vunpack.c.l.b16 %v254
  %v2035 = vunpack.c.l.b16 %v255
  %v2036 = vunpack.c.l.b16 %v256
  %v2037 = vunpack.c.l.b16 %v257
  %v2038 = vunpack.c.l.b16 %v258
  %v2039 = vunpack.c.l.b16 %v259
  %v2040 = vunpack.c.l.b16 %v260
  %v2041 = vunpack.c.l.b16 %v261
  %v2042 = vunpack.c.l.b16 %v262
  %v2043 = vunpack.c.l.b16 %v263
  %v2044 = vunpack.c.l.b16 %v264
  %v2045 = vunpack.c.l.b16 %v265
  %v2046 = vunpack.c.l.b16 %v266
  %v2047 = vunpack.c.l.b16 %v267
  %v2048 = vunpack.c.l.b16 %v268
  %v2049 = vunpack.c.l.b16 %v269
  %v2050 = vunpack.c.l.b16 %v270
  %v2051 = vunpack.c.l.b16 %v271
  %v2052 = vunpack.c.l.b16 %v272
  %v2053 = vunpack.c.l.b16 %v273
  %v2054 = vunpack.c.l.b16 %v274
  %v2055 = vunpack.c.l.b16 %v275
  %v2056 = vunpack.c.l.b16 %v276
  %v2057 = vunpack.c.l.b16 %v277
  %v2058 = vunpack.c.l.b16 %v278
  %v2059 = vunpack.c.l.b16 %v279
  %v2060 = vunpack.c.l.b16 %v280
  %v2061 = vunpack.c.l.b16 %v281
  %v2062 = vunpack.c.l.b16 %v282
  %v2063 = vunpack.c.l.b16 %v283
  %v2064 = vunpack.c.l.b16 %v284
  %v2065 = vunpack.c.l.b16 %v285
  %v2066 = vunpack.c.l.b16 %v286
  %v2067 = vunpack.c.l.b16 %v287
  %v2068 = vunpack.c.l.b16 %v288
  %v2069 = vunpack.c.l.b16 %v289
  %v2070 = vunpack.c.l.b16 %v290
  %v2071 = vunpack.c.l.b16 %v291
  %v2072 = vunpack.c.l.b16 %v292
  %v2073 = vunpack.c.l.b16 %v293
  %v2074 = vunpack.c.l.b16 %v294
  %v2075 = vunpack.c.l.b16 %v295
  %v2076 = vunpack.c.l.b16 %v296
  %v2077 = vunpack.c.l.b16 %v297
  %v2078 = vunpack.c.l.b16 %v298
  %v2079 = vunpack.c.l.b16 %v299
  %v2080 = vunpack.c.l.b16 %v300
  %v2081 = vunpack.c.l.b16 %v301
  %v2082 = vunpack.c.l.b16 %v302
  %v2083 = vunpack.c.l.b16 %v303
  %v2084 = vunpack.c.l.b16 %v304
  %v2085 = vunpack.c.l.b16 %v305
  %v2086 = vunpack.c.l.b16 %v306
  %v2087 = vunpack.c.l.b16 %v307
  %v2088 = vunpack.c.l.b16 %v308
  %v2089 = vunpack.c.l.b16 %v309
  %v2090 = vunpack.c.l.b16 %v310
  %v2091 = vunpack.c.l.b16 %v311
  %v2092 = vunpack.c.l.b16 %v312
  %v2093 = vunpack.c.l.b16 %v313
  %v2094 = vunpack.c.l.b16 %v314
  %v2095 = vunpack.c.l.b16 %v315
  %v2096 = vunpack.c.l.b16 %v316
  %v2097 = vunpack.c.l.b16 %v317
  %v2098 = vunpack.c.l.b16 %v318
  %v2099 = vunpack.c.l.b16 %v319
  %v2100 = vunpack.c.l.b16 %v320
  %v2101 = vunpack.c.l.b16 %v321
  %v2102 = vunpack.c.l.b16 %v322
  %v2103 = vunpack.c.l.b16 %v323
  %v2104 = vunpack.c.l.b16 %v324
  %v2105 = vunpack.c.l.b16 %v325
  %v2106 = vunpack.c.l.b16 %v326
  %v2107 = vunpack.c.l.b16 %v327
  %v2108 = vunpack.c.l.b16 %v328
  %v2109 = vunpack.c.l.b16 %v329
  %v2110 = vunpack.c.l.b16 %v330
  %v2111 = vunpack.c.l.b16 %v331
  %v2112 = vunpack.c.l.b16 %v332
  %v2113 = vunpack.c.l.b16 %v333
  %v2114 = vunpack.c.l.b16 %v334
  %v2115 = vunpack.c.l.b16 %v335
  %v2116 = vunpack.c.l.b16 %v336
  %v2117 = vunpack.c.l.b16 %v337
  %v2118 = vunpack.c.l.b16 %v338
  %v2119 = vunpack.c.l.b16 %v339
  %v2120 = vunpack.c.l.b16 %v340
  %v2121 = vunpack.c.l.b16 %v341
  %v2122 = vunpack.c.l.b16 %v342
  %v2123 = vunpack.c.l.b16 %v343
  %v2124 = vunpack.c.l.b16 %v344
  %v2125 = vunpack.c.l.b16 %v345
  %v2126 = vunpack.c.l.b16 %v346
  %v2127 = vunpack.c.l.b16 %v347
  %v2128 = vunpack.c.l.b16 %v348
  %v2129 = vunpack.c.l.b16 %v349
  %v2130 = vunpack.c.l.b16 %v350
  %v2131 = vunpack.c.l.b16 %v351
  %v2132 = vunpack.c.l.b16 %v352
  %v2133 = vunpack.c.l.b16 %v353
  %v2134 = vunpack.c.l.b16 %v354
  %v2135 = vunpack.c.l.b16 %v355
  %v2136 = vunpack.c.l.b16 %v356
  %v2137 = vunpack.c.l.b16 %v357
  %v2138 = vunpack.c.l.b16 %v358
  %v2139 = vunpack.c.l.b16 %v359
  %v2140 = vunpack.c.l.b16 %v360
  %v2141 = vunpack.c.l.b16 %v361
  %v2142 = vunpack.c.l.b16 %v362
  %v2143 = vunpack.c.l.b16 %v363
  %v2144 = vunpack.c.l.b16 %v364
  %v2145 = vunpack.c.l.b16 %v365
  %v2146 = vunpack.c.l.b16 %v366
  %v2147 = vunpack.c.l.b16 %v367
  %v2148 = vunpack.c.l.b16 %v368
  %v2149 = vunpack.c.l.b16 %v369
  %v2150 = vunpack.c.l.b16 %v370
  %v2151 = vunpack.c.l.b16 %v371
  %v2152 = vunpack.c.l.b16 %v372
  %v2153 = vunpack.c.l.b16 %v373
  %v2154 = vunpack.c.l.b16 %v374
  %v2155 = vunpack.c.l.b16 %v375
  %v2156 = vunpack.c.l.b16 %v376
  %v2157 = vunpack.c.l.b16 %v377
  %v2158 = vunpack.c.l.b16 %v378
  %v2159 = vunpack.c.l.b16 %v379
  %v2160 = vunpack.c.l.b16 %v380
  %v2161 = vunpack.c.l.b16 %v381
  %v2162 = vunpack.c.l.b16 %v382
  %v2163 = vunpack.c.l.b16 %v383
  %v2164 = vunpack.c.l.b16 %v384
  %v2165 = vunpack.c.l.b16 %v385
  %v2166 = vunpack.c.l.b16 %v386
  %v2167 = vunpack.c.l.b16 %v387
  %v2168 = vunpack.c.l.b16 %v388
  %v2169 = vunpack.c.l.b16 %v389
  %v2170 = vunpack.c.l.b16 %v390
  %v2171 = vunpack.c.l.b16 %v391
  %v2172 = vunpack.c.l.b16 %v392
  %v2173 = vunpack.c.l.b16 %v393
  %v2174 = vunpack.c.l.b16 %v394
  %v2175 = vunpack.c.l.b16 %v395
  %v2176 = vunpack.c.l.b16 %v396
  %v2177 = vunpack.c.l.b16 %v397
  %v2178 = vunpack.c.l.b16 %v398
  %v2179 = vunpack.c.l.b16 %v399
  %v2180 = vunpack.c.l.b16 %v400
  %v2181 = vunpack.c.l.b16 %v401
  %v2182 = vunpack.c.l.b16 %v402
  %v2183 = vunpack.c.l.b16 %v403
  %v2184 = vunpack.c.l.b16 %v404
  %v2185 = vunpack.c.l.b16 %v405
  %v2186 = vunpack.c.l.b16 %v406
  %v2187 = vunpack.c.l.b16 %v407
  %v2188 = vunpack.c.l.b16 %v408
  %v2189 = vunpack.c.l.b16 %v409
  %v2190 = vunpack.c.l.b16 %v410
  %v2191 = vunpack.c.l.b16 %v411
  %v2192 = vunpack.c.l.b16 %v412
  %v2193 = vunpack.c.l.b16 %v413
  %v2194 = vunpack.c.l.b16 %v414
  %v2195 = vunpack.c.l.b16 %v415
  %v2196 = vunpack.c.l.b16 %v416
  %v2197 = vunpack.c.l.b16 %v417
  %v2198 = vunpack.c.l.b16 %v418
  %v2199 = vunpack.c.l.b16 %v419
  %v2200 = vunpack.c.l.b16 %v420
  %v2201 = vunpack.c.l.b16 %v421
  %v2202 = vunpack.c.l.b16 %v422
  %v2203 = vunpack.c.l.b16 %v423
  %v2204 = vunpack.c.l.b16 %v424
  %v2205 = vunpack.c.l.b16 %v425
  %v2206 = vunpack.c.l.b16 %v426
  %v2207 = vunpack.c.l.b16 %v427
  %v2208 = vunpack.c.l.b16 %v428
  %v2209 = vunpack.c.l.b16 %v429
  %v2210 = vunpack.c.l.b16 %v430
  %v2211 = vunpack.c.l.b16 %v431
  %v2212 = vunpack.c.l.b16 %v432
  %v2213 = vunpack.c.l.b16 %v433
  %v2214 = vunpack.c.l.b16 %v434
  %v2215 = vunpack.c.l.b16 %v435
  %v2216 = vunpack.c.l.b16 %v436
  %v2217 = vunpack.c.l.b16 %v437
  %v2218 = vunpack.c.l.b16 %v438
  %v2219 = vunpack.c.l.b16 %v439
  %v2220 = vunpack.c.l.b16 %v440
  %v2221 = vunpack.c.l.b16 %v441
  %v2222 = vunpack.c.l.b16 %v442
  %v2223 = vunpack.c.l.b16 %v443
  %v2224 = vunpack.c.l.b16 %v444
  %v2225 = vunpack.c.l.b16 %v445
  %v2226 = vunpack.c.l.b16 %v446
  %v2227 = vunpack.c.l.b16 %v447
  %v2228 = vunpack.c.l.b16 %v448
  %v2229 = vunpack.c.l.b16 %v449
  %v2230 = vunpack.c.l.b16 %v450
  %v2231 = vunpack.c.l.b16 %v451
  %v2232 = vunpack.c.l.b16 %v452
  %v2233 = vunpack.c.l.b16 %v453
  %v2234 = vunpack.c.l.b16 %v454
  %v2235 = vunpack.c.l.b16 %v455
  %v2236 = vunpack.c.l.b16 %v456
  %v2237 = vunpack.c.l.b16 %v457
  %v2238 = vunpack.c.l.b16 %v458
  %v2239 = vunpack.c.l.b16 %v459
  %v2240 = vunpack.c.l.b16 %v460
  %v2241 = vunpack.c.l.b16 %v461
  %v2242 = vunpack.c.l.b16 %v462
  %v2243 = vunpack.c.l.b16 %v463
  %v2244 = vunpack.c.l.b16 %v464
  %v2245 = vunpack.c.l.b16 %v465
  %v2246 = vunpack.c.l.b16 %v466
  %v2247 = vunpack.c.l.b16 %v467
  %v2248 = vunpack.c.l.b16 %v468
  %v2249 = vunpack.c.l.b16 %v469
  %v2250 = vunpack.c.l.b16 %v470
  %v2251 = vunpack.c.l.b16 %v471
  %v2252 = vunpack.c.l.b16 %v472
  %v2253 = vunpack.c.l.b16 %v473
  %v2254 = vunpack.c.l.b16 %v474
  %v2255 = vunpack.c.l.b16 %v475
  %v2256 = vunpack.c.l.b16 %v476
  %v2257 = vunpack.c.l.b16 %v477
  %v2258 = vunpack.c.l.b16 %v478
  %v2259 = vunpack.c.l.b16 %v479
  %v2260 = vunpack.c.l.b16 %v480
  %v2261 = vunpack.c.l.b16 %v481
  %v2262 = vunpack.c.l.b16 %v482
  %v2263 = vunpack.c.l.b16 %v483
  %v2264 = vunpack.c.l.b16 %v484
  %v2265 = vunpack.c.l.b16 %v485
  %v2266 = vunpack.c.l.b16 %v486
  %v2267 = vunpack.c.l.b16 %v487
  %v2268 = vunpack.c.l.b16 %v488
  %v2269 = vunpack.c.l.b16 %v489
  %v2270 = vunpack.c.l.b16 %v490
  %v2271 = vunpack.c.l.b16 %v491
  %v2272 = vunpack.c.l.b16 %v492
  %v2273 = vunpack.c.l.b16 %v493
  %v2274 = vunpack.c.l.b16 %v494
  %v2275 = vunpack.c.l.b16 %v495
  %v2276 = vunpack.c.l.b16 %v496
  %v2277 = vunpack.c.l.b16 %v497
  %v2278 = vunpack.c.l.b16 %v498
  %v2279 = vunpack.c.l.b16 %v499
  %v2280 = vunpack.c.l.b16 %v500
  %v2281 = vunpack.c.l.b16 %v501
  %v2282 = vunpack.c.l.b16 %v502
  %v2283 = vunpack.c.l.b16 %v503
  %v2284 = vunpack.c.l.b16 %v504
  %v2285 = vunpack.c.l.b16 %v505
  %v2286 = vunpack.c.l.b16 %v506
  %v2287 = vunpack.c.l.b16 %v507
  %v2288 = vunpack.c.l.b16 %v508
  %v2289 = vunpack.c.l.b16 %v509
  %v2290 = vunpack.c.l.b16 %v510
  %v2291 = vunpack.c.l.b16 %v511
  %v2292 = vunpack.c.l.b16 %v512
  %v2293 = vunpack.c.l.b16 %v513
  %v2294 = vunpack.c.l.b16 %v514
  %v2295 = vunpack.c.l.b16 %v515
  %v2296 = vunpack.c.l.b16 %v516
  %v2297 = vunpack.c.l.b16 %v517
  %v2298 = vunpack.c.l.b16 %v518
  %v2299 = vunpack.c.l.b16 %v519
  %v2300 = vunpack.c.l.b16 %v520
  %v2301 = vunpack.c.l.b16 %v521
  %v2302 = vunpack.c.l.b16 %v522
  %v2303 = vunpack.c.l.b16 %v523
  %v2304 = vunpack.c.l.b16 %v524
  %v2305 = vunpack.c.l.b16 %v525
  %v2306 = vunpack.c.l.b16 %v526
  %v2307 = vunpack.c.l.b16 %v527
  %v2308 = vunpack.c.l.b16 %v528
  %v2309 = vunpack.c.l.b16 %v529
  %v2310 = vunpack.c.l.b16 %v530
  %v2311 = vunpack.c.l.b16 %v531
  %v2312 = vunpack.c.l.b16 %v532
  %v2313 = vunpack.c.l.b16 %v533
  %v2314 = vunpack.c.l.b16 %v534
  %v2315 = vunpack.c.l.b16 %v535
  %v2316 = vunpack.c.l.b16 %v536
  %v2317 = vunpack.c.l.b16 %v537
  %v2318 = vunpack.c.l.b16 %v538
  %v2319 = vunpack.c.l.b16 %v539
  %v2320 = vunpack.c.l.b16 %v540
  %v2321 = vunpack.c.l.b16 %v541
  %v2322 = vunpack.c.l.b16 %v542
  %v2323 = vunpack.c.l.b16 %v543
  %v2324 = vunpack.c.l.b16 %v544
  %v2325 = vunpack.c.l.b16 %v545
  %v2326 = vunpack.c.l.b16 %v546
  %v2327 = vunpack.c.l.b16 %v547
  %v2328 = vunpack.c.l.b16 %v548
  %v2329 = vunpack.c.l.b16 %v549
  %v2330 = vunpack.c.l.b16 %v550
  %v2331 = vunpack.c.l.b16 %v551
  %v2332 = vunpack.c.l.b16 %v552
  %v2333 = vunpack.c.l.b16 %v553
  %v2334 = vunpack.c.l.b16 %v554
  %v2335 = vunpack.c.l.b16 %v555
  %v2336 = vunpack.c.l.b16 %v556
  %v2337 = vunpack.c.l.b16 %v557
  %v2338 = vunpack.c.l.b16 %v558
  %v2339 = vunpack.c.l.b16 %v559
  %v2340 = vunpack.c.l.b16 %v560
  %v2341 = vunpack.c.l.b16 %v561
  %v2342 = vunpack.c.l.b16 %v562
  %v2343 = vunpack.c.l.b16 %v563
  %v2344 = vunpack.c.l.b16 %v564
  %v2345 = vunpack.c.l.b16 %v565
  %v2346 = vunpack.c.l.b16 %v566
  %v2347 = vunpack.c.l.b16 %v567
  %v2348 = vunpack.c.l.b16 %v568
  %v2349 = vunpack.c.l.b16 %v569
  %v2350 = vunpack.c.l.b16 %v570
  %v2351 = vunpack.c.l.b16 %v571
  %v2352 = vunpack.c.l.b16 %v572
  %v2353 = vunpack.c.l.b16 %v573
  %v2354 = vunpack.c.l.b16 %v574
  %v2355 = vunpack.c.l.b16 %v575
  %v2356 = vunpack.c.l.b16 %v576
  %v2357 = vunpack.c.l.b16 %v577
  %v2358 = vunpack.c.l.b16 %v578
  %v2359 = vunpack.c.l.b16 %v579
  %v2360 = vunpack.c.l.b16 %v580
  %v2361 = vunpack.c.l.b16 %v581
  %v2362 = vunpack.c.l.b16 %v582
  %v2363 = vunpack.c.l.b16 %v583
  %v2364 = vunpack.c.l.b16 %v584
  %v2365 = vunpack.c.l.b16 %v585
  %v2366 = vunpack.c.l.b16 %v586
  %v2367 = vunpack.c.l.b16 %v587
  %v2368 = vunpack.c.l.b16 %v588
  %v2369 = vunpack.c.l.b16 %v589
  %v2370 = vunpack.c.l.b16 %v590
  %v2371 = vunpack.c.l.b16 %v591
  %v2372 = vunpack.c.l.b16 %v592
  %v2373 = vunpack.c.l.b16 %v593
  %v2374 = vunpack.c.l.b16 %v594
  %v2375 = vunpack.c.l.b16 %v595
  %v2376 = vunpack.c.l.b16 %v596
  %v2377 = vunpack.c.l.b16 %v597
  %v2378 = vunpack.c.l.b16 %v598
  %v2379 = vunpack.c.l.b16 %v599
  %v2380 = vunpack.c.l.b16 %v600
  %v2381 = vunpack.c.l.b16 %v601
  %v2382 = vunpack.c.l.b16 %v602
  %v2383 = vunpack.c.l.b16 %v603
  %v2384 = vunpack.c.l.b16 %v604
  %v2385 = vunpack.c.l.b16 %v605
  %v2386 = vunpack.c.l.b16 %v606
  %v2387 = vunpack.c.l.b16 %v607
  %v2388 = vunpack.c.l.b16 %v608
  %v2389 = vunpack.c.l.b16 %v609
  %v2390 = vunpack.c.l.b16 %v610
  %v2391 = vunpack.c.l.b16 %v611
  %v2392 = vunpack.c.l.b16 %v612
  %v2393 = vunpack.c.l.b16 %v613
  %v2394 = vunpack.c.l.b16 %v614
  %v2395 = vunpack.c.l.b16 %v615
  %v2396 = vunpack.c.l.b16 %v616
  %v2397 = vunpack.c.l.b16 %v617
  %v2398 = vunpack.c.l.b16 %v618
  %v2399 = vunpack.c.l.b16 %v619
  %v2400 = vunpack.c.l.b16 %v620
  %v2401 = vunpack.c.l.b16 %v621
  %v2402 = vunpack.c.l.b16 %v622
  %v2403 = vunpack.c.l.b16 %v623
  %v2404 = vunpack.c.l.b16 %v624
  %v2405 = vunpack.c.l.b16 %v625
  %v2406 = vunpack.c.l.b16 %v626
  %v2407 = vunpack.c.l.b16 %v627
  %v2408 = vunpack.c.l.b16 %v628
  %v2409 = vunpack.c.l.b16 %v629
  %v2410 = vunpack.c.l.b16 %v630
  %v2411 = vunpack.c.l.b16 %v631
  %v2412 = vunpack.c.l.b16 %v632
  %v2413 = vunpack.c.l.b16 %v633
  %v2414 = vunpack.c.l.b16 %v634
  %v2415 = vunpack.c.l.b16 %v635
  %v2416 = vunpack.c.l.b16 %v636
  %v2417 = vunpack.c.l.b16 %v637
  %v2418 = vunpack.c.l.b16 %v638
  %v2419 = vunpack.c.l.b16 %v639
  %v2420 = vunpack.c.l.b16 %v640
  %v2421 = vunpack.c.l.b16 %v641
  %v2422 = vunpack.c.l.b16 %v642
  %v2423 = vunpack.c.l.b16 %v643
  %v2424 = vunpack.c.l.b16 %v644
  %v2425 = vunpack.c.l.b16 %v645
  %v2426 = vunpack.c.l.b16 %v646
  %v2427 = vunpack.c.l.b16 %v647
  %v2428 = vunpack.c.l.b16 %v648
  %v2429 = vunpack.c.l.b16 %v649
  %v2430 = vunpack.c.l.b16 %v650
  %v2431 = vunpack.c.l.b16 %v651
  %v2432 = vunpack.c.l.b16 %v652
  %v2433 = vunpack.c.l.b16 %v653
  %v2434 = vunpack.c.l.b16 %v654
  %v2435 = vunpack.c.l.b16 %v655
  %v2436 = vunpack.c.l.b16 %v656
  %v2437 = vunpack.c.l.b16 %v657
  %v2438 = vunpack.c.l.b16 %v658
  %v2439 = vunpack.c.l.b16 %v659
  %v2440 = vunpack.c.l.b16 %v660
  %v2441 = vunpack.c.l.b16 %v661
  %v2442 = vunpack.c.l.b16 %v662
  %v2443 = vunpack.c.l.b16 %v663
  %v2444 = vunpack.c.l.b16 %v664
  %v2445 = vunpack.c.l.b16 %v665
  %v2446 = vunpack.c.l.b16 %v666
  %v2447 = vunpack.c.l.b16 %v667
  %v2448 = vunpack.c.l.b16 %v668
  %v2449 = vunpack.c.l.b16 %v669
  %v2450 = vpack.c.b16 %v1939, %v1938
  %v2451 = vpack.c.b16 %v1941, %v1940
  %v2452 = vpack.c.b16 %v1943, %v1942
  %v2453 = vpack.c.b16 %v1945, %v1944
  %v2454 = vpack.c.b16 %v1947, %v1946
  %v2455 = vpack.c.b16 %v1949, %v1948
  %v2456 = vpack.c.b16 %v1951, %v1950
  %v2457 = vpack.c.b16 %v1953, %v1952
  %v2458 = vpack.c.b16 %v1955, %v1954
  %v2459 = vpack.c.b16 %v1957, %v1956
  %v2460 = vpack.c.b16 %v1959, %v1958
  %v2461 = vpack.c.b16 %v1961, %v1960
  %v2462 = vpack.c.b16 %v1963, %v1962
  %v2463 = vpack.c.b16 %v1965, %v1964
  %v2464 = vpack.c.b16 %v1967, %v1966
  %v2465 = vpack.c.b16 %v1969, %v1968
  %v2466 = vpack.c.b16 %v1971, %v1970
  %v2467 = vpack.c.b16 %v1973, %v1972
  %v2468 = vpack.c.b16 %v1975, %v1974
  %v2469 = vpack.c.b16 %v1977, %v1976
  %v2470 = vpack.c.b16 %v1979, %v1978
  %v2471 = vpack.c.b16 %v1981, %v1980
  %v2472 = vpack.c.b16 %v1983, %v1982
  %v2473 = vpack.c.b16 %v1985, %v1984
  %v2474 = vpack.c.b16 %v1987, %v1986
  %v2475 = vpack.c.b16 %v1989, %v1988
  %v2476 = vpack.c.b16 %v1991, %v1990
  %v2477 = vpack.c.b16 %v1993, %v1992
  %v2478 = vpack.c.b16 %v1995, %v1994
  %v2479 = vpack.c.b16 %v1997, %v1996
  %v2480 = vpack.c.b16 %v1999, %v1998
  %v2481 = vpack.c.b16 %v2001, %v2000
  %v2482 = vpack.c.b16 %v2003, %v2002
  %v2483 = vpack.c.b16 %v2005, %v2004
  %v2484 = vpack.c.b16 %v2007, %v2006
  %v2485 = vpack.c.b16 %v2009, %v2008
  %v2486 = vpack.c.b16 %v2011, %v2010
  %v2487 = vpack.c.b16 %v2013, %v2012
  %v2488 = vpack.c.b16 %v2015, %v2014
  %v2489 = vpack.c.b16 %v2017, %v2016
  %v2490 = vpack.c.b16 %v2019, %v2018
  %v2491 = vpack.c.b16 %v2021, %v2020
  %v2492 = vpack.c.b16 %v2023, %v2022
  %v2493 = vpack.c.b16 %v2025, %v2024
  %v2494 = vpack.c.b16 %v2027, %v2026
  %v2495 = vpack.c.b16 %v2029, %v2028
  %v2496 = vpack.c.b16 %v2031, %v2030
  %v2497 = vpack.c.b16 %v2033, %v2032
  %v2498 = vpack.c.b16 %v2035, %v2034
  %v2499 = vpack.c.b16 %v2037, %v2036
  %v2500 = vpack.c.b16 %v2039, %v2038
  %v2501 = vpack.c.b16 %v2041, %v2040
  %v2502 = vpack.c.b16 %v2043, %v2042
  %v2503 = vpack.c.b16 %v2045, %v2044
  %v2504 = vpack.c.b16 %v2047, %v2046
  %v2505 = vpack.c.b16 %v2049, %v2048
  %v2506 = vpack.c.b16 %v2051, %v2050
  %v2507 = vpack.c.b16 %v2053, %v2052
  %v2508 = vpack.c.b16 %v2055, %v2054
  %v2509 = vpack.c.b16 %v2057, %v2056
  %v2510 = vpack.c.b16 %v2059, %v2058
  %v2511 = vpack.c.b16 %v2061, %v2060
  %v2512 = vpack.c.b16 %v2063, %v2062
  %v2513 = vpack.c.b16 %v2065, %v2064
  %v2514 = vpack.c.b16 %v2067, %v2066
  %v2515 = vpack.c.b16 %v2069, %v2068
  %v2516 = vpack.c.b16 %v2071, %v2070
  %v2517 = vpack.c.b16 %v2073, %v2072
  %v2518 = vpack.c.b16 %v2075, %v2074
  %v2519 = vpack.c.b16 %v2077, %v2076
  %v2520 = vpack.c.b16 %v2079, %v2078
  %v2521 = vpack.c.b16 %v2081, %v2080
  %v2522 = vpack.c.b16 %v2083, %v2082
  %v2523 = vpack.c.b16 %v2085, %v2084
  %v2524 = vpack.c.b16 %v2087, %v2086
  %v2525 = vpack.c.b16 %v2089, %v2088
  %v2526 = vpack.c.b16 %v2091, %v2090
  %v2527 = vpack.c.b16 %v2093, %v2092
  %v2528 = vpack.c.b16 %v2095, %v2094
  %v2529 = vpack.c.b16 %v2097, %v2096
  %v2530 = vpack.c.b16 %v2099, %v2098
  %v2531 = vpack.c.b16 %v2101, %v2100
  %v2532 = vpack.c.b16 %v2103, %v2102
  %v2533 = vpack.c.b16 %v2105, %v2104
  %v2534 = vpack.c.b16 %v2107, %v2106
  %v2535 = vpack.c.b16 %v2109, %v2108
  %v2536 = vpack.c.b16 %v2111, %v2110
  %v2537 = vpack.c.b16 %v2113, %v2112
  %v2538 = vpack.c.b16 %v2115, %v2114
  %v2539 = vpack.c.b16 %v2117, %v2116
  %v2540 = vpack.c.b16 %v2119, %v2118
  %v2541 = vpack.c.b16 %v2121, %v2120
  %v2542 = vpack.c.b16 %v2123, %v2122
  %v2543 = vpack.c.b16 %v2125, %v2124
  %v2544 = vpack.c.b16 %v2127, %v2126
  %v2545 = vpack.c.b16 %v2129, %v2128
  %v2546 = vpack.c.b16 %v2131, %v2130
  %v2547 = vpack.c.b16 %v2133, %v2132
  %v2548 = vpack.c.b16 %v2135, %v2134
  %v2549 = vpack.c.b16 %v2137, %v2136
  %v2550 = vpack.c.b16 %v2139, %v2138
  %v2551 = vpack.c.b16 %v2141, %v2140
  %v2552 = vpack.c.b16 %v2143, %v2142
  %v2553 = vpack.c.b16 %v2145, %v2144
  %v2554 = vpack.c.b16 %v2147, %v2146
  %v2555 = vpack.c.b16 %v2149, %v2148
  %v2556 = vpack.c.b16 %v2151, %v2150
  %v2557 = vpack.c.b16 %v2153, %v2152
  %v2558 = vpack.c.b16 %v2155, %v2154
  %v2559 = vpack.c.b16 %v2157, %v2156
  %v2560 = vpack.c.b16 %v2159, %v2158
  %v2561 = vpack.c.b16 %v2161, %v2160
  %v2562 = vpack.c.b16 %v2163, %v2162
  %v2563 = vpack.c.b16 %v2165, %v2164
  %v2564 = vpack.c.b16 %v2167, %v2166
  %v2565 = vpack.c.b16 %v2169, %v2168
  %v2566 = vpack.c.b16 %v2171, %v2170
  %v2567 = vpack.c.b16 %v2173, %v2172
  %v2568 = vpack.c.b16 %v2175, %v2174
  %v2569 = vpack.c.b16 %v2177, %v2176
  %v2570 = vpack.c.b16 %v2179, %v2178
  %v2571 = vpack.c.b16 %v2181, %v2180
  %v2572 = vpack.c.b16 %v2183, %v2182
  %v2573 = vpack.c.b16 %v2185, %v2184
  %v2574 = vpack.c.b16 %v2187, %v2186
  %v2575 = vpack.c.b16 %v2189, %v2188
  %v2576 = vpack.c.b16 %v2191, %v2190
  %v2577 = vpack.c.b16 %v2193, %v2192
  %v2578 = vpack.c.b16 %v2195, %v2194
  %v2579 = vpack.c.b16 %v2197, %v2196
  %v2580 = vpack.c.b16 %v2199, %v2198
  %v2581 = vpack.c.b16 %v2201, %v2200
  %v2582 = vpack.c.b16 %v2203, %v2202
  %v2583 = vpack.c.b16 %v2205, %v2204
  %v2584 = vpack.c.b16 %v2207, %v2206
  %v2585 = vpack.c.b16 %v2209, %v2208
  %v2586 = vpack.c.b16 %v2211, %v2210
  %v2587 = vpack.c.b16 %v2213, %v2212
  %v2588 = vpack.c.b16 %v2215, %v2214
  %v2589 = vpack.c.b16 %v2217, %v2216
  %v2590 = vpack.c.b16 %v2219, %v2218
  %v2591 = vpack.c.b16 %v2221, %v2220
  %v2592 = vpack.c.b16 %v2223, %v2222
  %v2593 = vpack.c.b16 %v2225, %v2224
  %v2594 = vpack.c.b16 %v2227, %v2226
  %v2595 = vpack.c.b16 %v2229, %v2228
  %v2596 = vpack.c.b16 %v2231, %v2230
  %v2597 = vpack.c.b16 %v2233, %v2232
  %v2598 = vpack.c.b16 %v2235, %v2234
  %v2599 = vpack.c.b16 %v2237, %v2236
  %v2600 = vpack.c.b16 %v2239, %v2238
  %v2601 = vpack.c.b16 %v2241, %v2240
  %v2602 = vpack.c.b16 %v2243, %v2242
  %v2603 = vpack.c.b16 %v2245, %v2244
  %v2604 = vpack.c.b16 %v2247, %v2246
  %v2605 = vpack.c.b16 %v2249, %v2248
  %v2606 = vpack.c.b16 %v2251, %v2250
  %v2607 = vpack.c.b16 %v2253, %v2252
  %v2608 = vpack.c.b16 %v2255, %v2254
  %v2609 = vpack.c.b16 %v2257, %v2256
  %v2610 = vpack.c.b16 %v2259, %v2258
  %v2611 = vpack.c.b16 %v2261, %v2260
  %v2612 = vpack.c.b16 %v2263, %v2262
  %v2613 = vpack.c.b16 %v2265, %v2264
  %v2614 = vpack.c.b16 %v2267, %v2266
  %v2615 = vpack.c.b16 %v2269, %v2268
  %v2616 = vpack.c.b16 %v2271, %v2270
  %v2617 = vpack.c.b16 %v2273, %v2272
  %v2618 = vpack.c.b16 %v2275, %v2274
  %v2619 = vpack.c.b16 %v2277, %v2276
  %v2620 = vpack.c.b16 %v2279, %v2278
  %v2621 = vpack.c.b16 %v2281, %v2280
  %v2622 = vpack.c.b16 %v2283, %v2282
  %v2623 = vpack.c.b16 %v2285, %v2284
  %v2624 = vpack.c.b16 %v2287, %v2286
  %v2625 = vpack.c.b16 %v2289, %v2288
  %v2626 = vpack.c.b16 %v2291, %v2290
  %v2627 = vpack.c.b16 %v2293, %v2292
  %v2628 = vpack.c.b16 %v2295, %v2294
  %v2629 = vpack.c.b16 %v2297, %v2296
  %v2630 = vpack.c.b16 %v2299, %v2298
  %v2631 = vpack.c.b16 %v2301, %v2300
  %v2632 = vpack.c.b16 %v2303, %v2302
  %v2633 = vpack.c.b16 %v2305, %v2304
  %v2634 = vpack.c.b16 %v2307, %v2306
  %v2635 = vpack.c.b16 %v2309, %v2308
  %v2636 = vpack.c.b16 %v2311, %v2310
  %v2637 = vpack.c.b16 %v2313, %v2312
  %v2638 = vpack.c.b16 %v2315, %v2314
  %v2639 = vpack.c.b16 %v2317, %v2316
  %v2640 = vpack.c.b16 %v2319, %v2318
  %v2641 = vpack.c.b16 %v2321, %v2320
  %v2642 = vpack.c.b16 %v2323, %v2322
  %v2643 = vpack.c.b16 %v2325, %v2324
  %v2644 = vpack.c.b16 %v2327, %v2326
  %v2645 = vpack.c.b16 %v2329, %v2328
  %v2646 = vpack.c.b16 %v2331, %v2330
  %v2647 = vpack.c.b16 %v2333, %v2332
  %v2648 = vpack.c.b16 %v2335, %v2334
  %v2649 = vpack.c.b16 %v2337, %v2336
  %v2650 = vpack.c.b16 %v2339, %v2338
  %v2651 = vpack.c.b16 %v2341, %v2340
  %v2652 = vpack.c.b16 %v2343, %v2342
  %v2653 = vpack.c.b16 %v2345, %v2344
  %v2654 = vpack.c.b16 %v2347, %v2346
  %v2655 = vpack.c.b16 %v2349, %v2348
  %v2656 = vpack.c.b16 %v2351, %v2350
  %v2657 = vpack.c.b16 %v2353, %v2352
  %v2658 = vpack.c.b16 %v2355, %v2354
  %v2659 = vpack.c.b16 %v2357, %v2356
  %v2660 = vpack.c.b16 %v2359, %v2358
  %v2661 = vpack.c.b16 %v2361, %v2360
  %v2662 = vpack.c.b16 %v2363, %v2362
  %v2663 = vpack.c.b16 %v2365, %v2364
  %v2664 = vpack.c.b16 %v2367, %v2366
  %v2665 = vpack.c.b16 %v2369, %v2368
  %v2666 = vpack.c.b16 %v2371, %v2370
  %v2667 = vpack.c.b16 %v2373, %v2372
  %v2668 = vpack.c.b16 %v2375, %v2374
  %v2669 = vpack.c.b16 %v2377, %v2376
  %v2670 = vpack.c.b16 %v2379, %v2378
  %v2671 = vpack.c.b16 %v2381, %v2380
  %v2672 = vpack.c.b16 %v2383, %v2382
  %v2673 = vpack.c.b16 %v2385, %v2384
  %v2674 = vpack.c.b16 %v2387, %v2386
  %v2675 = vpack.c.b16 %v2389, %v2388
  %v2676 = vpack.c.b16 %v2391, %v2390
  %v2677 = vpack.c.b16 %v2393, %v2392
  %v2678 = vpack.c.b16 %v2395, %v2394
  %v2679 = vpack.c.b16 %v2397, %v2396
  %v2680 = vpack.c.b16 %v2399, %v2398
  %v2681 = vpack.c.b16 %v2401, %v2400
  %v2682 = vpack.c.b16 %v2403, %v2402
  %v2683 = vpack.c.b16 %v2405, %v2404
  %v2684 = vpack.c.b16 %v2407, %v2406
  %v2685 = vpack.c.b16 %v2409, %v2408
  %v2686 = vpack.c.b16 %v2411, %v2410
  %v2687 = vpack.c.b16 %v2413, %v2412
  %v2688 = vpack.c.b16 %v2415, %v2414
  %v2689 = vpack.c.b16 %v2417, %v2416
  %v2690 = vpack.c.b16 %v2419, %v2418
  %v2691 = vpack.c.b16 %v2421, %v2420
  %v2692 = vpack.c.b16 %v2423, %v2422
  %v2693 = vpack.c.b16 %v2425, %v2424
  %v2694 = vpack.c.b16 %v2427, %v2426
  %v2695 = vpack.c.b16 %v2429, %v2428
  %v2696 = vpack.c.b16 %v2431, %v2430
  %v2697 = vpack.c.b16 %v2433, %v2432
  %v2698 = vpack.c.b16 %v2435, %v2434
  %v2699 = vpack.c.b16 %v2437, %v2436
  %v2700 = vpack.c.b16 %v2439, %v2438
  %v2701 = vpack.c.b16 %v2441, %v2440
  %v2702 = vpack.c.b16 %v2443, %v2442
  %v2703 = vpack.c.b16 %v2445, %v2444
  %v2704 = vpack.c.b16 %v2447, %v2446
  %v2705 = vpack.c.b16 %v2449, %v2448
  %2962 = vmatpush.bf16.msra.mxu0 %v2457
  %2963 = vmatpush.bf16.msra.mxu0 %v2456
  %2964 = vmatpush.bf16.msra.mxu0 %v2455
  %2965 = vmatpush.bf16.msra.mxu0 %v2454
  %2966 = vmatpush.bf16.msra.mxu0 %v2453
  %2967 = vmatpush.bf16.msra.mxu0 %v2452
  %2968 = vmatpush.bf16.msra.mxu0 %v2451
  %2969 = vmatpush.bf16.msra.mxu0 %v2450
  %2970 = vmatmul.bf16.gmra.mxu0 %v1106
  %v2971 = vpop.f32.mrf.mxu0
  %v2972 = vadd.f32 %v672, %v2971
  %v2973 = vpop.f32.mrf.mxu0
  %v2974 = vadd.f32 %v672, %v2973
  %2975 = vmatmul.bf16.gmra.mxu0 %v1138
  %v2976 = vpop.f32.mrf.mxu0
  %v2977 = vadd.f32 %v672, %v2976
  %v2978 = vpop.f32.mrf.mxu0
  %v2979 = vadd.f32 %v672, %v2978
  %2980 = vmatmul.bf16.gmra.mxu0 %v1170
  %v2981 = vpop.f32.mrf.mxu0
  %v2982 = vadd.f32 %v672, %v2981
  %v2983 = vpop.f32.mrf.mxu0
  %v2984 = vadd.f32 %v672, %v2983
  %2985 = vmatmul.bf16.gmra.mxu0 %v1202
  %v2986 = vpop.f32.mrf.mxu0
  %v2987 = vadd.f32 %v672, %v2986
  %v2988 = vpop.f32.mrf.mxu0
  %v2989 = vadd.f32 %v672, %v2988
  %2990 = vmatmul.bf16.gmra.mxu0 %v1234
  %v2991 = vpop.f32.mrf.mxu0
  %v2992 = vadd.f32 %v672, %v2991
  %v2993 = vpop.f32.mrf.mxu0
  %2994 = vdwg.mxu0
  %2995 = vmatpush.bf16.msra.mxu0 %v2465
  %2996 = vmatpush.bf16.msra.mxu0 %v2464
  %2997 = vmatpush.bf16.msra.mxu0 %v2463
  %2998 = vmatpush.bf16.msra.mxu0 %v2462
  %2999 = vmatpush.bf16.msra.mxu0 %v2461
  %3000 = vmatpush.bf16.msra.mxu0 %v2460
  %3001 = vmatpush.bf16.msra.mxu0 %v2459
  %3002 = vmatpush.bf16.msra.mxu0 %v2458
  %3003 = vmatmul.bf16.gmra.mxu0 %v1107
  %v3004 = vpop.f32.mrf.mxu0
  %v3005 = vadd.f32 %v2972, %v3004
  %v3006 = vpop.f32.mrf.mxu0
  %v3007 = vadd.f32 %v2974, %v3006
  %3008 = vmatmul.bf16.gmra.mxu0 %v1139
  %v3009 = vpop.f32.mrf.mxu0
  %v3010 = vadd.f32 %v2977, %v3009
  %v3011 = vpop.f32.mrf.mxu0
  %v3012 = vadd.f32 %v2979, %v3011
  %3013 = vmatmul.bf16.gmra.mxu0 %v1171
  %v3014 = vpop.f32.mrf.mxu0
  %v3015 = vadd.f32 %v2982, %v3014
  %v3016 = vpop.f32.mrf.mxu0
  %v3017 = vadd.f32 %v2984, %v3016
  %3018 = vmatmul.bf16.gmra.mxu0 %v1203
  %v3019 = vpop.f32.mrf.mxu0
  %v3020 = vadd.f32 %v2987, %v3019
  %v3021 = vpop.f32.mrf.mxu0
  %v3022 = vadd.f32 %v2989, %v3021
  %3023 = vmatmul.bf16.gmra.mxu0 %v1235
  %v3024 = vpop.f32.mrf.mxu0
  %v3025 = vadd.f32 %v2992, %v3024
  %v3026 = vpop.f32.mrf.mxu0
  %3027 = vdwg.mxu0
  %3028 = vmatpush.bf16.msra.mxu0 %v2473
  %3029 = vmatpush.bf16.msra.mxu0 %v2472
  %3030 = vmatpush.bf16.msra.mxu0 %v2471
  %3031 = vmatpush.bf16.msra.mxu0 %v2470
  %3032 = vmatpush.bf16.msra.mxu0 %v2469
  %3033 = vmatpush.bf16.msra.mxu0 %v2468
  %3034 = vmatpush.bf16.msra.mxu0 %v2467
  %3035 = vmatpush.bf16.msra.mxu0 %v2466
  %3036 = vmatmul.bf16.gmra.mxu0 %v1108
  %v3037 = vpop.f32.mrf.mxu0
  %v3038 = vadd.f32 %v3005, %v3037
  %v3039 = vpop.f32.mrf.mxu0
  %v3040 = vadd.f32 %v3007, %v3039
  %3041 = vmatmul.bf16.gmra.mxu0 %v1140
  %v3042 = vpop.f32.mrf.mxu0
  %v3043 = vadd.f32 %v3010, %v3042
  %v3044 = vpop.f32.mrf.mxu0
  %v3045 = vadd.f32 %v3012, %v3044
  %3046 = vmatmul.bf16.gmra.mxu0 %v1172
  %v3047 = vpop.f32.mrf.mxu0
  %v3048 = vadd.f32 %v3015, %v3047
  %v3049 = vpop.f32.mrf.mxu0
  %v3050 = vadd.f32 %v3017, %v3049
  %3051 = vmatmul.bf16.gmra.mxu0 %v1204
  %v3052 = vpop.f32.mrf.mxu0
  %v3053 = vadd.f32 %v3020, %v3052
  %v3054 = vpop.f32.mrf.mxu0
  %v3055 = vadd.f32 %v3022, %v3054
  %3056 = vmatmul.bf16.gmra.mxu0 %v1236
  %v3057 = vpop.f32.mrf.mxu0
  %v3058 = vadd.f32 %v3025, %v3057
  %v3059 = vpop.f32.mrf.mxu0
  %3060 = vdwg.mxu0
  %3061 = vmatpush.bf16.msra.mxu0 %v2481
  %3062 = vmatpush.bf16.msra.mxu0 %v2480
  %3063 = vmatpush.bf16.msra.mxu0 %v2479
  %3064 = vmatpush.bf16.msra.mxu0 %v2478
  %3065 = vmatpush.bf16.msra.mxu0 %v2477
  %3066 = vmatpush.bf16.msra.mxu0 %v2476
  %3067 = vmatpush.bf16.msra.mxu0 %v2475
  %3068 = vmatpush.bf16.msra.mxu0 %v2474
  %3069 = vmatmul.bf16.gmra.mxu0 %v1109
  %v3070 = vpop.f32.mrf.mxu0
  %v3071 = vadd.f32 %v3038, %v3070
  %v3072 = vpop.f32.mrf.mxu0
  %v3073 = vadd.f32 %v3040, %v3072
  %3074 = vmatmul.bf16.gmra.mxu0 %v1141
  %v3075 = vpop.f32.mrf.mxu0
  %v3076 = vadd.f32 %v3043, %v3075
  %v3077 = vpop.f32.mrf.mxu0
  %v3078 = vadd.f32 %v3045, %v3077
  %3079 = vmatmul.bf16.gmra.mxu0 %v1173
  %v3080 = vpop.f32.mrf.mxu0
  %v3081 = vadd.f32 %v3048, %v3080
  %v3082 = vpop.f32.mrf.mxu0
  %v3083 = vadd.f32 %v3050, %v3082
  %3084 = vmatmul.bf16.gmra.mxu0 %v1205
  %v3085 = vpop.f32.mrf.mxu0
  %v3086 = vadd.f32 %v3053, %v3085
  %v3087 = vpop.f32.mrf.mxu0
  %v3088 = vadd.f32 %v3055, %v3087
  %3089 = vmatmul.bf16.gmra.mxu0 %v1237
  %v3090 = vpop.f32.mrf.mxu0
  %v3091 = vadd.f32 %v3058, %v3090
  %v3092 = vpop.f32.mrf.mxu0
  %3093 = vdwg.mxu0
  %3094 = vmatpush.bf16.msra.mxu0 %v2489
  %3095 = vmatpush.bf16.msra.mxu0 %v2488
  %3096 = vmatpush.bf16.msra.mxu0 %v2487
  %3097 = vmatpush.bf16.msra.mxu0 %v2486
  %3098 = vmatpush.bf16.msra.mxu0 %v2485
  %3099 = vmatpush.bf16.msra.mxu0 %v2484
  %3100 = vmatpush.bf16.msra.mxu0 %v2483
  %3101 = vmatpush.bf16.msra.mxu0 %v2482
  %3102 = vmatmul.bf16.gmra.mxu0 %v1110
  %v3103 = vpop.f32.mrf.mxu0
  %v3104 = vadd.f32 %v3071, %v3103
  %v3105 = vpop.f32.mrf.mxu0
  %v3106 = vadd.f32 %v3073, %v3105
  %3107 = vmatmul.bf16.gmra.mxu0 %v1142
  %v3108 = vpop.f32.mrf.mxu0
  %v3109 = vadd.f32 %v3076, %v3108
  %v3110 = vpop.f32.mrf.mxu0
  %v3111 = vadd.f32 %v3078, %v3110
  %3112 = vmatmul.bf16.gmra.mxu0 %v1174
  %v3113 = vpop.f32.mrf.mxu0
  %v3114 = vadd.f32 %v3081, %v3113
  %v3115 = vpop.f32.mrf.mxu0
  %v3116 = vadd.f32 %v3083, %v3115
  %3117 = vmatmul.bf16.gmra.mxu0 %v1206
  %v3118 = vpop.f32.mrf.mxu0
  %v3119 = vadd.f32 %v3086, %v3118
  %v3120 = vpop.f32.mrf.mxu0
  %v3121 = vadd.f32 %v3088, %v3120
  %3122 = vmatmul.bf16.gmra.mxu0 %v1238
  %v3123 = vpop.f32.mrf.mxu0
  %v3124 = vadd.f32 %v3091, %v3123
  %v3125 = vpop.f32.mrf.mxu0
  %3126 = vdwg.mxu0
  %3127 = vmatpush.bf16.msra.mxu0 %v2497
  %3128 = vmatpush.bf16.msra.mxu0 %v2496
  %3129 = vmatpush.bf16.msra.mxu0 %v2495
  %3130 = vmatpush.bf16.msra.mxu0 %v2494
  %3131 = vmatpush.bf16.msra.mxu0 %v2493
  %3132 = vmatpush.bf16.msra.mxu0 %v2492
  %3133 = vmatpush.bf16.msra.mxu0 %v2491
  %3134 = vmatpush.bf16.msra.mxu0 %v2490
  %3135 = vmatmul.bf16.gmra.mxu0 %v1111
  %v3136 = vpop.f32.mrf.mxu0
  %v3137 = vadd.f32 %v3104, %v3136
  %v3138 = vpop.f32.mrf.mxu0
  %v3139 = vadd.f32 %v3106, %v3138
  %3140 = vmatmul.bf16.gmra.mxu0 %v1143
  %v3141 = vpop.f32.mrf.mxu0
  %v3142 = vadd.f32 %v3109, %v3141
  %v3143 = vpop.f32.mrf.mxu0
  %v3144 = vadd.f32 %v3111, %v3143
  %3145 = vmatmul.bf16.gmra.mxu0 %v1175
  %v3146 = vpop.f32.mrf.mxu0
  %v3147 = vadd.f32 %v3114, %v3146
  %v3148 = vpop.f32.mrf.mxu0
  %v3149 = vadd.f32 %v3116, %v3148
  %3150 = vmatmul.bf16.gmra.mxu0 %v1207
  %v3151 = vpop.f32.mrf.mxu0
  %v3152 = vadd.f32 %v3119, %v3151
  %v3153 = vpop.f32.mrf.mxu0
  %v3154 = vadd.f32 %v3121, %v3153
  %3155 = vmatmul.bf16.gmra.mxu0 %v1239
  %v3156 = vpop.f32.mrf.mxu0
  %v3157 = vadd.f32 %v3124, %v3156
  %v3158 = vpop.f32.mrf.mxu0
  %3159 = vdwg.mxu0
  %3160 = vmatpush.bf16.msra.mxu0 %v2505
  %3161 = vmatpush.bf16.msra.mxu0 %v2504
  %3162 = vmatpush.bf16.msra.mxu0 %v2503
  %3163 = vmatpush.bf16.msra.mxu0 %v2502
  %3164 = vmatpush.bf16.msra.mxu0 %v2501
  %3165 = vmatpush.bf16.msra.mxu0 %v2500
  %3166 = vmatpush.bf16.msra.mxu0 %v2499
  %3167 = vmatpush.bf16.msra.mxu0 %v2498
  %3168 = vmatmul.bf16.gmra.mxu0 %v1112
  %v3169 = vpop.f32.mrf.mxu0
  %v3170 = vadd.f32 %v3137, %v3169
  %v3171 = vpop.f32.mrf.mxu0
  %v3172 = vadd.f32 %v3139, %v3171
  %3173 = vmatmul.bf16.gmra.mxu0 %v1144
  %v3174 = vpop.f32.mrf.mxu0
  %v3175 = vadd.f32 %v3142, %v3174
  %v3176 = vpop.f32.mrf.mxu0
  %v3177 = vadd.f32 %v3144, %v3176
  %3178 = vmatmul.bf16.gmra.mxu0 %v1176
  %v3179 = vpop.f32.mrf.mxu0
  %v3180 = vadd.f32 %v3147, %v3179
  %v3181 = vpop.f32.mrf.mxu0
  %v3182 = vadd.f32 %v3149, %v3181
  %3183 = vmatmul.bf16.gmra.mxu0 %v1208
  %v3184 = vpop.f32.mrf.mxu0
  %v3185 = vadd.f32 %v3152, %v3184
  %v3186 = vpop.f32.mrf.mxu0
  %v3187 = vadd.f32 %v3154, %v3186
  %3188 = vmatmul.bf16.gmra.mxu0 %v1240
  %v3189 = vpop.f32.mrf.mxu0
  %v3190 = vadd.f32 %v3157, %v3189
  %v3191 = vpop.f32.mrf.mxu0
  %3192 = vdwg.mxu0
  %3193 = vmatpush.bf16.msra.mxu0 %v2513
  %3194 = vmatpush.bf16.msra.mxu0 %v2512
  %3195 = vmatpush.bf16.msra.mxu0 %v2511
  %3196 = vmatpush.bf16.msra.mxu0 %v2510
  %3197 = vmatpush.bf16.msra.mxu0 %v2509
  %3198 = vmatpush.bf16.msra.mxu0 %v2508
  %3199 = vmatpush.bf16.msra.mxu0 %v2507
  %3200 = vmatpush.bf16.msra.mxu0 %v2506
  %3201 = vmatmul.bf16.gmra.mxu0 %v1113
  %v3202 = vpop.f32.mrf.mxu0
  %v3203 = vadd.f32 %v3170, %v3202
  %v3204 = vpop.f32.mrf.mxu0
  %v3205 = vadd.f32 %v3172, %v3204
  %3206 = vmatmul.bf16.gmra.mxu0 %v1145
  %v3207 = vpop.f32.mrf.mxu0
  %v3208 = vadd.f32 %v3175, %v3207
  %v3209 = vpop.f32.mrf.mxu0
  %v3210 = vadd.f32 %v3177, %v3209
  %3211 = vmatmul.bf16.gmra.mxu0 %v1177
  %v3212 = vpop.f32.mrf.mxu0
  %v3213 = vadd.f32 %v3180, %v3212
  %v3214 = vpop.f32.mrf.mxu0
  %v3215 = vadd.f32 %v3182, %v3214
  %3216 = vmatmul.bf16.gmra.mxu0 %v1209
  %v3217 = vpop.f32.mrf.mxu0
  %v3218 = vadd.f32 %v3185, %v3217
  %v3219 = vpop.f32.mrf.mxu0
  %v3220 = vadd.f32 %v3187, %v3219
  %3221 = vmatmul.bf16.gmra.mxu0 %v1241
  %v3222 = vpop.f32.mrf.mxu0
  %v3223 = vadd.f32 %v3190, %v3222
  %v3224 = vpop.f32.mrf.mxu0
  %3225 = vdwg.mxu0
  %3226 = vmatpush.bf16.msra.mxu0 %v2521
  %3227 = vmatpush.bf16.msra.mxu0 %v2520
  %3228 = vmatpush.bf16.msra.mxu0 %v2519
  %3229 = vmatpush.bf16.msra.mxu0 %v2518
  %3230 = vmatpush.bf16.msra.mxu0 %v2517
  %3231 = vmatpush.bf16.msra.mxu0 %v2516
  %3232 = vmatpush.bf16.msra.mxu0 %v2515
  %3233 = vmatpush.bf16.msra.mxu0 %v2514
  %3234 = vmatmul.bf16.gmra.mxu0 %v1114
  %v3235 = vpop.f32.mrf.mxu0
  %v3236 = vadd.f32 %v3203, %v3235
  %v3237 = vpop.f32.mrf.mxu0
  %v3238 = vadd.f32 %v3205, %v3237
  %3239 = vmatmul.bf16.gmra.mxu0 %v1146
  %v3240 = vpop.f32.mrf.mxu0
  %v3241 = vadd.f32 %v3208, %v3240
  %v3242 = vpop.f32.mrf.mxu0
  %v3243 = vadd.f32 %v3210, %v3242
  %3244 = vmatmul.bf16.gmra.mxu0 %v1178
  %v3245 = vpop.f32.mrf.mxu0
  %v3246 = vadd.f32 %v3213, %v3245
  %v3247 = vpop.f32.mrf.mxu0
  %v3248 = vadd.f32 %v3215, %v3247
  %3249 = vmatmul.bf16.gmra.mxu0 %v1210
  %v3250 = vpop.f32.mrf.mxu0
  %v3251 = vadd.f32 %v3218, %v3250
  %v3252 = vpop.f32.mrf.mxu0
  %v3253 = vadd.f32 %v3220, %v3252
  %3254 = vmatmul.bf16.gmra.mxu0 %v1242
  %v3255 = vpop.f32.mrf.mxu0
  %v3256 = vadd.f32 %v3223, %v3255
  %v3257 = vpop.f32.mrf.mxu0
  %3258 = vdwg.mxu0
  %3259 = vmatpush.bf16.msra.mxu0 %v2529
  %3260 = vmatpush.bf16.msra.mxu0 %v2528
  %3261 = vmatpush.bf16.msra.mxu0 %v2527
  %3262 = vmatpush.bf16.msra.mxu0 %v2526
  %3263 = vmatpush.bf16.msra.mxu0 %v2525
  %3264 = vmatpush.bf16.msra.mxu0 %v2524
  %3265 = vmatpush.bf16.msra.mxu0 %v2523
  %3266 = vmatpush.bf16.msra.mxu0 %v2522
  %3267 = vmatmul.bf16.gmra.mxu0 %v1115
  %v3268 = vpop.f32.mrf.mxu0
  %v3269 = vadd.f32 %v3236, %v3268
  %v3270 = vpop.f32.mrf.mxu0
  %v3271 = vadd.f32 %v3238, %v3270
  %3272 = vmatmul.bf16.gmra.mxu0 %v1147
  %v3273 = vpop.f32.mrf.mxu0
  %v3274 = vadd.f32 %v3241, %v3273
  %v3275 = vpop.f32.mrf.mxu0
  %v3276 = vadd.f32 %v3243, %v3275
  %3277 = vmatmul.bf16.gmra.mxu0 %v1179
  %v3278 = vpop.f32.mrf.mxu0
  %v3279 = vadd.f32 %v3246, %v3278
  %v3280 = vpop.f32.mrf.mxu0
  %v3281 = vadd.f32 %v3248, %v3280
  %3282 = vmatmul.bf16.gmra.mxu0 %v1211
  %v3283 = vpop.f32.mrf.mxu0
  %v3284 = vadd.f32 %v3251, %v3283
  %v3285 = vpop.f32.mrf.mxu0
  %v3286 = vadd.f32 %v3253, %v3285
  %3287 = vmatmul.bf16.gmra.mxu0 %v1243
  %v3288 = vpop.f32.mrf.mxu0
  %v3289 = vadd.f32 %v3256, %v3288
  %v3290 = vpop.f32.mrf.mxu0
  %3291 = vdwg.mxu0
  %3292 = vmatpush.bf16.msra.mxu0 %v2537
  %3293 = vmatpush.bf16.msra.mxu0 %v2536
  %3294 = vmatpush.bf16.msra.mxu0 %v2535
  %3295 = vmatpush.bf16.msra.mxu0 %v2534
  %3296 = vmatpush.bf16.msra.mxu0 %v2533
  %3297 = vmatpush.bf16.msra.mxu0 %v2532
  %3298 = vmatpush.bf16.msra.mxu0 %v2531
  %3299 = vmatpush.bf16.msra.mxu0 %v2530
  %3300 = vmatmul.bf16.gmra.mxu0 %v1116
  %v3301 = vpop.f32.mrf.mxu0
  %v3302 = vadd.f32 %v3269, %v3301
  %v3303 = vpop.f32.mrf.mxu0
  %v3304 = vadd.f32 %v3271, %v3303
  %3305 = vmatmul.bf16.gmra.mxu0 %v1148
  %v3306 = vpop.f32.mrf.mxu0
  %v3307 = vadd.f32 %v3274, %v3306
  %v3308 = vpop.f32.mrf.mxu0
  %v3309 = vadd.f32 %v3276, %v3308
  %3310 = vmatmul.bf16.gmra.mxu0 %v1180
  %v3311 = vpop.f32.mrf.mxu0
  %v3312 = vadd.f32 %v3279, %v3311
  %v3313 = vpop.f32.mrf.mxu0
  %v3314 = vadd.f32 %v3281, %v3313
  %3315 = vmatmul.bf16.gmra.mxu0 %v1212
  %v3316 = vpop.f32.mrf.mxu0
  %v3317 = vadd.f32 %v3284, %v3316
  %v3318 = vpop.f32.mrf.mxu0
  %v3319 = vadd.f32 %v3286, %v3318
  %3320 = vmatmul.bf16.gmra.mxu0 %v1244
  %v3321 = vpop.f32.mrf.mxu0
  %v3322 = vadd.f32 %v3289, %v3321
  %v3323 = vpop.f32.mrf.mxu0
  %3324 = vdwg.mxu0
  %3325 = vmatpush.bf16.msra.mxu0 %v2545
  %3326 = vmatpush.bf16.msra.mxu0 %v2544
  %3327 = vmatpush.bf16.msra.mxu0 %v2543
  %3328 = vmatpush.bf16.msra.mxu0 %v2542
  %3329 = vmatpush.bf16.msra.mxu0 %v2541
  %3330 = vmatpush.bf16.msra.mxu0 %v2540
  %3331 = vmatpush.bf16.msra.mxu0 %v2539
  %3332 = vmatpush.bf16.msra.mxu0 %v2538
  %3333 = vmatmul.bf16.gmra.mxu0 %v1117
  %v3334 = vpop.f32.mrf.mxu0
  %v3335 = vadd.f32 %v3302, %v3334
  %v3336 = vpop.f32.mrf.mxu0
  %v3337 = vadd.f32 %v3304, %v3336
  %3338 = vmatmul.bf16.gmra.mxu0 %v1149
  %v3339 = vpop.f32.mrf.mxu0
  %v3340 = vadd.f32 %v3307, %v3339
  %v3341 = vpop.f32.mrf.mxu0
  %v3342 = vadd.f32 %v3309, %v3341
  %3343 = vmatmul.bf16.gmra.mxu0 %v1181
  %v3344 = vpop.f32.mrf.mxu0
  %v3345 = vadd.f32 %v3312, %v3344
  %v3346 = vpop.f32.mrf.mxu0
  %v3347 = vadd.f32 %v3314, %v3346
  %3348 = vmatmul.bf16.gmra.mxu0 %v1213
  %v3349 = vpop.f32.mrf.mxu0
  %v3350 = vadd.f32 %v3317, %v3349
  %v3351 = vpop.f32.mrf.mxu0
  %v3352 = vadd.f32 %v3319, %v3351
  %3353 = vmatmul.bf16.gmra.mxu0 %v1245
  %v3354 = vpop.f32.mrf.mxu0
  %v3355 = vadd.f32 %v3322, %v3354
  %v3356 = vpop.f32.mrf.mxu0
  %3357 = vdwg.mxu0
  %3358 = vmatpush.bf16.msra.mxu0 %v2553
  %3359 = vmatpush.bf16.msra.mxu0 %v2552
  %3360 = vmatpush.bf16.msra.mxu0 %v2551
  %3361 = vmatpush.bf16.msra.mxu0 %v2550
  %3362 = vmatpush.bf16.msra.mxu0 %v2549
  %3363 = vmatpush.bf16.msra.mxu0 %v2548
  %3364 = vmatpush.bf16.msra.mxu0 %v2547
  %3365 = vmatpush.bf16.msra.mxu0 %v2546
  %3366 = vmatmul.bf16.gmra.mxu0 %v1118
  %v3367 = vpop.f32.mrf.mxu0
  %v3368 = vadd.f32 %v3335, %v3367
  %v3369 = vpop.f32.mrf.mxu0
  %v3370 = vadd.f32 %v3337, %v3369
  %3371 = vmatmul.bf16.gmra.mxu0 %v1150
  %v3372 = vpop.f32.mrf.mxu0
  %v3373 = vadd.f32 %v3340, %v3372
  %v3374 = vpop.f32.mrf.mxu0
  %v3375 = vadd.f32 %v3342, %v3374
  %3376 = vmatmul.bf16.gmra.mxu0 %v1182
  %v3377 = vpop.f32.mrf.mxu0
  %v3378 = vadd.f32 %v3345, %v3377
  %v3379 = vpop.f32.mrf.mxu0
  %v3380 = vadd.f32 %v3347, %v3379
  %3381 = vmatmul.bf16.gmra.mxu0 %v1214
  %v3382 = vpop.f32.mrf.mxu0
  %v3383 = vadd.f32 %v3350, %v3382
  %v3384 = vpop.f32.mrf.mxu0
  %v3385 = vadd.f32 %v3352, %v3384
  %3386 = vmatmul.bf16.gmra.mxu0 %v1246
  %v3387 = vpop.f32.mrf.mxu0
  %v3388 = vadd.f32 %v3355, %v3387
  %v3389 = vpop.f32.mrf.mxu0
  %3390 = vdwg.mxu0
  %3391 = vmatpush.bf16.msra.mxu0 %v2561
  %3392 = vmatpush.bf16.msra.mxu0 %v2560
  %3393 = vmatpush.bf16.msra.mxu0 %v2559
  %3394 = vmatpush.bf16.msra.mxu0 %v2558
  %3395 = vmatpush.bf16.msra.mxu0 %v2557
  %3396 = vmatpush.bf16.msra.mxu0 %v2556
  %3397 = vmatpush.bf16.msra.mxu0 %v2555
  %3398 = vmatpush.bf16.msra.mxu0 %v2554
  %3399 = vmatmul.bf16.gmra.mxu0 %v1119
  %v3400 = vpop.f32.mrf.mxu0
  %v3401 = vadd.f32 %v3368, %v3400
  %v3402 = vpop.f32.mrf.mxu0
  %v3403 = vadd.f32 %v3370, %v3402
  %3404 = vmatmul.bf16.gmra.mxu0 %v1151
  %v3405 = vpop.f32.mrf.mxu0
  %v3406 = vadd.f32 %v3373, %v3405
  %v3407 = vpop.f32.mrf.mxu0
  %v3408 = vadd.f32 %v3375, %v3407
  %3409 = vmatmul.bf16.gmra.mxu0 %v1183
  %v3410 = vpop.f32.mrf.mxu0
  %v3411 = vadd.f32 %v3378, %v3410
  %v3412 = vpop.f32.mrf.mxu0
  %v3413 = vadd.f32 %v3380, %v3412
  %3414 = vmatmul.bf16.gmra.mxu0 %v1215
  %v3415 = vpop.f32.mrf.mxu0
  %v3416 = vadd.f32 %v3383, %v3415
  %v3417 = vpop.f32.mrf.mxu0
  %v3418 = vadd.f32 %v3385, %v3417
  %3419 = vmatmul.bf16.gmra.mxu0 %v1247
  %v3420 = vpop.f32.mrf.mxu0
  %v3421 = vadd.f32 %v3388, %v3420
  %v3422 = vpop.f32.mrf.mxu0
  %3423 = vdwg.mxu0
  %3424 = vmatpush.bf16.msra.mxu0 %v2569
  %3425 = vmatpush.bf16.msra.mxu0 %v2568
  %3426 = vmatpush.bf16.msra.mxu0 %v2567
  %3427 = vmatpush.bf16.msra.mxu0 %v2566
  %3428 = vmatpush.bf16.msra.mxu0 %v2565
  %3429 = vmatpush.bf16.msra.mxu0 %v2564
  %3430 = vmatpush.bf16.msra.mxu0 %v2563
  %3431 = vmatpush.bf16.msra.mxu0 %v2562
  %3432 = vmatmul.bf16.gmra.mxu0 %v1120
  %v3433 = vpop.f32.mrf.mxu0
  %v3434 = vadd.f32 %v3401, %v3433
  %v3435 = vpop.f32.mrf.mxu0
  %v3436 = vadd.f32 %v3403, %v3435
  %3437 = vmatmul.bf16.gmra.mxu0 %v1152
  %v3438 = vpop.f32.mrf.mxu0
  %v3439 = vadd.f32 %v3406, %v3438
  %v3440 = vpop.f32.mrf.mxu0
  %v3441 = vadd.f32 %v3408, %v3440
  %3442 = vmatmul.bf16.gmra.mxu0 %v1184
  %v3443 = vpop.f32.mrf.mxu0
  %v3444 = vadd.f32 %v3411, %v3443
  %v3445 = vpop.f32.mrf.mxu0
  %v3446 = vadd.f32 %v3413, %v3445
  %3447 = vmatmul.bf16.gmra.mxu0 %v1216
  %v3448 = vpop.f32.mrf.mxu0
  %v3449 = vadd.f32 %v3416, %v3448
  %v3450 = vpop.f32.mrf.mxu0
  %v3451 = vadd.f32 %v3418, %v3450
  %3452 = vmatmul.bf16.gmra.mxu0 %v1248
  %v3453 = vpop.f32.mrf.mxu0
  %v3454 = vadd.f32 %v3421, %v3453
  %v3455 = vpop.f32.mrf.mxu0
  %3456 = vdwg.mxu0
  %3457 = vmatpush.bf16.msra.mxu0 %v2577
  %3458 = vmatpush.bf16.msra.mxu0 %v2576
  %3459 = vmatpush.bf16.msra.mxu0 %v2575
  %3460 = vmatpush.bf16.msra.mxu0 %v2574
  %3461 = vmatpush.bf16.msra.mxu0 %v2573
  %3462 = vmatpush.bf16.msra.mxu0 %v2572
  %3463 = vmatpush.bf16.msra.mxu0 %v2571
  %3464 = vmatpush.bf16.msra.mxu0 %v2570
  %3465 = vmatmul.bf16.gmra.mxu0 %v1121
  %v3466 = vpop.f32.mrf.mxu0
  %v3467 = vadd.f32 %v3434, %v3466
  %v3468 = vpop.f32.mrf.mxu0
  %v3469 = vadd.f32 %v3436, %v3468
  %3470 = vmatmul.bf16.gmra.mxu0 %v1153
  %v3471 = vpop.f32.mrf.mxu0
  %v3472 = vadd.f32 %v3439, %v3471
  %v3473 = vpop.f32.mrf.mxu0
  %v3474 = vadd.f32 %v3441, %v3473
  %3475 = vmatmul.bf16.gmra.mxu0 %v1185
  %v3476 = vpop.f32.mrf.mxu0
  %v3477 = vadd.f32 %v3444, %v3476
  %v3478 = vpop.f32.mrf.mxu0
  %v3479 = vadd.f32 %v3446, %v3478
  %3480 = vmatmul.bf16.gmra.mxu0 %v1217
  %v3481 = vpop.f32.mrf.mxu0
  %v3482 = vadd.f32 %v3449, %v3481
  %v3483 = vpop.f32.mrf.mxu0
  %v3484 = vadd.f32 %v3451, %v3483
  %3485 = vmatmul.bf16.gmra.mxu0 %v1249
  %v3486 = vpop.f32.mrf.mxu0
  %v3487 = vadd.f32 %v3454, %v3486
  %v3488 = vpop.f32.mrf.mxu0
  %3489 = vdwg.mxu0
  %3490 = vmatpush.bf16.msra.mxu0 %v2585
  %3491 = vmatpush.bf16.msra.mxu0 %v2584
  %3492 = vmatpush.bf16.msra.mxu0 %v2583
  %3493 = vmatpush.bf16.msra.mxu0 %v2582
  %3494 = vmatpush.bf16.msra.mxu0 %v2581
  %3495 = vmatpush.bf16.msra.mxu0 %v2580
  %3496 = vmatpush.bf16.msra.mxu0 %v2579
  %3497 = vmatpush.bf16.msra.mxu0 %v2578
  %3498 = vmatmul.bf16.gmra.mxu0 %v1122
  %v3499 = vpop.f32.mrf.mxu0
  %v3500 = vadd.f32 %v3467, %v3499
  %v3501 = vpop.f32.mrf.mxu0
  %v3502 = vadd.f32 %v3469, %v3501
  %3503 = vmatmul.bf16.gmra.mxu0 %v1154
  %v3504 = vpop.f32.mrf.mxu0
  %v3505 = vadd.f32 %v3472, %v3504
  %v3506 = vpop.f32.mrf.mxu0
  %v3507 = vadd.f32 %v3474, %v3506
  %3508 = vmatmul.bf16.gmra.mxu0 %v1186
  %v3509 = vpop.f32.mrf.mxu0
  %v3510 = vadd.f32 %v3477, %v3509
  %v3511 = vpop.f32.mrf.mxu0
  %v3512 = vadd.f32 %v3479, %v3511
  %3513 = vmatmul.bf16.gmra.mxu0 %v1218
  %v3514 = vpop.f32.mrf.mxu0
  %v3515 = vadd.f32 %v3482, %v3514
  %v3516 = vpop.f32.mrf.mxu0
  %v3517 = vadd.f32 %v3484, %v3516
  %3518 = vmatmul.bf16.gmra.mxu0 %v1250
  %v3519 = vpop.f32.mrf.mxu0
  %v3520 = vadd.f32 %v3487, %v3519
  %v3521 = vpop.f32.mrf.mxu0
  %3522 = vdwg.mxu0
  %3523 = vmatpush.bf16.msra.mxu0 %v2593
  %3524 = vmatpush.bf16.msra.mxu0 %v2592
  %3525 = vmatpush.bf16.msra.mxu0 %v2591
  %3526 = vmatpush.bf16.msra.mxu0 %v2590
  %3527 = vmatpush.bf16.msra.mxu0 %v2589
  %3528 = vmatpush.bf16.msra.mxu0 %v2588
  %3529 = vmatpush.bf16.msra.mxu0 %v2587
  %3530 = vmatpush.bf16.msra.mxu0 %v2586
  %3531 = vmatmul.bf16.gmra.mxu0 %v1123
  %v3532 = vpop.f32.mrf.mxu0
  %v3533 = vadd.f32 %v3500, %v3532
  %v3534 = vpop.f32.mrf.mxu0
  %v3535 = vadd.f32 %v3502, %v3534
  %3536 = vmatmul.bf16.gmra.mxu0 %v1155
  %v3537 = vpop.f32.mrf.mxu0
  %v3538 = vadd.f32 %v3505, %v3537
  %v3539 = vpop.f32.mrf.mxu0
  %v3540 = vadd.f32 %v3507, %v3539
  %3541 = vmatmul.bf16.gmra.mxu0 %v1187
  %v3542 = vpop.f32.mrf.mxu0
  %v3543 = vadd.f32 %v3510, %v3542
  %v3544 = vpop.f32.mrf.mxu0
  %v3545 = vadd.f32 %v3512, %v3544
  %3546 = vmatmul.bf16.gmra.mxu0 %v1219
  %v3547 = vpop.f32.mrf.mxu0
  %v3548 = vadd.f32 %v3515, %v3547
  %v3549 = vpop.f32.mrf.mxu0
  %v3550 = vadd.f32 %v3517, %v3549
  %3551 = vmatmul.bf16.gmra.mxu0 %v1251
  %v3552 = vpop.f32.mrf.mxu0
  %v3553 = vadd.f32 %v3520, %v3552
  %v3554 = vpop.f32.mrf.mxu0
  %3555 = vdwg.mxu0
  %3556 = vmatpush.bf16.msra.mxu0 %v2601
  %3557 = vmatpush.bf16.msra.mxu0 %v2600
  %3558 = vmatpush.bf16.msra.mxu0 %v2599
  %3559 = vmatpush.bf16.msra.mxu0 %v2598
  %3560 = vmatpush.bf16.msra.mxu0 %v2597
  %3561 = vmatpush.bf16.msra.mxu0 %v2596
  %3562 = vmatpush.bf16.msra.mxu0 %v2595
  %3563 = vmatpush.bf16.msra.mxu0 %v2594
  %3564 = vmatmul.bf16.gmra.mxu0 %v1124
  %v3565 = vpop.f32.mrf.mxu0
  %v3566 = vadd.f32 %v3533, %v3565
  %v3567 = vpop.f32.mrf.mxu0
  %v3568 = vadd.f32 %v3535, %v3567
  %3569 = vmatmul.bf16.gmra.mxu0 %v1156
  %v3570 = vpop.f32.mrf.mxu0
  %v3571 = vadd.f32 %v3538, %v3570
  %v3572 = vpop.f32.mrf.mxu0
  %v3573 = vadd.f32 %v3540, %v3572
  %3574 = vmatmul.bf16.gmra.mxu0 %v1188
  %v3575 = vpop.f32.mrf.mxu0
  %v3576 = vadd.f32 %v3543, %v3575
  %v3577 = vpop.f32.mrf.mxu0
  %v3578 = vadd.f32 %v3545, %v3577
  %3579 = vmatmul.bf16.gmra.mxu0 %v1220
  %v3580 = vpop.f32.mrf.mxu0
  %v3581 = vadd.f32 %v3548, %v3580
  %v3582 = vpop.f32.mrf.mxu0
  %v3583 = vadd.f32 %v3550, %v3582
  %3584 = vmatmul.bf16.gmra.mxu0 %v1252
  %v3585 = vpop.f32.mrf.mxu0
  %v3586 = vadd.f32 %v3553, %v3585
  %v3587 = vpop.f32.mrf.mxu0
  %3588 = vdwg.mxu0
  %3589 = vmatpush.bf16.msra.mxu0 %v2609
  %3590 = vmatpush.bf16.msra.mxu0 %v2608
  %3591 = vmatpush.bf16.msra.mxu0 %v2607
  %3592 = vmatpush.bf16.msra.mxu0 %v2606
  %3593 = vmatpush.bf16.msra.mxu0 %v2605
  %3594 = vmatpush.bf16.msra.mxu0 %v2604
  %3595 = vmatpush.bf16.msra.mxu0 %v2603
  %3596 = vmatpush.bf16.msra.mxu0 %v2602
  %3597 = vmatmul.bf16.gmra.mxu0 %v1125
  %v3598 = vpop.f32.mrf.mxu0
  %v3599 = vadd.f32 %v3566, %v3598
  %v3600 = vpop.f32.mrf.mxu0
  %v3601 = vadd.f32 %v3568, %v3600
  %3602 = vmatmul.bf16.gmra.mxu0 %v1157
  %v3603 = vpop.f32.mrf.mxu0
  %v3604 = vadd.f32 %v3571, %v3603
  %v3605 = vpop.f32.mrf.mxu0
  %v3606 = vadd.f32 %v3573, %v3605
  %3607 = vmatmul.bf16.gmra.mxu0 %v1189
  %v3608 = vpop.f32.mrf.mxu0
  %v3609 = vadd.f32 %v3576, %v3608
  %v3610 = vpop.f32.mrf.mxu0
  %v3611 = vadd.f32 %v3578, %v3610
  %3612 = vmatmul.bf16.gmra.mxu0 %v1221
  %v3613 = vpop.f32.mrf.mxu0
  %v3614 = vadd.f32 %v3581, %v3613
  %v3615 = vpop.f32.mrf.mxu0
  %v3616 = vadd.f32 %v3583, %v3615
  %3617 = vmatmul.bf16.gmra.mxu0 %v1253
  %v3618 = vpop.f32.mrf.mxu0
  %v3619 = vadd.f32 %v3586, %v3618
  %v3620 = vpop.f32.mrf.mxu0
  %3621 = vdwg.mxu0
  %3622 = vmatpush.bf16.msra.mxu0 %v2617
  %3623 = vmatpush.bf16.msra.mxu0 %v2616
  %3624 = vmatpush.bf16.msra.mxu0 %v2615
  %3625 = vmatpush.bf16.msra.mxu0 %v2614
  %3626 = vmatpush.bf16.msra.mxu0 %v2613
  %3627 = vmatpush.bf16.msra.mxu0 %v2612
  %3628 = vmatpush.bf16.msra.mxu0 %v2611
  %3629 = vmatpush.bf16.msra.mxu0 %v2610
  %3630 = vmatmul.bf16.gmra.mxu0 %v1126
  %v3631 = vpop.f32.mrf.mxu0
  %v3632 = vadd.f32 %v3599, %v3631
  %v3633 = vpop.f32.mrf.mxu0
  %v3634 = vadd.f32 %v3601, %v3633
  %3635 = vmatmul.bf16.gmra.mxu0 %v1158
  %v3636 = vpop.f32.mrf.mxu0
  %v3637 = vadd.f32 %v3604, %v3636
  %v3638 = vpop.f32.mrf.mxu0
  %v3639 = vadd.f32 %v3606, %v3638
  %3640 = vmatmul.bf16.gmra.mxu0 %v1190
  %v3641 = vpop.f32.mrf.mxu0
  %v3642 = vadd.f32 %v3609, %v3641
  %v3643 = vpop.f32.mrf.mxu0
  %v3644 = vadd.f32 %v3611, %v3643
  %3645 = vmatmul.bf16.gmra.mxu0 %v1222
  %v3646 = vpop.f32.mrf.mxu0
  %v3647 = vadd.f32 %v3614, %v3646
  %v3648 = vpop.f32.mrf.mxu0
  %v3649 = vadd.f32 %v3616, %v3648
  %3650 = vmatmul.bf16.gmra.mxu0 %v1254
  %v3651 = vpop.f32.mrf.mxu0
  %v3652 = vadd.f32 %v3619, %v3651
  %v3653 = vpop.f32.mrf.mxu0
  %3654 = vdwg.mxu0
  %3655 = vmatpush.bf16.msra.mxu0 %v2625
  %3656 = vmatpush.bf16.msra.mxu0 %v2624
  %3657 = vmatpush.bf16.msra.mxu0 %v2623
  %3658 = vmatpush.bf16.msra.mxu0 %v2622
  %3659 = vmatpush.bf16.msra.mxu0 %v2621
  %3660 = vmatpush.bf16.msra.mxu0 %v2620
  %3661 = vmatpush.bf16.msra.mxu0 %v2619
  %3662 = vmatpush.bf16.msra.mxu0 %v2618
  %3663 = vmatmul.bf16.gmra.mxu0 %v1127
  %v3664 = vpop.f32.mrf.mxu0
  %v3665 = vadd.f32 %v3632, %v3664
  %v3666 = vpop.f32.mrf.mxu0
  %v3667 = vadd.f32 %v3634, %v3666
  %3668 = vmatmul.bf16.gmra.mxu0 %v1159
  %v3669 = vpop.f32.mrf.mxu0
  %v3670 = vadd.f32 %v3637, %v3669
  %v3671 = vpop.f32.mrf.mxu0
  %v3672 = vadd.f32 %v3639, %v3671
  %3673 = vmatmul.bf16.gmra.mxu0 %v1191
  %v3674 = vpop.f32.mrf.mxu0
  %v3675 = vadd.f32 %v3642, %v3674
  %v3676 = vpop.f32.mrf.mxu0
  %v3677 = vadd.f32 %v3644, %v3676
  %3678 = vmatmul.bf16.gmra.mxu0 %v1223
  %v3679 = vpop.f32.mrf.mxu0
  %v3680 = vadd.f32 %v3647, %v3679
  %v3681 = vpop.f32.mrf.mxu0
  %v3682 = vadd.f32 %v3649, %v3681
  %3683 = vmatmul.bf16.gmra.mxu0 %v1255
  %v3684 = vpop.f32.mrf.mxu0
  %v3685 = vadd.f32 %v3652, %v3684
  %v3686 = vpop.f32.mrf.mxu0
  %3687 = vdwg.mxu0
  %3688 = vmatpush.bf16.msra.mxu0 %v2633
  %3689 = vmatpush.bf16.msra.mxu0 %v2632
  %3690 = vmatpush.bf16.msra.mxu0 %v2631
  %3691 = vmatpush.bf16.msra.mxu0 %v2630
  %3692 = vmatpush.bf16.msra.mxu0 %v2629
  %3693 = vmatpush.bf16.msra.mxu0 %v2628
  %3694 = vmatpush.bf16.msra.mxu0 %v2627
  %3695 = vmatpush.bf16.msra.mxu0 %v2626
  %3696 = vmatmul.bf16.gmra.mxu0 %v1128
  %v3697 = vpop.f32.mrf.mxu0
  %v3698 = vadd.f32 %v3665, %v3697
  %v3699 = vpop.f32.mrf.mxu0
  %v3700 = vadd.f32 %v3667, %v3699
  %3701 = vmatmul.bf16.gmra.mxu0 %v1160
  %v3702 = vpop.f32.mrf.mxu0
  %v3703 = vadd.f32 %v3670, %v3702
  %v3704 = vpop.f32.mrf.mxu0
  %v3705 = vadd.f32 %v3672, %v3704
  %3706 = vmatmul.bf16.gmra.mxu0 %v1192
  %v3707 = vpop.f32.mrf.mxu0
  %v3708 = vadd.f32 %v3675, %v3707
  %v3709 = vpop.f32.mrf.mxu0
  %v3710 = vadd.f32 %v3677, %v3709
  %3711 = vmatmul.bf16.gmra.mxu0 %v1224
  %v3712 = vpop.f32.mrf.mxu0
  %v3713 = vadd.f32 %v3680, %v3712
  %v3714 = vpop.f32.mrf.mxu0
  %v3715 = vadd.f32 %v3682, %v3714
  %3716 = vmatmul.bf16.gmra.mxu0 %v1256
  %v3717 = vpop.f32.mrf.mxu0
  %v3718 = vadd.f32 %v3685, %v3717
  %v3719 = vpop.f32.mrf.mxu0
  %3720 = vdwg.mxu0
  %3721 = vmatpush.bf16.msra.mxu0 %v2641
  %3722 = vmatpush.bf16.msra.mxu0 %v2640
  %3723 = vmatpush.bf16.msra.mxu0 %v2639
  %3724 = vmatpush.bf16.msra.mxu0 %v2638
  %3725 = vmatpush.bf16.msra.mxu0 %v2637
  %3726 = vmatpush.bf16.msra.mxu0 %v2636
  %3727 = vmatpush.bf16.msra.mxu0 %v2635
  %3728 = vmatpush.bf16.msra.mxu0 %v2634
  %3729 = vmatmul.bf16.gmra.mxu0 %v1129
  %v3730 = vpop.f32.mrf.mxu0
  %v3731 = vadd.f32 %v3698, %v3730
  %v3732 = vpop.f32.mrf.mxu0
  %v3733 = vadd.f32 %v3700, %v3732
  %3734 = vmatmul.bf16.gmra.mxu0 %v1161
  %v3735 = vpop.f32.mrf.mxu0
  %v3736 = vadd.f32 %v3703, %v3735
  %v3737 = vpop.f32.mrf.mxu0
  %v3738 = vadd.f32 %v3705, %v3737
  %3739 = vmatmul.bf16.gmra.mxu0 %v1193
  %v3740 = vpop.f32.mrf.mxu0
  %v3741 = vadd.f32 %v3708, %v3740
  %v3742 = vpop.f32.mrf.mxu0
  %v3743 = vadd.f32 %v3710, %v3742
  %3744 = vmatmul.bf16.gmra.mxu0 %v1225
  %v3745 = vpop.f32.mrf.mxu0
  %v3746 = vadd.f32 %v3713, %v3745
  %v3747 = vpop.f32.mrf.mxu0
  %v3748 = vadd.f32 %v3715, %v3747
  %3749 = vmatmul.bf16.gmra.mxu0 %v1257
  %v3750 = vpop.f32.mrf.mxu0
  %v3751 = vadd.f32 %v3718, %v3750
  %v3752 = vpop.f32.mrf.mxu0
  %3753 = vdwg.mxu0
  %3754 = vmatpush.bf16.msra.mxu0 %v2649
  %3755 = vmatpush.bf16.msra.mxu0 %v2648
  %3756 = vmatpush.bf16.msra.mxu0 %v2647
  %3757 = vmatpush.bf16.msra.mxu0 %v2646
  %3758 = vmatpush.bf16.msra.mxu0 %v2645
  %3759 = vmatpush.bf16.msra.mxu0 %v2644
  %3760 = vmatpush.bf16.msra.mxu0 %v2643
  %3761 = vmatpush.bf16.msra.mxu0 %v2642
  %3762 = vmatmul.bf16.gmra.mxu0 %v1130
  %v3763 = vpop.f32.mrf.mxu0
  %v3764 = vadd.f32 %v3731, %v3763
  %v3765 = vpop.f32.mrf.mxu0
  %v3766 = vadd.f32 %v3733, %v3765
  %3767 = vmatmul.bf16.gmra.mxu0 %v1162
  %v3768 = vpop.f32.mrf.mxu0
  %v3769 = vadd.f32 %v3736, %v3768
  %v3770 = vpop.f32.mrf.mxu0
  %v3771 = vadd.f32 %v3738, %v3770
  %3772 = vmatmul.bf16.gmra.mxu0 %v1194
  %v3773 = vpop.f32.mrf.mxu0
  %v3774 = vadd.f32 %v3741, %v3773
  %v3775 = vpop.f32.mrf.mxu0
  %v3776 = vadd.f32 %v3743, %v3775
  %3777 = vmatmul.bf16.gmra.mxu0 %v1226
  %v3778 = vpop.f32.mrf.mxu0
  %v3779 = vadd.f32 %v3746, %v3778
  %v3780 = vpop.f32.mrf.mxu0
  %v3781 = vadd.f32 %v3748, %v3780
  %3782 = vmatmul.bf16.gmra.mxu0 %v1258
  %v3783 = vpop.f32.mrf.mxu0
  %v3784 = vadd.f32 %v3751, %v3783
  %v3785 = vpop.f32.mrf.mxu0
  %3786 = vdwg.mxu0
  %3787 = vmatpush.bf16.msra.mxu0 %v2657
  %3788 = vmatpush.bf16.msra.mxu0 %v2656
  %3789 = vmatpush.bf16.msra.mxu0 %v2655
  %3790 = vmatpush.bf16.msra.mxu0 %v2654
  %3791 = vmatpush.bf16.msra.mxu0 %v2653
  %3792 = vmatpush.bf16.msra.mxu0 %v2652
  %3793 = vmatpush.bf16.msra.mxu0 %v2651
  %3794 = vmatpush.bf16.msra.mxu0 %v2650
  %3795 = vmatmul.bf16.gmra.mxu0 %v1131
  %v3796 = vpop.f32.mrf.mxu0
  %v3797 = vadd.f32 %v3764, %v3796
  %v3798 = vpop.f32.mrf.mxu0
  %v3799 = vadd.f32 %v3766, %v3798
  %3800 = vmatmul.bf16.gmra.mxu0 %v1163
  %v3801 = vpop.f32.mrf.mxu0
  %v3802 = vadd.f32 %v3769, %v3801
  %v3803 = vpop.f32.mrf.mxu0
  %v3804 = vadd.f32 %v3771, %v3803
  %3805 = vmatmul.bf16.gmra.mxu0 %v1195
  %v3806 = vpop.f32.mrf.mxu0
  %v3807 = vadd.f32 %v3774, %v3806
  %v3808 = vpop.f32.mrf.mxu0
  %v3809 = vadd.f32 %v3776, %v3808
  %3810 = vmatmul.bf16.gmra.mxu0 %v1227
  %v3811 = vpop.f32.mrf.mxu0
  %v3812 = vadd.f32 %v3779, %v3811
  %v3813 = vpop.f32.mrf.mxu0
  %v3814 = vadd.f32 %v3781, %v3813
  %3815 = vmatmul.bf16.gmra.mxu0 %v1259
  %v3816 = vpop.f32.mrf.mxu0
  %v3817 = vadd.f32 %v3784, %v3816
  %v3818 = vpop.f32.mrf.mxu0
  %3819 = vdwg.mxu0
  %3820 = vmatpush.bf16.msra.mxu0 %v2665
  %3821 = vmatpush.bf16.msra.mxu0 %v2664
  %3822 = vmatpush.bf16.msra.mxu0 %v2663
  %3823 = vmatpush.bf16.msra.mxu0 %v2662
  %3824 = vmatpush.bf16.msra.mxu0 %v2661
  %3825 = vmatpush.bf16.msra.mxu0 %v2660
  %3826 = vmatpush.bf16.msra.mxu0 %v2659
  %3827 = vmatpush.bf16.msra.mxu0 %v2658
  %3828 = vmatmul.bf16.gmra.mxu0 %v1132
  %v3829 = vpop.f32.mrf.mxu0
  %v3830 = vadd.f32 %v3797, %v3829
  %v3831 = vpop.f32.mrf.mxu0
  %v3832 = vadd.f32 %v3799, %v3831
  %3833 = vmatmul.bf16.gmra.mxu0 %v1164
  %v3834 = vpop.f32.mrf.mxu0
  %v3835 = vadd.f32 %v3802, %v3834
  %v3836 = vpop.f32.mrf.mxu0
  %v3837 = vadd.f32 %v3804, %v3836
  %3838 = vmatmul.bf16.gmra.mxu0 %v1196
  %v3839 = vpop.f32.mrf.mxu0
  %v3840 = vadd.f32 %v3807, %v3839
  %v3841 = vpop.f32.mrf.mxu0
  %v3842 = vadd.f32 %v3809, %v3841
  %3843 = vmatmul.bf16.gmra.mxu0 %v1228
  %v3844 = vpop.f32.mrf.mxu0
  %v3845 = vadd.f32 %v3812, %v3844
  %v3846 = vpop.f32.mrf.mxu0
  %v3847 = vadd.f32 %v3814, %v3846
  %3848 = vmatmul.bf16.gmra.mxu0 %v1260
  %v3849 = vpop.f32.mrf.mxu0
  %v3850 = vadd.f32 %v3817, %v3849
  %v3851 = vpop.f32.mrf.mxu0
  %3852 = vdwg.mxu0
  %3853 = vmatpush.bf16.msra.mxu0 %v2673
  %3854 = vmatpush.bf16.msra.mxu0 %v2672
  %3855 = vmatpush.bf16.msra.mxu0 %v2671
  %3856 = vmatpush.bf16.msra.mxu0 %v2670
  %3857 = vmatpush.bf16.msra.mxu0 %v2669
  %3858 = vmatpush.bf16.msra.mxu0 %v2668
  %3859 = vmatpush.bf16.msra.mxu0 %v2667
  %3860 = vmatpush.bf16.msra.mxu0 %v2666
  %3861 = vmatmul.bf16.gmra.mxu0 %v1133
  %v3862 = vpop.f32.mrf.mxu0
  %v3863 = vadd.f32 %v3830, %v3862
  %v3864 = vpop.f32.mrf.mxu0
  %v3865 = vadd.f32 %v3832, %v3864
  %3866 = vmatmul.bf16.gmra.mxu0 %v1165
  %v3867 = vpop.f32.mrf.mxu0
  %v3868 = vadd.f32 %v3835, %v3867
  %v3869 = vpop.f32.mrf.mxu0
  %v3870 = vadd.f32 %v3837, %v3869
  %3871 = vmatmul.bf16.gmra.mxu0 %v1197
  %v3872 = vpop.f32.mrf.mxu0
  %v3873 = vadd.f32 %v3840, %v3872
  %v3874 = vpop.f32.mrf.mxu0
  %v3875 = vadd.f32 %v3842, %v3874
  %3876 = vmatmul.bf16.gmra.mxu0 %v1229
  %v3877 = vpop.f32.mrf.mxu0
  %v3878 = vadd.f32 %v3845, %v3877
  %v3879 = vpop.f32.mrf.mxu0
  %v3880 = vadd.f32 %v3847, %v3879
  %3881 = vmatmul.bf16.gmra.mxu0 %v1261
  %v3882 = vpop.f32.mrf.mxu0
  %v3883 = vadd.f32 %v3850, %v3882
  %v3884 = vpop.f32.mrf.mxu0
  %3885 = vdwg.mxu0
  %3886 = vmatpush.bf16.msra.mxu0 %v2681
  %3887 = vmatpush.bf16.msra.mxu0 %v2680
  %3888 = vmatpush.bf16.msra.mxu0 %v2679
  %3889 = vmatpush.bf16.msra.mxu0 %v2678
  %3890 = vmatpush.bf16.msra.mxu0 %v2677
  %3891 = vmatpush.bf16.msra.mxu0 %v2676
  %3892 = vmatpush.bf16.msra.mxu0 %v2675
  %3893 = vmatpush.bf16.msra.mxu0 %v2674
  %3894 = vmatmul.bf16.gmra.mxu0 %v1134
  %v3895 = vpop.f32.mrf.mxu0
  %v3896 = vadd.f32 %v3863, %v3895
  %v3897 = vpop.f32.mrf.mxu0
  %v3898 = vadd.f32 %v3865, %v3897
  %3899 = vmatmul.bf16.gmra.mxu0 %v1166
  %v3900 = vpop.f32.mrf.mxu0
  %v3901 = vadd.f32 %v3868, %v3900
  %v3902 = vpop.f32.mrf.mxu0
  %v3903 = vadd.f32 %v3870, %v3902
  %3904 = vmatmul.bf16.gmra.mxu0 %v1198
  %v3905 = vpop.f32.mrf.mxu0
  %v3906 = vadd.f32 %v3873, %v3905
  %v3907 = vpop.f32.mrf.mxu0
  %v3908 = vadd.f32 %v3875, %v3907
  %3909 = vmatmul.bf16.gmra.mxu0 %v1230
  %v3910 = vpop.f32.mrf.mxu0
  %v3911 = vadd.f32 %v3878, %v3910
  %v3912 = vpop.f32.mrf.mxu0
  %v3913 = vadd.f32 %v3880, %v3912
  %3914 = vmatmul.bf16.gmra.mxu0 %v1262
  %v3915 = vpop.f32.mrf.mxu0
  %v3916 = vadd.f32 %v3883, %v3915
  %v3917 = vpop.f32.mrf.mxu0
  %3918 = vdwg.mxu0
  %3919 = vmatpush.bf16.msra.mxu0 %v2689
  %3920 = vmatpush.bf16.msra.mxu0 %v2688
  %3921 = vmatpush.bf16.msra.mxu0 %v2687
  %3922 = vmatpush.bf16.msra.mxu0 %v2686
  %3923 = vmatpush.bf16.msra.mxu0 %v2685
  %3924 = vmatpush.bf16.msra.mxu0 %v2684
  %3925 = vmatpush.bf16.msra.mxu0 %v2683
  %3926 = vmatpush.bf16.msra.mxu0 %v2682
  %3927 = vmatmul.bf16.gmra.mxu0 %v1135
  %v3928 = vpop.f32.mrf.mxu0
  %v3929 = vadd.f32 %v3896, %v3928
  %v3930 = vpop.f32.mrf.mxu0
  %v3931 = vadd.f32 %v3898, %v3930
  %3932 = vmatmul.bf16.gmra.mxu0 %v1167
  %v3933 = vpop.f32.mrf.mxu0
  %v3934 = vadd.f32 %v3901, %v3933
  %v3935 = vpop.f32.mrf.mxu0
  %v3936 = vadd.f32 %v3903, %v3935
  %3937 = vmatmul.bf16.gmra.mxu0 %v1199
  %v3938 = vpop.f32.mrf.mxu0
  %v3939 = vadd.f32 %v3906, %v3938
  %v3940 = vpop.f32.mrf.mxu0
  %v3941 = vadd.f32 %v3908, %v3940
  %3942 = vmatmul.bf16.gmra.mxu0 %v1231
  %v3943 = vpop.f32.mrf.mxu0
  %v3944 = vadd.f32 %v3911, %v3943
  %v3945 = vpop.f32.mrf.mxu0
  %v3946 = vadd.f32 %v3913, %v3945
  %3947 = vmatmul.bf16.gmra.mxu0 %v1263
  %v3948 = vpop.f32.mrf.mxu0
  %v3949 = vadd.f32 %v3916, %v3948
  %v3950 = vpop.f32.mrf.mxu0
  %3951 = vdwg.mxu0
  %3952 = vmatpush.bf16.msra.mxu0 %v2697
  %3953 = vmatpush.bf16.msra.mxu0 %v2696
  %3954 = vmatpush.bf16.msra.mxu0 %v2695
  %3955 = vmatpush.bf16.msra.mxu0 %v2694
  %3956 = vmatpush.bf16.msra.mxu0 %v2693
  %3957 = vmatpush.bf16.msra.mxu0 %v2692
  %3958 = vmatpush.bf16.msra.mxu0 %v2691
  %3959 = vmatpush.bf16.msra.mxu0 %v2690
  %3960 = vmatmul.bf16.gmra.mxu0 %v1136
  %v3961 = vpop.f32.mrf.mxu0
  %v3962 = vadd.f32 %v3929, %v3961
  %v3963 = vpop.f32.mrf.mxu0
  %v3964 = vadd.f32 %v3931, %v3963
  %3965 = vmatmul.bf16.gmra.mxu0 %v1168
  %v3966 = vpop.f32.mrf.mxu0
  %v3967 = vadd.f32 %v3934, %v3966
  %v3968 = vpop.f32.mrf.mxu0
  %v3969 = vadd.f32 %v3936, %v3968
  %3970 = vmatmul.bf16.gmra.mxu0 %v1200
  %v3971 = vpop.f32.mrf.mxu0
  %v3972 = vadd.f32 %v3939, %v3971
  %v3973 = vpop.f32.mrf.mxu0
  %v3974 = vadd.f32 %v3941, %v3973
  %3975 = vmatmul.bf16.gmra.mxu0 %v1232
  %v3976 = vpop.f32.mrf.mxu0
  %v3977 = vadd.f32 %v3944, %v3976
  %v3978 = vpop.f32.mrf.mxu0
  %v3979 = vadd.f32 %v3946, %v3978
  %3980 = vmatmul.bf16.gmra.mxu0 %v1264
  %v3981 = vpop.f32.mrf.mxu0
  %v3982 = vadd.f32 %v3949, %v3981
  %v3983 = vpop.f32.mrf.mxu0
  %3984 = vdwg.mxu0
  %3985 = vmatpush.bf16.msra.mxu0 %v2705
  %3986 = vmatpush.bf16.msra.mxu0 %v2704
  %3987 = vmatpush.bf16.msra.mxu0 %v2703
  %3988 = vmatpush.bf16.msra.mxu0 %v2702
  %3989 = vmatpush.bf16.msra.mxu0 %v2701
  %3990 = vmatpush.bf16.msra.mxu0 %v2700
  %3991 = vmatpush.bf16.msra.mxu0 %v2699
  %3992 = vmatpush.bf16.msra.mxu0 %v2698
  %3993 = vmatmul.bf16.gmra.mxu0 %v1137
  %v3994 = vpop.f32.mrf.mxu0
  %v3995 = vadd.f32 %v3962, %v3994
  %v3996 = vpop.f32.mrf.mxu0
  %v3997 = vadd.f32 %v3964, %v3996
  %3998 = vmatmul.bf16.gmra.mxu0 %v1169
  %v3999 = vpop.f32.mrf.mxu0
  %v4000 = vadd.f32 %v3967, %v3999
  %v4001 = vpop.f32.mrf.mxu0
  %v4002 = vadd.f32 %v3969, %v4001
  %4003 = vmatmul.bf16.gmra.mxu0 %v1201
  %v4004 = vpop.f32.mrf.mxu0
  %v4005 = vadd.f32 %v3972, %v4004
  %v4006 = vpop.f32.mrf.mxu0
  %v4007 = vadd.f32 %v3974, %v4006
  %4008 = vmatmul.bf16.gmra.mxu0 %v1233
  %v4009 = vpop.f32.mrf.mxu0
  %v4010 = vadd.f32 %v3977, %v4009
  %v4011 = vpop.f32.mrf.mxu0
  %v4012 = vadd.f32 %v3979, %v4011
  %4013 = vmatmul.bf16.gmra.mxu0 %v1265
  %v4014 = vpop.f32.mrf.mxu0
  %v4015 = vadd.f32 %v3982, %v4014
  %v4016 = vpop.f32.mrf.mxu0
  %4017 = vdwg.mxu0
  %v4018 = vmax.f32 %v3995, 0.0
  %v4019 = vmax.f32 %v3997, 0.0
  %v4020 = vmax.f32 %v4000, 0.0
  %v4021 = vmax.f32 %v4002, 0.0
  %v4022 = vmax.f32 %v4005, 0.0
  %v4023 = vmax.f32 %v4007, 0.0
  %v4024 = vmax.f32 %v4010, 0.0
  %v4025 = vmax.f32 %v4012, 0.0
  %v4026 = vmax.f32 %v4015, 0.0
  %v4027 = vpack.c.bf16 %v4018, %v4018
  %v4028 = vpack.c.bf16 %v4019, %v4019
  %v4029 = vpack.c.bf16 %v4020, %v4020
  %v4030 = vpack.c.bf16 %v4021, %v4021
  %v4031 = vpack.c.bf16 %v4022, %v4022
  %v4032 = vpack.c.bf16 %v4023, %v4023
  %v4033 = vpack.c.bf16 %v4024, %v4024
  %v4034 = vpack.c.bf16 %v4025, %v4025
  %v4035 = vpack.c.bf16 %v4026, %v4026
  %4036 = vst [vmem:[%s3] sm:$0xf] %v4027
  %4037 = vst [vmem:[%s3 + $0x4] sm:$0xf] %v4028
  %4038 = vst [vmem:[%s3 + $0x8] sm:$0xf] %v4029
  %4039 = vst [vmem:[%s3 + $0xc] sm:$0xf] %v4030
  %4040 = vst [vmem:[%s3 + $0x10] sm:$0xf] %v4031
  %4041 = vst [vmem:[%s3 + $0x14] sm:$0xf] %v4032
  %4042 = vst [vmem:[%s3 + $0x18] sm:$0xf] %v4033
  %4043 = vst [vmem:[%s3 + $0x1c] sm:$0xf] %v4034
  %4044 = vst [vmem:[%s3 + $0x20] sm:$0xf] %v4035
  // Predicated region
  $region14: #{cnn2_forward.4} parent=0 // pred_check
    _
  $region15: #{cnn2_forward.4} parent=0 // pred_check_branch
    %4046 = sbr.rel (0) target = $region17
  $region16: #{cnn2_forward.4} parent=0 // pred_region
    _
  $region17: #{cnn2_forward.4} parent=0 // pred_fallthru
    _
  // Predicated region
  $region18: #{cnn2_forward.4} parent=0 // pred_check
    _
  $region19: #{cnn2_forward.4} parent=0 // pred_check_branch
    %4048 = sbr.rel (0) target = $region21
  $region20: #{cnn2_forward.4} parent=0 // pred_region
    _
  $region21: #{cnn2_forward.4} parent=0 // pred_fallthru
    _

// kernel: cnn2_forward.5
$region0: #{cnn2_forward.5}
  #allocation0 [shape = 'u32[]', space=smem, size = 0x4, offset = 0x4, fixed_abs, tag = 'smem constant byte address 0x4 - core index']
  #allocation1 [shape = 'u32[72,128]{1,0:T(1,128)}', space=vmem, size = 0x9000, scoped, tag = 'internal scratch']
  %s0 = inlined_call_operand.vmem [shape: bf16[2,4608], index: 0, kind: input, shape index: {}]
  %s1 = inlined_call_operand.vmem [shape: bf16[4608,512], index: 1, kind: input, shape index: {}]
  %s2 = inlined_call_operand.vmem [shape: f32[1,512], index: 2, kind: input, shape index: {}]
  %s3 = inlined_call_operand.vmem [shape: bf16[512,128], index: 3, kind: input, shape index: {}]
  %s4 = inlined_call_operand.vmem [shape: f32[1,128], index: 4, kind: input, shape index: {}]
  %s5 = inlined_call_operand.hbm [shape: f32[2,128], index: 5, kind: output, shape index: {}]
  %s6 = sld [smem:[#allocation0]]
  $region30: #{cnn2_forward.5} parent=0
    _
  %s8 = ssub.s32 1, %s6
  %s9 = scalar_select 0, %s8, %s6
  $region1: #{cnn2_forward.5} parent=0
    #allocation2 [shape = 'u8[1024]{0}', space=vmem, size = 0x400, scoped, tag = 'output window, operand 0, single buffered']
    #allocation3 [shape = 's32[1]{0}', space=sflag, size = 0x4, scoped, tag = 'scoped memory for cnn2_forward.5']
    %10 = vsyncpa [#allocation3], 0
    // Predicated region
    $region2: #{cnn2_forward.5} parent=1 // pred_check
      _
    $region3: #{cnn2_forward.5} parent=1 // pred_check_branch
      %12 = sbr.rel (0) target = $region5
    $region4: #{cnn2_forward.5} parent=1 // pred_region
      _
    $region5: #{cnn2_forward.5} parent=1 // pred_fallthru
      _
    // Predicated region
    $region6: #{cnn2_forward.5} parent=1 // pred_check
      _
    $region7: #{cnn2_forward.5} parent=1 // pred_check_branch
      %14 = sbr.rel (0) target = $region9
    $region8: #{cnn2_forward.5} parent=1 // pred_region
      _
    $region9: #{cnn2_forward.5} parent=1 // pred_fallthru
      _
    // Predicated region
    $region10: #{cnn2_forward.5} parent=1 // pred_check
      _
    $region11: #{cnn2_forward.5} parent=1 // pred_check_branch
      %16 = sbr.rel (0) target = $region13
    $region12: #{cnn2_forward.5} parent=1 // pred_region
      _
    $region13: #{cnn2_forward.5} parent=1 // pred_fallthru
      _
    // Predicated region
    $region14: #{cnn2_forward.5} parent=1 // pred_check
      _
    $region15: #{cnn2_forward.5} parent=1 // pred_check_branch
      %18 = sbr.rel (0) target = $region17
    $region16: #{cnn2_forward.5} parent=1 // pred_region
      _
    $region17: #{cnn2_forward.5} parent=1 // pred_fallthru
      _
    // Predicated region
    $region18: #{cnn2_forward.5} parent=1 // pred_check
      _
    $region19: #{cnn2_forward.5} parent=1 // pred_check_branch
      %20 = sbr.rel (0) target = $region21
    $region20: #{cnn2_forward.5} parent=1 // pred_region
      _
    $region21: #{cnn2_forward.5} parent=1 // pred_fallthru
      _
    %v21 = vld [vmem:[%s0] sm:$0xff]
    %v22 = vld [vmem:[%s0 + $0x8] sm:$0xff]
    %v23 = vld [vmem:[%s0 + $0x10] sm:$0xff]
    %v24 = vld [vmem:[%s0 + $0x18] sm:$0xff]
    %v25 = vld [vmem:[%s0 + $0x20] sm:$0xf]
    %v26 = vld [vmem:[%s1] sm:$0xff]
    %v27 = vld [vmem:[%s1 + $0x8] sm:$0xff]
    %v28 = vld [vmem:[%s1 + $0x10] sm:$0xff]
    %v29 = vld [vmem:[%s1 + $0x18] sm:$0xff]
    %v30 = vld [vmem:[%s1 + $0x20] sm:$0xff]
    %v31 = vld [vmem:[%s1 + $0x28] sm:$0xff]
    %v32 = vld [vmem:[%s1 + $0x30] sm:$0xff]
    %v33 = vld [vmem:[%s1 + $0x38] sm:$0xff]
    %v34 = vld [vmem:[%s1 + $0x40] sm:$0xff]
    %v35 = vld [vmem:[%s1 + $0x48] sm:$0xff]
    %v36 = vld [vmem:[%s1 + $0x50] sm:$0xff]
    %v37 = vld [vmem:[%s1 + $0x58] sm:$0xff]
    %v38 = vld [vmem:[%s1 + $0x60] sm:$0xff]
    %v39 = vld [vmem:[%s1 + $0x68] sm:$0xff]
    %v40 = vld [vmem:[%s1 + $0x70] sm:$0xff]
    %v41 = vld [vmem:[%s1 + $0x78] sm:$0xff]
    %v42 = vld [vmem:[%s1 + $0x80] sm:$0xff]
    %v43 = vld [vmem:[%s1 + $0x88] sm:$0xff]
    %v44 = vld [vmem:[%s1 + $0x90] sm:$0xff]
    %v45 = vld [vmem:[%s1 + $0x98] sm:$0xff]
    %v46 = vld [vmem:[%s1 + $0xa0] sm:$0xff]
    %v47 = vld [vmem:[%s1 + $0xa8] sm:$0xff]
    %v48 = vld [vmem:[%s1 + $0xb0] sm:$0xff]
    %v49 = vld [vmem:[%s1 + $0xb8] sm:$0xff]
    %v50 = vld [vmem:[%s1 + $0xc0] sm:$0xff]
    %v51 = vld [vmem:[%s1 + $0xc8] sm:$0xff]
    %v52 = vld [vmem:[%s1 + $0xd0] sm:$0xff]
    %v53 = vld [vmem:[%s1 + $0xd8] sm:$0xff]
    %v54 = vld [vmem:[%s1 + $0xe0] sm:$0xff]
    %v55 = vld [vmem:[%s1 + $0xe8] sm:$0xff]
    %v56 = vld [vmem:[%s1 + $0xf0] sm:$0xff]
    %v57 = vld [vmem:[%s1 + $0xf8] sm:$0xff]
    %v58 = vld [vmem:[%s1 + $0x100] sm:$0xff]
    %v59 = vld [vmem:[%s1 + $0x108] sm:$0xff]
    %v60 = vld [vmem:[%s1 + $0x110] sm:$0xff]
    %v61 = vld [vmem:[%s1 + $0x118] sm:$0xff]
    %v62 = vld [vmem:[%s1 + $0x120] sm:$0xff]
    %v63 = vld [vmem:[%s1 + $0x128] sm:$0xff]
    %v64 = vld [vmem:[%s1 + $0x130] sm:$0xff]
    %v65 = vld [vmem:[%s1 + $0x138] sm:$0xff]
    %v66 = vld [vmem:[%s1 + $0x140] sm:$0xff]
    %v67 = vld [vmem:[%s1 + $0x148] sm:$0xff]
    %v68 = vld [vmem:[%s1 + $0x150] sm:$0xff]
    %v69 = vld [vmem:[%s1 + $0x158] sm:$0xff]
    %v70 = vld [vmem:[%s1 + $0x160] sm:$0xff]
    %v71 = vld [vmem:[%s1 + $0x168] sm:$0xff]
    %v72 = vld [vmem:[%s1 + $0x170] sm:$0xff]
    %v73 = vld [vmem:[%s1 + $0x178] sm:$0xff]
    %v74 = vld [vmem:[%s1 + $0x180] sm:$0xff]
    %v75 = vld [vmem:[%s1 + $0x188] sm:$0xff]
    %v76 = vld [vmem:[%s1 + $0x190] sm:$0xff]
    %v77 = vld [vmem:[%s1 + $0x198] sm:$0xff]
    %v78 = vld [vmem:[%s1 + $0x1a0] sm:$0xff]
    %v79 = vld [vmem:[%s1 + $0x1a8] sm:$0xff]
    %v80 = vld [vmem:[%s1 + $0x1b0] sm:$0xff]
    %v81 = vld [vmem:[%s1 + $0x1b8] sm:$0xff]
    %v82 = vld [vmem:[%s1 + $0x1c0] sm:$0xff]
    %v83 = vld [vmem:[%s1 + $0x1c8] sm:$0xff]
    %v84 = vld [vmem:[%s1 + $0x1d0] sm:$0xff]
    %v85 = vld [vmem:[%s1 + $0x1d8] sm:$0xff]
    %v86 = vld [vmem:[%s1 + $0x1e0] sm:$0xff]
    %v87 = vld [vmem:[%s1 + $0x1e8] sm:$0xff]
    %v88 = vld [vmem:[%s1 + $0x1f0] sm:$0xff]
    %v89 = vld [vmem:[%s1 + $0x1f8] sm:$0xff]
    %v90 = vld [vmem:[%s1 + $0x200] sm:$0xff]
    %v91 = vld [vmem:[%s1 + $0x208] sm:$0xff]
    %v92 = vld [vmem:[%s1 + $0x210] sm:$0xff]
    %v93 = vld [vmem:[%s1 + $0x218] sm:$0xff]
    %v94 = vld [vmem:[%s1 + $0x220] sm:$0xff]
    %v95 = vld [vmem:[%s1 + $0x228] sm:$0xff]
    %v96 = vld [vmem:[%s1 + $0x230] sm:$0xff]
    %v97 = vld [vmem:[%s1 + $0x238] sm:$0xff]
    %v98 = vld [vmem:[%s1 + $0x240] sm:$0xff]
    %v99 = vld [vmem:[%s1 + $0x248] sm:$0xff]
    %v100 = vld [vmem:[%s1 + $0x250] sm:$0xff]
    %v101 = vld [vmem:[%s1 + $0x258] sm:$0xff]
    %v102 = vld [vmem:[%s1 + $0x260] sm:$0xff]
    %v103 = vld [vmem:[%s1 + $0x268] sm:$0xff]
    %v104 = vld [vmem:[%s1 + $0x270] sm:$0xff]
    %v105 = vld [vmem:[%s1 + $0x278] sm:$0xff]
    %v106 = vld [vmem:[%s1 + $0x280] sm:$0xff]
    %v107 = vld [vmem:[%s1 + $0x288] sm:$0xff]
    %v108 = vld [vmem:[%s1 + $0x290] sm:$0xff]
    %v109 = vld [vmem:[%s1 + $0x298] sm:$0xff]
    %v110 = vld [vmem:[%s1 + $0x2a0] sm:$0xff]
    %v111 = vld [vmem:[%s1 + $0x2a8] sm:$0xff]
    %v112 = vld [vmem:[%s1 + $0x2b0] sm:$0xff]
    %v113 = vld [vmem:[%s1 + $0x2b8] sm:$0xff]
    %v114 = vld [vmem:[%s1 + $0x2c0] sm:$0xff]
    %v115 = vld [vmem:[%s1 + $0x2c8] sm:$0xff]
    %v116 = vld [vmem:[%s1 + $0x2d0] sm:$0xff]
    %v117 = vld [vmem:[%s1 + $0x2d8] sm:$0xff]
    %v118 = vld [vmem:[%s1 + $0x2e0] sm:$0xff]
    %v119 = vld [vmem:[%s1 + $0x2e8] sm:$0xff]
    %v120 = vld [vmem:[%s1 + $0x2f0] sm:$0xff]
    %v121 = vld [vmem:[%s1 + $0x2f8] sm:$0xff]
    %v122 = vld [vmem:[%s1 + $0x300] sm:$0xff]
    %v123 = vld [vmem:[%s1 + $0x308] sm:$0xff]
    %v124 = vld [vmem:[%s1 + $0x310] sm:$0xff]
    %v125 = vld [vmem:[%s1 + $0x318] sm:$0xff]
    %v126 = vld [vmem:[%s1 + $0x320] sm:$0xff]
    %v127 = vld [vmem:[%s1 + $0x328] sm:$0xff]
    %v128 = vld [vmem:[%s1 + $0x330] sm:$0xff]
    %v129 = vld [vmem:[%s1 + $0x338] sm:$0xff]
    %v130 = vld [vmem:[%s1 + $0x340] sm:$0xff]
    %v131 = vld [vmem:[%s1 + $0x348] sm:$0xff]
    %v132 = vld [vmem:[%s1 + $0x350] sm:$0xff]
    %v133 = vld [vmem:[%s1 + $0x358] sm:$0xff]
    %v134 = vld [vmem:[%s1 + $0x360] sm:$0xff]
    %v135 = vld [vmem:[%s1 + $0x368] sm:$0xff]
    %v136 = vld [vmem:[%s1 + $0x370] sm:$0xff]
    %v137 = vld [vmem:[%s1 + $0x378] sm:$0xff]
    %v138 = vld [vmem:[%s1 + $0x380] sm:$0xff]
    %v139 = vld [vmem:[%s1 + $0x388] sm:$0xff]
    %v140 = vld [vmem:[%s1 + $0x390] sm:$0xff]
    %v141 = vld [vmem:[%s1 + $0x398] sm:$0xff]
    %v142 = vld [vmem:[%s1 + $0x3a0] sm:$0xff]
    %v143 = vld [vmem:[%s1 + $0x3a8] sm:$0xff]
    %v144 = vld [vmem:[%s1 + $0x3b0] sm:$0xff]
    %v145 = vld [vmem:[%s1 + $0x3b8] sm:$0xff]
    %v146 = vld [vmem:[%s1 + $0x3c0] sm:$0xff]
    %v147 = vld [vmem:[%s1 + $0x3c8] sm:$0xff]
    %v148 = vld [vmem:[%s1 + $0x3d0] sm:$0xff]
    %v149 = vld [vmem:[%s1 + $0x3d8] sm:$0xff]
    %v150 = vld [vmem:[%s1 + $0x3e0] sm:$0xff]
    %v151 = vld [vmem:[%s1 + $0x3e8] sm:$0xff]
    %v152 = vld [vmem:[%s1 + $0x3f0] sm:$0xff]
    %v153 = vld [vmem:[%s1 + $0x3f8] sm:$0xff]
    %v154 = vld [vmem:[%s1 + $0x400] sm:$0xff]
    %v155 = vld [vmem:[%s1 + $0x408] sm:$0xff]
    %v156 = vld [vmem:[%s1 + $0x410] sm:$0xff]
    %v157 = vld [vmem:[%s1 + $0x418] sm:$0xff]
    %v158 = vld [vmem:[%s1 + $0x420] sm:$0xff]
    %v159 = vld [vmem:[%s1 + $0x428] sm:$0xff]
    %v160 = vld [vmem:[%s1 + $0x430] sm:$0xff]
    %v161 = vld [vmem:[%s1 + $0x438] sm:$0xff]
    %v162 = vld [vmem:[%s1 + $0x440] sm:$0xff]
    %v163 = vld [vmem:[%s1 + $0x448] sm:$0xff]
    %v164 = vld [vmem:[%s1 + $0x450] sm:$0xff]
    %v165 = vld [vmem:[%s1 + $0x458] sm:$0xff]
    %v166 = vld [vmem:[%s1 + $0x460] sm:$0xff]
    %v167 = vld [vmem:[%s1 + $0x468] sm:$0xff]
    %v168 = vld [vmem:[%s1 + $0x470] sm:$0xff]
    %v169 = vld [vmem:[%s1 + $0x478] sm:$0xff]
    %v170 = vld [vmem:[%s1 + $0x480] sm:$0xff]
    %v171 = vld [vmem:[%s1 + $0x488] sm:$0xff]
    %v172 = vld [vmem:[%s1 + $0x490] sm:$0xff]
    %v173 = vld [vmem:[%s1 + $0x498] sm:$0xff]
    %v174 = vld [vmem:[%s1 + $0x4a0] sm:$0xff]
    %v175 = vld [vmem:[%s1 + $0x4a8] sm:$0xff]
    %v176 = vld [vmem:[%s1 + $0x4b0] sm:$0xff]
    %v177 = vld [vmem:[%s1 + $0x4b8] sm:$0xff]
    %v178 = vld [vmem:[%s1 + $0x4c0] sm:$0xff]
    %v179 = vld [vmem:[%s1 + $0x4c8] sm:$0xff]
    %v180 = vld [vmem:[%s1 + $0x4d0] sm:$0xff]
    %v181 = vld [vmem:[%s1 + $0x4d8] sm:$0xff]
    %v182 = vld [vmem:[%s1 + $0x4e0] sm:$0xff]
    %v183 = vld [vmem:[%s1 + $0x4e8] sm:$0xff]
    %v184 = vld [vmem:[%s1 + $0x4f0] sm:$0xff]
    %v185 = vld [vmem:[%s1 + $0x4f8] sm:$0xff]
    %v186 = vld [vmem:[%s1 + $0x500] sm:$0xff]
    %v187 = vld [vmem:[%s1 + $0x508] sm:$0xff]
    %v188 = vld [vmem:[%s1 + $0x510] sm:$0xff]
    %v189 = vld [vmem:[%s1 + $0x518] sm:$0xff]
    %v190 = vld [vmem:[%s1 + $0x520] sm:$0xff]
    %v191 = vld [vmem:[%s1 + $0x528] sm:$0xff]
    %v192 = vld [vmem:[%s1 + $0x530] sm:$0xff]
    %v193 = vld [vmem:[%s1 + $0x538] sm:$0xff]
    %v194 = vld [vmem:[%s1 + $0x540] sm:$0xff]
    %v195 = vld [vmem:[%s1 + $0x548] sm:$0xff]
    %v196 = vld [vmem:[%s1 + $0x550] sm:$0xff]
    %v197 = vld [vmem:[%s1 + $0x558] sm:$0xff]
    %v198 = vld [vmem:[%s1 + $0x560] sm:$0xff]
    %v199 = vld [vmem:[%s1 + $0x568] sm:$0xff]
    %v200 = vld [vmem:[%s1 + $0x570] sm:$0xff]
    %v201 = vld [vmem:[%s1 + $0x578] sm:$0xff]
    %v202 = vld [vmem:[%s1 + $0x580] sm:$0xff]
    %v203 = vld [vmem:[%s1 + $0x588] sm:$0xff]
    %v204 = vld [vmem:[%s1 + $0x590] sm:$0xff]
    %v205 = vld [vmem:[%s1 + $0x598] sm:$0xff]
    %v206 = vld [vmem:[%s1 + $0x5a0] sm:$0xff]
    %v207 = vld [vmem:[%s1 + $0x5a8] sm:$0xff]
    %v208 = vld [vmem:[%s1 + $0x5b0] sm:$0xff]
    %v209 = vld [vmem:[%s1 + $0x5b8] sm:$0xff]
    %v210 = vld [vmem:[%s1 + $0x5c0] sm:$0xff]
    %v211 = vld [vmem:[%s1 + $0x5c8] sm:$0xff]
    %v212 = vld [vmem:[%s1 + $0x5d0] sm:$0xff]
    %v213 = vld [vmem:[%s1 + $0x5d8] sm:$0xff]
    %v214 = vld [vmem:[%s1 + $0x5e0] sm:$0xff]
    %v215 = vld [vmem:[%s1 + $0x5e8] sm:$0xff]
    %v216 = vld [vmem:[%s1 + $0x5f0] sm:$0xff]
    %v217 = vld [vmem:[%s1 + $0x5f8] sm:$0xff]
    %v218 = vld [vmem:[%s1 + $0x600] sm:$0xff]
    %v219 = vld [vmem:[%s1 + $0x608] sm:$0xff]
    %v220 = vld [vmem:[%s1 + $0x610] sm:$0xff]
    %v221 = vld [vmem:[%s1 + $0x618] sm:$0xff]
    %v222 = vld [vmem:[%s1 + $0x620] sm:$0xff]
    %v223 = vld [vmem:[%s1 + $0x628] sm:$0xff]
    %v224 = vld [vmem:[%s1 + $0x630] sm:$0xff]
    %v225 = vld [vmem:[%s1 + $0x638] sm:$0xff]
    %v226 = vld [vmem:[%s1 + $0x640] sm:$0xff]
    %v227 = vld [vmem:[%s1 + $0x648] sm:$0xff]
    %v228 = vld [vmem:[%s1 + $0x650] sm:$0xff]
    %v229 = vld [vmem:[%s1 + $0x658] sm:$0xff]
    %v230 = vld [vmem:[%s1 + $0x660] sm:$0xff]
    %v231 = vld [vmem:[%s1 + $0x668] sm:$0xff]
    %v232 = vld [vmem:[%s1 + $0x670] sm:$0xff]
    %v233 = vld [vmem:[%s1 + $0x678] sm:$0xff]
    %v234 = vld [vmem:[%s1 + $0x680] sm:$0xff]
    %v235 = vld [vmem:[%s1 + $0x688] sm:$0xff]
    %v236 = vld [vmem:[%s1 + $0x690] sm:$0xff]
    %v237 = vld [vmem:[%s1 + $0x698] sm:$0xff]
    %v238 = vld [vmem:[%s1 + $0x6a0] sm:$0xff]
    %v239 = vld [vmem:[%s1 + $0x6a8] sm:$0xff]
    %v240 = vld [vmem:[%s1 + $0x6b0] sm:$0xff]
    %v241 = vld [vmem:[%s1 + $0x6b8] sm:$0xff]
    %v242 = vld [vmem:[%s1 + $0x6c0] sm:$0xff]
    %v243 = vld [vmem:[%s1 + $0x6c8] sm:$0xff]
    %v244 = vld [vmem:[%s1 + $0x6d0] sm:$0xff]
    %v245 = vld [vmem:[%s1 + $0x6d8] sm:$0xff]
    %v246 = vld [vmem:[%s1 + $0x6e0] sm:$0xff]
    %v247 = vld [vmem:[%s1 + $0x6e8] sm:$0xff]
    %v248 = vld [vmem:[%s1 + $0x6f0] sm:$0xff]
    %v249 = vld [vmem:[%s1 + $0x6f8] sm:$0xff]
    %v250 = vld [vmem:[%s1 + $0x700] sm:$0xff]
    %v251 = vld [vmem:[%s1 + $0x708] sm:$0xff]
    %v252 = vld [vmem:[%s1 + $0x710] sm:$0xff]
    %v253 = vld [vmem:[%s1 + $0x718] sm:$0xff]
    %v254 = vld [vmem:[%s1 + $0x720] sm:$0xff]
    %v255 = vld [vmem:[%s1 + $0x728] sm:$0xff]
    %v256 = vld [vmem:[%s1 + $0x730] sm:$0xff]
    %v257 = vld [vmem:[%s1 + $0x738] sm:$0xff]
    %v258 = vld [vmem:[%s1 + $0x740] sm:$0xff]
    %v259 = vld [vmem:[%s1 + $0x748] sm:$0xff]
    %v260 = vld [vmem:[%s1 + $0x750] sm:$0xff]
    %v261 = vld [vmem:[%s1 + $0x758] sm:$0xff]
    %v262 = vld [vmem:[%s1 + $0x760] sm:$0xff]
    %v263 = vld [vmem:[%s1 + $0x768] sm:$0xff]
    %v264 = vld [vmem:[%s1 + $0x770] sm:$0xff]
    %v265 = vld [vmem:[%s1 + $0x778] sm:$0xff]
    %v266 = vld [vmem:[%s1 + $0x780] sm:$0xff]
    %v267 = vld [vmem:[%s1 + $0x788] sm:$0xff]
    %v268 = vld [vmem:[%s1 + $0x790] sm:$0xff]
    %v269 = vld [vmem:[%s1 + $0x798] sm:$0xff]
    %v270 = vld [vmem:[%s1 + $0x7a0] sm:$0xff]
    %v271 = vld [vmem:[%s1 + $0x7a8] sm:$0xff]
    %v272 = vld [vmem:[%s1 + $0x7b0] sm:$0xff]
    %v273 = vld [vmem:[%s1 + $0x7b8] sm:$0xff]
    %v274 = vld [vmem:[%s1 + $0x7c0] sm:$0xff]
    %v275 = vld [vmem:[%s1 + $0x7c8] sm:$0xff]
    %v276 = vld [vmem:[%s1 + $0x7d0] sm:$0xff]
    %v277 = vld [vmem:[%s1 + $0x7d8] sm:$0xff]
    %v278 = vld [vmem:[%s1 + $0x7e0] sm:$0xff]
    %v279 = vld [vmem:[%s1 + $0x7e8] sm:$0xff]
    %v280 = vld [vmem:[%s1 + $0x7f0] sm:$0xff]
    %v281 = vld [vmem:[%s1 + $0x7f8] sm:$0xff]
    %v282 = vld [vmem:[%s1 + $0x800] sm:$0xff]
    %v283 = vld [vmem:[%s1 + $0x808] sm:$0xff]
    %v284 = vld [vmem:[%s1 + $0x810] sm:$0xff]
    %v285 = vld [vmem:[%s1 + $0x818] sm:$0xff]
    %v286 = vld [vmem:[%s1 + $0x820] sm:$0xff]
    %v287 = vld [vmem:[%s1 + $0x828] sm:$0xff]
    %v288 = vld [vmem:[%s1 + $0x830] sm:$0xff]
    %v289 = vld [vmem:[%s1 + $0x838] sm:$0xff]
    %v290 = vld [vmem:[%s1 + $0x840] sm:$0xff]
    %v291 = vld [vmem:[%s1 + $0x848] sm:$0xff]
    %v292 = vld [vmem:[%s1 + $0x850] sm:$0xff]
    %v293 = vld [vmem:[%s1 + $0x858] sm:$0xff]
    %v294 = vld [vmem:[%s1 + $0x860] sm:$0xff]
    %v295 = vld [vmem:[%s1 + $0x868] sm:$0xff]
    %v296 = vld [vmem:[%s1 + $0x870] sm:$0xff]
    %v297 = vld [vmem:[%s1 + $0x878] sm:$0xff]
    %v298 = vld [vmem:[%s1 + $0x880] sm:$0xff]
    %v299 = vld [vmem:[%s1 + $0x888] sm:$0xff]
    %v300 = vld [vmem:[%s1 + $0x890] sm:$0xff]
    %v301 = vld [vmem:[%s1 + $0x898] sm:$0xff]
    %v302 = vld [vmem:[%s1 + $0x8a0] sm:$0xff]
    %v303 = vld [vmem:[%s1 + $0x8a8] sm:$0xff]
    %v304 = vld [vmem:[%s1 + $0x8b0] sm:$0xff]
    %v305 = vld [vmem:[%s1 + $0x8b8] sm:$0xff]
    %v306 = vld [vmem:[%s1 + $0x8c0] sm:$0xff]
    %v307 = vld [vmem:[%s1 + $0x8c8] sm:$0xff]
    %v308 = vld [vmem:[%s1 + $0x8d0] sm:$0xff]
    %v309 = vld [vmem:[%s1 + $0x8d8] sm:$0xff]
    %v310 = vld [vmem:[%s1 + $0x8e0] sm:$0xff]
    %v311 = vld [vmem:[%s1 + $0x8e8] sm:$0xff]
    %v312 = vld [vmem:[%s1 + $0x8f0] sm:$0xff]
    %v313 = vld [vmem:[%s1 + $0x8f8] sm:$0xff]
    %v314 = vld [vmem:[%s1 + $0x900] sm:$0xff]
    %v315 = vld [vmem:[%s1 + $0x908] sm:$0xff]
    %v316 = vld [vmem:[%s1 + $0x910] sm:$0xff]
    %v317 = vld [vmem:[%s1 + $0x918] sm:$0xff]
    %v318 = vld [vmem:[%s1 + $0x920] sm:$0xff]
    %v319 = vld [vmem:[%s1 + $0x928] sm:$0xff]
    %v320 = vld [vmem:[%s1 + $0x930] sm:$0xff]
    %v321 = vld [vmem:[%s1 + $0x938] sm:$0xff]
    %v322 = vld [vmem:[%s1 + $0x940] sm:$0xff]
    %v323 = vld [vmem:[%s1 + $0x948] sm:$0xff]
    %v324 = vld [vmem:[%s1 + $0x950] sm:$0xff]
    %v325 = vld [vmem:[%s1 + $0x958] sm:$0xff]
    %v326 = vld [vmem:[%s1 + $0x960] sm:$0xff]
    %v327 = vld [vmem:[%s1 + $0x968] sm:$0xff]
    %v328 = vld [vmem:[%s1 + $0x970] sm:$0xff]
    %v329 = vld [vmem:[%s1 + $0x978] sm:$0xff]
    %v330 = vld [vmem:[%s1 + $0x980] sm:$0xff]
    %v331 = vld [vmem:[%s1 + $0x988] sm:$0xff]
    %v332 = vld [vmem:[%s1 + $0x990] sm:$0xff]
    %v333 = vld [vmem:[%s1 + $0x998] sm:$0xff]
    %v334 = vld [vmem:[%s1 + $0x9a0] sm:$0xff]
    %v335 = vld [vmem:[%s1 + $0x9a8] sm:$0xff]
    %v336 = vld [vmem:[%s1 + $0x9b0] sm:$0xff]
    %v337 = vld [vmem:[%s1 + $0x9b8] sm:$0xff]
    %v338 = vld [vmem:[%s1 + $0x9c0] sm:$0xff]
    %v339 = vld [vmem:[%s1 + $0x9c8] sm:$0xff]
    %v340 = vld [vmem:[%s1 + $0x9d0] sm:$0xff]
    %v341 = vld [vmem:[%s1 + $0x9d8] sm:$0xff]
    %v342 = vld [vmem:[%s1 + $0x9e0] sm:$0xff]
    %v343 = vld [vmem:[%s1 + $0x9e8] sm:$0xff]
    %v344 = vld [vmem:[%s1 + $0x9f0] sm:$0xff]
    %v345 = vld [vmem:[%s1 + $0x9f8] sm:$0xff]
    %v346 = vld [vmem:[%s1 + $0xa00] sm:$0xff]
    %v347 = vld [vmem:[%s1 + $0xa08] sm:$0xff]
    %v348 = vld [vmem:[%s1 + $0xa10] sm:$0xff]
    %v349 = vld [vmem:[%s1 + $0xa18] sm:$0xff]
    %v350 = vld [vmem:[%s1 + $0xa20] sm:$0xff]
    %v351 = vld [vmem:[%s1 + $0xa28] sm:$0xff]
    %v352 = vld [vmem:[%s1 + $0xa30] sm:$0xff]
    %v353 = vld [vmem:[%s1 + $0xa38] sm:$0xff]
    %v354 = vld [vmem:[%s1 + $0xa40] sm:$0xff]
    %v355 = vld [vmem:[%s1 + $0xa48] sm:$0xff]
    %v356 = vld [vmem:[%s1 + $0xa50] sm:$0xff]
    %v357 = vld [vmem:[%s1 + $0xa58] sm:$0xff]
    %v358 = vld [vmem:[%s1 + $0xa60] sm:$0xff]
    %v359 = vld [vmem:[%s1 + $0xa68] sm:$0xff]
    %v360 = vld [vmem:[%s1 + $0xa70] sm:$0xff]
    %v361 = vld [vmem:[%s1 + $0xa78] sm:$0xff]
    %v362 = vld [vmem:[%s1 + $0xa80] sm:$0xff]
    %v363 = vld [vmem:[%s1 + $0xa88] sm:$0xff]
    %v364 = vld [vmem:[%s1 + $0xa90] sm:$0xff]
    %v365 = vld [vmem:[%s1 + $0xa98] sm:$0xff]
    %v366 = vld [vmem:[%s1 + $0xaa0] sm:$0xff]
    %v367 = vld [vmem:[%s1 + $0xaa8] sm:$0xff]
    %v368 = vld [vmem:[%s1 + $0xab0] sm:$0xff]
    %v369 = vld [vmem:[%s1 + $0xab8] sm:$0xff]
    %v370 = vld [vmem:[%s1 + $0xac0] sm:$0xff]
    %v371 = vld [vmem:[%s1 + $0xac8] sm:$0xff]
    %v372 = vld [vmem:[%s1 + $0xad0] sm:$0xff]
    %v373 = vld [vmem:[%s1 + $0xad8] sm:$0xff]
    %v374 = vld [vmem:[%s1 + $0xae0] sm:$0xff]
    %v375 = vld [vmem:[%s1 + $0xae8] sm:$0xff]
    %v376 = vld [vmem:[%s1 + $0xaf0] sm:$0xff]
    %v377 = vld [vmem:[%s1 + $0xaf8] sm:$0xff]
    %v378 = vld [vmem:[%s1 + $0xb00] sm:$0xff]
    %v379 = vld [vmem:[%s1 + $0xb08] sm:$0xff]
    %v380 = vld [vmem:[%s1 + $0xb10] sm:$0xff]
    %v381 = vld [vmem:[%s1 + $0xb18] sm:$0xff]
    %v382 = vld [vmem:[%s1 + $0xb20] sm:$0xff]
    %v383 = vld [vmem:[%s1 + $0xb28] sm:$0xff]
    %v384 = vld [vmem:[%s1 + $0xb30] sm:$0xff]
    %v385 = vld [vmem:[%s1 + $0xb38] sm:$0xff]
    %v386 = vld [vmem:[%s1 + $0xb40] sm:$0xff]
    %v387 = vld [vmem:[%s1 + $0xb48] sm:$0xff]
    %v388 = vld [vmem:[%s1 + $0xb50] sm:$0xff]
    %v389 = vld [vmem:[%s1 + $0xb58] sm:$0xff]
    %v390 = vld [vmem:[%s1 + $0xb60] sm:$0xff]
    %v391 = vld [vmem:[%s1 + $0xb68] sm:$0xff]
    %v392 = vld [vmem:[%s1 + $0xb70] sm:$0xff]
    %v393 = vld [vmem:[%s1 + $0xb78] sm:$0xff]
    %v394 = vld [vmem:[%s1 + $0xb80] sm:$0xff]
    %v395 = vld [vmem:[%s1 + $0xb88] sm:$0xff]
    %v396 = vld [vmem:[%s1 + $0xb90] sm:$0xff]
    %v397 = vld [vmem:[%s1 + $0xb98] sm:$0xff]
    %v398 = vld [vmem:[%s1 + $0xba0] sm:$0xff]
    %v399 = vld [vmem:[%s1 + $0xba8] sm:$0xff]
    %v400 = vld [vmem:[%s1 + $0xbb0] sm:$0xff]
    %v401 = vld [vmem:[%s1 + $0xbb8] sm:$0xff]
    %v402 = vld [vmem:[%s1 + $0xbc0] sm:$0xff]
    %v403 = vld [vmem:[%s1 + $0xbc8] sm:$0xff]
    %v404 = vld [vmem:[%s1 + $0xbd0] sm:$0xff]
    %v405 = vld [vmem:[%s1 + $0xbd8] sm:$0xff]
    %v406 = vld [vmem:[%s1 + $0xbe0] sm:$0xff]
    %v407 = vld [vmem:[%s1 + $0xbe8] sm:$0xff]
    %v408 = vld [vmem:[%s1 + $0xbf0] sm:$0xff]
    %v409 = vld [vmem:[%s1 + $0xbf8] sm:$0xff]
    %v410 = vld [vmem:[%s1 + $0xc00] sm:$0xff]
    %v411 = vld [vmem:[%s1 + $0xc08] sm:$0xff]
    %v412 = vld [vmem:[%s1 + $0xc10] sm:$0xff]
    %v413 = vld [vmem:[%s1 + $0xc18] sm:$0xff]
    %v414 = vld [vmem:[%s1 + $0xc20] sm:$0xff]
    %v415 = vld [vmem:[%s1 + $0xc28] sm:$0xff]
    %v416 = vld [vmem:[%s1 + $0xc30] sm:$0xff]
    %v417 = vld [vmem:[%s1 + $0xc38] sm:$0xff]
    %v418 = vld [vmem:[%s1 + $0xc40] sm:$0xff]
    %v419 = vld [vmem:[%s1 + $0xc48] sm:$0xff]
    %v420 = vld [vmem:[%s1 + $0xc50] sm:$0xff]
    %v421 = vld [vmem:[%s1 + $0xc58] sm:$0xff]
    %v422 = vld [vmem:[%s1 + $0xc60] sm:$0xff]
    %v423 = vld [vmem:[%s1 + $0xc68] sm:$0xff]
    %v424 = vld [vmem:[%s1 + $0xc70] sm:$0xff]
    %v425 = vld [vmem:[%s1 + $0xc78] sm:$0xff]
    %v426 = vld [vmem:[%s1 + $0xc80] sm:$0xff]
    %v427 = vld [vmem:[%s1 + $0xc88] sm:$0xff]
    %v428 = vld [vmem:[%s1 + $0xc90] sm:$0xff]
    %v429 = vld [vmem:[%s1 + $0xc98] sm:$0xff]
    %v430 = vld [vmem:[%s1 + $0xca0] sm:$0xff]
    %v431 = vld [vmem:[%s1 + $0xca8] sm:$0xff]
    %v432 = vld [vmem:[%s1 + $0xcb0] sm:$0xff]
    %v433 = vld [vmem:[%s1 + $0xcb8] sm:$0xff]
    %v434 = vld [vmem:[%s1 + $0xcc0] sm:$0xff]
    %v435 = vld [vmem:[%s1 + $0xcc8] sm:$0xff]
    %v436 = vld [vmem:[%s1 + $0xcd0] sm:$0xff]
    %v437 = vld [vmem:[%s1 + $0xcd8] sm:$0xff]
    %v438 = vld [vmem:[%s1 + $0xce0] sm:$0xff]
    %v439 = vld [vmem:[%s1 + $0xce8] sm:$0xff]
    %v440 = vld [vmem:[%s1 + $0xcf0] sm:$0xff]
    %v441 = vld [vmem:[%s1 + $0xcf8] sm:$0xff]
    %v442 = vld [vmem:[%s1 + $0xd00] sm:$0xff]
    %v443 = vld [vmem:[%s1 + $0xd08] sm:$0xff]
    %v444 = vld [vmem:[%s1 + $0xd10] sm:$0xff]
    %v445 = vld [vmem:[%s1 + $0xd18] sm:$0xff]
    %v446 = vld [vmem:[%s1 + $0xd20] sm:$0xff]
    %v447 = vld [vmem:[%s1 + $0xd28] sm:$0xff]
    %v448 = vld [vmem:[%s1 + $0xd30] sm:$0xff]
    %v449 = vld [vmem:[%s1 + $0xd38] sm:$0xff]
    %v450 = vld [vmem:[%s1 + $0xd40] sm:$0xff]
    %v451 = vld [vmem:[%s1 + $0xd48] sm:$0xff]
    %v452 = vld [vmem:[%s1 + $0xd50] sm:$0xff]
    %v453 = vld [vmem:[%s1 + $0xd58] sm:$0xff]
    %v454 = vld [vmem:[%s1 + $0xd60] sm:$0xff]
    %v455 = vld [vmem:[%s1 + $0xd68] sm:$0xff]
    %v456 = vld [vmem:[%s1 + $0xd70] sm:$0xff]
    %v457 = vld [vmem:[%s1 + $0xd78] sm:$0xff]
    %v458 = vld [vmem:[%s1 + $0xd80] sm:$0xff]
    %v459 = vld [vmem:[%s1 + $0xd88] sm:$0xff]
    %v460 = vld [vmem:[%s1 + $0xd90] sm:$0xff]
    %v461 = vld [vmem:[%s1 + $0xd98] sm:$0xff]
    %v462 = vld [vmem:[%s1 + $0xda0] sm:$0xff]
    %v463 = vld [vmem:[%s1 + $0xda8] sm:$0xff]
    %v464 = vld [vmem:[%s1 + $0xdb0] sm:$0xff]
    %v465 = vld [vmem:[%s1 + $0xdb8] sm:$0xff]
    %v466 = vld [vmem:[%s1 + $0xdc0] sm:$0xff]
    %v467 = vld [vmem:[%s1 + $0xdc8] sm:$0xff]
    %v468 = vld [vmem:[%s1 + $0xdd0] sm:$0xff]
    %v469 = vld [vmem:[%s1 + $0xdd8] sm:$0xff]
    %v470 = vld [vmem:[%s1 + $0xde0] sm:$0xff]
    %v471 = vld [vmem:[%s1 + $0xde8] sm:$0xff]
    %v472 = vld [vmem:[%s1 + $0xdf0] sm:$0xff]
    %v473 = vld [vmem:[%s1 + $0xdf8] sm:$0xff]
    %v474 = vld [vmem:[%s1 + $0xe00] sm:$0xff]
    %v475 = vld [vmem:[%s1 + $0xe08] sm:$0xff]
    %v476 = vld [vmem:[%s1 + $0xe10] sm:$0xff]
    %v477 = vld [vmem:[%s1 + $0xe18] sm:$0xff]
    %v478 = vld [vmem:[%s1 + $0xe20] sm:$0xff]
    %v479 = vld [vmem:[%s1 + $0xe28] sm:$0xff]
    %v480 = vld [vmem:[%s1 + $0xe30] sm:$0xff]
    %v481 = vld [vmem:[%s1 + $0xe38] sm:$0xff]
    %v482 = vld [vmem:[%s1 + $0xe40] sm:$0xff]
    %v483 = vld [vmem:[%s1 + $0xe48] sm:$0xff]
    %v484 = vld [vmem:[%s1 + $0xe50] sm:$0xff]
    %v485 = vld [vmem:[%s1 + $0xe58] sm:$0xff]
    %v486 = vld [vmem:[%s1 + $0xe60] sm:$0xff]
    %v487 = vld [vmem:[%s1 + $0xe68] sm:$0xff]
    %v488 = vld [vmem:[%s1 + $0xe70] sm:$0xff]
    %v489 = vld [vmem:[%s1 + $0xe78] sm:$0xff]
    %v490 = vld [vmem:[%s1 + $0xe80] sm:$0xff]
    %v491 = vld [vmem:[%s1 + $0xe88] sm:$0xff]
    %v492 = vld [vmem:[%s1 + $0xe90] sm:$0xff]
    %v493 = vld [vmem:[%s1 + $0xe98] sm:$0xff]
    %v494 = vld [vmem:[%s1 + $0xea0] sm:$0xff]
    %v495 = vld [vmem:[%s1 + $0xea8] sm:$0xff]
    %v496 = vld [vmem:[%s1 + $0xeb0] sm:$0xff]
    %v497 = vld [vmem:[%s1 + $0xeb8] sm:$0xff]
    %v498 = vld [vmem:[%s1 + $0xec0] sm:$0xff]
    %v499 = vld [vmem:[%s1 + $0xec8] sm:$0xff]
    %v500 = vld [vmem:[%s1 + $0xed0] sm:$0xff]
    %v501 = vld [vmem:[%s1 + $0xed8] sm:$0xff]
    %v502 = vld [vmem:[%s1 + $0xee0] sm:$0xff]
    %v503 = vld [vmem:[%s1 + $0xee8] sm:$0xff]
    %v504 = vld [vmem:[%s1 + $0xef0] sm:$0xff]
    %v505 = vld [vmem:[%s1 + $0xef8] sm:$0xff]
    %v506 = vld [vmem:[%s1 + $0xf00] sm:$0xff]
    %v507 = vld [vmem:[%s1 + $0xf08] sm:$0xff]
    %v508 = vld [vmem:[%s1 + $0xf10] sm:$0xff]
    %v509 = vld [vmem:[%s1 + $0xf18] sm:$0xff]
    %v510 = vld [vmem:[%s1 + $0xf20] sm:$0xff]
    %v511 = vld [vmem:[%s1 + $0xf28] sm:$0xff]
    %v512 = vld [vmem:[%s1 + $0xf30] sm:$0xff]
    %v513 = vld [vmem:[%s1 + $0xf38] sm:$0xff]
    %v514 = vld [vmem:[%s1 + $0xf40] sm:$0xff]
    %v515 = vld [vmem:[%s1 + $0xf48] sm:$0xff]
    %v516 = vld [vmem:[%s1 + $0xf50] sm:$0xff]
    %v517 = vld [vmem:[%s1 + $0xf58] sm:$0xff]
    %v518 = vld [vmem:[%s1 + $0xf60] sm:$0xff]
    %v519 = vld [vmem:[%s1 + $0xf68] sm:$0xff]
    %v520 = vld [vmem:[%s1 + $0xf70] sm:$0xff]
    %v521 = vld [vmem:[%s1 + $0xf78] sm:$0xff]
    %v522 = vld [vmem:[%s1 + $0xf80] sm:$0xff]
    %v523 = vld [vmem:[%s1 + $0xf88] sm:$0xff]
    %v524 = vld [vmem:[%s1 + $0xf90] sm:$0xff]
    %v525 = vld [vmem:[%s1 + $0xf98] sm:$0xff]
    %v526 = vld [vmem:[%s1 + $0xfa0] sm:$0xff]
    %v527 = vld [vmem:[%s1 + $0xfa8] sm:$0xff]
    %v528 = vld [vmem:[%s1 + $0xfb0] sm:$0xff]
    %v529 = vld [vmem:[%s1 + $0xfb8] sm:$0xff]
    %v530 = vld [vmem:[%s1 + $0xfc0] sm:$0xff]
    %v531 = vld [vmem:[%s1 + $0xfc8] sm:$0xff]
    %v532 = vld [vmem:[%s1 + $0xfd0] sm:$0xff]
    %v533 = vld [vmem:[%s1 + $0xfd8] sm:$0xff]
    %v534 = vld [vmem:[%s1 + $0xfe0] sm:$0xff]
    %v535 = vld [vmem:[%s1 + $0xfe8] sm:$0xff]
    %v536 = vld [vmem:[%s1 + $0xff0] sm:$0xff]
    %v537 = vld [vmem:[%s1 + $0xff8] sm:$0xff]
    %v538 = vld [vmem:[%s1 + $0x1000] sm:$0xff]
    %v539 = vld [vmem:[%s1 + $0x1008] sm:$0xff]
    %v540 = vld [vmem:[%s1 + $0x1010] sm:$0xff]
    %v541 = vld [vmem:[%s1 + $0x1018] sm:$0xff]
    %v542 = vld [vmem:[%s1 + $0x1020] sm:$0xff]
    %v543 = vld [vmem:[%s1 + $0x1028] sm:$0xff]
    %v544 = vld [vmem:[%s1 + $0x1030] sm:$0xff]
    %v545 = vld [vmem:[%s1 + $0x1038] sm:$0xff]
    %v546 = vld [vmem:[%s1 + $0x1040] sm:$0xff]
    %v547 = vld [vmem:[%s1 + $0x1048] sm:$0xff]
    %v548 = vld [vmem:[%s1 + $0x1050] sm:$0xff]
    %v549 = vld [vmem:[%s1 + $0x1058] sm:$0xff]
    %v550 = vld [vmem:[%s1 + $0x1060] sm:$0xff]
    %v551 = vld [vmem:[%s1 + $0x1068] sm:$0xff]
    %v552 = vld [vmem:[%s1 + $0x1070] sm:$0xff]
    %v553 = vld [vmem:[%s1 + $0x1078] sm:$0xff]
    %v554 = vld [vmem:[%s1 + $0x1080] sm:$0xff]
    %v555 = vld [vmem:[%s1 + $0x1088] sm:$0xff]
    %v556 = vld [vmem:[%s1 + $0x1090] sm:$0xff]
    %v557 = vld [vmem:[%s1 + $0x1098] sm:$0xff]
    %v558 = vld [vmem:[%s1 + $0x10a0] sm:$0xff]
    %v559 = vld [vmem:[%s1 + $0x10a8] sm:$0xff]
    %v560 = vld [vmem:[%s1 + $0x10b0] sm:$0xff]
    %v561 = vld [vmem:[%s1 + $0x10b8] sm:$0xff]
    %v562 = vld [vmem:[%s1 + $0x10c0] sm:$0xff]
    %v563 = vld [vmem:[%s1 + $0x10c8] sm:$0xff]
    %v564 = vld [vmem:[%s1 + $0x10d0] sm:$0xff]
    %v565 = vld [vmem:[%s1 + $0x10d8] sm:$0xff]
    %v566 = vld [vmem:[%s1 + $0x10e0] sm:$0xff]
    %v567 = vld [vmem:[%s1 + $0x10e8] sm:$0xff]
    %v568 = vld [vmem:[%s1 + $0x10f0] sm:$0xff]
    %v569 = vld [vmem:[%s1 + $0x10f8] sm:$0xff]
    %v570 = vld [vmem:[%s1 + $0x1100] sm:$0xff]
    %v571 = vld [vmem:[%s1 + $0x1108] sm:$0xff]
    %v572 = vld [vmem:[%s1 + $0x1110] sm:$0xff]
    %v573 = vld [vmem:[%s1 + $0x1118] sm:$0xff]
    %v574 = vld [vmem:[%s1 + $0x1120] sm:$0xff]
    %v575 = vld [vmem:[%s1 + $0x1128] sm:$0xff]
    %v576 = vld [vmem:[%s1 + $0x1130] sm:$0xff]
    %v577 = vld [vmem:[%s1 + $0x1138] sm:$0xff]
    %v578 = vld [vmem:[%s1 + $0x1140] sm:$0xff]
    %v579 = vld [vmem:[%s1 + $0x1148] sm:$0xff]
    %v580 = vld [vmem:[%s1 + $0x1150] sm:$0xff]
    %v581 = vld [vmem:[%s1 + $0x1158] sm:$0xff]
    %v582 = vld [vmem:[%s1 + $0x1160] sm:$0xff]
    %v583 = vld [vmem:[%s1 + $0x1168] sm:$0xff]
    %v584 = vld [vmem:[%s1 + $0x1170] sm:$0xff]
    %v585 = vld [vmem:[%s1 + $0x1178] sm:$0xff]
    %v586 = vld [vmem:[%s1 + $0x1180] sm:$0xff]
    %v587 = vld [vmem:[%s1 + $0x1188] sm:$0xff]
    %v588 = vld [vmem:[%s1 + $0x1190] sm:$0xff]
    %v589 = vld [vmem:[%s1 + $0x1198] sm:$0xff]
    %v590 = vld [vmem:[%s1 + $0x11a0] sm:$0xff]
    %v591 = vld [vmem:[%s1 + $0x11a8] sm:$0xff]
    %v592 = vld [vmem:[%s1 + $0x11b0] sm:$0xff]
    %v593 = vld [vmem:[%s1 + $0x11b8] sm:$0xff]
    %v594 = vld [vmem:[%s1 + $0x11c0] sm:$0xff]
    %v595 = vld [vmem:[%s1 + $0x11c8] sm:$0xff]
    %v596 = vld [vmem:[%s1 + $0x11d0] sm:$0xff]
    %v597 = vld [vmem:[%s1 + $0x11d8] sm:$0xff]
    %v598 = vld [vmem:[%s1 + $0x11e0] sm:$0xff]
    %v599 = vld [vmem:[%s1 + $0x11e8] sm:$0xff]
    %v600 = vld [vmem:[%s1 + $0x11f0] sm:$0xff]
    %v601 = vld [vmem:[%s1 + $0x11f8] sm:$0xff]
    %v602 = vld [vmem:[%s1 + $0x1200] sm:$0xff]
    %v603 = vld [vmem:[%s1 + $0x1208] sm:$0xff]
    %v604 = vld [vmem:[%s1 + $0x1210] sm:$0xff]
    %v605 = vld [vmem:[%s1 + $0x1218] sm:$0xff]
    %v606 = vld [vmem:[%s1 + $0x1220] sm:$0xff]
    %v607 = vld [vmem:[%s1 + $0x1228] sm:$0xff]
    %v608 = vld [vmem:[%s1 + $0x1230] sm:$0xff]
    %v609 = vld [vmem:[%s1 + $0x1238] sm:$0xff]
    %v610 = vld [vmem:[%s1 + $0x1240] sm:$0xff]
    %v611 = vld [vmem:[%s1 + $0x1248] sm:$0xff]
    %v612 = vld [vmem:[%s1 + $0x1250] sm:$0xff]
    %v613 = vld [vmem:[%s1 + $0x1258] sm:$0xff]
    %v614 = vld [vmem:[%s1 + $0x1260] sm:$0xff]
    %v615 = vld [vmem:[%s1 + $0x1268] sm:$0xff]
    %v616 = vld [vmem:[%s1 + $0x1270] sm:$0xff]
    %v617 = vld [vmem:[%s1 + $0x1278] sm:$0xff]
    %v618 = vld [vmem:[%s1 + $0x1280] sm:$0xff]
    %v619 = vld [vmem:[%s1 + $0x1288] sm:$0xff]
    %v620 = vld [vmem:[%s1 + $0x1290] sm:$0xff]
    %v621 = vld [vmem:[%s1 + $0x1298] sm:$0xff]
    %v622 = vld [vmem:[%s1 + $0x12a0] sm:$0xff]
    %v623 = vld [vmem:[%s1 + $0x12a8] sm:$0xff]
    %v624 = vld [vmem:[%s1 + $0x12b0] sm:$0xff]
    %v625 = vld [vmem:[%s1 + $0x12b8] sm:$0xff]
    %v626 = vld [vmem:[%s1 + $0x12c0] sm:$0xff]
    %v627 = vld [vmem:[%s1 + $0x12c8] sm:$0xff]
    %v628 = vld [vmem:[%s1 + $0x12d0] sm:$0xff]
    %v629 = vld [vmem:[%s1 + $0x12d8] sm:$0xff]
    %v630 = vld [vmem:[%s1 + $0x12e0] sm:$0xff]
    %v631 = vld [vmem:[%s1 + $0x12e8] sm:$0xff]
    %v632 = vld [vmem:[%s1 + $0x12f0] sm:$0xff]
    %v633 = vld [vmem:[%s1 + $0x12f8] sm:$0xff]
    %v634 = vld [vmem:[%s1 + $0x1300] sm:$0xff]
    %v635 = vld [vmem:[%s1 + $0x1308] sm:$0xff]
    %v636 = vld [vmem:[%s1 + $0x1310] sm:$0xff]
    %v637 = vld [vmem:[%s1 + $0x1318] sm:$0xff]
    %v638 = vld [vmem:[%s1 + $0x1320] sm:$0xff]
    %v639 = vld [vmem:[%s1 + $0x1328] sm:$0xff]
    %v640 = vld [vmem:[%s1 + $0x1330] sm:$0xff]
    %v641 = vld [vmem:[%s1 + $0x1338] sm:$0xff]
    %v642 = vld [vmem:[%s1 + $0x1340] sm:$0xff]
    %v643 = vld [vmem:[%s1 + $0x1348] sm:$0xff]
    %v644 = vld [vmem:[%s1 + $0x1350] sm:$0xff]
    %v645 = vld [vmem:[%s1 + $0x1358] sm:$0xff]
    %v646 = vld [vmem:[%s1 + $0x1360] sm:$0xff]
    %v647 = vld [vmem:[%s1 + $0x1368] sm:$0xff]
    %v648 = vld [vmem:[%s1 + $0x1370] sm:$0xff]
    %v649 = vld [vmem:[%s1 + $0x1378] sm:$0xff]
    %v650 = vld [vmem:[%s1 + $0x1380] sm:$0xff]
    %v651 = vld [vmem:[%s1 + $0x1388] sm:$0xff]
    %v652 = vld [vmem:[%s1 + $0x1390] sm:$0xff]
    %v653 = vld [vmem:[%s1 + $0x1398] sm:$0xff]
    %v654 = vld [vmem:[%s1 + $0x13a0] sm:$0xff]
    %v655 = vld [vmem:[%s1 + $0x13a8] sm:$0xff]
    %v656 = vld [vmem:[%s1 + $0x13b0] sm:$0xff]
    %v657 = vld [vmem:[%s1 + $0x13b8] sm:$0xff]
    %v658 = vld [vmem:[%s1 + $0x13c0] sm:$0xff]
    %v659 = vld [vmem:[%s1 + $0x13c8] sm:$0xff]
    %v660 = vld [vmem:[%s1 + $0x13d0] sm:$0xff]
    %v661 = vld [vmem:[%s1 + $0x13d8] sm:$0xff]
    %v662 = vld [vmem:[%s1 + $0x13e0] sm:$0xff]
    %v663 = vld [vmem:[%s1 + $0x13e8] sm:$0xff]
    %v664 = vld [vmem:[%s1 + $0x13f0] sm:$0xff]
    %v665 = vld [vmem:[%s1 + $0x13f8] sm:$0xff]
    %v666 = vld [vmem:[%s1 + $0x1400] sm:$0xff]
    %v667 = vld [vmem:[%s1 + $0x1408] sm:$0xff]
    %v668 = vld [vmem:[%s1 + $0x1410] sm:$0xff]
    %v669 = vld [vmem:[%s1 + $0x1418] sm:$0xff]
    %v670 = vld [vmem:[%s1 + $0x1420] sm:$0xff]
    %v671 = vld [vmem:[%s1 + $0x1428] sm:$0xff]
    %v672 = vld [vmem:[%s1 + $0x1430] sm:$0xff]
    %v673 = vld [vmem:[%s1 + $0x1438] sm:$0xff]
    %v674 = vld [vmem:[%s1 + $0x1440] sm:$0xff]
    %v675 = vld [vmem:[%s1 + $0x1448] sm:$0xff]
    %v676 = vld [vmem:[%s1 + $0x1450] sm:$0xff]
    %v677 = vld [vmem:[%s1 + $0x1458] sm:$0xff]
    %v678 = vld [vmem:[%s1 + $0x1460] sm:$0xff]
    %v679 = vld [vmem:[%s1 + $0x1468] sm:$0xff]
    %v680 = vld [vmem:[%s1 + $0x1470] sm:$0xff]
    %v681 = vld [vmem:[%s1 + $0x1478] sm:$0xff]
    %v682 = vld [vmem:[%s1 + $0x1480] sm:$0xff]
    %v683 = vld [vmem:[%s1 + $0x1488] sm:$0xff]
    %v684 = vld [vmem:[%s1 + $0x1490] sm:$0xff]
    %v685 = vld [vmem:[%s1 + $0x1498] sm:$0xff]
    %v686 = vld [vmem:[%s1 + $0x14a0] sm:$0xff]
    %v687 = vld [vmem:[%s1 + $0x14a8] sm:$0xff]
    %v688 = vld [vmem:[%s1 + $0x14b0] sm:$0xff]
    %v689 = vld [vmem:[%s1 + $0x14b8] sm:$0xff]
    %v690 = vld [vmem:[%s1 + $0x14c0] sm:$0xff]
    %v691 = vld [vmem:[%s1 + $0x14c8] sm:$0xff]
    %v692 = vld [vmem:[%s1 + $0x14d0] sm:$0xff]
    %v693 = vld [vmem:[%s1 + $0x14d8] sm:$0xff]
    %v694 = vld [vmem:[%s1 + $0x14e0] sm:$0xff]
    %v695 = vld [vmem:[%s1 + $0x14e8] sm:$0xff]
    %v696 = vld [vmem:[%s1 + $0x14f0] sm:$0xff]
    %v697 = vld [vmem:[%s1 + $0x14f8] sm:$0xff]
    %v698 = vld [vmem:[%s1 + $0x1500] sm:$0xff]
    %v699 = vld [vmem:[%s1 + $0x1508] sm:$0xff]
    %v700 = vld [vmem:[%s1 + $0x1510] sm:$0xff]
    %v701 = vld [vmem:[%s1 + $0x1518] sm:$0xff]
    %v702 = vld [vmem:[%s1 + $0x1520] sm:$0xff]
    %v703 = vld [vmem:[%s1 + $0x1528] sm:$0xff]
    %v704 = vld [vmem:[%s1 + $0x1530] sm:$0xff]
    %v705 = vld [vmem:[%s1 + $0x1538] sm:$0xff]
    %v706 = vld [vmem:[%s1 + $0x1540] sm:$0xff]
    %v707 = vld [vmem:[%s1 + $0x1548] sm:$0xff]
    %v708 = vld [vmem:[%s1 + $0x1550] sm:$0xff]
    %v709 = vld [vmem:[%s1 + $0x1558] sm:$0xff]
    %v710 = vld [vmem:[%s1 + $0x1560] sm:$0xff]
    %v711 = vld [vmem:[%s1 + $0x1568] sm:$0xff]
    %v712 = vld [vmem:[%s1 + $0x1570] sm:$0xff]
    %v713 = vld [vmem:[%s1 + $0x1578] sm:$0xff]
    %v714 = vld [vmem:[%s1 + $0x1580] sm:$0xff]
    %v715 = vld [vmem:[%s1 + $0x1588] sm:$0xff]
    %v716 = vld [vmem:[%s1 + $0x1590] sm:$0xff]
    %v717 = vld [vmem:[%s1 + $0x1598] sm:$0xff]
    %v718 = vld [vmem:[%s1 + $0x15a0] sm:$0xff]
    %v719 = vld [vmem:[%s1 + $0x15a8] sm:$0xff]
    %v720 = vld [vmem:[%s1 + $0x15b0] sm:$0xff]
    %v721 = vld [vmem:[%s1 + $0x15b8] sm:$0xff]
    %v722 = vld [vmem:[%s1 + $0x15c0] sm:$0xff]
    %v723 = vld [vmem:[%s1 + $0x15c8] sm:$0xff]
    %v724 = vld [vmem:[%s1 + $0x15d0] sm:$0xff]
    %v725 = vld [vmem:[%s1 + $0x15d8] sm:$0xff]
    %v726 = vld [vmem:[%s1 + $0x15e0] sm:$0xff]
    %v727 = vld [vmem:[%s1 + $0x15e8] sm:$0xff]
    %v728 = vld [vmem:[%s1 + $0x15f0] sm:$0xff]
    %v729 = vld [vmem:[%s1 + $0x15f8] sm:$0xff]
    %v730 = vld [vmem:[%s1 + $0x1600] sm:$0xff]
    %v731 = vld [vmem:[%s1 + $0x1608] sm:$0xff]
    %v732 = vld [vmem:[%s1 + $0x1610] sm:$0xff]
    %v733 = vld [vmem:[%s1 + $0x1618] sm:$0xff]
    %v734 = vld [vmem:[%s1 + $0x1620] sm:$0xff]
    %v735 = vld [vmem:[%s1 + $0x1628] sm:$0xff]
    %v736 = vld [vmem:[%s1 + $0x1630] sm:$0xff]
    %v737 = vld [vmem:[%s1 + $0x1638] sm:$0xff]
    %v738 = vld [vmem:[%s1 + $0x1640] sm:$0xff]
    %v739 = vld [vmem:[%s1 + $0x1648] sm:$0xff]
    %v740 = vld [vmem:[%s1 + $0x1650] sm:$0xff]
    %v741 = vld [vmem:[%s1 + $0x1658] sm:$0xff]
    %v742 = vld [vmem:[%s1 + $0x1660] sm:$0xff]
    %v743 = vld [vmem:[%s1 + $0x1668] sm:$0xff]
    %v744 = vld [vmem:[%s1 + $0x1670] sm:$0xff]
    %v745 = vld [vmem:[%s1 + $0x1678] sm:$0xff]
    %v746 = vld [vmem:[%s1 + $0x1680] sm:$0xff]
    %v747 = vld [vmem:[%s1 + $0x1688] sm:$0xff]
    %v748 = vld [vmem:[%s1 + $0x1690] sm:$0xff]
    %v749 = vld [vmem:[%s1 + $0x1698] sm:$0xff]
    %v750 = vld [vmem:[%s1 + $0x16a0] sm:$0xff]
    %v751 = vld [vmem:[%s1 + $0x16a8] sm:$0xff]
    %v752 = vld [vmem:[%s1 + $0x16b0] sm:$0xff]
    %v753 = vld [vmem:[%s1 + $0x16b8] sm:$0xff]
    %v754 = vld [vmem:[%s1 + $0x16c0] sm:$0xff]
    %v755 = vld [vmem:[%s1 + $0x16c8] sm:$0xff]
    %v756 = vld [vmem:[%s1 + $0x16d0] sm:$0xff]
    %v757 = vld [vmem:[%s1 + $0x16d8] sm:$0xff]
    %v758 = vld [vmem:[%s1 + $0x16e0] sm:$0xff]
    %v759 = vld [vmem:[%s1 + $0x16e8] sm:$0xff]
    %v760 = vld [vmem:[%s1 + $0x16f0] sm:$0xff]
    %v761 = vld [vmem:[%s1 + $0x16f8] sm:$0xff]
    %v762 = vld [vmem:[%s1 + $0x1700] sm:$0xff]
    %v763 = vld [vmem:[%s1 + $0x1708] sm:$0xff]
    %v764 = vld [vmem:[%s1 + $0x1710] sm:$0xff]
    %v765 = vld [vmem:[%s1 + $0x1718] sm:$0xff]
    %v766 = vld [vmem:[%s1 + $0x1720] sm:$0xff]
    %v767 = vld [vmem:[%s1 + $0x1728] sm:$0xff]
    %v768 = vld [vmem:[%s1 + $0x1730] sm:$0xff]
    %v769 = vld [vmem:[%s1 + $0x1738] sm:$0xff]
    %v770 = vld [vmem:[%s1 + $0x1740] sm:$0xff]
    %v771 = vld [vmem:[%s1 + $0x1748] sm:$0xff]
    %v772 = vld [vmem:[%s1 + $0x1750] sm:$0xff]
    %v773 = vld [vmem:[%s1 + $0x1758] sm:$0xff]
    %v774 = vld [vmem:[%s1 + $0x1760] sm:$0xff]
    %v775 = vld [vmem:[%s1 + $0x1768] sm:$0xff]
    %v776 = vld [vmem:[%s1 + $0x1770] sm:$0xff]
    %v777 = vld [vmem:[%s1 + $0x1778] sm:$0xff]
    %v778 = vld [vmem:[%s1 + $0x1780] sm:$0xff]
    %v779 = vld [vmem:[%s1 + $0x1788] sm:$0xff]
    %v780 = vld [vmem:[%s1 + $0x1790] sm:$0xff]
    %v781 = vld [vmem:[%s1 + $0x1798] sm:$0xff]
    %v782 = vld [vmem:[%s1 + $0x17a0] sm:$0xff]
    %v783 = vld [vmem:[%s1 + $0x17a8] sm:$0xff]
    %v784 = vld [vmem:[%s1 + $0x17b0] sm:$0xff]
    %v785 = vld [vmem:[%s1 + $0x17b8] sm:$0xff]
    %v786 = vld [vmem:[%s1 + $0x17c0] sm:$0xff]
    %v787 = vld [vmem:[%s1 + $0x17c8] sm:$0xff]
    %v788 = vld [vmem:[%s1 + $0x17d0] sm:$0xff]
    %v789 = vld [vmem:[%s1 + $0x17d8] sm:$0xff]
    %v790 = vld [vmem:[%s1 + $0x17e0] sm:$0xff]
    %v791 = vld [vmem:[%s1 + $0x17e8] sm:$0xff]
    %v792 = vld [vmem:[%s1 + $0x17f0] sm:$0xff]
    %v793 = vld [vmem:[%s1 + $0x17f8] sm:$0xff]
    %v794 = vld [vmem:[%s1 + $0x1800] sm:$0xff]
    %v795 = vld [vmem:[%s1 + $0x1808] sm:$0xff]
    %v796 = vld [vmem:[%s1 + $0x1810] sm:$0xff]
    %v797 = vld [vmem:[%s1 + $0x1818] sm:$0xff]
    %v798 = vld [vmem:[%s1 + $0x1820] sm:$0xff]
    %v799 = vld [vmem:[%s1 + $0x1828] sm:$0xff]
    %v800 = vld [vmem:[%s1 + $0x1830] sm:$0xff]
    %v801 = vld [vmem:[%s1 + $0x1838] sm:$0xff]
    %v802 = vld [vmem:[%s1 + $0x1840] sm:$0xff]
    %v803 = vld [vmem:[%s1 + $0x1848] sm:$0xff]
    %v804 = vld [vmem:[%s1 + $0x1850] sm:$0xff]
    %v805 = vld [vmem:[%s1 + $0x1858] sm:$0xff]
    %v806 = vld [vmem:[%s1 + $0x1860] sm:$0xff]
    %v807 = vld [vmem:[%s1 + $0x1868] sm:$0xff]
    %v808 = vld [vmem:[%s1 + $0x1870] sm:$0xff]
    %v809 = vld [vmem:[%s1 + $0x1878] sm:$0xff]
    %v810 = vld [vmem:[%s1 + $0x1880] sm:$0xff]
    %v811 = vld [vmem:[%s1 + $0x1888] sm:$0xff]
    %v812 = vld [vmem:[%s1 + $0x1890] sm:$0xff]
    %v813 = vld [vmem:[%s1 + $0x1898] sm:$0xff]
    %v814 = vld [vmem:[%s1 + $0x18a0] sm:$0xff]
    %v815 = vld [vmem:[%s1 + $0x18a8] sm:$0xff]
    %v816 = vld [vmem:[%s1 + $0x18b0] sm:$0xff]
    %v817 = vld [vmem:[%s1 + $0x18b8] sm:$0xff]
    %v818 = vld [vmem:[%s1 + $0x18c0] sm:$0xff]
    %v819 = vld [vmem:[%s1 + $0x18c8] sm:$0xff]
    %v820 = vld [vmem:[%s1 + $0x18d0] sm:$0xff]
    %v821 = vld [vmem:[%s1 + $0x18d8] sm:$0xff]
    %v822 = vld [vmem:[%s1 + $0x18e0] sm:$0xff]
    %v823 = vld [vmem:[%s1 + $0x18e8] sm:$0xff]
    %v824 = vld [vmem:[%s1 + $0x18f0] sm:$0xff]
    %v825 = vld [vmem:[%s1 + $0x18f8] sm:$0xff]
    %v826 = vld [vmem:[%s1 + $0x1900] sm:$0xff]
    %v827 = vld [vmem:[%s1 + $0x1908] sm:$0xff]
    %v828 = vld [vmem:[%s1 + $0x1910] sm:$0xff]
    %v829 = vld [vmem:[%s1 + $0x1918] sm:$0xff]
    %v830 = vld [vmem:[%s1 + $0x1920] sm:$0xff]
    %v831 = vld [vmem:[%s1 + $0x1928] sm:$0xff]
    %v832 = vld [vmem:[%s1 + $0x1930] sm:$0xff]
    %v833 = vld [vmem:[%s1 + $0x1938] sm:$0xff]
    %v834 = vld [vmem:[%s1 + $0x1940] sm:$0xff]
    %v835 = vld [vmem:[%s1 + $0x1948] sm:$0xff]
    %v836 = vld [vmem:[%s1 + $0x1950] sm:$0xff]
    %v837 = vld [vmem:[%s1 + $0x1958] sm:$0xff]
    %v838 = vld [vmem:[%s1 + $0x1960] sm:$0xff]
    %v839 = vld [vmem:[%s1 + $0x1968] sm:$0xff]
    %v840 = vld [vmem:[%s1 + $0x1970] sm:$0xff]
    %v841 = vld [vmem:[%s1 + $0x1978] sm:$0xff]
    %v842 = vld [vmem:[%s1 + $0x1980] sm:$0xff]
    %v843 = vld [vmem:[%s1 + $0x1988] sm:$0xff]
    %v844 = vld [vmem:[%s1 + $0x1990] sm:$0xff]
    %v845 = vld [vmem:[%s1 + $0x1998] sm:$0xff]
    %v846 = vld [vmem:[%s1 + $0x19a0] sm:$0xff]
    %v847 = vld [vmem:[%s1 + $0x19a8] sm:$0xff]
    %v848 = vld [vmem:[%s1 + $0x19b0] sm:$0xff]
    %v849 = vld [vmem:[%s1 + $0x19b8] sm:$0xff]
    %v850 = vld [vmem:[%s1 + $0x19c0] sm:$0xff]
    %v851 = vld [vmem:[%s1 + $0x19c8] sm:$0xff]
    %v852 = vld [vmem:[%s1 + $0x19d0] sm:$0xff]
    %v853 = vld [vmem:[%s1 + $0x19d8] sm:$0xff]
    %v854 = vld [vmem:[%s1 + $0x19e0] sm:$0xff]
    %v855 = vld [vmem:[%s1 + $0x19e8] sm:$0xff]
    %v856 = vld [vmem:[%s1 + $0x19f0] sm:$0xff]
    %v857 = vld [vmem:[%s1 + $0x19f8] sm:$0xff]
    %v858 = vld [vmem:[%s1 + $0x1a00] sm:$0xff]
    %v859 = vld [vmem:[%s1 + $0x1a08] sm:$0xff]
    %v860 = vld [vmem:[%s1 + $0x1a10] sm:$0xff]
    %v861 = vld [vmem:[%s1 + $0x1a18] sm:$0xff]
    %v862 = vld [vmem:[%s1 + $0x1a20] sm:$0xff]
    %v863 = vld [vmem:[%s1 + $0x1a28] sm:$0xff]
    %v864 = vld [vmem:[%s1 + $0x1a30] sm:$0xff]
    %v865 = vld [vmem:[%s1 + $0x1a38] sm:$0xff]
    %v866 = vld [vmem:[%s1 + $0x1a40] sm:$0xff]
    %v867 = vld [vmem:[%s1 + $0x1a48] sm:$0xff]
    %v868 = vld [vmem:[%s1 + $0x1a50] sm:$0xff]
    %v869 = vld [vmem:[%s1 + $0x1a58] sm:$0xff]
    %v870 = vld [vmem:[%s1 + $0x1a60] sm:$0xff]
    %v871 = vld [vmem:[%s1 + $0x1a68] sm:$0xff]
    %v872 = vld [vmem:[%s1 + $0x1a70] sm:$0xff]
    %v873 = vld [vmem:[%s1 + $0x1a78] sm:$0xff]
    %v874 = vld [vmem:[%s1 + $0x1a80] sm:$0xff]
    %v875 = vld [vmem:[%s1 + $0x1a88] sm:$0xff]
    %v876 = vld [vmem:[%s1 + $0x1a90] sm:$0xff]
    %v877 = vld [vmem:[%s1 + $0x1a98] sm:$0xff]
    %v878 = vld [vmem:[%s1 + $0x1aa0] sm:$0xff]
    %v879 = vld [vmem:[%s1 + $0x1aa8] sm:$0xff]
    %v880 = vld [vmem:[%s1 + $0x1ab0] sm:$0xff]
    %v881 = vld [vmem:[%s1 + $0x1ab8] sm:$0xff]
    %v882 = vld [vmem:[%s1 + $0x1ac0] sm:$0xff]
    %v883 = vld [vmem:[%s1 + $0x1ac8] sm:$0xff]
    %v884 = vld [vmem:[%s1 + $0x1ad0] sm:$0xff]
    %v885 = vld [vmem:[%s1 + $0x1ad8] sm:$0xff]
    %v886 = vld [vmem:[%s1 + $0x1ae0] sm:$0xff]
    %v887 = vld [vmem:[%s1 + $0x1ae8] sm:$0xff]
    %v888 = vld [vmem:[%s1 + $0x1af0] sm:$0xff]
    %v889 = vld [vmem:[%s1 + $0x1af8] sm:$0xff]
    %v890 = vld [vmem:[%s1 + $0x1b00] sm:$0xff]
    %v891 = vld [vmem:[%s1 + $0x1b08] sm:$0xff]
    %v892 = vld [vmem:[%s1 + $0x1b10] sm:$0xff]
    %v893 = vld [vmem:[%s1 + $0x1b18] sm:$0xff]
    %v894 = vld [vmem:[%s1 + $0x1b20] sm:$0xff]
    %v895 = vld [vmem:[%s1 + $0x1b28] sm:$0xff]
    %v896 = vld [vmem:[%s1 + $0x1b30] sm:$0xff]
    %v897 = vld [vmem:[%s1 + $0x1b38] sm:$0xff]
    %v898 = vld [vmem:[%s1 + $0x1b40] sm:$0xff]
    %v899 = vld [vmem:[%s1 + $0x1b48] sm:$0xff]
    %v900 = vld [vmem:[%s1 + $0x1b50] sm:$0xff]
    %v901 = vld [vmem:[%s1 + $0x1b58] sm:$0xff]
    %v902 = vld [vmem:[%s1 + $0x1b60] sm:$0xff]
    %v903 = vld [vmem:[%s1 + $0x1b68] sm:$0xff]
    %v904 = vld [vmem:[%s1 + $0x1b70] sm:$0xff]
    %v905 = vld [vmem:[%s1 + $0x1b78] sm:$0xff]
    %v906 = vld [vmem:[%s1 + $0x1b80] sm:$0xff]
    %v907 = vld [vmem:[%s1 + $0x1b88] sm:$0xff]
    %v908 = vld [vmem:[%s1 + $0x1b90] sm:$0xff]
    %v909 = vld [vmem:[%s1 + $0x1b98] sm:$0xff]
    %v910 = vld [vmem:[%s1 + $0x1ba0] sm:$0xff]
    %v911 = vld [vmem:[%s1 + $0x1ba8] sm:$0xff]
    %v912 = vld [vmem:[%s1 + $0x1bb0] sm:$0xff]
    %v913 = vld [vmem:[%s1 + $0x1bb8] sm:$0xff]
    %v914 = vld [vmem:[%s1 + $0x1bc0] sm:$0xff]
    %v915 = vld [vmem:[%s1 + $0x1bc8] sm:$0xff]
    %v916 = vld [vmem:[%s1 + $0x1bd0] sm:$0xff]
    %v917 = vld [vmem:[%s1 + $0x1bd8] sm:$0xff]
    %v918 = vld [vmem:[%s1 + $0x1be0] sm:$0xff]
    %v919 = vld [vmem:[%s1 + $0x1be8] sm:$0xff]
    %v920 = vld [vmem:[%s1 + $0x1bf0] sm:$0xff]
    %v921 = vld [vmem:[%s1 + $0x1bf8] sm:$0xff]
    %v922 = vld [vmem:[%s1 + $0x1c00] sm:$0xff]
    %v923 = vld [vmem:[%s1 + $0x1c08] sm:$0xff]
    %v924 = vld [vmem:[%s1 + $0x1c10] sm:$0xff]
    %v925 = vld [vmem:[%s1 + $0x1c18] sm:$0xff]
    %v926 = vld [vmem:[%s1 + $0x1c20] sm:$0xff]
    %v927 = vld [vmem:[%s1 + $0x1c28] sm:$0xff]
    %v928 = vld [vmem:[%s1 + $0x1c30] sm:$0xff]
    %v929 = vld [vmem:[%s1 + $0x1c38] sm:$0xff]
    %v930 = vld [vmem:[%s1 + $0x1c40] sm:$0xff]
    %v931 = vld [vmem:[%s1 + $0x1c48] sm:$0xff]
    %v932 = vld [vmem:[%s1 + $0x1c50] sm:$0xff]
    %v933 = vld [vmem:[%s1 + $0x1c58] sm:$0xff]
    %v934 = vld [vmem:[%s1 + $0x1c60] sm:$0xff]
    %v935 = vld [vmem:[%s1 + $0x1c68] sm:$0xff]
    %v936 = vld [vmem:[%s1 + $0x1c70] sm:$0xff]
    %v937 = vld [vmem:[%s1 + $0x1c78] sm:$0xff]
    %v938 = vld [vmem:[%s1 + $0x1c80] sm:$0xff]
    %v939 = vld [vmem:[%s1 + $0x1c88] sm:$0xff]
    %v940 = vld [vmem:[%s1 + $0x1c90] sm:$0xff]
    %v941 = vld [vmem:[%s1 + $0x1c98] sm:$0xff]
    %v942 = vld [vmem:[%s1 + $0x1ca0] sm:$0xff]
    %v943 = vld [vmem:[%s1 + $0x1ca8] sm:$0xff]
    %v944 = vld [vmem:[%s1 + $0x1cb0] sm:$0xff]
    %v945 = vld [vmem:[%s1 + $0x1cb8] sm:$0xff]
    %v946 = vld [vmem:[%s1 + $0x1cc0] sm:$0xff]
    %v947 = vld [vmem:[%s1 + $0x1cc8] sm:$0xff]
    %v948 = vld [vmem:[%s1 + $0x1cd0] sm:$0xff]
    %v949 = vld [vmem:[%s1 + $0x1cd8] sm:$0xff]
    %v950 = vld [vmem:[%s1 + $0x1ce0] sm:$0xff]
    %v951 = vld [vmem:[%s1 + $0x1ce8] sm:$0xff]
    %v952 = vld [vmem:[%s1 + $0x1cf0] sm:$0xff]
    %v953 = vld [vmem:[%s1 + $0x1cf8] sm:$0xff]
    %v954 = vld [vmem:[%s1 + $0x1d00] sm:$0xff]
    %v955 = vld [vmem:[%s1 + $0x1d08] sm:$0xff]
    %v956 = vld [vmem:[%s1 + $0x1d10] sm:$0xff]
    %v957 = vld [vmem:[%s1 + $0x1d18] sm:$0xff]
    %v958 = vld [vmem:[%s1 + $0x1d20] sm:$0xff]
    %v959 = vld [vmem:[%s1 + $0x1d28] sm:$0xff]
    %v960 = vld [vmem:[%s1 + $0x1d30] sm:$0xff]
    %v961 = vld [vmem:[%s1 + $0x1d38] sm:$0xff]
    %v962 = vld [vmem:[%s1 + $0x1d40] sm:$0xff]
    %v963 = vld [vmem:[%s1 + $0x1d48] sm:$0xff]
    %v964 = vld [vmem:[%s1 + $0x1d50] sm:$0xff]
    %v965 = vld [vmem:[%s1 + $0x1d58] sm:$0xff]
    %v966 = vld [vmem:[%s1 + $0x1d60] sm:$0xff]
    %v967 = vld [vmem:[%s1 + $0x1d68] sm:$0xff]
    %v968 = vld [vmem:[%s1 + $0x1d70] sm:$0xff]
    %v969 = vld [vmem:[%s1 + $0x1d78] sm:$0xff]
    %v970 = vld [vmem:[%s1 + $0x1d80] sm:$0xff]
    %v971 = vld [vmem:[%s1 + $0x1d88] sm:$0xff]
    %v972 = vld [vmem:[%s1 + $0x1d90] sm:$0xff]
    %v973 = vld [vmem:[%s1 + $0x1d98] sm:$0xff]
    %v974 = vld [vmem:[%s1 + $0x1da0] sm:$0xff]
    %v975 = vld [vmem:[%s1 + $0x1da8] sm:$0xff]
    %v976 = vld [vmem:[%s1 + $0x1db0] sm:$0xff]
    %v977 = vld [vmem:[%s1 + $0x1db8] sm:$0xff]
    %v978 = vld [vmem:[%s1 + $0x1dc0] sm:$0xff]
    %v979 = vld [vmem:[%s1 + $0x1dc8] sm:$0xff]
    %v980 = vld [vmem:[%s1 + $0x1dd0] sm:$0xff]
    %v981 = vld [vmem:[%s1 + $0x1dd8] sm:$0xff]
    %v982 = vld [vmem:[%s1 + $0x1de0] sm:$0xff]
    %v983 = vld [vmem:[%s1 + $0x1de8] sm:$0xff]
    %v984 = vld [vmem:[%s1 + $0x1df0] sm:$0xff]
    %v985 = vld [vmem:[%s1 + $0x1df8] sm:$0xff]
    %v986 = vld [vmem:[%s1 + $0x1e00] sm:$0xff]
    %v987 = vld [vmem:[%s1 + $0x1e08] sm:$0xff]
    %v988 = vld [vmem:[%s1 + $0x1e10] sm:$0xff]
    %v989 = vld [vmem:[%s1 + $0x1e18] sm:$0xff]
    %v990 = vld [vmem:[%s1 + $0x1e20] sm:$0xff]
    %v991 = vld [vmem:[%s1 + $0x1e28] sm:$0xff]
    %v992 = vld [vmem:[%s1 + $0x1e30] sm:$0xff]
    %v993 = vld [vmem:[%s1 + $0x1e38] sm:$0xff]
    %v994 = vld [vmem:[%s1 + $0x1e40] sm:$0xff]
    %v995 = vld [vmem:[%s1 + $0x1e48] sm:$0xff]
    %v996 = vld [vmem:[%s1 + $0x1e50] sm:$0xff]
    %v997 = vld [vmem:[%s1 + $0x1e58] sm:$0xff]
    %v998 = vld [vmem:[%s1 + $0x1e60] sm:$0xff]
    %v999 = vld [vmem:[%s1 + $0x1e68] sm:$0xff]
    %v1000 = vld [vmem:[%s1 + $0x1e70] sm:$0xff]
    %v1001 = vld [vmem:[%s1 + $0x1e78] sm:$0xff]
    %v1002 = vld [vmem:[%s1 + $0x1e80] sm:$0xff]
    %v1003 = vld [vmem:[%s1 + $0x1e88] sm:$0xff]
    %v1004 = vld [vmem:[%s1 + $0x1e90] sm:$0xff]
    %v1005 = vld [vmem:[%s1 + $0x1e98] sm:$0xff]
    %v1006 = vld [vmem:[%s1 + $0x1ea0] sm:$0xff]
    %v1007 = vld [vmem:[%s1 + $0x1ea8] sm:$0xff]
    %v1008 = vld [vmem:[%s1 + $0x1eb0] sm:$0xff]
    %v1009 = vld [vmem:[%s1 + $0x1eb8] sm:$0xff]
    %v1010 = vld [vmem:[%s1 + $0x1ec0] sm:$0xff]
    %v1011 = vld [vmem:[%s1 + $0x1ec8] sm:$0xff]
    %v1012 = vld [vmem:[%s1 + $0x1ed0] sm:$0xff]
    %v1013 = vld [vmem:[%s1 + $0x1ed8] sm:$0xff]
    %v1014 = vld [vmem:[%s1 + $0x1ee0] sm:$0xff]
    %v1015 = vld [vmem:[%s1 + $0x1ee8] sm:$0xff]
    %v1016 = vld [vmem:[%s1 + $0x1ef0] sm:$0xff]
    %v1017 = vld [vmem:[%s1 + $0x1ef8] sm:$0xff]
    %v1018 = vld [vmem:[%s1 + $0x1f00] sm:$0xff]
    %v1019 = vld [vmem:[%s1 + $0x1f08] sm:$0xff]
    %v1020 = vld [vmem:[%s1 + $0x1f10] sm:$0xff]
    %v1021 = vld [vmem:[%s1 + $0x1f18] sm:$0xff]
    %v1022 = vld [vmem:[%s1 + $0x1f20] sm:$0xff]
    %v1023 = vld [vmem:[%s1 + $0x1f28] sm:$0xff]
    %v1024 = vld [vmem:[%s1 + $0x1f30] sm:$0xff]
    %v1025 = vld [vmem:[%s1 + $0x1f38] sm:$0xff]
    %v1026 = vld [vmem:[%s1 + $0x1f40] sm:$0xff]
    %v1027 = vld [vmem:[%s1 + $0x1f48] sm:$0xff]
    %v1028 = vld [vmem:[%s1 + $0x1f50] sm:$0xff]
    %v1029 = vld [vmem:[%s1 + $0x1f58] sm:$0xff]
    %v1030 = vld [vmem:[%s1 + $0x1f60] sm:$0xff]
    %v1031 = vld [vmem:[%s1 + $0x1f68] sm:$0xff]
    %v1032 = vld [vmem:[%s1 + $0x1f70] sm:$0xff]
    %v1033 = vld [vmem:[%s1 + $0x1f78] sm:$0xff]
    %v1034 = vld [vmem:[%s1 + $0x1f80] sm:$0xff]
    %v1035 = vld [vmem:[%s1 + $0x1f88] sm:$0xff]
    %v1036 = vld [vmem:[%s1 + $0x1f90] sm:$0xff]
    %v1037 = vld [vmem:[%s1 + $0x1f98] sm:$0xff]
    %v1038 = vld [vmem:[%s1 + $0x1fa0] sm:$0xff]
    %v1039 = vld [vmem:[%s1 + $0x1fa8] sm:$0xff]
    %v1040 = vld [vmem:[%s1 + $0x1fb0] sm:$0xff]
    %v1041 = vld [vmem:[%s1 + $0x1fb8] sm:$0xff]
    %v1042 = vld [vmem:[%s1 + $0x1fc0] sm:$0xff]
    %v1043 = vld [vmem:[%s1 + $0x1fc8] sm:$0xff]
    %v1044 = vld [vmem:[%s1 + $0x1fd0] sm:$0xff]
    %v1045 = vld [vmem:[%s1 + $0x1fd8] sm:$0xff]
    %v1046 = vld [vmem:[%s1 + $0x1fe0] sm:$0xff]
    %v1047 = vld [vmem:[%s1 + $0x1fe8] sm:$0xff]
    %v1048 = vld [vmem:[%s1 + $0x1ff0] sm:$0xff]
    %v1049 = vld [vmem:[%s1 + $0x1ff8] sm:$0xff]
    %v1050 = vld [vmem:[%s1 + $0x2000] sm:$0xff]
    %v1051 = vld [vmem:[%s1 + $0x2008] sm:$0xff]
    %v1052 = vld [vmem:[%s1 + $0x2010] sm:$0xff]
    %v1053 = vld [vmem:[%s1 + $0x2018] sm:$0xff]
    %v1054 = vld [vmem:[%s1 + $0x2020] sm:$0xff]
    %v1055 = vld [vmem:[%s1 + $0x2028] sm:$0xff]
    %v1056 = vld [vmem:[%s1 + $0x2030] sm:$0xff]
    %v1057 = vld [vmem:[%s1 + $0x2038] sm:$0xff]
    %v1058 = vld [vmem:[%s1 + $0x2040] sm:$0xff]
    %v1059 = vld [vmem:[%s1 + $0x2048] sm:$0xff]
    %v1060 = vld [vmem:[%s1 + $0x2050] sm:$0xff]
    %v1061 = vld [vmem:[%s1 + $0x2058] sm:$0xff]
    %v1062 = vld [vmem:[%s1 + $0x2060] sm:$0xff]
    %v1063 = vld [vmem:[%s1 + $0x2068] sm:$0xff]
    %v1064 = vld [vmem:[%s1 + $0x2070] sm:$0xff]
    %v1065 = vld [vmem:[%s1 + $0x2078] sm:$0xff]
    %v1066 = vld [vmem:[%s1 + $0x2080] sm:$0xff]
    %v1067 = vld [vmem:[%s1 + $0x2088] sm:$0xff]
    %v1068 = vld [vmem:[%s1 + $0x2090] sm:$0xff]
    %v1069 = vld [vmem:[%s1 + $0x2098] sm:$0xff]
    %v1070 = vld [vmem:[%s1 + $0x20a0] sm:$0xff]
    %v1071 = vld [vmem:[%s1 + $0x20a8] sm:$0xff]
    %v1072 = vld [vmem:[%s1 + $0x20b0] sm:$0xff]
    %v1073 = vld [vmem:[%s1 + $0x20b8] sm:$0xff]
    %v1074 = vld [vmem:[%s1 + $0x20c0] sm:$0xff]
    %v1075 = vld [vmem:[%s1 + $0x20c8] sm:$0xff]
    %v1076 = vld [vmem:[%s1 + $0x20d0] sm:$0xff]
    %v1077 = vld [vmem:[%s1 + $0x20d8] sm:$0xff]
    %v1078 = vld [vmem:[%s1 + $0x20e0] sm:$0xff]
    %v1079 = vld [vmem:[%s1 + $0x20e8] sm:$0xff]
    %v1080 = vld [vmem:[%s1 + $0x20f0] sm:$0xff]
    %v1081 = vld [vmem:[%s1 + $0x20f8] sm:$0xff]
    %v1082 = vld [vmem:[%s1 + $0x2100] sm:$0xff]
    %v1083 = vld [vmem:[%s1 + $0x2108] sm:$0xff]
    %v1084 = vld [vmem:[%s1 + $0x2110] sm:$0xff]
    %v1085 = vld [vmem:[%s1 + $0x2118] sm:$0xff]
    %v1086 = vld [vmem:[%s1 + $0x2120] sm:$0xff]
    %v1087 = vld [vmem:[%s1 + $0x2128] sm:$0xff]
    %v1088 = vld [vmem:[%s1 + $0x2130] sm:$0xff]
    %v1089 = vld [vmem:[%s1 + $0x2138] sm:$0xff]
    %v1090 = vld [vmem:[%s1 + $0x2140] sm:$0xff]
    %v1091 = vld [vmem:[%s1 + $0x2148] sm:$0xff]
    %v1092 = vld [vmem:[%s1 + $0x2150] sm:$0xff]
    %v1093 = vld [vmem:[%s1 + $0x2158] sm:$0xff]
    %v1094 = vld [vmem:[%s1 + $0x2160] sm:$0xff]
    %v1095 = vld [vmem:[%s1 + $0x2168] sm:$0xff]
    %v1096 = vld [vmem:[%s1 + $0x2170] sm:$0xff]
    %v1097 = vld [vmem:[%s1 + $0x2178] sm:$0xff]
    %v1098 = vld [vmem:[%s1 + $0x2180] sm:$0xff]
    %v1099 = vld [vmem:[%s1 + $0x2188] sm:$0xff]
    %v1100 = vld [vmem:[%s1 + $0x2190] sm:$0xff]
    %v1101 = vld [vmem:[%s1 + $0x2198] sm:$0xff]
    %v1102 = vld [vmem:[%s1 + $0x21a0] sm:$0xff]
    %v1103 = vld [vmem:[%s1 + $0x21a8] sm:$0xff]
    %v1104 = vld [vmem:[%s1 + $0x21b0] sm:$0xff]
    %v1105 = vld [vmem:[%s1 + $0x21b8] sm:$0xff]
    %v1106 = vld [vmem:[%s1 + $0x21c0] sm:$0xff]
    %v1107 = vld [vmem:[%s1 + $0x21c8] sm:$0xff]
    %v1108 = vld [vmem:[%s1 + $0x21d0] sm:$0xff]
    %v1109 = vld [vmem:[%s1 + $0x21d8] sm:$0xff]
    %v1110 = vld [vmem:[%s1 + $0x21e0] sm:$0xff]
    %v1111 = vld [vmem:[%s1 + $0x21e8] sm:$0xff]
    %v1112 = vld [vmem:[%s1 + $0x21f0] sm:$0xff]
    %v1113 = vld [vmem:[%s1 + $0x21f8] sm:$0xff]
    %v1114 = vld [vmem:[%s1 + $0x2200] sm:$0xff]
    %v1115 = vld [vmem:[%s1 + $0x2208] sm:$0xff]
    %v1116 = vld [vmem:[%s1 + $0x2210] sm:$0xff]
    %v1117 = vld [vmem:[%s1 + $0x2218] sm:$0xff]
    %v1118 = vld [vmem:[%s1 + $0x2220] sm:$0xff]
    %v1119 = vld [vmem:[%s1 + $0x2228] sm:$0xff]
    %v1120 = vld [vmem:[%s1 + $0x2230] sm:$0xff]
    %v1121 = vld [vmem:[%s1 + $0x2238] sm:$0xff]
    %v1122 = vld [vmem:[%s1 + $0x2240] sm:$0xff]
    %v1123 = vld [vmem:[%s1 + $0x2248] sm:$0xff]
    %v1124 = vld [vmem:[%s1 + $0x2250] sm:$0xff]
    %v1125 = vld [vmem:[%s1 + $0x2258] sm:$0xff]
    %v1126 = vld [vmem:[%s1 + $0x2260] sm:$0xff]
    %v1127 = vld [vmem:[%s1 + $0x2268] sm:$0xff]
    %v1128 = vld [vmem:[%s1 + $0x2270] sm:$0xff]
    %v1129 = vld [vmem:[%s1 + $0x2278] sm:$0xff]
    %v1130 = vld [vmem:[%s1 + $0x2280] sm:$0xff]
    %v1131 = vld [vmem:[%s1 + $0x2288] sm:$0xff]
    %v1132 = vld [vmem:[%s1 + $0x2290] sm:$0xff]
    %v1133 = vld [vmem:[%s1 + $0x2298] sm:$0xff]
    %v1134 = vld [vmem:[%s1 + $0x22a0] sm:$0xff]
    %v1135 = vld [vmem:[%s1 + $0x22a8] sm:$0xff]
    %v1136 = vld [vmem:[%s1 + $0x22b0] sm:$0xff]
    %v1137 = vld [vmem:[%s1 + $0x22b8] sm:$0xff]
    %v1138 = vld [vmem:[%s1 + $0x22c0] sm:$0xff]
    %v1139 = vld [vmem:[%s1 + $0x22c8] sm:$0xff]
    %v1140 = vld [vmem:[%s1 + $0x22d0] sm:$0xff]
    %v1141 = vld [vmem:[%s1 + $0x22d8] sm:$0xff]
    %v1142 = vld [vmem:[%s1 + $0x22e0] sm:$0xff]
    %v1143 = vld [vmem:[%s1 + $0x22e8] sm:$0xff]
    %v1144 = vld [vmem:[%s1 + $0x22f0] sm:$0xff]
    %v1145 = vld [vmem:[%s1 + $0x22f8] sm:$0xff]
    %v1146 = vld [vmem:[%s1 + $0x2300] sm:$0xff]
    %v1147 = vld [vmem:[%s1 + $0x2308] sm:$0xff]
    %v1148 = vld [vmem:[%s1 + $0x2310] sm:$0xff]
    %v1149 = vld [vmem:[%s1 + $0x2318] sm:$0xff]
    %v1150 = vld [vmem:[%s1 + $0x2320] sm:$0xff]
    %v1151 = vld [vmem:[%s1 + $0x2328] sm:$0xff]
    %v1152 = vld [vmem:[%s1 + $0x2330] sm:$0xff]
    %v1153 = vld [vmem:[%s1 + $0x2338] sm:$0xff]
    %v1154 = vld [vmem:[%s1 + $0x2340] sm:$0xff]
    %v1155 = vld [vmem:[%s1 + $0x2348] sm:$0xff]
    %v1156 = vld [vmem:[%s1 + $0x2350] sm:$0xff]
    %v1157 = vld [vmem:[%s1 + $0x2358] sm:$0xff]
    %v1158 = vld [vmem:[%s1 + $0x2360] sm:$0xff]
    %v1159 = vld [vmem:[%s1 + $0x2368] sm:$0xff]
    %v1160 = vld [vmem:[%s1 + $0x2370] sm:$0xff]
    %v1161 = vld [vmem:[%s1 + $0x2378] sm:$0xff]
    %v1162 = vld [vmem:[%s1 + $0x2380] sm:$0xff]
    %v1163 = vld [vmem:[%s1 + $0x2388] sm:$0xff]
    %v1164 = vld [vmem:[%s1 + $0x2390] sm:$0xff]
    %v1165 = vld [vmem:[%s1 + $0x2398] sm:$0xff]
    %v1166 = vld [vmem:[%s1 + $0x23a0] sm:$0xff]
    %v1167 = vld [vmem:[%s1 + $0x23a8] sm:$0xff]
    %v1168 = vld [vmem:[%s1 + $0x23b0] sm:$0xff]
    %v1169 = vld [vmem:[%s1 + $0x23b8] sm:$0xff]
    %v1170 = vld [vmem:[%s1 + $0x23c0] sm:$0xff]
    %v1171 = vld [vmem:[%s1 + $0x23c8] sm:$0xff]
    %v1172 = vld [vmem:[%s1 + $0x23d0] sm:$0xff]
    %v1173 = vld [vmem:[%s1 + $0x23d8] sm:$0xff]
    %v1174 = vld [vmem:[%s1 + $0x23e0] sm:$0xff]
    %v1175 = vld [vmem:[%s1 + $0x23e8] sm:$0xff]
    %v1176 = vld [vmem:[%s1 + $0x23f0] sm:$0xff]
    %v1177 = vld [vmem:[%s1 + $0x23f8] sm:$0xff]
    %v1178 = vld [vmem:[%s2] sm:$0xf]
    %v1180 = vperm.slane %v1178, 0
    %v1181 = vperm.slane %v1178, 1
    %v1182 = vperm.slane %v1178, 2
    %v1183 = vperm.slane %v1178, 3
    %1189 = vst [vmem:[#allocation1] ss:$9 sm:$0xff] %v21
    %v1190 = vld [vmem:[#allocation1] sm:$0xff]
    %v1191 = vld [vmem:[#allocation1 + $0x9] sm:$0xff]
    %v1192 = vld [vmem:[#allocation1 + $0x12] sm:$0xff]
    %v1193 = vld [vmem:[#allocation1 + $0x1b] sm:$0xff]
    %v1194 = vld [vmem:[#allocation1 + $0x24] sm:$0xff]
    %v1195 = vld [vmem:[#allocation1 + $0x2d] sm:$0xff]
    %v1196 = vld [vmem:[#allocation1 + $0x36] sm:$0xff]
    %v1197 = vld [vmem:[#allocation1 + $0x3f] sm:$0xff]
    %1199 = vst [vmem:[#allocation1] ss:$9 sm:$0xff] %v22
    %v1200 = vld [vmem:[#allocation1] sm:$0xff]
    %v1201 = vld [vmem:[#allocation1 + $0x9] sm:$0xff]
    %v1202 = vld [vmem:[#allocation1 + $0x12] sm:$0xff]
    %v1203 = vld [vmem:[#allocation1 + $0x1b] sm:$0xff]
    %v1204 = vld [vmem:[#allocation1 + $0x24] sm:$0xff]
    %v1205 = vld [vmem:[#allocation1 + $0x2d] sm:$0xff]
    %v1206 = vld [vmem:[#allocation1 + $0x36] sm:$0xff]
    %v1207 = vld [vmem:[#allocation1 + $0x3f] sm:$0xff]
    %1209 = vst [vmem:[#allocation1] ss:$9 sm:$0xff] %v23
    %v1210 = vld [vmem:[#allocation1] sm:$0xff]
    %v1211 = vld [vmem:[#allocation1 + $0x9] sm:$0xff]
    %v1212 = vld [vmem:[#allocation1 + $0x12] sm:$0xff]
    %v1213 = vld [vmem:[#allocation1 + $0x1b] sm:$0xff]
    %v1214 = vld [vmem:[#allocation1 + $0x24] sm:$0xff]
    %v1215 = vld [vmem:[#allocation1 + $0x2d] sm:$0xff]
    %v1216 = vld [vmem:[#allocation1 + $0x36] sm:$0xff]
    %v1217 = vld [vmem:[#allocation1 + $0x3f] sm:$0xff]
    %1219 = vst [vmem:[#allocation1] ss:$9 sm:$0xff] %v24
    %v1220 = vld [vmem:[#allocation1] sm:$0xff]
    %v1221 = vld [vmem:[#allocation1 + $0x9] sm:$0xff]
    %v1222 = vld [vmem:[#allocation1 + $0x12] sm:$0xff]
    %v1223 = vld [vmem:[#allocation1 + $0x1b] sm:$0xff]
    %v1224 = vld [vmem:[#allocation1 + $0x24] sm:$0xff]
    %v1225 = vld [vmem:[#allocation1 + $0x2d] sm:$0xff]
    %v1226 = vld [vmem:[#allocation1 + $0x36] sm:$0xff]
    %v1227 = vld [vmem:[#allocation1 + $0x3f] sm:$0xff]
    %1229 = vst [vmem:[#allocation1] ss:$9 sm:$0xff] %v25
    %v1230 = vld [vmem:[#allocation1] sm:$0xff]
    %v1231 = vld [vmem:[#allocation1 + $0x9] sm:$0xff]
    %v1232 = vld [vmem:[#allocation1 + $0x12] sm:$0xff]
    %v1233 = vld [vmem:[#allocation1 + $0x1b] sm:$0xff]
    %v2422 = vunpack.c.l.b16 %v26
    %v2423 = vunpack.c.h.b16 %v26
    %v2424 = vunpack.c.l.b16 %v27
    %v2425 = vunpack.c.h.b16 %v27
    %v2426 = vunpack.c.l.b16 %v28
    %v2427 = vunpack.c.h.b16 %v28
    %v2428 = vunpack.c.l.b16 %v29
    %v2429 = vunpack.c.h.b16 %v29
    %v2430 = vunpack.c.l.b16 %v30
    %v2431 = vunpack.c.h.b16 %v30
    %v2432 = vunpack.c.l.b16 %v31
    %v2433 = vunpack.c.h.b16 %v31
    %v2434 = vunpack.c.l.b16 %v32
    %v2435 = vunpack.c.h.b16 %v32
    %v2436 = vunpack.c.l.b16 %v33
    %v2437 = vunpack.c.h.b16 %v33
    %v2438 = vunpack.c.l.b16 %v34
    %v2439 = vunpack.c.h.b16 %v34
    %v2440 = vunpack.c.l.b16 %v35
    %v2441 = vunpack.c.h.b16 %v35
    %v2442 = vunpack.c.l.b16 %v36
    %v2443 = vunpack.c.h.b16 %v36
    %v2444 = vunpack.c.l.b16 %v37
    %v2445 = vunpack.c.h.b16 %v37
    %v2446 = vunpack.c.l.b16 %v38
    %v2447 = vunpack.c.h.b16 %v38
    %v2448 = vunpack.c.l.b16 %v39
    %v2449 = vunpack.c.h.b16 %v39
    %v2450 = vunpack.c.l.b16 %v40
    %v2451 = vunpack.c.h.b16 %v40
    %v2452 = vunpack.c.l.b16 %v41
    %v2453 = vunpack.c.h.b16 %v41
    %v2454 = vunpack.c.l.b16 %v42
    %v2455 = vunpack.c.h.b16 %v42
    %v2456 = vunpack.c.l.b16 %v43
    %v2457 = vunpack.c.h.b16 %v43
    %v2458 = vunpack.c.l.b16 %v44
    %v2459 = vunpack.c.h.b16 %v44
    %v2460 = vunpack.c.l.b16 %v45
    %v2461 = vunpack.c.h.b16 %v45
    %v2462 = vunpack.c.l.b16 %v46
    %v2463 = vunpack.c.h.b16 %v46
    %v2464 = vunpack.c.l.b16 %v47
    %v2465 = vunpack.c.h.b16 %v47
    %v2466 = vunpack.c.l.b16 %v48
    %v2467 = vunpack.c.h.b16 %v48
    %v2468 = vunpack.c.l.b16 %v49
    %v2469 = vunpack.c.h.b16 %v49
    %v2470 = vunpack.c.l.b16 %v50
    %v2471 = vunpack.c.h.b16 %v50
    %v2472 = vunpack.c.l.b16 %v51
    %v2473 = vunpack.c.h.b16 %v51
    %v2474 = vunpack.c.l.b16 %v52
    %v2475 = vunpack.c.h.b16 %v52
    %v2476 = vunpack.c.l.b16 %v53
    %v2477 = vunpack.c.h.b16 %v53
    %v2478 = vunpack.c.l.b16 %v54
    %v2479 = vunpack.c.h.b16 %v54
    %v2480 = vunpack.c.l.b16 %v55
    %v2481 = vunpack.c.h.b16 %v55
    %v2482 = vunpack.c.l.b16 %v56
    %v2483 = vunpack.c.h.b16 %v56
    %v2484 = vunpack.c.l.b16 %v57
    %v2485 = vunpack.c.h.b16 %v57
    %v2486 = vunpack.c.l.b16 %v58
    %v2487 = vunpack.c.h.b16 %v58
    %v2488 = vunpack.c.l.b16 %v59
    %v2489 = vunpack.c.h.b16 %v59
    %v2490 = vunpack.c.l.b16 %v60
    %v2491 = vunpack.c.h.b16 %v60
    %v2492 = vunpack.c.l.b16 %v61
    %v2493 = vunpack.c.h.b16 %v61
    %v2494 = vunpack.c.l.b16 %v62
    %v2495 = vunpack.c.h.b16 %v62
    %v2496 = vunpack.c.l.b16 %v63
    %v2497 = vunpack.c.h.b16 %v63
    %v2498 = vunpack.c.l.b16 %v64
    %v2499 = vunpack.c.h.b16 %v64
    %v2500 = vunpack.c.l.b16 %v65
    %v2501 = vunpack.c.h.b16 %v65
    %v2502 = vunpack.c.l.b16 %v66
    %v2503 = vunpack.c.h.b16 %v66
    %v2504 = vunpack.c.l.b16 %v67
    %v2505 = vunpack.c.h.b16 %v67
    %v2506 = vunpack.c.l.b16 %v68
    %v2507 = vunpack.c.h.b16 %v68
    %v2508 = vunpack.c.l.b16 %v69
    %v2509 = vunpack.c.h.b16 %v69
    %v2510 = vunpack.c.l.b16 %v70
    %v2511 = vunpack.c.h.b16 %v70
    %v2512 = vunpack.c.l.b16 %v71
    %v2513 = vunpack.c.h.b16 %v71
    %v2514 = vunpack.c.l.b16 %v72
    %v2515 = vunpack.c.h.b16 %v72
    %v2516 = vunpack.c.l.b16 %v73
    %v2517 = vunpack.c.h.b16 %v73
    %v2518 = vunpack.c.l.b16 %v74
    %v2519 = vunpack.c.h.b16 %v74
    %v2520 = vunpack.c.l.b16 %v75
    %v2521 = vunpack.c.h.b16 %v75
    %v2522 = vunpack.c.l.b16 %v76
    %v2523 = vunpack.c.h.b16 %v76
    %v2524 = vunpack.c.l.b16 %v77
    %v2525 = vunpack.c.h.b16 %v77
    %v2526 = vunpack.c.l.b16 %v78
    %v2527 = vunpack.c.h.b16 %v78
    %v2528 = vunpack.c.l.b16 %v79
    %v2529 = vunpack.c.h.b16 %v79
    %v2530 = vunpack.c.l.b16 %v80
    %v2531 = vunpack.c.h.b16 %v80
    %v2532 = vunpack.c.l.b16 %v81
    %v2533 = vunpack.c.h.b16 %v81
    %v2534 = vunpack.c.l.b16 %v82
    %v2535 = vunpack.c.h.b16 %v82
    %v2536 = vunpack.c.l.b16 %v83
    %v2537 = vunpack.c.h.b16 %v83
    %v2538 = vunpack.c.l.b16 %v84
    %v2539 = vunpack.c.h.b16 %v84
    %v2540 = vunpack.c.l.b16 %v85
    %v2541 = vunpack.c.h.b16 %v85
    %v2542 = vunpack.c.l.b16 %v86
    %v2543 = vunpack.c.h.b16 %v86
    %v2544 = vunpack.c.l.b16 %v87
    %v2545 = vunpack.c.h.b16 %v87
    %v2546 = vunpack.c.l.b16 %v88
    %v2547 = vunpack.c.h.b16 %v88
    %v2548 = vunpack.c.l.b16 %v89
    %v2549 = vunpack.c.h.b16 %v89
    %v2550 = vunpack.c.l.b16 %v90
    %v2551 = vunpack.c.h.b16 %v90
    %v2552 = vunpack.c.l.b16 %v91
    %v2553 = vunpack.c.h.b16 %v91
    %v2554 = vunpack.c.l.b16 %v92
    %v2555 = vunpack.c.h.b16 %v92
    %v2556 = vunpack.c.l.b16 %v93
    %v2557 = vunpack.c.h.b16 %v93
    %v2558 = vunpack.c.l.b16 %v94
    %v2559 = vunpack.c.h.b16 %v94
    %v2560 = vunpack.c.l.b16 %v95
    %v2561 = vunpack.c.h.b16 %v95
    %v2562 = vunpack.c.l.b16 %v96
    %v2563 = vunpack.c.h.b16 %v96
    %v2564 = vunpack.c.l.b16 %v97
    %v2565 = vunpack.c.h.b16 %v97
    %v2566 = vunpack.c.l.b16 %v98
    %v2567 = vunpack.c.h.b16 %v98
    %v2568 = vunpack.c.l.b16 %v99
    %v2569 = vunpack.c.h.b16 %v99
    %v2570 = vunpack.c.l.b16 %v100
    %v2571 = vunpack.c.h.b16 %v100
    %v2572 = vunpack.c.l.b16 %v101
    %v2573 = vunpack.c.h.b16 %v101
    %v2574 = vunpack.c.l.b16 %v102
    %v2575 = vunpack.c.h.b16 %v102
    %v2576 = vunpack.c.l.b16 %v103
    %v2577 = vunpack.c.h.b16 %v103
    %v2578 = vunpack.c.l.b16 %v104
    %v2579 = vunpack.c.h.b16 %v104
    %v2580 = vunpack.c.l.b16 %v105
    %v2581 = vunpack.c.h.b16 %v105
    %v2582 = vunpack.c.l.b16 %v106
    %v2583 = vunpack.c.h.b16 %v106
    %v2584 = vunpack.c.l.b16 %v107
    %v2585 = vunpack.c.h.b16 %v107
    %v2586 = vunpack.c.l.b16 %v108
    %v2587 = vunpack.c.h.b16 %v108
    %v2588 = vunpack.c.l.b16 %v109
    %v2589 = vunpack.c.h.b16 %v109
    %v2590 = vunpack.c.l.b16 %v110
    %v2591 = vunpack.c.h.b16 %v110
    %v2592 = vunpack.c.l.b16 %v111
    %v2593 = vunpack.c.h.b16 %v111
    %v2594 = vunpack.c.l.b16 %v112
    %v2595 = vunpack.c.h.b16 %v112
    %v2596 = vunpack.c.l.b16 %v113
    %v2597 = vunpack.c.h.b16 %v113
    %v2598 = vunpack.c.l.b16 %v114
    %v2599 = vunpack.c.h.b16 %v114
    %v2600 = vunpack.c.l.b16 %v115
    %v2601 = vunpack.c.h.b16 %v115
    %v2602 = vunpack.c.l.b16 %v116
    %v2603 = vunpack.c.h.b16 %v116
    %v2604 = vunpack.c.l.b16 %v117
    %v2605 = vunpack.c.h.b16 %v117
    %v2606 = vunpack.c.l.b16 %v118
    %v2607 = vunpack.c.h.b16 %v118
    %v2608 = vunpack.c.l.b16 %v119
    %v2609 = vunpack.c.h.b16 %v119
    %v2610 = vunpack.c.l.b16 %v120
    %v2611 = vunpack.c.h.b16 %v120
    %v2612 = vunpack.c.l.b16 %v121
    %v2613 = vunpack.c.h.b16 %v121
    %v2614 = vunpack.c.l.b16 %v122
    %v2615 = vunpack.c.h.b16 %v122
    %v2616 = vunpack.c.l.b16 %v123
    %v2617 = vunpack.c.h.b16 %v123
    %v2618 = vunpack.c.l.b16 %v124
    %v2619 = vunpack.c.h.b16 %v124
    %v2620 = vunpack.c.l.b16 %v125
    %v2621 = vunpack.c.h.b16 %v125
    %v2622 = vunpack.c.l.b16 %v126
    %v2623 = vunpack.c.h.b16 %v126
    %v2624 = vunpack.c.l.b16 %v127
    %v2625 = vunpack.c.h.b16 %v127
    %v2626 = vunpack.c.l.b16 %v128
    %v2627 = vunpack.c.h.b16 %v128
    %v2628 = vunpack.c.l.b16 %v129
    %v2629 = vunpack.c.h.b16 %v129
    %v2630 = vunpack.c.l.b16 %v130
    %v2631 = vunpack.c.h.b16 %v130
    %v2632 = vunpack.c.l.b16 %v131
    %v2633 = vunpack.c.h.b16 %v131
    %v2634 = vunpack.c.l.b16 %v132
    %v2635 = vunpack.c.h.b16 %v132
    %v2636 = vunpack.c.l.b16 %v133
    %v2637 = vunpack.c.h.b16 %v133
    %v2638 = vunpack.c.l.b16 %v134
    %v2639 = vunpack.c.h.b16 %v134
    %v2640 = vunpack.c.l.b16 %v135
    %v2641 = vunpack.c.h.b16 %v135
    %v2642 = vunpack.c.l.b16 %v136
    %v2643 = vunpack.c.h.b16 %v136
    %v2644 = vunpack.c.l.b16 %v137
    %v2645 = vunpack.c.h.b16 %v137
    %v2646 = vunpack.c.l.b16 %v138
    %v2647 = vunpack.c.h.b16 %v138
    %v2648 = vunpack.c.l.b16 %v139
    %v2649 = vunpack.c.h.b16 %v139
    %v2650 = vunpack.c.l.b16 %v140
    %v2651 = vunpack.c.h.b16 %v140
    %v2652 = vunpack.c.l.b16 %v141
    %v2653 = vunpack.c.h.b16 %v141
    %v2654 = vunpack.c.l.b16 %v142
    %v2655 = vunpack.c.h.b16 %v142
    %v2656 = vunpack.c.l.b16 %v143
    %v2657 = vunpack.c.h.b16 %v143
    %v2658 = vunpack.c.l.b16 %v144
    %v2659 = vunpack.c.h.b16 %v144
    %v2660 = vunpack.c.l.b16 %v145
    %v2661 = vunpack.c.h.b16 %v145
    %v2662 = vunpack.c.l.b16 %v146
    %v2663 = vunpack.c.h.b16 %v146
    %v2664 = vunpack.c.l.b16 %v147
    %v2665 = vunpack.c.h.b16 %v147
    %v2666 = vunpack.c.l.b16 %v148
    %v2667 = vunpack.c.h.b16 %v148
    %v2668 = vunpack.c.l.b16 %v149
    %v2669 = vunpack.c.h.b16 %v149
    %v2670 = vunpack.c.l.b16 %v150
    %v2671 = vunpack.c.h.b16 %v150
    %v2672 = vunpack.c.l.b16 %v151
    %v2673 = vunpack.c.h.b16 %v151
    %v2674 = vunpack.c.l.b16 %v152
    %v2675 = vunpack.c.h.b16 %v152
    %v2676 = vunpack.c.l.b16 %v153
    %v2677 = vunpack.c.h.b16 %v153
    %v2678 = vunpack.c.l.b16 %v154
    %v2679 = vunpack.c.h.b16 %v154
    %v2680 = vunpack.c.l.b16 %v155
    %v2681 = vunpack.c.h.b16 %v155
    %v2682 = vunpack.c.l.b16 %v156
    %v2683 = vunpack.c.h.b16 %v156
    %v2684 = vunpack.c.l.b16 %v157
    %v2685 = vunpack.c.h.b16 %v157
    %v2686 = vunpack.c.l.b16 %v158
    %v2687 = vunpack.c.h.b16 %v158
    %v2688 = vunpack.c.l.b16 %v159
    %v2689 = vunpack.c.h.b16 %v159
    %v2690 = vunpack.c.l.b16 %v160
    %v2691 = vunpack.c.h.b16 %v160
    %v2692 = vunpack.c.l.b16 %v161
    %v2693 = vunpack.c.h.b16 %v161
    %v2694 = vunpack.c.l.b16 %v162
    %v2695 = vunpack.c.h.b16 %v162
    %v2696 = vunpack.c.l.b16 %v163
    %v2697 = vunpack.c.h.b16 %v163
    %v2698 = vunpack.c.l.b16 %v164
    %v2699 = vunpack.c.h.b16 %v164
    %v2700 = vunpack.c.l.b16 %v165
    %v2701 = vunpack.c.h.b16 %v165
    %v2702 = vunpack.c.l.b16 %v166
    %v2703 = vunpack.c.h.b16 %v166
    %v2704 = vunpack.c.l.b16 %v167
    %v2705 = vunpack.c.h.b16 %v167
    %v2706 = vunpack.c.l.b16 %v168
    %v2707 = vunpack.c.h.b16 %v168
    %v2708 = vunpack.c.l.b16 %v169
    %v2709 = vunpack.c.h.b16 %v169
    %v2710 = vunpack.c.l.b16 %v170
    %v2711 = vunpack.c.h.b16 %v170
    %v2712 = vunpack.c.l.b16 %v171
    %v2713 = vunpack.c.h.b16 %v171
    %v2714 = vunpack.c.l.b16 %v172
    %v2715 = vunpack.c.h.b16 %v172
    %v2716 = vunpack.c.l.b16 %v173
    %v2717 = vunpack.c.h.b16 %v173
    %v2718 = vunpack.c.l.b16 %v174
    %v2719 = vunpack.c.h.b16 %v174
    %v2720 = vunpack.c.l.b16 %v175
    %v2721 = vunpack.c.h.b16 %v175
    %v2722 = vunpack.c.l.b16 %v176
    %v2723 = vunpack.c.h.b16 %v176
    %v2724 = vunpack.c.l.b16 %v177
    %v2725 = vunpack.c.h.b16 %v177
    %v2726 = vunpack.c.l.b16 %v178
    %v2727 = vunpack.c.h.b16 %v178
    %v2728 = vunpack.c.l.b16 %v179
    %v2729 = vunpack.c.h.b16 %v179
    %v2730 = vunpack.c.l.b16 %v180
    %v2731 = vunpack.c.h.b16 %v180
    %v2732 = vunpack.c.l.b16 %v181
    %v2733 = vunpack.c.h.b16 %v181
    %v2734 = vunpack.c.l.b16 %v182
    %v2735 = vunpack.c.h.b16 %v182
    %v2736 = vunpack.c.l.b16 %v183
    %v2737 = vunpack.c.h.b16 %v183
    %v2738 = vunpack.c.l.b16 %v184
    %v2739 = vunpack.c.h.b16 %v184
    %v2740 = vunpack.c.l.b16 %v185
    %v2741 = vunpack.c.h.b16 %v185
    %v2742 = vunpack.c.l.b16 %v186
    %v2743 = vunpack.c.h.b16 %v186
    %v2744 = vunpack.c.l.b16 %v187
    %v2745 = vunpack.c.h.b16 %v187
    %v2746 = vunpack.c.l.b16 %v188
    %v2747 = vunpack.c.h.b16 %v188
    %v2748 = vunpack.c.l.b16 %v189
    %v2749 = vunpack.c.h.b16 %v189
    %v2750 = vunpack.c.l.b16 %v190
    %v2751 = vunpack.c.h.b16 %v190
    %v2752 = vunpack.c.l.b16 %v191
    %v2753 = vunpack.c.h.b16 %v191
    %v2754 = vunpack.c.l.b16 %v192
    %v2755 = vunpack.c.h.b16 %v192
    %v2756 = vunpack.c.l.b16 %v193
    %v2757 = vunpack.c.h.b16 %v193
    %v2758 = vunpack.c.l.b16 %v194
    %v2759 = vunpack.c.h.b16 %v194
    %v2760 = vunpack.c.l.b16 %v195
    %v2761 = vunpack.c.h.b16 %v195
    %v2762 = vunpack.c.l.b16 %v196
    %v2763 = vunpack.c.h.b16 %v196
    %v2764 = vunpack.c.l.b16 %v197
    %v2765 = vunpack.c.h.b16 %v197
    %v2766 = vunpack.c.l.b16 %v198
    %v2767 = vunpack.c.h.b16 %v198
    %v2768 = vunpack.c.l.b16 %v199
    %v2769 = vunpack.c.h.b16 %v199
    %v2770 = vunpack.c.l.b16 %v200
    %v2771 = vunpack.c.h.b16 %v200
    %v2772 = vunpack.c.l.b16 %v201
    %v2773 = vunpack.c.h.b16 %v201
    %v2774 = vunpack.c.l.b16 %v202
    %v2775 = vunpack.c.h.b16 %v202
    %v2776 = vunpack.c.l.b16 %v203
    %v2777 = vunpack.c.h.b16 %v203
    %v2778 = vunpack.c.l.b16 %v204
    %v2779 = vunpack.c.h.b16 %v204
    %v2780 = vunpack.c.l.b16 %v205
    %v2781 = vunpack.c.h.b16 %v205
    %v2782 = vunpack.c.l.b16 %v206
    %v2783 = vunpack.c.h.b16 %v206
    %v2784 = vunpack.c.l.b16 %v207
    %v2785 = vunpack.c.h.b16 %v207
    %v2786 = vunpack.c.l.b16 %v208
    %v2787 = vunpack.c.h.b16 %v208
    %v2788 = vunpack.c.l.b16 %v209
    %v2789 = vunpack.c.h.b16 %v209
    %v2790 = vunpack.c.l.b16 %v210
    %v2791 = vunpack.c.h.b16 %v210
    %v2792 = vunpack.c.l.b16 %v211
    %v2793 = vunpack.c.h.b16 %v211
    %v2794 = vunpack.c.l.b16 %v212
    %v2795 = vunpack.c.h.b16 %v212
    %v2796 = vunpack.c.l.b16 %v213
    %v2797 = vunpack.c.h.b16 %v213
    %v2798 = vunpack.c.l.b16 %v214
    %v2799 = vunpack.c.h.b16 %v214
    %v2800 = vunpack.c.l.b16 %v215
    %v2801 = vunpack.c.h.b16 %v215
    %v2802 = vunpack.c.l.b16 %v216
    %v2803 = vunpack.c.h.b16 %v216
    %v2804 = vunpack.c.l.b16 %v217
    %v2805 = vunpack.c.h.b16 %v217
    %v2806 = vunpack.c.l.b16 %v218
    %v2807 = vunpack.c.h.b16 %v218
    %v2808 = vunpack.c.l.b16 %v219
    %v2809 = vunpack.c.h.b16 %v219
    %v2810 = vunpack.c.l.b16 %v220
    %v2811 = vunpack.c.h.b16 %v220
    %v2812 = vunpack.c.l.b16 %v221
    %v2813 = vunpack.c.h.b16 %v221
    %v2814 = vunpack.c.l.b16 %v222
    %v2815 = vunpack.c.h.b16 %v222
    %v2816 = vunpack.c.l.b16 %v223
    %v2817 = vunpack.c.h.b16 %v223
    %v2818 = vunpack.c.l.b16 %v224
    %v2819 = vunpack.c.h.b16 %v224
    %v2820 = vunpack.c.l.b16 %v225
    %v2821 = vunpack.c.h.b16 %v225
    %v2822 = vunpack.c.l.b16 %v226
    %v2823 = vunpack.c.h.b16 %v226
    %v2824 = vunpack.c.l.b16 %v227
    %v2825 = vunpack.c.h.b16 %v227
    %v2826 = vunpack.c.l.b16 %v228
    %v2827 = vunpack.c.h.b16 %v228
    %v2828 = vunpack.c.l.b16 %v229
    %v2829 = vunpack.c.h.b16 %v229
    %v2830 = vunpack.c.l.b16 %v230
    %v2831 = vunpack.c.h.b16 %v230
    %v2832 = vunpack.c.l.b16 %v231
    %v2833 = vunpack.c.h.b16 %v231
    %v2834 = vunpack.c.l.b16 %v232
    %v2835 = vunpack.c.h.b16 %v232
    %v2836 = vunpack.c.l.b16 %v233
    %v2837 = vunpack.c.h.b16 %v233
    %v2838 = vunpack.c.l.b16 %v234
    %v2839 = vunpack.c.h.b16 %v234
    %v2840 = vunpack.c.l.b16 %v235
    %v2841 = vunpack.c.h.b16 %v235
    %v2842 = vunpack.c.l.b16 %v236
    %v2843 = vunpack.c.h.b16 %v236
    %v2844 = vunpack.c.l.b16 %v237
    %v2845 = vunpack.c.h.b16 %v237
    %v2846 = vunpack.c.l.b16 %v238
    %v2847 = vunpack.c.h.b16 %v238
    %v2848 = vunpack.c.l.b16 %v239
    %v2849 = vunpack.c.h.b16 %v239
    %v2850 = vunpack.c.l.b16 %v240
    %v2851 = vunpack.c.h.b16 %v240
    %v2852 = vunpack.c.l.b16 %v241
    %v2853 = vunpack.c.h.b16 %v241
    %v2854 = vunpack.c.l.b16 %v242
    %v2855 = vunpack.c.h.b16 %v242
    %v2856 = vunpack.c.l.b16 %v243
    %v2857 = vunpack.c.h.b16 %v243
    %v2858 = vunpack.c.l.b16 %v244
    %v2859 = vunpack.c.h.b16 %v244
    %v2860 = vunpack.c.l.b16 %v245
    %v2861 = vunpack.c.h.b16 %v245
    %v2862 = vunpack.c.l.b16 %v246
    %v2863 = vunpack.c.h.b16 %v246
    %v2864 = vunpack.c.l.b16 %v247
    %v2865 = vunpack.c.h.b16 %v247
    %v2866 = vunpack.c.l.b16 %v248
    %v2867 = vunpack.c.h.b16 %v248
    %v2868 = vunpack.c.l.b16 %v249
    %v2869 = vunpack.c.h.b16 %v249
    %v2870 = vunpack.c.l.b16 %v250
    %v2871 = vunpack.c.h.b16 %v250
    %v2872 = vunpack.c.l.b16 %v251
    %v2873 = vunpack.c.h.b16 %v251
    %v2874 = vunpack.c.l.b16 %v252
    %v2875 = vunpack.c.h.b16 %v252
    %v2876 = vunpack.c.l.b16 %v253
    %v2877 = vunpack.c.h.b16 %v253
    %v2878 = vunpack.c.l.b16 %v254
    %v2879 = vunpack.c.h.b16 %v254
    %v2880 = vunpack.c.l.b16 %v255
    %v2881 = vunpack.c.h.b16 %v255
    %v2882 = vunpack.c.l.b16 %v256
    %v2883 = vunpack.c.h.b16 %v256
    %v2884 = vunpack.c.l.b16 %v257
    %v2885 = vunpack.c.h.b16 %v257
    %v2886 = vunpack.c.l.b16 %v258
    %v2887 = vunpack.c.h.b16 %v258
    %v2888 = vunpack.c.l.b16 %v259
    %v2889 = vunpack.c.h.b16 %v259
    %v2890 = vunpack.c.l.b16 %v260
    %v2891 = vunpack.c.h.b16 %v260
    %v2892 = vunpack.c.l.b16 %v261
    %v2893 = vunpack.c.h.b16 %v261
    %v2894 = vunpack.c.l.b16 %v262
    %v2895 = vunpack.c.h.b16 %v262
    %v2896 = vunpack.c.l.b16 %v263
    %v2897 = vunpack.c.h.b16 %v263
    %v2898 = vunpack.c.l.b16 %v264
    %v2899 = vunpack.c.h.b16 %v264
    %v2900 = vunpack.c.l.b16 %v265
    %v2901 = vunpack.c.h.b16 %v265
    %v2902 = vunpack.c.l.b16 %v266
    %v2903 = vunpack.c.h.b16 %v266
    %v2904 = vunpack.c.l.b16 %v267
    %v2905 = vunpack.c.h.b16 %v267
    %v2906 = vunpack.c.l.b16 %v268
    %v2907 = vunpack.c.h.b16 %v268
    %v2908 = vunpack.c.l.b16 %v269
    %v2909 = vunpack.c.h.b16 %v269
    %v2910 = vunpack.c.l.b16 %v270
    %v2911 = vunpack.c.h.b16 %v270
    %v2912 = vunpack.c.l.b16 %v271
    %v2913 = vunpack.c.h.b16 %v271
    %v2914 = vunpack.c.l.b16 %v272
    %v2915 = vunpack.c.h.b16 %v272
    %v2916 = vunpack.c.l.b16 %v273
    %v2917 = vunpack.c.h.b16 %v273
    %v2918 = vunpack.c.l.b16 %v274
    %v2919 = vunpack.c.h.b16 %v274
    %v2920 = vunpack.c.l.b16 %v275
    %v2921 = vunpack.c.h.b16 %v275
    %v2922 = vunpack.c.l.b16 %v276
    %v2923 = vunpack.c.h.b16 %v276
    %v2924 = vunpack.c.l.b16 %v277
    %v2925 = vunpack.c.h.b16 %v277
    %v2926 = vunpack.c.l.b16 %v278
    %v2927 = vunpack.c.h.b16 %v278
    %v2928 = vunpack.c.l.b16 %v279
    %v2929 = vunpack.c.h.b16 %v279
    %v2930 = vunpack.c.l.b16 %v280
    %v2931 = vunpack.c.h.b16 %v280
    %v2932 = vunpack.c.l.b16 %v281
    %v2933 = vunpack.c.h.b16 %v281
    %v2934 = vunpack.c.l.b16 %v282
    %v2935 = vunpack.c.h.b16 %v282
    %v2936 = vunpack.c.l.b16 %v283
    %v2937 = vunpack.c.h.b16 %v283
    %v2938 = vunpack.c.l.b16 %v284
    %v2939 = vunpack.c.h.b16 %v284
    %v2940 = vunpack.c.l.b16 %v285
    %v2941 = vunpack.c.h.b16 %v285
    %v2942 = vunpack.c.l.b16 %v286
    %v2943 = vunpack.c.h.b16 %v286
    %v2944 = vunpack.c.l.b16 %v287
    %v2945 = vunpack.c.h.b16 %v287
    %v2946 = vunpack.c.l.b16 %v288
    %v2947 = vunpack.c.h.b16 %v288
    %v2948 = vunpack.c.l.b16 %v289
    %v2949 = vunpack.c.h.b16 %v289
    %v2950 = vunpack.c.l.b16 %v290
    %v2951 = vunpack.c.h.b16 %v290
    %v2952 = vunpack.c.l.b16 %v291
    %v2953 = vunpack.c.h.b16 %v291
    %v2954 = vunpack.c.l.b16 %v292
    %v2955 = vunpack.c.h.b16 %v292
    %v2956 = vunpack.c.l.b16 %v293
    %v2957 = vunpack.c.h.b16 %v293
    %v2958 = vunpack.c.l.b16 %v294
    %v2959 = vunpack.c.h.b16 %v294
    %v2960 = vunpack.c.l.b16 %v295
    %v2961 = vunpack.c.h.b16 %v295
    %v2962 = vunpack.c.l.b16 %v296
    %v2963 = vunpack.c.h.b16 %v296
    %v2964 = vunpack.c.l.b16 %v297
    %v2965 = vunpack.c.h.b16 %v297
    %v2966 = vunpack.c.l.b16 %v298
    %v2967 = vunpack.c.h.b16 %v298
    %v2968 = vunpack.c.l.b16 %v299
    %v2969 = vunpack.c.h.b16 %v299
    %v2970 = vunpack.c.l.b16 %v300
    %v2971 = vunpack.c.h.b16 %v300
    %v2972 = vunpack.c.l.b16 %v301
    %v2973 = vunpack.c.h.b16 %v301
    %v2974 = vunpack.c.l.b16 %v302
    %v2975 = vunpack.c.h.b16 %v302
    %v2976 = vunpack.c.l.b16 %v303
    %v2977 = vunpack.c.h.b16 %v303
    %v2978 = vunpack.c.l.b16 %v304
    %v2979 = vunpack.c.h.b16 %v304
    %v2980 = vunpack.c.l.b16 %v305
    %v2981 = vunpack.c.h.b16 %v305
    %v2982 = vunpack.c.l.b16 %v306
    %v2983 = vunpack.c.h.b16 %v306
    %v2984 = vunpack.c.l.b16 %v307
    %v2985 = vunpack.c.h.b16 %v307
    %v2986 = vunpack.c.l.b16 %v308
    %v2987 = vunpack.c.h.b16 %v308
    %v2988 = vunpack.c.l.b16 %v309
    %v2989 = vunpack.c.h.b16 %v309
    %v2990 = vunpack.c.l.b16 %v310
    %v2991 = vunpack.c.h.b16 %v310
    %v2992 = vunpack.c.l.b16 %v311
    %v2993 = vunpack.c.h.b16 %v311
    %v2994 = vunpack.c.l.b16 %v312
    %v2995 = vunpack.c.h.b16 %v312
    %v2996 = vunpack.c.l.b16 %v313
    %v2997 = vunpack.c.h.b16 %v313
    %v2998 = vunpack.c.l.b16 %v314
    %v2999 = vunpack.c.h.b16 %v314
    %v3000 = vunpack.c.l.b16 %v315
    %v3001 = vunpack.c.h.b16 %v315
    %v3002 = vunpack.c.l.b16 %v316
    %v3003 = vunpack.c.h.b16 %v316
    %v3004 = vunpack.c.l.b16 %v317
    %v3005 = vunpack.c.h.b16 %v317
    %v3006 = vunpack.c.l.b16 %v318
    %v3007 = vunpack.c.h.b16 %v318
    %v3008 = vunpack.c.l.b16 %v319
    %v3009 = vunpack.c.h.b16 %v319
    %v3010 = vunpack.c.l.b16 %v320
    %v3011 = vunpack.c.h.b16 %v320
    %v3012 = vunpack.c.l.b16 %v321
    %v3013 = vunpack.c.h.b16 %v321
    %v3014 = vunpack.c.l.b16 %v322
    %v3015 = vunpack.c.h.b16 %v322
    %v3016 = vunpack.c.l.b16 %v323
    %v3017 = vunpack.c.h.b16 %v323
    %v3018 = vunpack.c.l.b16 %v324
    %v3019 = vunpack.c.h.b16 %v324
    %v3020 = vunpack.c.l.b16 %v325
    %v3021 = vunpack.c.h.b16 %v325
    %v3022 = vunpack.c.l.b16 %v326
    %v3023 = vunpack.c.h.b16 %v326
    %v3024 = vunpack.c.l.b16 %v327
    %v3025 = vunpack.c.h.b16 %v327
    %v3026 = vunpack.c.l.b16 %v328
    %v3027 = vunpack.c.h.b16 %v328
    %v3028 = vunpack.c.l.b16 %v329
    %v3029 = vunpack.c.h.b16 %v329
    %v3030 = vunpack.c.l.b16 %v330
    %v3031 = vunpack.c.h.b16 %v330
    %v3032 = vunpack.c.l.b16 %v331
    %v3033 = vunpack.c.h.b16 %v331
    %v3034 = vunpack.c.l.b16 %v332
    %v3035 = vunpack.c.h.b16 %v332
    %v3036 = vunpack.c.l.b16 %v333
    %v3037 = vunpack.c.h.b16 %v333
    %v3038 = vunpack.c.l.b16 %v334
    %v3039 = vunpack.c.h.b16 %v334
    %v3040 = vunpack.c.l.b16 %v335
    %v3041 = vunpack.c.h.b16 %v335
    %v3042 = vunpack.c.l.b16 %v336
    %v3043 = vunpack.c.h.b16 %v336
    %v3044 = vunpack.c.l.b16 %v337
    %v3045 = vunpack.c.h.b16 %v337
    %v3046 = vunpack.c.l.b16 %v338
    %v3047 = vunpack.c.h.b16 %v338
    %v3048 = vunpack.c.l.b16 %v339
    %v3049 = vunpack.c.h.b16 %v339
    %v3050 = vunpack.c.l.b16 %v340
    %v3051 = vunpack.c.h.b16 %v340
    %v3052 = vunpack.c.l.b16 %v341
    %v3053 = vunpack.c.h.b16 %v341
    %v3054 = vunpack.c.l.b16 %v342
    %v3055 = vunpack.c.h.b16 %v342
    %v3056 = vunpack.c.l.b16 %v343
    %v3057 = vunpack.c.h.b16 %v343
    %v3058 = vunpack.c.l.b16 %v344
    %v3059 = vunpack.c.h.b16 %v344
    %v3060 = vunpack.c.l.b16 %v345
    %v3061 = vunpack.c.h.b16 %v345
    %v3062 = vunpack.c.l.b16 %v346
    %v3063 = vunpack.c.h.b16 %v346
    %v3064 = vunpack.c.l.b16 %v347
    %v3065 = vunpack.c.h.b16 %v347
    %v3066 = vunpack.c.l.b16 %v348
    %v3067 = vunpack.c.h.b16 %v348
    %v3068 = vunpack.c.l.b16 %v349
    %v3069 = vunpack.c.h.b16 %v349
    %v3070 = vunpack.c.l.b16 %v350
    %v3071 = vunpack.c.h.b16 %v350
    %v3072 = vunpack.c.l.b16 %v351
    %v3073 = vunpack.c.h.b16 %v351
    %v3074 = vunpack.c.l.b16 %v352
    %v3075 = vunpack.c.h.b16 %v352
    %v3076 = vunpack.c.l.b16 %v353
    %v3077 = vunpack.c.h.b16 %v353
    %v3078 = vunpack.c.l.b16 %v354
    %v3079 = vunpack.c.h.b16 %v354
    %v3080 = vunpack.c.l.b16 %v355
    %v3081 = vunpack.c.h.b16 %v355
    %v3082 = vunpack.c.l.b16 %v356
    %v3083 = vunpack.c.h.b16 %v356
    %v3084 = vunpack.c.l.b16 %v357
    %v3085 = vunpack.c.h.b16 %v357
    %v3086 = vunpack.c.l.b16 %v358
    %v3087 = vunpack.c.h.b16 %v358
    %v3088 = vunpack.c.l.b16 %v359
    %v3089 = vunpack.c.h.b16 %v359
    %v3090 = vunpack.c.l.b16 %v360
    %v3091 = vunpack.c.h.b16 %v360
    %v3092 = vunpack.c.l.b16 %v361
    %v3093 = vunpack.c.h.b16 %v361
    %v3094 = vunpack.c.l.b16 %v362
    %v3095 = vunpack.c.h.b16 %v362
    %v3096 = vunpack.c.l.b16 %v363
    %v3097 = vunpack.c.h.b16 %v363
    %v3098 = vunpack.c.l.b16 %v364
    %v3099 = vunpack.c.h.b16 %v364
    %v3100 = vunpack.c.l.b16 %v365
    %v3101 = vunpack.c.h.b16 %v365
    %v3102 = vunpack.c.l.b16 %v366
    %v3103 = vunpack.c.h.b16 %v366
    %v3104 = vunpack.c.l.b16 %v367
    %v3105 = vunpack.c.h.b16 %v367
    %v3106 = vunpack.c.l.b16 %v368
    %v3107 = vunpack.c.h.b16 %v368
    %v3108 = vunpack.c.l.b16 %v369
    %v3109 = vunpack.c.h.b16 %v369
    %v3110 = vunpack.c.l.b16 %v370
    %v3111 = vunpack.c.h.b16 %v370
    %v3112 = vunpack.c.l.b16 %v371
    %v3113 = vunpack.c.h.b16 %v371
    %v3114 = vunpack.c.l.b16 %v372
    %v3115 = vunpack.c.h.b16 %v372
    %v3116 = vunpack.c.l.b16 %v373
    %v3117 = vunpack.c.h.b16 %v373
    %v3118 = vunpack.c.l.b16 %v374
    %v3119 = vunpack.c.h.b16 %v374
    %v3120 = vunpack.c.l.b16 %v375
    %v3121 = vunpack.c.h.b16 %v375
    %v3122 = vunpack.c.l.b16 %v376
    %v3123 = vunpack.c.h.b16 %v376
    %v3124 = vunpack.c.l.b16 %v377
    %v3125 = vunpack.c.h.b16 %v377
    %v3126 = vunpack.c.l.b16 %v378
    %v3127 = vunpack.c.h.b16 %v378
    %v3128 = vunpack.c.l.b16 %v379
    %v3129 = vunpack.c.h.b16 %v379
    %v3130 = vunpack.c.l.b16 %v380
    %v3131 = vunpack.c.h.b16 %v380
    %v3132 = vunpack.c.l.b16 %v381
    %v3133 = vunpack.c.h.b16 %v381
    %v3134 = vunpack.c.l.b16 %v382
    %v3135 = vunpack.c.h.b16 %v382
    %v3136 = vunpack.c.l.b16 %v383
    %v3137 = vunpack.c.h.b16 %v383
    %v3138 = vunpack.c.l.b16 %v384
    %v3139 = vunpack.c.h.b16 %v384
    %v3140 = vunpack.c.l.b16 %v385
    %v3141 = vunpack.c.h.b16 %v385
    %v3142 = vunpack.c.l.b16 %v386
    %v3143 = vunpack.c.h.b16 %v386
    %v3144 = vunpack.c.l.b16 %v387
    %v3145 = vunpack.c.h.b16 %v387
    %v3146 = vunpack.c.l.b16 %v388
    %v3147 = vunpack.c.h.b16 %v388
    %v3148 = vunpack.c.l.b16 %v389
    %v3149 = vunpack.c.h.b16 %v389
    %v3150 = vunpack.c.l.b16 %v390
    %v3151 = vunpack.c.h.b16 %v390
    %v3152 = vunpack.c.l.b16 %v391
    %v3153 = vunpack.c.h.b16 %v391
    %v3154 = vunpack.c.l.b16 %v392
    %v3155 = vunpack.c.h.b16 %v392
    %v3156 = vunpack.c.l.b16 %v393
    %v3157 = vunpack.c.h.b16 %v393
    %v3158 = vunpack.c.l.b16 %v394
    %v3159 = vunpack.c.h.b16 %v394
    %v3160 = vunpack.c.l.b16 %v395
    %v3161 = vunpack.c.h.b16 %v395
    %v3162 = vunpack.c.l.b16 %v396
    %v3163 = vunpack.c.h.b16 %v396
    %v3164 = vunpack.c.l.b16 %v397
    %v3165 = vunpack.c.h.b16 %v397
    %v3166 = vunpack.c.l.b16 %v398
    %v3167 = vunpack.c.h.b16 %v398
    %v3168 = vunpack.c.l.b16 %v399
    %v3169 = vunpack.c.h.b16 %v399
    %v3170 = vunpack.c.l.b16 %v400
    %v3171 = vunpack.c.h.b16 %v400
    %v3172 = vunpack.c.l.b16 %v401
    %v3173 = vunpack.c.h.b16 %v401
    %v3174 = vunpack.c.l.b16 %v402
    %v3175 = vunpack.c.h.b16 %v402
    %v3176 = vunpack.c.l.b16 %v403
    %v3177 = vunpack.c.h.b16 %v403
    %v3178 = vunpack.c.l.b16 %v404
    %v3179 = vunpack.c.h.b16 %v404
    %v3180 = vunpack.c.l.b16 %v405
    %v3181 = vunpack.c.h.b16 %v405
    %v3182 = vunpack.c.l.b16 %v406
    %v3183 = vunpack.c.h.b16 %v406
    %v3184 = vunpack.c.l.b16 %v407
    %v3185 = vunpack.c.h.b16 %v407
    %v3186 = vunpack.c.l.b16 %v408
    %v3187 = vunpack.c.h.b16 %v408
    %v3188 = vunpack.c.l.b16 %v409
    %v3189 = vunpack.c.h.b16 %v409
    %v3190 = vunpack.c.l.b16 %v410
    %v3191 = vunpack.c.h.b16 %v410
    %v3192 = vunpack.c.l.b16 %v411
    %v3193 = vunpack.c.h.b16 %v411
    %v3194 = vunpack.c.l.b16 %v412
    %v3195 = vunpack.c.h.b16 %v412
    %v3196 = vunpack.c.l.b16 %v413
    %v3197 = vunpack.c.h.b16 %v413
    %v3198 = vunpack.c.l.b16 %v414
    %v3199 = vunpack.c.h.b16 %v414
    %v3200 = vunpack.c.l.b16 %v415
    %v3201 = vunpack.c.h.b16 %v415
    %v3202 = vunpack.c.l.b16 %v416
    %v3203 = vunpack.c.h.b16 %v416
    %v3204 = vunpack.c.l.b16 %v417
    %v3205 = vunpack.c.h.b16 %v417
    %v3206 = vunpack.c.l.b16 %v418
    %v3207 = vunpack.c.h.b16 %v418
    %v3208 = vunpack.c.l.b16 %v419
    %v3209 = vunpack.c.h.b16 %v419
    %v3210 = vunpack.c.l.b16 %v420
    %v3211 = vunpack.c.h.b16 %v420
    %v3212 = vunpack.c.l.b16 %v421
    %v3213 = vunpack.c.h.b16 %v421
    %v3214 = vunpack.c.l.b16 %v422
    %v3215 = vunpack.c.h.b16 %v422
    %v3216 = vunpack.c.l.b16 %v423
    %v3217 = vunpack.c.h.b16 %v423
    %v3218 = vunpack.c.l.b16 %v424
    %v3219 = vunpack.c.h.b16 %v424
    %v3220 = vunpack.c.l.b16 %v425
    %v3221 = vunpack.c.h.b16 %v425
    %v3222 = vunpack.c.l.b16 %v426
    %v3223 = vunpack.c.h.b16 %v426
    %v3224 = vunpack.c.l.b16 %v427
    %v3225 = vunpack.c.h.b16 %v427
    %v3226 = vunpack.c.l.b16 %v428
    %v3227 = vunpack.c.h.b16 %v428
    %v3228 = vunpack.c.l.b16 %v429
    %v3229 = vunpack.c.h.b16 %v429
    %v3230 = vunpack.c.l.b16 %v430
    %v3231 = vunpack.c.h.b16 %v430
    %v3232 = vunpack.c.l.b16 %v431
    %v3233 = vunpack.c.h.b16 %v431
    %v3234 = vunpack.c.l.b16 %v432
    %v3235 = vunpack.c.h.b16 %v432
    %v3236 = vunpack.c.l.b16 %v433
    %v3237 = vunpack.c.h.b16 %v433
    %v3238 = vunpack.c.l.b16 %v434
    %v3239 = vunpack.c.h.b16 %v434
    %v3240 = vunpack.c.l.b16 %v435
    %v3241 = vunpack.c.h.b16 %v435
    %v3242 = vunpack.c.l.b16 %v436
    %v3243 = vunpack.c.h.b16 %v436
    %v3244 = vunpack.c.l.b16 %v437
    %v3245 = vunpack.c.h.b16 %v437
    %v3246 = vunpack.c.l.b16 %v438
    %v3247 = vunpack.c.h.b16 %v438
    %v3248 = vunpack.c.l.b16 %v439
    %v3249 = vunpack.c.h.b16 %v439
    %v3250 = vunpack.c.l.b16 %v440
    %v3251 = vunpack.c.h.b16 %v440
    %v3252 = vunpack.c.l.b16 %v441
    %v3253 = vunpack.c.h.b16 %v441
    %v3254 = vunpack.c.l.b16 %v442
    %v3255 = vunpack.c.h.b16 %v442
    %v3256 = vunpack.c.l.b16 %v443
    %v3257 = vunpack.c.h.b16 %v443
    %v3258 = vunpack.c.l.b16 %v444
    %v3259 = vunpack.c.h.b16 %v444
    %v3260 = vunpack.c.l.b16 %v445
    %v3261 = vunpack.c.h.b16 %v445
    %v3262 = vunpack.c.l.b16 %v446
    %v3263 = vunpack.c.h.b16 %v446
    %v3264 = vunpack.c.l.b16 %v447
    %v3265 = vunpack.c.h.b16 %v447
    %v3266 = vunpack.c.l.b16 %v448
    %v3267 = vunpack.c.h.b16 %v448
    %v3268 = vunpack.c.l.b16 %v449
    %v3269 = vunpack.c.h.b16 %v449
    %v3270 = vunpack.c.l.b16 %v450
    %v3271 = vunpack.c.h.b16 %v450
    %v3272 = vunpack.c.l.b16 %v451
    %v3273 = vunpack.c.h.b16 %v451
    %v3274 = vunpack.c.l.b16 %v452
    %v3275 = vunpack.c.h.b16 %v452
    %v3276 = vunpack.c.l.b16 %v453
    %v3277 = vunpack.c.h.b16 %v453
    %v3278 = vunpack.c.l.b16 %v454
    %v3279 = vunpack.c.h.b16 %v454
    %v3280 = vunpack.c.l.b16 %v455
    %v3281 = vunpack.c.h.b16 %v455
    %v3282 = vunpack.c.l.b16 %v456
    %v3283 = vunpack.c.h.b16 %v456
    %v3284 = vunpack.c.l.b16 %v457
    %v3285 = vunpack.c.h.b16 %v457
    %v3286 = vunpack.c.l.b16 %v458
    %v3287 = vunpack.c.h.b16 %v458
    %v3288 = vunpack.c.l.b16 %v459
    %v3289 = vunpack.c.h.b16 %v459
    %v3290 = vunpack.c.l.b16 %v460
    %v3291 = vunpack.c.h.b16 %v460
    %v3292 = vunpack.c.l.b16 %v461
    %v3293 = vunpack.c.h.b16 %v461
    %v3294 = vunpack.c.l.b16 %v462
    %v3295 = vunpack.c.h.b16 %v462
    %v3296 = vunpack.c.l.b16 %v463
    %v3297 = vunpack.c.h.b16 %v463
    %v3298 = vunpack.c.l.b16 %v464
    %v3299 = vunpack.c.h.b16 %v464
    %v3300 = vunpack.c.l.b16 %v465
    %v3301 = vunpack.c.h.b16 %v465
    %v3302 = vunpack.c.l.b16 %v466
    %v3303 = vunpack.c.h.b16 %v466
    %v3304 = vunpack.c.l.b16 %v467
    %v3305 = vunpack.c.h.b16 %v467
    %v3306 = vunpack.c.l.b16 %v468
    %v3307 = vunpack.c.h.b16 %v468
    %v3308 = vunpack.c.l.b16 %v469
    %v3309 = vunpack.c.h.b16 %v469
    %v3310 = vunpack.c.l.b16 %v470
    %v3311 = vunpack.c.h.b16 %v470
    %v3312 = vunpack.c.l.b16 %v471
    %v3313 = vunpack.c.h.b16 %v471
    %v3314 = vunpack.c.l.b16 %v472
    %v3315 = vunpack.c.h.b16 %v472
    %v3316 = vunpack.c.l.b16 %v473
    %v3317 = vunpack.c.h.b16 %v473
    %v3318 = vunpack.c.l.b16 %v474
    %v3319 = vunpack.c.h.b16 %v474
    %v3320 = vunpack.c.l.b16 %v475
    %v3321 = vunpack.c.h.b16 %v475
    %v3322 = vunpack.c.l.b16 %v476
    %v3323 = vunpack.c.h.b16 %v476
    %v3324 = vunpack.c.l.b16 %v477
    %v3325 = vunpack.c.h.b16 %v477
    %v3326 = vunpack.c.l.b16 %v478
    %v3327 = vunpack.c.h.b16 %v478
    %v3328 = vunpack.c.l.b16 %v479
    %v3329 = vunpack.c.h.b16 %v479
    %v3330 = vunpack.c.l.b16 %v480
    %v3331 = vunpack.c.h.b16 %v480
    %v3332 = vunpack.c.l.b16 %v481
    %v3333 = vunpack.c.h.b16 %v481
    %v3334 = vunpack.c.l.b16 %v482
    %v3335 = vunpack.c.h.b16 %v482
    %v3336 = vunpack.c.l.b16 %v483
    %v3337 = vunpack.c.h.b16 %v483
    %v3338 = vunpack.c.l.b16 %v484
    %v3339 = vunpack.c.h.b16 %v484
    %v3340 = vunpack.c.l.b16 %v485
    %v3341 = vunpack.c.h.b16 %v485
    %v3342 = vunpack.c.l.b16 %v486
    %v3343 = vunpack.c.h.b16 %v486
    %v3344 = vunpack.c.l.b16 %v487
    %v3345 = vunpack.c.h.b16 %v487
    %v3346 = vunpack.c.l.b16 %v488
    %v3347 = vunpack.c.h.b16 %v488
    %v3348 = vunpack.c.l.b16 %v489
    %v3349 = vunpack.c.h.b16 %v489
    %v3350 = vunpack.c.l.b16 %v490
    %v3351 = vunpack.c.h.b16 %v490
    %v3352 = vunpack.c.l.b16 %v491
    %v3353 = vunpack.c.h.b16 %v491
    %v3354 = vunpack.c.l.b16 %v492
    %v3355 = vunpack.c.h.b16 %v492
    %v3356 = vunpack.c.l.b16 %v493
    %v3357 = vunpack.c.h.b16 %v493
    %v3358 = vunpack.c.l.b16 %v494
    %v3359 = vunpack.c.h.b16 %v494
    %v3360 = vunpack.c.l.b16 %v495
    %v3361 = vunpack.c.h.b16 %v495
    %v3362 = vunpack.c.l.b16 %v496
    %v3363 = vunpack.c.h.b16 %v496
    %v3364 = vunpack.c.l.b16 %v497
    %v3365 = vunpack.c.h.b16 %v497
    %v3366 = vunpack.c.l.b16 %v498
    %v3367 = vunpack.c.h.b16 %v498
    %v3368 = vunpack.c.l.b16 %v499
    %v3369 = vunpack.c.h.b16 %v499
    %v3370 = vunpack.c.l.b16 %v500
    %v3371 = vunpack.c.h.b16 %v500
    %v3372 = vunpack.c.l.b16 %v501
    %v3373 = vunpack.c.h.b16 %v501
    %v3374 = vunpack.c.l.b16 %v502
    %v3375 = vunpack.c.h.b16 %v502
    %v3376 = vunpack.c.l.b16 %v503
    %v3377 = vunpack.c.h.b16 %v503
    %v3378 = vunpack.c.l.b16 %v504
    %v3379 = vunpack.c.h.b16 %v504
    %v3380 = vunpack.c.l.b16 %v505
    %v3381 = vunpack.c.h.b16 %v505
    %v3382 = vunpack.c.l.b16 %v506
    %v3383 = vunpack.c.h.b16 %v506
    %v3384 = vunpack.c.l.b16 %v507
    %v3385 = vunpack.c.h.b16 %v507
    %v3386 = vunpack.c.l.b16 %v508
    %v3387 = vunpack.c.h.b16 %v508
    %v3388 = vunpack.c.l.b16 %v509
    %v3389 = vunpack.c.h.b16 %v509
    %v3390 = vunpack.c.l.b16 %v510
    %v3391 = vunpack.c.h.b16 %v510
    %v3392 = vunpack.c.l.b16 %v511
    %v3393 = vunpack.c.h.b16 %v511
    %v3394 = vunpack.c.l.b16 %v512
    %v3395 = vunpack.c.h.b16 %v512
    %v3396 = vunpack.c.l.b16 %v513
    %v3397 = vunpack.c.h.b16 %v513
    %v3398 = vunpack.c.l.b16 %v514
    %v3399 = vunpack.c.h.b16 %v514
    %v3400 = vunpack.c.l.b16 %v515
    %v3401 = vunpack.c.h.b16 %v515
    %v3402 = vunpack.c.l.b16 %v516
    %v3403 = vunpack.c.h.b16 %v516
    %v3404 = vunpack.c.l.b16 %v517
    %v3405 = vunpack.c.h.b16 %v517
    %v3406 = vunpack.c.l.b16 %v518
    %v3407 = vunpack.c.h.b16 %v518
    %v3408 = vunpack.c.l.b16 %v519
    %v3409 = vunpack.c.h.b16 %v519
    %v3410 = vunpack.c.l.b16 %v520
    %v3411 = vunpack.c.h.b16 %v520
    %v3412 = vunpack.c.l.b16 %v521
    %v3413 = vunpack.c.h.b16 %v521
    %v3414 = vunpack.c.l.b16 %v522
    %v3415 = vunpack.c.h.b16 %v522
    %v3416 = vunpack.c.l.b16 %v523
    %v3417 = vunpack.c.h.b16 %v523
    %v3418 = vunpack.c.l.b16 %v524
    %v3419 = vunpack.c.h.b16 %v524
    %v3420 = vunpack.c.l.b16 %v525
    %v3421 = vunpack.c.h.b16 %v525
    %v3422 = vunpack.c.l.b16 %v526
    %v3423 = vunpack.c.h.b16 %v526
    %v3424 = vunpack.c.l.b16 %v527
    %v3425 = vunpack.c.h.b16 %v527
    %v3426 = vunpack.c.l.b16 %v528
    %v3427 = vunpack.c.h.b16 %v528
    %v3428 = vunpack.c.l.b16 %v529
    %v3429 = vunpack.c.h.b16 %v529
    %v3430 = vunpack.c.l.b16 %v530
    %v3431 = vunpack.c.h.b16 %v530
    %v3432 = vunpack.c.l.b16 %v531
    %v3433 = vunpack.c.h.b16 %v531
    %v3434 = vunpack.c.l.b16 %v532
    %v3435 = vunpack.c.h.b16 %v532
    %v3436 = vunpack.c.l.b16 %v533
    %v3437 = vunpack.c.h.b16 %v533
    %v3438 = vunpack.c.l.b16 %v534
    %v3439 = vunpack.c.h.b16 %v534
    %v3440 = vunpack.c.l.b16 %v535
    %v3441 = vunpack.c.h.b16 %v535
    %v3442 = vunpack.c.l.b16 %v536
    %v3443 = vunpack.c.h.b16 %v536
    %v3444 = vunpack.c.l.b16 %v537
    %v3445 = vunpack.c.h.b16 %v537
    %v3446 = vunpack.c.l.b16 %v538
    %v3447 = vunpack.c.h.b16 %v538
    %v3448 = vunpack.c.l.b16 %v539
    %v3449 = vunpack.c.h.b16 %v539
    %v3450 = vunpack.c.l.b16 %v540
    %v3451 = vunpack.c.h.b16 %v540
    %v3452 = vunpack.c.l.b16 %v541
    %v3453 = vunpack.c.h.b16 %v541
    %v3454 = vunpack.c.l.b16 %v542
    %v3455 = vunpack.c.h.b16 %v542
    %v3456 = vunpack.c.l.b16 %v543
    %v3457 = vunpack.c.h.b16 %v543
    %v3458 = vunpack.c.l.b16 %v544
    %v3459 = vunpack.c.h.b16 %v544
    %v3460 = vunpack.c.l.b16 %v545
    %v3461 = vunpack.c.h.b16 %v545
    %v3462 = vunpack.c.l.b16 %v546
    %v3463 = vunpack.c.h.b16 %v546
    %v3464 = vunpack.c.l.b16 %v547
    %v3465 = vunpack.c.h.b16 %v547
    %v3466 = vunpack.c.l.b16 %v548
    %v3467 = vunpack.c.h.b16 %v548
    %v3468 = vunpack.c.l.b16 %v549
    %v3469 = vunpack.c.h.b16 %v549
    %v3470 = vunpack.c.l.b16 %v550
    %v3471 = vunpack.c.h.b16 %v550
    %v3472 = vunpack.c.l.b16 %v551
    %v3473 = vunpack.c.h.b16 %v551
    %v3474 = vunpack.c.l.b16 %v552
    %v3475 = vunpack.c.h.b16 %v552
    %v3476 = vunpack.c.l.b16 %v553
    %v3477 = vunpack.c.h.b16 %v553
    %v3478 = vunpack.c.l.b16 %v554
    %v3479 = vunpack.c.h.b16 %v554
    %v3480 = vunpack.c.l.b16 %v555
    %v3481 = vunpack.c.h.b16 %v555
    %v3482 = vunpack.c.l.b16 %v556
    %v3483 = vunpack.c.h.b16 %v556
    %v3484 = vunpack.c.l.b16 %v557
    %v3485 = vunpack.c.h.b16 %v557
    %v3486 = vunpack.c.l.b16 %v558
    %v3487 = vunpack.c.h.b16 %v558
    %v3488 = vunpack.c.l.b16 %v559
    %v3489 = vunpack.c.h.b16 %v559
    %v3490 = vunpack.c.l.b16 %v560
    %v3491 = vunpack.c.h.b16 %v560
    %v3492 = vunpack.c.l.b16 %v561
    %v3493 = vunpack.c.h.b16 %v561
    %v3494 = vunpack.c.l.b16 %v562
    %v3495 = vunpack.c.h.b16 %v562
    %v3496 = vunpack.c.l.b16 %v563
    %v3497 = vunpack.c.h.b16 %v563
    %v3498 = vunpack.c.l.b16 %v564
    %v3499 = vunpack.c.h.b16 %v564
    %v3500 = vunpack.c.l.b16 %v565
    %v3501 = vunpack.c.h.b16 %v565
    %v3502 = vunpack.c.l.b16 %v566
    %v3503 = vunpack.c.h.b16 %v566
    %v3504 = vunpack.c.l.b16 %v567
    %v3505 = vunpack.c.h.b16 %v567
    %v3506 = vunpack.c.l.b16 %v568
    %v3507 = vunpack.c.h.b16 %v568
    %v3508 = vunpack.c.l.b16 %v569
    %v3509 = vunpack.c.h.b16 %v569
    %v3510 = vunpack.c.l.b16 %v570
    %v3511 = vunpack.c.h.b16 %v570
    %v3512 = vunpack.c.l.b16 %v571
    %v3513 = vunpack.c.h.b16 %v571
    %v3514 = vunpack.c.l.b16 %v572
    %v3515 = vunpack.c.h.b16 %v572
    %v3516 = vunpack.c.l.b16 %v573
    %v3517 = vunpack.c.h.b16 %v573
    %v3518 = vunpack.c.l.b16 %v574
    %v3519 = vunpack.c.h.b16 %v574
    %v3520 = vunpack.c.l.b16 %v575
    %v3521 = vunpack.c.h.b16 %v575
    %v3522 = vunpack.c.l.b16 %v576
    %v3523 = vunpack.c.h.b16 %v576
    %v3524 = vunpack.c.l.b16 %v577
    %v3525 = vunpack.c.h.b16 %v577
    %v3526 = vunpack.c.l.b16 %v578
    %v3527 = vunpack.c.h.b16 %v578
    %v3528 = vunpack.c.l.b16 %v579
    %v3529 = vunpack.c.h.b16 %v579
    %v3530 = vunpack.c.l.b16 %v580
    %v3531 = vunpack.c.h.b16 %v580
    %v3532 = vunpack.c.l.b16 %v581
    %v3533 = vunpack.c.h.b16 %v581
    %v3534 = vunpack.c.l.b16 %v582
    %v3535 = vunpack.c.h.b16 %v582
    %v3536 = vunpack.c.l.b16 %v583
    %v3537 = vunpack.c.h.b16 %v583
    %v3538 = vunpack.c.l.b16 %v584
    %v3539 = vunpack.c.h.b16 %v584
    %v3540 = vunpack.c.l.b16 %v585
    %v3541 = vunpack.c.h.b16 %v585
    %v3542 = vunpack.c.l.b16 %v586
    %v3543 = vunpack.c.h.b16 %v586
    %v3544 = vunpack.c.l.b16 %v587
    %v3545 = vunpack.c.h.b16 %v587
    %v3546 = vunpack.c.l.b16 %v588
    %v3547 = vunpack.c.h.b16 %v588
    %v3548 = vunpack.c.l.b16 %v589
    %v3549 = vunpack.c.h.b16 %v589
    %v3550 = vunpack.c.l.b16 %v590
    %v3551 = vunpack.c.h.b16 %v590
    %v3552 = vunpack.c.l.b16 %v591
    %v3553 = vunpack.c.h.b16 %v591
    %v3554 = vunpack.c.l.b16 %v592
    %v3555 = vunpack.c.h.b16 %v592
    %v3556 = vunpack.c.l.b16 %v593
    %v3557 = vunpack.c.h.b16 %v593
    %v3558 = vunpack.c.l.b16 %v594
    %v3559 = vunpack.c.h.b16 %v594
    %v3560 = vunpack.c.l.b16 %v595
    %v3561 = vunpack.c.h.b16 %v595
    %v3562 = vunpack.c.l.b16 %v596
    %v3563 = vunpack.c.h.b16 %v596
    %v3564 = vunpack.c.l.b16 %v597
    %v3565 = vunpack.c.h.b16 %v597
    %v3566 = vunpack.c.l.b16 %v598
    %v3567 = vunpack.c.h.b16 %v598
    %v3568 = vunpack.c.l.b16 %v599
    %v3569 = vunpack.c.h.b16 %v599
    %v3570 = vunpack.c.l.b16 %v600
    %v3571 = vunpack.c.h.b16 %v600
    %v3572 = vunpack.c.l.b16 %v601
    %v3573 = vunpack.c.h.b16 %v601
    %v3574 = vunpack.c.l.b16 %v602
    %v3575 = vunpack.c.h.b16 %v602
    %v3576 = vunpack.c.l.b16 %v603
    %v3577 = vunpack.c.h.b16 %v603
    %v3578 = vunpack.c.l.b16 %v604
    %v3579 = vunpack.c.h.b16 %v604
    %v3580 = vunpack.c.l.b16 %v605
    %v3581 = vunpack.c.h.b16 %v605
    %v3582 = vunpack.c.l.b16 %v606
    %v3583 = vunpack.c.h.b16 %v606
    %v3584 = vunpack.c.l.b16 %v607
    %v3585 = vunpack.c.h.b16 %v607
    %v3586 = vunpack.c.l.b16 %v608
    %v3587 = vunpack.c.h.b16 %v608
    %v3588 = vunpack.c.l.b16 %v609
    %v3589 = vunpack.c.h.b16 %v609
    %v3590 = vunpack.c.l.b16 %v610
    %v3591 = vunpack.c.h.b16 %v610
    %v3592 = vunpack.c.l.b16 %v611
    %v3593 = vunpack.c.h.b16 %v611
    %v3594 = vunpack.c.l.b16 %v612
    %v3595 = vunpack.c.h.b16 %v612
    %v3596 = vunpack.c.l.b16 %v613
    %v3597 = vunpack.c.h.b16 %v613
    %v3598 = vunpack.c.l.b16 %v614
    %v3599 = vunpack.c.h.b16 %v614
    %v3600 = vunpack.c.l.b16 %v615
    %v3601 = vunpack.c.h.b16 %v615
    %v3602 = vunpack.c.l.b16 %v616
    %v3603 = vunpack.c.h.b16 %v616
    %v3604 = vunpack.c.l.b16 %v617
    %v3605 = vunpack.c.h.b16 %v617
    %v3606 = vunpack.c.l.b16 %v618
    %v3607 = vunpack.c.h.b16 %v618
    %v3608 = vunpack.c.l.b16 %v619
    %v3609 = vunpack.c.h.b16 %v619
    %v3610 = vunpack.c.l.b16 %v620
    %v3611 = vunpack.c.h.b16 %v620
    %v3612 = vunpack.c.l.b16 %v621
    %v3613 = vunpack.c.h.b16 %v621
    %v3614 = vunpack.c.l.b16 %v622
    %v3615 = vunpack.c.h.b16 %v622
    %v3616 = vunpack.c.l.b16 %v623
    %v3617 = vunpack.c.h.b16 %v623
    %v3618 = vunpack.c.l.b16 %v624
    %v3619 = vunpack.c.h.b16 %v624
    %v3620 = vunpack.c.l.b16 %v625
    %v3621 = vunpack.c.h.b16 %v625
    %v3622 = vunpack.c.l.b16 %v626
    %v3623 = vunpack.c.h.b16 %v626
    %v3624 = vunpack.c.l.b16 %v627
    %v3625 = vunpack.c.h.b16 %v627
    %v3626 = vunpack.c.l.b16 %v628
    %v3627 = vunpack.c.h.b16 %v628
    %v3628 = vunpack.c.l.b16 %v629
    %v3629 = vunpack.c.h.b16 %v629
    %v3630 = vunpack.c.l.b16 %v630
    %v3631 = vunpack.c.h.b16 %v630
    %v3632 = vunpack.c.l.b16 %v631
    %v3633 = vunpack.c.h.b16 %v631
    %v3634 = vunpack.c.l.b16 %v632
    %v3635 = vunpack.c.h.b16 %v632
    %v3636 = vunpack.c.l.b16 %v633
    %v3637 = vunpack.c.h.b16 %v633
    %v3638 = vunpack.c.l.b16 %v634
    %v3639 = vunpack.c.h.b16 %v634
    %v3640 = vunpack.c.l.b16 %v635
    %v3641 = vunpack.c.h.b16 %v635
    %v3642 = vunpack.c.l.b16 %v636
    %v3643 = vunpack.c.h.b16 %v636
    %v3644 = vunpack.c.l.b16 %v637
    %v3645 = vunpack.c.h.b16 %v637
    %v3646 = vunpack.c.l.b16 %v638
    %v3647 = vunpack.c.h.b16 %v638
    %v3648 = vunpack.c.l.b16 %v639
    %v3649 = vunpack.c.h.b16 %v639
    %v3650 = vunpack.c.l.b16 %v640
    %v3651 = vunpack.c.h.b16 %v640
    %v3652 = vunpack.c.l.b16 %v641
    %v3653 = vunpack.c.h.b16 %v641
    %v3654 = vunpack.c.l.b16 %v642
    %v3655 = vunpack.c.h.b16 %v642
    %v3656 = vunpack.c.l.b16 %v643
    %v3657 = vunpack.c.h.b16 %v643
    %v3658 = vunpack.c.l.b16 %v644
    %v3659 = vunpack.c.h.b16 %v644
    %v3660 = vunpack.c.l.b16 %v645
    %v3661 = vunpack.c.h.b16 %v645
    %v3662 = vunpack.c.l.b16 %v646
    %v3663 = vunpack.c.h.b16 %v646
    %v3664 = vunpack.c.l.b16 %v647
    %v3665 = vunpack.c.h.b16 %v647
    %v3666 = vunpack.c.l.b16 %v648
    %v3667 = vunpack.c.h.b16 %v648
    %v3668 = vunpack.c.l.b16 %v649
    %v3669 = vunpack.c.h.b16 %v649
    %v3670 = vunpack.c.l.b16 %v650
    %v3671 = vunpack.c.h.b16 %v650
    %v3672 = vunpack.c.l.b16 %v651
    %v3673 = vunpack.c.h.b16 %v651
    %v3674 = vunpack.c.l.b16 %v652
    %v3675 = vunpack.c.h.b16 %v652
    %v3676 = vunpack.c.l.b16 %v653
    %v3677 = vunpack.c.h.b16 %v653
    %v3678 = vunpack.c.l.b16 %v654
    %v3679 = vunpack.c.h.b16 %v654
    %v3680 = vunpack.c.l.b16 %v655
    %v3681 = vunpack.c.h.b16 %v655
    %v3682 = vunpack.c.l.b16 %v656
    %v3683 = vunpack.c.h.b16 %v656
    %v3684 = vunpack.c.l.b16 %v657
    %v3685 = vunpack.c.h.b16 %v657
    %v3686 = vunpack.c.l.b16 %v658
    %v3687 = vunpack.c.h.b16 %v658
    %v3688 = vunpack.c.l.b16 %v659
    %v3689 = vunpack.c.h.b16 %v659
    %v3690 = vunpack.c.l.b16 %v660
    %v3691 = vunpack.c.h.b16 %v660
    %v3692 = vunpack.c.l.b16 %v661
    %v3693 = vunpack.c.h.b16 %v661
    %v3694 = vunpack.c.l.b16 %v662
    %v3695 = vunpack.c.h.b16 %v662
    %v3696 = vunpack.c.l.b16 %v663
    %v3697 = vunpack.c.h.b16 %v663
    %v3698 = vunpack.c.l.b16 %v664
    %v3699 = vunpack.c.h.b16 %v664
    %v3700 = vunpack.c.l.b16 %v665
    %v3701 = vunpack.c.h.b16 %v665
    %v3702 = vunpack.c.l.b16 %v666
    %v3703 = vunpack.c.h.b16 %v666
    %v3704 = vunpack.c.l.b16 %v667
    %v3705 = vunpack.c.h.b16 %v667
    %v3706 = vunpack.c.l.b16 %v668
    %v3707 = vunpack.c.h.b16 %v668
    %v3708 = vunpack.c.l.b16 %v669
    %v3709 = vunpack.c.h.b16 %v669
    %v3710 = vunpack.c.l.b16 %v670
    %v3711 = vunpack.c.h.b16 %v670
    %v3712 = vunpack.c.l.b16 %v671
    %v3713 = vunpack.c.h.b16 %v671
    %v3714 = vunpack.c.l.b16 %v672
    %v3715 = vunpack.c.h.b16 %v672
    %v3716 = vunpack.c.l.b16 %v673
    %v3717 = vunpack.c.h.b16 %v673
    %v3718 = vunpack.c.l.b16 %v674
    %v3719 = vunpack.c.h.b16 %v674
    %v3720 = vunpack.c.l.b16 %v675
    %v3721 = vunpack.c.h.b16 %v675
    %v3722 = vunpack.c.l.b16 %v676
    %v3723 = vunpack.c.h.b16 %v676
    %v3724 = vunpack.c.l.b16 %v677
    %v3725 = vunpack.c.h.b16 %v677
    %v3726 = vunpack.c.l.b16 %v678
    %v3727 = vunpack.c.h.b16 %v678
    %v3728 = vunpack.c.l.b16 %v679
    %v3729 = vunpack.c.h.b16 %v679
    %v3730 = vunpack.c.l.b16 %v680
    %v3731 = vunpack.c.h.b16 %v680
    %v3732 = vunpack.c.l.b16 %v681
    %v3733 = vunpack.c.h.b16 %v681
    %v3734 = vunpack.c.l.b16 %v682
    %v3735 = vunpack.c.h.b16 %v682
    %v3736 = vunpack.c.l.b16 %v683
    %v3737 = vunpack.c.h.b16 %v683
    %v3738 = vunpack.c.l.b16 %v684
    %v3739 = vunpack.c.h.b16 %v684
    %v3740 = vunpack.c.l.b16 %v685
    %v3741 = vunpack.c.h.b16 %v685
    %v3742 = vunpack.c.l.b16 %v686
    %v3743 = vunpack.c.h.b16 %v686
    %v3744 = vunpack.c.l.b16 %v687
    %v3745 = vunpack.c.h.b16 %v687
    %v3746 = vunpack.c.l.b16 %v688
    %v3747 = vunpack.c.h.b16 %v688
    %v3748 = vunpack.c.l.b16 %v689
    %v3749 = vunpack.c.h.b16 %v689
    %v3750 = vunpack.c.l.b16 %v690
    %v3751 = vunpack.c.h.b16 %v690
    %v3752 = vunpack.c.l.b16 %v691
    %v3753 = vunpack.c.h.b16 %v691
    %v3754 = vunpack.c.l.b16 %v692
    %v3755 = vunpack.c.h.b16 %v692
    %v3756 = vunpack.c.l.b16 %v693
    %v3757 = vunpack.c.h.b16 %v693
    %v3758 = vunpack.c.l.b16 %v694
    %v3759 = vunpack.c.h.b16 %v694
    %v3760 = vunpack.c.l.b16 %v695
    %v3761 = vunpack.c.h.b16 %v695
    %v3762 = vunpack.c.l.b16 %v696
    %v3763 = vunpack.c.h.b16 %v696
    %v3764 = vunpack.c.l.b16 %v697
    %v3765 = vunpack.c.h.b16 %v697
    %v3766 = vunpack.c.l.b16 %v698
    %v3767 = vunpack.c.h.b16 %v698
    %v3768 = vunpack.c.l.b16 %v699
    %v3769 = vunpack.c.h.b16 %v699
    %v3770 = vunpack.c.l.b16 %v700
    %v3771 = vunpack.c.h.b16 %v700
    %v3772 = vunpack.c.l.b16 %v701
    %v3773 = vunpack.c.h.b16 %v701
    %v3774 = vunpack.c.l.b16 %v702
    %v3775 = vunpack.c.h.b16 %v702
    %v3776 = vunpack.c.l.b16 %v703
    %v3777 = vunpack.c.h.b16 %v703
    %v3778 = vunpack.c.l.b16 %v704
    %v3779 = vunpack.c.h.b16 %v704
    %v3780 = vunpack.c.l.b16 %v705
    %v3781 = vunpack.c.h.b16 %v705
    %v3782 = vunpack.c.l.b16 %v706
    %v3783 = vunpack.c.h.b16 %v706
    %v3784 = vunpack.c.l.b16 %v707
    %v3785 = vunpack.c.h.b16 %v707
    %v3786 = vunpack.c.l.b16 %v708
    %v3787 = vunpack.c.h.b16 %v708
    %v3788 = vunpack.c.l.b16 %v709
    %v3789 = vunpack.c.h.b16 %v709
    %v3790 = vunpack.c.l.b16 %v710
    %v3791 = vunpack.c.h.b16 %v710
    %v3792 = vunpack.c.l.b16 %v711
    %v3793 = vunpack.c.h.b16 %v711
    %v3794 = vunpack.c.l.b16 %v712
    %v3795 = vunpack.c.h.b16 %v712
    %v3796 = vunpack.c.l.b16 %v713
    %v3797 = vunpack.c.h.b16 %v713
    %v3798 = vunpack.c.l.b16 %v714
    %v3799 = vunpack.c.h.b16 %v714
    %v3800 = vunpack.c.l.b16 %v715
    %v3801 = vunpack.c.h.b16 %v715
    %v3802 = vunpack.c.l.b16 %v716
    %v3803 = vunpack.c.h.b16 %v716
    %v3804 = vunpack.c.l.b16 %v717
    %v3805 = vunpack.c.h.b16 %v717
    %v3806 = vunpack.c.l.b16 %v718
    %v3807 = vunpack.c.h.b16 %v718
    %v3808 = vunpack.c.l.b16 %v719
    %v3809 = vunpack.c.h.b16 %v719
    %v3810 = vunpack.c.l.b16 %v720
    %v3811 = vunpack.c.h.b16 %v720
    %v3812 = vunpack.c.l.b16 %v721
    %v3813 = vunpack.c.h.b16 %v721
    %v3814 = vunpack.c.l.b16 %v722
    %v3815 = vunpack.c.h.b16 %v722
    %v3816 = vunpack.c.l.b16 %v723
    %v3817 = vunpack.c.h.b16 %v723
    %v3818 = vunpack.c.l.b16 %v724
    %v3819 = vunpack.c.h.b16 %v724
    %v3820 = vunpack.c.l.b16 %v725
    %v3821 = vunpack.c.h.b16 %v725
    %v3822 = vunpack.c.l.b16 %v726
    %v3823 = vunpack.c.h.b16 %v726
    %v3824 = vunpack.c.l.b16 %v727
    %v3825 = vunpack.c.h.b16 %v727
    %v3826 = vunpack.c.l.b16 %v728
    %v3827 = vunpack.c.h.b16 %v728
    %v3828 = vunpack.c.l.b16 %v729
    %v3829 = vunpack.c.h.b16 %v729
    %v3830 = vunpack.c.l.b16 %v730
    %v3831 = vunpack.c.h.b16 %v730
    %v3832 = vunpack.c.l.b16 %v731
    %v3833 = vunpack.c.h.b16 %v731
    %v3834 = vunpack.c.l.b16 %v732
    %v3835 = vunpack.c.h.b16 %v732
    %v3836 = vunpack.c.l.b16 %v733
    %v3837 = vunpack.c.h.b16 %v733
    %v3838 = vunpack.c.l.b16 %v734
    %v3839 = vunpack.c.h.b16 %v734
    %v3840 = vunpack.c.l.b16 %v735
    %v3841 = vunpack.c.h.b16 %v735
    %v3842 = vunpack.c.l.b16 %v736
    %v3843 = vunpack.c.h.b16 %v736
    %v3844 = vunpack.c.l.b16 %v737
    %v3845 = vunpack.c.h.b16 %v737
    %v3846 = vunpack.c.l.b16 %v738
    %v3847 = vunpack.c.h.b16 %v738
    %v3848 = vunpack.c.l.b16 %v739
    %v3849 = vunpack.c.h.b16 %v739
    %v3850 = vunpack.c.l.b16 %v740
    %v3851 = vunpack.c.h.b16 %v740
    %v3852 = vunpack.c.l.b16 %v741
    %v3853 = vunpack.c.h.b16 %v741
    %v3854 = vunpack.c.l.b16 %v742
    %v3855 = vunpack.c.h.b16 %v742
    %v3856 = vunpack.c.l.b16 %v743
    %v3857 = vunpack.c.h.b16 %v743
    %v3858 = vunpack.c.l.b16 %v744
    %v3859 = vunpack.c.h.b16 %v744
    %v3860 = vunpack.c.l.b16 %v745
    %v3861 = vunpack.c.h.b16 %v745
    %v3862 = vunpack.c.l.b16 %v746
    %v3863 = vunpack.c.h.b16 %v746
    %v3864 = vunpack.c.l.b16 %v747
    %v3865 = vunpack.c.h.b16 %v747
    %v3866 = vunpack.c.l.b16 %v748
    %v3867 = vunpack.c.h.b16 %v748
    %v3868 = vunpack.c.l.b16 %v749
    %v3869 = vunpack.c.h.b16 %v749
    %v3870 = vunpack.c.l.b16 %v750
    %v3871 = vunpack.c.h.b16 %v750
    %v3872 = vunpack.c.l.b16 %v751
    %v3873 = vunpack.c.h.b16 %v751
    %v3874 = vunpack.c.l.b16 %v752
    %v3875 = vunpack.c.h.b16 %v752
    %v3876 = vunpack.c.l.b16 %v753
    %v3877 = vunpack.c.h.b16 %v753
    %v3878 = vunpack.c.l.b16 %v754
    %v3879 = vunpack.c.h.b16 %v754
    %v3880 = vunpack.c.l.b16 %v755
    %v3881 = vunpack.c.h.b16 %v755
    %v3882 = vunpack.c.l.b16 %v756
    %v3883 = vunpack.c.h.b16 %v756
    %v3884 = vunpack.c.l.b16 %v757
    %v3885 = vunpack.c.h.b16 %v757
    %v3886 = vunpack.c.l.b16 %v758
    %v3887 = vunpack.c.h.b16 %v758
    %v3888 = vunpack.c.l.b16 %v759
    %v3889 = vunpack.c.h.b16 %v759
    %v3890 = vunpack.c.l.b16 %v760
    %v3891 = vunpack.c.h.b16 %v760
    %v3892 = vunpack.c.l.b16 %v761
    %v3893 = vunpack.c.h.b16 %v761
    %v3894 = vunpack.c.l.b16 %v762
    %v3895 = vunpack.c.h.b16 %v762
    %v3896 = vunpack.c.l.b16 %v763
    %v3897 = vunpack.c.h.b16 %v763
    %v3898 = vunpack.c.l.b16 %v764
    %v3899 = vunpack.c.h.b16 %v764
    %v3900 = vunpack.c.l.b16 %v765
    %v3901 = vunpack.c.h.b16 %v765
    %v3902 = vunpack.c.l.b16 %v766
    %v3903 = vunpack.c.h.b16 %v766
    %v3904 = vunpack.c.l.b16 %v767
    %v3905 = vunpack.c.h.b16 %v767
    %v3906 = vunpack.c.l.b16 %v768
    %v3907 = vunpack.c.h.b16 %v768
    %v3908 = vunpack.c.l.b16 %v769
    %v3909 = vunpack.c.h.b16 %v769
    %v3910 = vunpack.c.l.b16 %v770
    %v3911 = vunpack.c.h.b16 %v770
    %v3912 = vunpack.c.l.b16 %v771
    %v3913 = vunpack.c.h.b16 %v771
    %v3914 = vunpack.c.l.b16 %v772
    %v3915 = vunpack.c.h.b16 %v772
    %v3916 = vunpack.c.l.b16 %v773
    %v3917 = vunpack.c.h.b16 %v773
    %v3918 = vunpack.c.l.b16 %v774
    %v3919 = vunpack.c.h.b16 %v774
    %v3920 = vunpack.c.l.b16 %v775
    %v3921 = vunpack.c.h.b16 %v775
    %v3922 = vunpack.c.l.b16 %v776
    %v3923 = vunpack.c.h.b16 %v776
    %v3924 = vunpack.c.l.b16 %v777
    %v3925 = vunpack.c.h.b16 %v777
    %v3926 = vunpack.c.l.b16 %v778
    %v3927 = vunpack.c.h.b16 %v778
    %v3928 = vunpack.c.l.b16 %v779
    %v3929 = vunpack.c.h.b16 %v779
    %v3930 = vunpack.c.l.b16 %v780
    %v3931 = vunpack.c.h.b16 %v780
    %v3932 = vunpack.c.l.b16 %v781
    %v3933 = vunpack.c.h.b16 %v781
    %v3934 = vunpack.c.l.b16 %v782
    %v3935 = vunpack.c.h.b16 %v782
    %v3936 = vunpack.c.l.b16 %v783
    %v3937 = vunpack.c.h.b16 %v783
    %v3938 = vunpack.c.l.b16 %v784
    %v3939 = vunpack.c.h.b16 %v784
    %v3940 = vunpack.c.l.b16 %v785
    %v3941 = vunpack.c.h.b16 %v785
    %v3942 = vunpack.c.l.b16 %v786
    %v3943 = vunpack.c.h.b16 %v786
    %v3944 = vunpack.c.l.b16 %v787
    %v3945 = vunpack.c.h.b16 %v787
    %v3946 = vunpack.c.l.b16 %v788
    %v3947 = vunpack.c.h.b16 %v788
    %v3948 = vunpack.c.l.b16 %v789
    %v3949 = vunpack.c.h.b16 %v789
    %v3950 = vunpack.c.l.b16 %v790
    %v3951 = vunpack.c.h.b16 %v790
    %v3952 = vunpack.c.l.b16 %v791
    %v3953 = vunpack.c.h.b16 %v791
    %v3954 = vunpack.c.l.b16 %v792
    %v3955 = vunpack.c.h.b16 %v792
    %v3956 = vunpack.c.l.b16 %v793
    %v3957 = vunpack.c.h.b16 %v793
    %v3958 = vunpack.c.l.b16 %v794
    %v3959 = vunpack.c.h.b16 %v794
    %v3960 = vunpack.c.l.b16 %v795
    %v3961 = vunpack.c.h.b16 %v795
    %v3962 = vunpack.c.l.b16 %v796
    %v3963 = vunpack.c.h.b16 %v796
    %v3964 = vunpack.c.l.b16 %v797
    %v3965 = vunpack.c.h.b16 %v797
    %v3966 = vunpack.c.l.b16 %v798
    %v3967 = vunpack.c.h.b16 %v798
    %v3968 = vunpack.c.l.b16 %v799
    %v3969 = vunpack.c.h.b16 %v799
    %v3970 = vunpack.c.l.b16 %v800
    %v3971 = vunpack.c.h.b16 %v800
    %v3972 = vunpack.c.l.b16 %v801
    %v3973 = vunpack.c.h.b16 %v801
    %v3974 = vunpack.c.l.b16 %v802
    %v3975 = vunpack.c.h.b16 %v802
    %v3976 = vunpack.c.l.b16 %v803
    %v3977 = vunpack.c.h.b16 %v803
    %v3978 = vunpack.c.l.b16 %v804
    %v3979 = vunpack.c.h.b16 %v804
    %v3980 = vunpack.c.l.b16 %v805
    %v3981 = vunpack.c.h.b16 %v805
    %v3982 = vunpack.c.l.b16 %v806
    %v3983 = vunpack.c.h.b16 %v806
    %v3984 = vunpack.c.l.b16 %v807
    %v3985 = vunpack.c.h.b16 %v807
    %v3986 = vunpack.c.l.b16 %v808
    %v3987 = vunpack.c.h.b16 %v808
    %v3988 = vunpack.c.l.b16 %v809
    %v3989 = vunpack.c.h.b16 %v809
    %v3990 = vunpack.c.l.b16 %v810
    %v3991 = vunpack.c.h.b16 %v810
    %v3992 = vunpack.c.l.b16 %v811
    %v3993 = vunpack.c.h.b16 %v811
    %v3994 = vunpack.c.l.b16 %v812
    %v3995 = vunpack.c.h.b16 %v812
    %v3996 = vunpack.c.l.b16 %v813
    %v3997 = vunpack.c.h.b16 %v813
    %v3998 = vunpack.c.l.b16 %v814
    %v3999 = vunpack.c.h.b16 %v814
    %v4000 = vunpack.c.l.b16 %v815
    %v4001 = vunpack.c.h.b16 %v815
    %v4002 = vunpack.c.l.b16 %v816
    %v4003 = vunpack.c.h.b16 %v816
    %v4004 = vunpack.c.l.b16 %v817
    %v4005 = vunpack.c.h.b16 %v817
    %v4006 = vunpack.c.l.b16 %v818
    %v4007 = vunpack.c.h.b16 %v818
    %v4008 = vunpack.c.l.b16 %v819
    %v4009 = vunpack.c.h.b16 %v819
    %v4010 = vunpack.c.l.b16 %v820
    %v4011 = vunpack.c.h.b16 %v820
    %v4012 = vunpack.c.l.b16 %v821
    %v4013 = vunpack.c.h.b16 %v821
    %v4014 = vunpack.c.l.b16 %v822
    %v4015 = vunpack.c.h.b16 %v822
    %v4016 = vunpack.c.l.b16 %v823
    %v4017 = vunpack.c.h.b16 %v823
    %v4018 = vunpack.c.l.b16 %v824
    %v4019 = vunpack.c.h.b16 %v824
    %v4020 = vunpack.c.l.b16 %v825
    %v4021 = vunpack.c.h.b16 %v825
    %v4022 = vunpack.c.l.b16 %v826
    %v4023 = vunpack.c.h.b16 %v826
    %v4024 = vunpack.c.l.b16 %v827
    %v4025 = vunpack.c.h.b16 %v827
    %v4026 = vunpack.c.l.b16 %v828
    %v4027 = vunpack.c.h.b16 %v828
    %v4028 = vunpack.c.l.b16 %v829
    %v4029 = vunpack.c.h.b16 %v829
    %v4030 = vunpack.c.l.b16 %v830
    %v4031 = vunpack.c.h.b16 %v830
    %v4032 = vunpack.c.l.b16 %v831
    %v4033 = vunpack.c.h.b16 %v831
    %v4034 = vunpack.c.l.b16 %v832
    %v4035 = vunpack.c.h.b16 %v832
    %v4036 = vunpack.c.l.b16 %v833
    %v4037 = vunpack.c.h.b16 %v833
    %v4038 = vunpack.c.l.b16 %v834
    %v4039 = vunpack.c.h.b16 %v834
    %v4040 = vunpack.c.l.b16 %v835
    %v4041 = vunpack.c.h.b16 %v835
    %v4042 = vunpack.c.l.b16 %v836
    %v4043 = vunpack.c.h.b16 %v836
    %v4044 = vunpack.c.l.b16 %v837
    %v4045 = vunpack.c.h.b16 %v837
    %v4046 = vunpack.c.l.b16 %v838
    %v4047 = vunpack.c.h.b16 %v838
    %v4048 = vunpack.c.l.b16 %v839
    %v4049 = vunpack.c.h.b16 %v839
    %v4050 = vunpack.c.l.b16 %v840
    %v4051 = vunpack.c.h.b16 %v840
    %v4052 = vunpack.c.l.b16 %v841
    %v4053 = vunpack.c.h.b16 %v841
    %v4054 = vunpack.c.l.b16 %v842
    %v4055 = vunpack.c.h.b16 %v842
    %v4056 = vunpack.c.l.b16 %v843
    %v4057 = vunpack.c.h.b16 %v843
    %v4058 = vunpack.c.l.b16 %v844
    %v4059 = vunpack.c.h.b16 %v844
    %v4060 = vunpack.c.l.b16 %v845
    %v4061 = vunpack.c.h.b16 %v845
    %v4062 = vunpack.c.l.b16 %v846
    %v4063 = vunpack.c.h.b16 %v846
    %v4064 = vunpack.c.l.b16 %v847
    %v4065 = vunpack.c.h.b16 %v847
    %v4066 = vunpack.c.l.b16 %v848
    %v4067 = vunpack.c.h.b16 %v848
    %v4068 = vunpack.c.l.b16 %v849
    %v4069 = vunpack.c.h.b16 %v849
    %v4070 = vunpack.c.l.b16 %v850
    %v4071 = vunpack.c.h.b16 %v850
    %v4072 = vunpack.c.l.b16 %v851
    %v4073 = vunpack.c.h.b16 %v851
    %v4074 = vunpack.c.l.b16 %v852
    %v4075 = vunpack.c.h.b16 %v852
    %v4076 = vunpack.c.l.b16 %v853
    %v4077 = vunpack.c.h.b16 %v853
    %v4078 = vunpack.c.l.b16 %v854
    %v4079 = vunpack.c.h.b16 %v854
    %v4080 = vunpack.c.l.b16 %v855
    %v4081 = vunpack.c.h.b16 %v855
    %v4082 = vunpack.c.l.b16 %v856
    %v4083 = vunpack.c.h.b16 %v856
    %v4084 = vunpack.c.l.b16 %v857
    %v4085 = vunpack.c.h.b16 %v857
    %v4086 = vunpack.c.l.b16 %v858
    %v4087 = vunpack.c.h.b16 %v858
    %v4088 = vunpack.c.l.b16 %v859
    %v4089 = vunpack.c.h.b16 %v859
    %v4090 = vunpack.c.l.b16 %v860
    %v4091 = vunpack.c.h.b16 %v860
    %v4092 = vunpack.c.l.b16 %v861
    %v4093 = vunpack.c.h.b16 %v861
    %v4094 = vunpack.c.l.b16 %v862
    %v4095 = vunpack.c.h.b16 %v862
    %v4096 = vunpack.c.l.b16 %v863
    %v4097 = vunpack.c.h.b16 %v863
    %v4098 = vunpack.c.l.b16 %v864
    %v4099 = vunpack.c.h.b16 %v864
    %v4100 = vunpack.c.l.b16 %v865
    %v4101 = vunpack.c.h.b16 %v865
    %v4102 = vunpack.c.l.b16 %v866
    %v4103 = vunpack.c.h.b16 %v866
    %v4104 = vunpack.c.l.b16 %v867
    %v4105 = vunpack.c.h.b16 %v867
    %v4106 = vunpack.c.l.b16 %v868
    %v4107 = vunpack.c.h.b16 %v868
    %v4108 = vunpack.c.l.b16 %v869
    %v4109 = vunpack.c.h.b16 %v869
    %v4110 = vunpack.c.l.b16 %v870
    %v4111 = vunpack.c.h.b16 %v870
    %v4112 = vunpack.c.l.b16 %v871
    %v4113 = vunpack.c.h.b16 %v871
    %v4114 = vunpack.c.l.b16 %v872
    %v4115 = vunpack.c.h.b16 %v872
    %v4116 = vunpack.c.l.b16 %v873
    %v4117 = vunpack.c.h.b16 %v873
    %v4118 = vunpack.c.l.b16 %v874
    %v4119 = vunpack.c.h.b16 %v874
    %v4120 = vunpack.c.l.b16 %v875
    %v4121 = vunpack.c.h.b16 %v875
    %v4122 = vunpack.c.l.b16 %v876
    %v4123 = vunpack.c.h.b16 %v876
    %v4124 = vunpack.c.l.b16 %v877
    %v4125 = vunpack.c.h.b16 %v877
    %v4126 = vunpack.c.l.b16 %v878
    %v4127 = vunpack.c.h.b16 %v878
    %v4128 = vunpack.c.l.b16 %v879
    %v4129 = vunpack.c.h.b16 %v879
    %v4130 = vunpack.c.l.b16 %v880
    %v4131 = vunpack.c.h.b16 %v880
    %v4132 = vunpack.c.l.b16 %v881
    %v4133 = vunpack.c.h.b16 %v881
    %v4134 = vunpack.c.l.b16 %v882
    %v4135 = vunpack.c.h.b16 %v882
    %v4136 = vunpack.c.l.b16 %v883
    %v4137 = vunpack.c.h.b16 %v883
    %v4138 = vunpack.c.l.b16 %v884
    %v4139 = vunpack.c.h.b16 %v884
    %v4140 = vunpack.c.l.b16 %v885
    %v4141 = vunpack.c.h.b16 %v885
    %v4142 = vunpack.c.l.b16 %v886
    %v4143 = vunpack.c.h.b16 %v886
    %v4144 = vunpack.c.l.b16 %v887
    %v4145 = vunpack.c.h.b16 %v887
    %v4146 = vunpack.c.l.b16 %v888
    %v4147 = vunpack.c.h.b16 %v888
    %v4148 = vunpack.c.l.b16 %v889
    %v4149 = vunpack.c.h.b16 %v889
    %v4150 = vunpack.c.l.b16 %v890
    %v4151 = vunpack.c.h.b16 %v890
    %v4152 = vunpack.c.l.b16 %v891
    %v4153 = vunpack.c.h.b16 %v891
    %v4154 = vunpack.c.l.b16 %v892
    %v4155 = vunpack.c.h.b16 %v892
    %v4156 = vunpack.c.l.b16 %v893
    %v4157 = vunpack.c.h.b16 %v893
    %v4158 = vunpack.c.l.b16 %v894
    %v4159 = vunpack.c.h.b16 %v894
    %v4160 = vunpack.c.l.b16 %v895
    %v4161 = vunpack.c.h.b16 %v895
    %v4162 = vunpack.c.l.b16 %v896
    %v4163 = vunpack.c.h.b16 %v896
    %v4164 = vunpack.c.l.b16 %v897
    %v4165 = vunpack.c.h.b16 %v897
    %v4166 = vunpack.c.l.b16 %v898
    %v4167 = vunpack.c.h.b16 %v898
    %v4168 = vunpack.c.l.b16 %v899
    %v4169 = vunpack.c.h.b16 %v899
    %v4170 = vunpack.c.l.b16 %v900
    %v4171 = vunpack.c.h.b16 %v900
    %v4172 = vunpack.c.l.b16 %v901
    %v4173 = vunpack.c.h.b16 %v901
    %v4174 = vunpack.c.l.b16 %v902
    %v4175 = vunpack.c.h.b16 %v902
    %v4176 = vunpack.c.l.b16 %v903
    %v4177 = vunpack.c.h.b16 %v903
    %v4178 = vunpack.c.l.b16 %v904
    %v4179 = vunpack.c.h.b16 %v904
    %v4180 = vunpack.c.l.b16 %v905
    %v4181 = vunpack.c.h.b16 %v905
    %v4182 = vunpack.c.l.b16 %v906
    %v4183 = vunpack.c.h.b16 %v906
    %v4184 = vunpack.c.l.b16 %v907
    %v4185 = vunpack.c.h.b16 %v907
    %v4186 = vunpack.c.l.b16 %v908
    %v4187 = vunpack.c.h.b16 %v908
    %v4188 = vunpack.c.l.b16 %v909
    %v4189 = vunpack.c.h.b16 %v909
    %v4190 = vunpack.c.l.b16 %v910
    %v4191 = vunpack.c.h.b16 %v910
    %v4192 = vunpack.c.l.b16 %v911
    %v4193 = vunpack.c.h.b16 %v911
    %v4194 = vunpack.c.l.b16 %v912
    %v4195 = vunpack.c.h.b16 %v912
    %v4196 = vunpack.c.l.b16 %v913
    %v4197 = vunpack.c.h.b16 %v913
    %v4198 = vunpack.c.l.b16 %v914
    %v4199 = vunpack.c.h.b16 %v914
    %v4200 = vunpack.c.l.b16 %v915
    %v4201 = vunpack.c.h.b16 %v915
    %v4202 = vunpack.c.l.b16 %v916
    %v4203 = vunpack.c.h.b16 %v916
    %v4204 = vunpack.c.l.b16 %v917
    %v4205 = vunpack.c.h.b16 %v917
    %v4206 = vunpack.c.l.b16 %v918
    %v4207 = vunpack.c.h.b16 %v918
    %v4208 = vunpack.c.l.b16 %v919
    %v4209 = vunpack.c.h.b16 %v919
    %v4210 = vunpack.c.l.b16 %v920
    %v4211 = vunpack.c.h.b16 %v920
    %v4212 = vunpack.c.l.b16 %v921
    %v4213 = vunpack.c.h.b16 %v921
    %v4214 = vunpack.c.l.b16 %v922
    %v4215 = vunpack.c.h.b16 %v922
    %v4216 = vunpack.c.l.b16 %v923
    %v4217 = vunpack.c.h.b16 %v923
    %v4218 = vunpack.c.l.b16 %v924
    %v4219 = vunpack.c.h.b16 %v924
    %v4220 = vunpack.c.l.b16 %v925
    %v4221 = vunpack.c.h.b16 %v925
    %v4222 = vunpack.c.l.b16 %v926
    %v4223 = vunpack.c.h.b16 %v926
    %v4224 = vunpack.c.l.b16 %v927
    %v4225 = vunpack.c.h.b16 %v927
    %v4226 = vunpack.c.l.b16 %v928
    %v4227 = vunpack.c.h.b16 %v928
    %v4228 = vunpack.c.l.b16 %v929
    %v4229 = vunpack.c.h.b16 %v929
    %v4230 = vunpack.c.l.b16 %v930
    %v4231 = vunpack.c.h.b16 %v930
    %v4232 = vunpack.c.l.b16 %v931
    %v4233 = vunpack.c.h.b16 %v931
    %v4234 = vunpack.c.l.b16 %v932
    %v4235 = vunpack.c.h.b16 %v932
    %v4236 = vunpack.c.l.b16 %v933
    %v4237 = vunpack.c.h.b16 %v933
    %v4238 = vunpack.c.l.b16 %v934
    %v4239 = vunpack.c.h.b16 %v934
    %v4240 = vunpack.c.l.b16 %v935
    %v4241 = vunpack.c.h.b16 %v935
    %v4242 = vunpack.c.l.b16 %v936
    %v4243 = vunpack.c.h.b16 %v936
    %v4244 = vunpack.c.l.b16 %v937
    %v4245 = vunpack.c.h.b16 %v937
    %v4246 = vunpack.c.l.b16 %v938
    %v4247 = vunpack.c.h.b16 %v938
    %v4248 = vunpack.c.l.b16 %v939
    %v4249 = vunpack.c.h.b16 %v939
    %v4250 = vunpack.c.l.b16 %v940
    %v4251 = vunpack.c.h.b16 %v940
    %v4252 = vunpack.c.l.b16 %v941
    %v4253 = vunpack.c.h.b16 %v941
    %v4254 = vunpack.c.l.b16 %v942
    %v4255 = vunpack.c.h.b16 %v942
    %v4256 = vunpack.c.l.b16 %v943
    %v4257 = vunpack.c.h.b16 %v943
    %v4258 = vunpack.c.l.b16 %v944
    %v4259 = vunpack.c.h.b16 %v944
    %v4260 = vunpack.c.l.b16 %v945
    %v4261 = vunpack.c.h.b16 %v945
    %v4262 = vunpack.c.l.b16 %v946
    %v4263 = vunpack.c.h.b16 %v946
    %v4264 = vunpack.c.l.b16 %v947
    %v4265 = vunpack.c.h.b16 %v947
    %v4266 = vunpack.c.l.b16 %v948
    %v4267 = vunpack.c.h.b16 %v948
    %v4268 = vunpack.c.l.b16 %v949
    %v4269 = vunpack.c.h.b16 %v949
    %v4270 = vunpack.c.l.b16 %v950
    %v4271 = vunpack.c.h.b16 %v950
    %v4272 = vunpack.c.l.b16 %v951
    %v4273 = vunpack.c.h.b16 %v951
    %v4274 = vunpack.c.l.b16 %v952
    %v4275 = vunpack.c.h.b16 %v952
    %v4276 = vunpack.c.l.b16 %v953
    %v4277 = vunpack.c.h.b16 %v953
    %v4278 = vunpack.c.l.b16 %v954
    %v4279 = vunpack.c.h.b16 %v954
    %v4280 = vunpack.c.l.b16 %v955
    %v4281 = vunpack.c.h.b16 %v955
    %v4282 = vunpack.c.l.b16 %v956
    %v4283 = vunpack.c.h.b16 %v956
    %v4284 = vunpack.c.l.b16 %v957
    %v4285 = vunpack.c.h.b16 %v957
    %v4286 = vunpack.c.l.b16 %v958
    %v4287 = vunpack.c.h.b16 %v958
    %v4288 = vunpack.c.l.b16 %v959
    %v4289 = vunpack.c.h.b16 %v959
    %v4290 = vunpack.c.l.b16 %v960
    %v4291 = vunpack.c.h.b16 %v960
    %v4292 = vunpack.c.l.b16 %v961
    %v4293 = vunpack.c.h.b16 %v961
    %v4294 = vunpack.c.l.b16 %v962
    %v4295 = vunpack.c.h.b16 %v962
    %v4296 = vunpack.c.l.b16 %v963
    %v4297 = vunpack.c.h.b16 %v963
    %v4298 = vunpack.c.l.b16 %v964
    %v4299 = vunpack.c.h.b16 %v964
    %v4300 = vunpack.c.l.b16 %v965
    %v4301 = vunpack.c.h.b16 %v965
    %v4302 = vunpack.c.l.b16 %v966
    %v4303 = vunpack.c.h.b16 %v966
    %v4304 = vunpack.c.l.b16 %v967
    %v4305 = vunpack.c.h.b16 %v967
    %v4306 = vunpack.c.l.b16 %v968
    %v4307 = vunpack.c.h.b16 %v968
    %v4308 = vunpack.c.l.b16 %v969
    %v4309 = vunpack.c.h.b16 %v969
    %v4310 = vunpack.c.l.b16 %v970
    %v4311 = vunpack.c.h.b16 %v970
    %v4312 = vunpack.c.l.b16 %v971
    %v4313 = vunpack.c.h.b16 %v971
    %v4314 = vunpack.c.l.b16 %v972
    %v4315 = vunpack.c.h.b16 %v972
    %v4316 = vunpack.c.l.b16 %v973
    %v4317 = vunpack.c.h.b16 %v973
    %v4318 = vunpack.c.l.b16 %v974
    %v4319 = vunpack.c.h.b16 %v974
    %v4320 = vunpack.c.l.b16 %v975
    %v4321 = vunpack.c.h.b16 %v975
    %v4322 = vunpack.c.l.b16 %v976
    %v4323 = vunpack.c.h.b16 %v976
    %v4324 = vunpack.c.l.b16 %v977
    %v4325 = vunpack.c.h.b16 %v977
    %v4326 = vunpack.c.l.b16 %v978
    %v4327 = vunpack.c.h.b16 %v978
    %v4328 = vunpack.c.l.b16 %v979
    %v4329 = vunpack.c.h.b16 %v979
    %v4330 = vunpack.c.l.b16 %v980
    %v4331 = vunpack.c.h.b16 %v980
    %v4332 = vunpack.c.l.b16 %v981
    %v4333 = vunpack.c.h.b16 %v981
    %v4334 = vunpack.c.l.b16 %v982
    %v4335 = vunpack.c.h.b16 %v982
    %v4336 = vunpack.c.l.b16 %v983
    %v4337 = vunpack.c.h.b16 %v983
    %v4338 = vunpack.c.l.b16 %v984
    %v4339 = vunpack.c.h.b16 %v984
    %v4340 = vunpack.c.l.b16 %v985
    %v4341 = vunpack.c.h.b16 %v985
    %v4342 = vunpack.c.l.b16 %v986
    %v4343 = vunpack.c.h.b16 %v986
    %v4344 = vunpack.c.l.b16 %v987
    %v4345 = vunpack.c.h.b16 %v987
    %v4346 = vunpack.c.l.b16 %v988
    %v4347 = vunpack.c.h.b16 %v988
    %v4348 = vunpack.c.l.b16 %v989
    %v4349 = vunpack.c.h.b16 %v989
    %v4350 = vunpack.c.l.b16 %v990
    %v4351 = vunpack.c.h.b16 %v990
    %v4352 = vunpack.c.l.b16 %v991
    %v4353 = vunpack.c.h.b16 %v991
    %v4354 = vunpack.c.l.b16 %v992
    %v4355 = vunpack.c.h.b16 %v992
    %v4356 = vunpack.c.l.b16 %v993
    %v4357 = vunpack.c.h.b16 %v993
    %v4358 = vunpack.c.l.b16 %v994
    %v4359 = vunpack.c.h.b16 %v994
    %v4360 = vunpack.c.l.b16 %v995
    %v4361 = vunpack.c.h.b16 %v995
    %v4362 = vunpack.c.l.b16 %v996
    %v4363 = vunpack.c.h.b16 %v996
    %v4364 = vunpack.c.l.b16 %v997
    %v4365 = vunpack.c.h.b16 %v997
    %v4366 = vunpack.c.l.b16 %v998
    %v4367 = vunpack.c.h.b16 %v998
    %v4368 = vunpack.c.l.b16 %v999
    %v4369 = vunpack.c.h.b16 %v999
    %v4370 = vunpack.c.l.b16 %v1000
    %v4371 = vunpack.c.h.b16 %v1000
    %v4372 = vunpack.c.l.b16 %v1001
    %v4373 = vunpack.c.h.b16 %v1001
    %v4374 = vunpack.c.l.b16 %v1002
    %v4375 = vunpack.c.h.b16 %v1002
    %v4376 = vunpack.c.l.b16 %v1003
    %v4377 = vunpack.c.h.b16 %v1003
    %v4378 = vunpack.c.l.b16 %v1004
    %v4379 = vunpack.c.h.b16 %v1004
    %v4380 = vunpack.c.l.b16 %v1005
    %v4381 = vunpack.c.h.b16 %v1005
    %v4382 = vunpack.c.l.b16 %v1006
    %v4383 = vunpack.c.h.b16 %v1006
    %v4384 = vunpack.c.l.b16 %v1007
    %v4385 = vunpack.c.h.b16 %v1007
    %v4386 = vunpack.c.l.b16 %v1008
    %v4387 = vunpack.c.h.b16 %v1008
    %v4388 = vunpack.c.l.b16 %v1009
    %v4389 = vunpack.c.h.b16 %v1009
    %v4390 = vunpack.c.l.b16 %v1010
    %v4391 = vunpack.c.h.b16 %v1010
    %v4392 = vunpack.c.l.b16 %v1011
    %v4393 = vunpack.c.h.b16 %v1011
    %v4394 = vunpack.c.l.b16 %v1012
    %v4395 = vunpack.c.h.b16 %v1012
    %v4396 = vunpack.c.l.b16 %v1013
    %v4397 = vunpack.c.h.b16 %v1013
    %v4398 = vunpack.c.l.b16 %v1014
    %v4399 = vunpack.c.h.b16 %v1014
    %v4400 = vunpack.c.l.b16 %v1015
    %v4401 = vunpack.c.h.b16 %v1015
    %v4402 = vunpack.c.l.b16 %v1016
    %v4403 = vunpack.c.h.b16 %v1016
    %v4404 = vunpack.c.l.b16 %v1017
    %v4405 = vunpack.c.h.b16 %v1017
    %v4406 = vunpack.c.l.b16 %v1018
    %v4407 = vunpack.c.h.b16 %v1018
    %v4408 = vunpack.c.l.b16 %v1019
    %v4409 = vunpack.c.h.b16 %v1019
    %v4410 = vunpack.c.l.b16 %v1020
    %v4411 = vunpack.c.h.b16 %v1020
    %v4412 = vunpack.c.l.b16 %v1021
    %v4413 = vunpack.c.h.b16 %v1021
    %v4414 = vunpack.c.l.b16 %v1022
    %v4415 = vunpack.c.h.b16 %v1022
    %v4416 = vunpack.c.l.b16 %v1023
    %v4417 = vunpack.c.h.b16 %v1023
    %v4418 = vunpack.c.l.b16 %v1024
    %v4419 = vunpack.c.h.b16 %v1024
    %v4420 = vunpack.c.l.b16 %v1025
    %v4421 = vunpack.c.h.b16 %v1025
    %v4422 = vunpack.c.l.b16 %v1026
    %v4423 = vunpack.c.h.b16 %v1026
    %v4424 = vunpack.c.l.b16 %v1027
    %v4425 = vunpack.c.h.b16 %v1027
    %v4426 = vunpack.c.l.b16 %v1028
    %v4427 = vunpack.c.h.b16 %v1028
    %v4428 = vunpack.c.l.b16 %v1029
    %v4429 = vunpack.c.h.b16 %v1029
    %v4430 = vunpack.c.l.b16 %v1030
    %v4431 = vunpack.c.h.b16 %v1030
    %v4432 = vunpack.c.l.b16 %v1031
    %v4433 = vunpack.c.h.b16 %v1031
    %v4434 = vunpack.c.l.b16 %v1032
    %v4435 = vunpack.c.h.b16 %v1032
    %v4436 = vunpack.c.l.b16 %v1033
    %v4437 = vunpack.c.h.b16 %v1033
    %v4438 = vunpack.c.l.b16 %v1034
    %v4439 = vunpack.c.h.b16 %v1034
    %v4440 = vunpack.c.l.b16 %v1035
    %v4441 = vunpack.c.h.b16 %v1035
    %v4442 = vunpack.c.l.b16 %v1036
    %v4443 = vunpack.c.h.b16 %v1036
    %v4444 = vunpack.c.l.b16 %v1037
    %v4445 = vunpack.c.h.b16 %v1037
    %v4446 = vunpack.c.l.b16 %v1038
    %v4447 = vunpack.c.h.b16 %v1038
    %v4448 = vunpack.c.l.b16 %v1039
    %v4449 = vunpack.c.h.b16 %v1039
    %v4450 = vunpack.c.l.b16 %v1040
    %v4451 = vunpack.c.h.b16 %v1040
    %v4452 = vunpack.c.l.b16 %v1041
    %v4453 = vunpack.c.h.b16 %v1041
    %v4454 = vunpack.c.l.b16 %v1042
    %v4455 = vunpack.c.h.b16 %v1042
    %v4456 = vunpack.c.l.b16 %v1043
    %v4457 = vunpack.c.h.b16 %v1043
    %v4458 = vunpack.c.l.b16 %v1044
    %v4459 = vunpack.c.h.b16 %v1044
    %v4460 = vunpack.c.l.b16 %v1045
    %v4461 = vunpack.c.h.b16 %v1045
    %v4462 = vunpack.c.l.b16 %v1046
    %v4463 = vunpack.c.h.b16 %v1046
    %v4464 = vunpack.c.l.b16 %v1047
    %v4465 = vunpack.c.h.b16 %v1047
    %v4466 = vunpack.c.l.b16 %v1048
    %v4467 = vunpack.c.h.b16 %v1048
    %v4468 = vunpack.c.l.b16 %v1049
    %v4469 = vunpack.c.h.b16 %v1049
    %v4470 = vunpack.c.l.b16 %v1050
    %v4471 = vunpack.c.h.b16 %v1050
    %v4472 = vunpack.c.l.b16 %v1051
    %v4473 = vunpack.c.h.b16 %v1051
    %v4474 = vunpack.c.l.b16 %v1052
    %v4475 = vunpack.c.h.b16 %v1052
    %v4476 = vunpack.c.l.b16 %v1053
    %v4477 = vunpack.c.h.b16 %v1053
    %v4478 = vunpack.c.l.b16 %v1054
    %v4479 = vunpack.c.h.b16 %v1054
    %v4480 = vunpack.c.l.b16 %v1055
    %v4481 = vunpack.c.h.b16 %v1055
    %v4482 = vunpack.c.l.b16 %v1056
    %v4483 = vunpack.c.h.b16 %v1056
    %v4484 = vunpack.c.l.b16 %v1057
    %v4485 = vunpack.c.h.b16 %v1057
    %v4486 = vunpack.c.l.b16 %v1058
    %v4487 = vunpack.c.h.b16 %v1058
    %v4488 = vunpack.c.l.b16 %v1059
    %v4489 = vunpack.c.h.b16 %v1059
    %v4490 = vunpack.c.l.b16 %v1060
    %v4491 = vunpack.c.h.b16 %v1060
    %v4492 = vunpack.c.l.b16 %v1061
    %v4493 = vunpack.c.h.b16 %v1061
    %v4494 = vunpack.c.l.b16 %v1062
    %v4495 = vunpack.c.h.b16 %v1062
    %v4496 = vunpack.c.l.b16 %v1063
    %v4497 = vunpack.c.h.b16 %v1063
    %v4498 = vunpack.c.l.b16 %v1064
    %v4499 = vunpack.c.h.b16 %v1064
    %v4500 = vunpack.c.l.b16 %v1065
    %v4501 = vunpack.c.h.b16 %v1065
    %v4502 = vunpack.c.l.b16 %v1066
    %v4503 = vunpack.c.h.b16 %v1066
    %v4504 = vunpack.c.l.b16 %v1067
    %v4505 = vunpack.c.h.b16 %v1067
    %v4506 = vunpack.c.l.b16 %v1068
    %v4507 = vunpack.c.h.b16 %v1068
    %v4508 = vunpack.c.l.b16 %v1069
    %v4509 = vunpack.c.h.b16 %v1069
    %v4510 = vunpack.c.l.b16 %v1070
    %v4511 = vunpack.c.h.b16 %v1070
    %v4512 = vunpack.c.l.b16 %v1071
    %v4513 = vunpack.c.h.b16 %v1071
    %v4514 = vunpack.c.l.b16 %v1072
    %v4515 = vunpack.c.h.b16 %v1072
    %v4516 = vunpack.c.l.b16 %v1073
    %v4517 = vunpack.c.h.b16 %v1073
    %v4518 = vunpack.c.l.b16 %v1074
    %v4519 = vunpack.c.h.b16 %v1074
    %v4520 = vunpack.c.l.b16 %v1075
    %v4521 = vunpack.c.h.b16 %v1075
    %v4522 = vunpack.c.l.b16 %v1076
    %v4523 = vunpack.c.h.b16 %v1076
    %v4524 = vunpack.c.l.b16 %v1077
    %v4525 = vunpack.c.h.b16 %v1077
    %v4526 = vunpack.c.l.b16 %v1078
    %v4527 = vunpack.c.h.b16 %v1078
    %v4528 = vunpack.c.l.b16 %v1079
    %v4529 = vunpack.c.h.b16 %v1079
    %v4530 = vunpack.c.l.b16 %v1080
    %v4531 = vunpack.c.h.b16 %v1080
    %v4532 = vunpack.c.l.b16 %v1081
    %v4533 = vunpack.c.h.b16 %v1081
    %v4534 = vunpack.c.l.b16 %v1082
    %v4535 = vunpack.c.h.b16 %v1082
    %v4536 = vunpack.c.l.b16 %v1083
    %v4537 = vunpack.c.h.b16 %v1083
    %v4538 = vunpack.c.l.b16 %v1084
    %v4539 = vunpack.c.h.b16 %v1084
    %v4540 = vunpack.c.l.b16 %v1085
    %v4541 = vunpack.c.h.b16 %v1085
    %v4542 = vunpack.c.l.b16 %v1086
    %v4543 = vunpack.c.h.b16 %v1086
    %v4544 = vunpack.c.l.b16 %v1087
    %v4545 = vunpack.c.h.b16 %v1087
    %v4546 = vunpack.c.l.b16 %v1088
    %v4547 = vunpack.c.h.b16 %v1088
    %v4548 = vunpack.c.l.b16 %v1089
    %v4549 = vunpack.c.h.b16 %v1089
    %v4550 = vunpack.c.l.b16 %v1090
    %v4551 = vunpack.c.h.b16 %v1090
    %v4552 = vunpack.c.l.b16 %v1091
    %v4553 = vunpack.c.h.b16 %v1091
    %v4554 = vunpack.c.l.b16 %v1092
    %v4555 = vunpack.c.h.b16 %v1092
    %v4556 = vunpack.c.l.b16 %v1093
    %v4557 = vunpack.c.h.b16 %v1093
    %v4558 = vunpack.c.l.b16 %v1094
    %v4559 = vunpack.c.h.b16 %v1094
    %v4560 = vunpack.c.l.b16 %v1095
    %v4561 = vunpack.c.h.b16 %v1095
    %v4562 = vunpack.c.l.b16 %v1096
    %v4563 = vunpack.c.h.b16 %v1096
    %v4564 = vunpack.c.l.b16 %v1097
    %v4565 = vunpack.c.h.b16 %v1097
    %v4566 = vunpack.c.l.b16 %v1098
    %v4567 = vunpack.c.h.b16 %v1098
    %v4568 = vunpack.c.l.b16 %v1099
    %v4569 = vunpack.c.h.b16 %v1099
    %v4570 = vunpack.c.l.b16 %v1100
    %v4571 = vunpack.c.h.b16 %v1100
    %v4572 = vunpack.c.l.b16 %v1101
    %v4573 = vunpack.c.h.b16 %v1101
    %v4574 = vunpack.c.l.b16 %v1102
    %v4575 = vunpack.c.h.b16 %v1102
    %v4576 = vunpack.c.l.b16 %v1103
    %v4577 = vunpack.c.h.b16 %v1103
    %v4578 = vunpack.c.l.b16 %v1104
    %v4579 = vunpack.c.h.b16 %v1104
    %v4580 = vunpack.c.l.b16 %v1105
    %v4581 = vunpack.c.h.b16 %v1105
    %v4582 = vunpack.c.l.b16 %v1106
    %v4583 = vunpack.c.h.b16 %v1106
    %v4584 = vunpack.c.l.b16 %v1107
    %v4585 = vunpack.c.h.b16 %v1107
    %v4586 = vunpack.c.l.b16 %v1108
    %v4587 = vunpack.c.h.b16 %v1108
    %v4588 = vunpack.c.l.b16 %v1109
    %v4589 = vunpack.c.h.b16 %v1109
    %v4590 = vunpack.c.l.b16 %v1110
    %v4591 = vunpack.c.h.b16 %v1110
    %v4592 = vunpack.c.l.b16 %v1111
    %v4593 = vunpack.c.h.b16 %v1111
    %v4594 = vunpack.c.l.b16 %v1112
    %v4595 = vunpack.c.h.b16 %v1112
    %v4596 = vunpack.c.l.b16 %v1113
    %v4597 = vunpack.c.h.b16 %v1113
    %v4598 = vunpack.c.l.b16 %v1114
    %v4599 = vunpack.c.h.b16 %v1114
    %v4600 = vunpack.c.l.b16 %v1115
    %v4601 = vunpack.c.h.b16 %v1115
    %v4602 = vunpack.c.l.b16 %v1116
    %v4603 = vunpack.c.h.b16 %v1116
    %v4604 = vunpack.c.l.b16 %v1117
    %v4605 = vunpack.c.h.b16 %v1117
    %v4606 = vunpack.c.l.b16 %v1118
    %v4607 = vunpack.c.h.b16 %v1118
    %v4608 = vunpack.c.l.b16 %v1119
    %v4609 = vunpack.c.h.b16 %v1119
    %v4610 = vunpack.c.l.b16 %v1120
    %v4611 = vunpack.c.h.b16 %v1120
    %v4612 = vunpack.c.l.b16 %v1121
    %v4613 = vunpack.c.h.b16 %v1121
    %v4614 = vunpack.c.l.b16 %v1122
    %v4615 = vunpack.c.h.b16 %v1122
    %v4616 = vunpack.c.l.b16 %v1123
    %v4617 = vunpack.c.h.b16 %v1123
    %v4618 = vunpack.c.l.b16 %v1124
    %v4619 = vunpack.c.h.b16 %v1124
    %v4620 = vunpack.c.l.b16 %v1125
    %v4621 = vunpack.c.h.b16 %v1125
    %v4622 = vunpack.c.l.b16 %v1126
    %v4623 = vunpack.c.h.b16 %v1126
    %v4624 = vunpack.c.l.b16 %v1127
    %v4625 = vunpack.c.h.b16 %v1127
    %v4626 = vunpack.c.l.b16 %v1128
    %v4627 = vunpack.c.h.b16 %v1128
    %v4628 = vunpack.c.l.b16 %v1129
    %v4629 = vunpack.c.h.b16 %v1129
    %v4630 = vunpack.c.l.b16 %v1130
    %v4631 = vunpack.c.h.b16 %v1130
    %v4632 = vunpack.c.l.b16 %v1131
    %v4633 = vunpack.c.h.b16 %v1131
    %v4634 = vunpack.c.l.b16 %v1132
    %v4635 = vunpack.c.h.b16 %v1132
    %v4636 = vunpack.c.l.b16 %v1133
    %v4637 = vunpack.c.h.b16 %v1133
    %v4638 = vunpack.c.l.b16 %v1134
    %v4639 = vunpack.c.h.b16 %v1134
    %v4640 = vunpack.c.l.b16 %v1135
    %v4641 = vunpack.c.h.b16 %v1135
    %v4642 = vunpack.c.l.b16 %v1136
    %v4643 = vunpack.c.h.b16 %v1136
    %v4644 = vunpack.c.l.b16 %v1137
    %v4645 = vunpack.c.h.b16 %v1137
    %v4646 = vunpack.c.l.b16 %v1138
    %v4647 = vunpack.c.h.b16 %v1138
    %v4648 = vunpack.c.l.b16 %v1139
    %v4649 = vunpack.c.h.b16 %v1139
    %v4650 = vunpack.c.l.b16 %v1140
    %v4651 = vunpack.c.h.b16 %v1140
    %v4652 = vunpack.c.l.b16 %v1141
    %v4653 = vunpack.c.h.b16 %v1141
    %v4654 = vunpack.c.l.b16 %v1142
    %v4655 = vunpack.c.h.b16 %v1142
    %v4656 = vunpack.c.l.b16 %v1143
    %v4657 = vunpack.c.h.b16 %v1143
    %v4658 = vunpack.c.l.b16 %v1144
    %v4659 = vunpack.c.h.b16 %v1144
    %v4660 = vunpack.c.l.b16 %v1145
    %v4661 = vunpack.c.h.b16 %v1145
    %v4662 = vunpack.c.l.b16 %v1146
    %v4663 = vunpack.c.h.b16 %v1146
    %v4664 = vunpack.c.l.b16 %v1147
    %v4665 = vunpack.c.h.b16 %v1147
    %v4666 = vunpack.c.l.b16 %v1148
    %v4667 = vunpack.c.h.b16 %v1148
    %v4668 = vunpack.c.l.b16 %v1149
    %v4669 = vunpack.c.h.b16 %v1149
    %v4670 = vunpack.c.l.b16 %v1150
    %v4671 = vunpack.c.h.b16 %v1150
    %v4672 = vunpack.c.l.b16 %v1151
    %v4673 = vunpack.c.h.b16 %v1151
    %v4674 = vunpack.c.l.b16 %v1152
    %v4675 = vunpack.c.h.b16 %v1152
    %v4676 = vunpack.c.l.b16 %v1153
    %v4677 = vunpack.c.h.b16 %v1153
    %v4678 = vunpack.c.l.b16 %v1154
    %v4679 = vunpack.c.h.b16 %v1154
    %v4680 = vunpack.c.l.b16 %v1155
    %v4681 = vunpack.c.h.b16 %v1155
    %v4682 = vunpack.c.l.b16 %v1156
    %v4683 = vunpack.c.h.b16 %v1156
    %v4684 = vunpack.c.l.b16 %v1157
    %v4685 = vunpack.c.h.b16 %v1157
    %v4686 = vunpack.c.l.b16 %v1158
    %v4687 = vunpack.c.h.b16 %v1158
    %v4688 = vunpack.c.l.b16 %v1159
    %v4689 = vunpack.c.h.b16 %v1159
    %v4690 = vunpack.c.l.b16 %v1160
    %v4691 = vunpack.c.h.b16 %v1160
    %v4692 = vunpack.c.l.b16 %v1161
    %v4693 = vunpack.c.h.b16 %v1161
    %v4694 = vunpack.c.l.b16 %v1162
    %v4695 = vunpack.c.h.b16 %v1162
    %v4696 = vunpack.c.l.b16 %v1163
    %v4697 = vunpack.c.h.b16 %v1163
    %v4698 = vunpack.c.l.b16 %v1164
    %v4699 = vunpack.c.h.b16 %v1164
    %v4700 = vunpack.c.l.b16 %v1165
    %v4701 = vunpack.c.h.b16 %v1165
    %v4702 = vunpack.c.l.b16 %v1166
    %v4703 = vunpack.c.h.b16 %v1166
    %v4704 = vunpack.c.l.b16 %v1167
    %v4705 = vunpack.c.h.b16 %v1167
    %v4706 = vunpack.c.l.b16 %v1168
    %v4707 = vunpack.c.h.b16 %v1168
    %v4708 = vunpack.c.l.b16 %v1169
    %v4709 = vunpack.c.h.b16 %v1169
    %v4710 = vunpack.c.l.b16 %v1170
    %v4711 = vunpack.c.h.b16 %v1170
    %v4712 = vunpack.c.l.b16 %v1171
    %v4713 = vunpack.c.h.b16 %v1171
    %v4714 = vunpack.c.l.b16 %v1172
    %v4715 = vunpack.c.h.b16 %v1172
    %v4716 = vunpack.c.l.b16 %v1173
    %v4717 = vunpack.c.h.b16 %v1173
    %v4718 = vunpack.c.l.b16 %v1174
    %v4719 = vunpack.c.h.b16 %v1174
    %v4720 = vunpack.c.l.b16 %v1175
    %v4721 = vunpack.c.h.b16 %v1175
    %v4722 = vunpack.c.l.b16 %v1176
    %v4723 = vunpack.c.h.b16 %v1176
    %v4724 = vunpack.c.l.b16 %v1177
    %v4725 = vunpack.c.h.b16 %v1177
    %v4726 = vpack.c.b16 %v2426, %v2422
    %v4727 = vpack.c.b16 %v2427, %v2423
    %v4728 = vpack.c.b16 %v2428, %v2424
    %v4729 = vpack.c.b16 %v2429, %v2425
    %v4730 = vpack.c.b16 %v2434, %v2430
    %v4731 = vpack.c.b16 %v2435, %v2431
    %v4732 = vpack.c.b16 %v2436, %v2432
    %v4733 = vpack.c.b16 %v2437, %v2433
    %v4734 = vpack.c.b16 %v2442, %v2438
    %v4735 = vpack.c.b16 %v2443, %v2439
    %v4736 = vpack.c.b16 %v2444, %v2440
    %v4737 = vpack.c.b16 %v2445, %v2441
    %v4738 = vpack.c.b16 %v2450, %v2446
    %v4739 = vpack.c.b16 %v2451, %v2447
    %v4740 = vpack.c.b16 %v2452, %v2448
    %v4741 = vpack.c.b16 %v2453, %v2449
    %v4742 = vpack.c.b16 %v2458, %v2454
    %v4743 = vpack.c.b16 %v2459, %v2455
    %v4744 = vpack.c.b16 %v2460, %v2456
    %v4745 = vpack.c.b16 %v2461, %v2457
    %v4746 = vpack.c.b16 %v2466, %v2462
    %v4747 = vpack.c.b16 %v2467, %v2463
    %v4748 = vpack.c.b16 %v2468, %v2464
    %v4749 = vpack.c.b16 %v2469, %v2465
    %v4750 = vpack.c.b16 %v2474, %v2470
    %v4751 = vpack.c.b16 %v2475, %v2471
    %v4752 = vpack.c.b16 %v2476, %v2472
    %v4753 = vpack.c.b16 %v2477, %v2473
    %v4754 = vpack.c.b16 %v2482, %v2478
    %v4755 = vpack.c.b16 %v2483, %v2479
    %v4756 = vpack.c.b16 %v2484, %v2480
    %v4757 = vpack.c.b16 %v2485, %v2481
    %v4758 = vpack.c.b16 %v2490, %v2486
    %v4759 = vpack.c.b16 %v2491, %v2487
    %v4760 = vpack.c.b16 %v2492, %v2488
    %v4761 = vpack.c.b16 %v2493, %v2489
    %v4762 = vpack.c.b16 %v2498, %v2494
    %v4763 = vpack.c.b16 %v2499, %v2495
    %v4764 = vpack.c.b16 %v2500, %v2496
    %v4765 = vpack.c.b16 %v2501, %v2497
    %v4766 = vpack.c.b16 %v2506, %v2502
    %v4767 = vpack.c.b16 %v2507, %v2503
    %v4768 = vpack.c.b16 %v2508, %v2504
    %v4769 = vpack.c.b16 %v2509, %v2505
    %v4770 = vpack.c.b16 %v2514, %v2510
    %v4771 = vpack.c.b16 %v2515, %v2511
    %v4772 = vpack.c.b16 %v2516, %v2512
    %v4773 = vpack.c.b16 %v2517, %v2513
    %v4774 = vpack.c.b16 %v2522, %v2518
    %v4775 = vpack.c.b16 %v2523, %v2519
    %v4776 = vpack.c.b16 %v2524, %v2520
    %v4777 = vpack.c.b16 %v2525, %v2521
    %v4778 = vpack.c.b16 %v2530, %v2526
    %v4779 = vpack.c.b16 %v2531, %v2527
    %v4780 = vpack.c.b16 %v2532, %v2528
    %v4781 = vpack.c.b16 %v2533, %v2529
    %v4782 = vpack.c.b16 %v2538, %v2534
    %v4783 = vpack.c.b16 %v2539, %v2535
    %v4784 = vpack.c.b16 %v2540, %v2536
    %v4785 = vpack.c.b16 %v2541, %v2537
    %v4786 = vpack.c.b16 %v2546, %v2542
    %v4787 = vpack.c.b16 %v2547, %v2543
    %v4788 = vpack.c.b16 %v2548, %v2544
    %v4789 = vpack.c.b16 %v2549, %v2545
    %v4790 = vpack.c.b16 %v2554, %v2550
    %v4791 = vpack.c.b16 %v2555, %v2551
    %v4792 = vpack.c.b16 %v2556, %v2552
    %v4793 = vpack.c.b16 %v2557, %v2553
    %v4794 = vpack.c.b16 %v2562, %v2558
    %v4795 = vpack.c.b16 %v2563, %v2559
    %v4796 = vpack.c.b16 %v2564, %v2560
    %v4797 = vpack.c.b16 %v2565, %v2561
    %v4798 = vpack.c.b16 %v2570, %v2566
    %v4799 = vpack.c.b16 %v2571, %v2567
    %v4800 = vpack.c.b16 %v2572, %v2568
    %v4801 = vpack.c.b16 %v2573, %v2569
    %v4802 = vpack.c.b16 %v2578, %v2574
    %v4803 = vpack.c.b16 %v2579, %v2575
    %v4804 = vpack.c.b16 %v2580, %v2576
    %v4805 = vpack.c.b16 %v2581, %v2577
    %v4806 = vpack.c.b16 %v2586, %v2582
    %v4807 = vpack.c.b16 %v2587, %v2583
    %v4808 = vpack.c.b16 %v2588, %v2584
    %v4809 = vpack.c.b16 %v2589, %v2585
    %v4810 = vpack.c.b16 %v2594, %v2590
    %v4811 = vpack.c.b16 %v2595, %v2591
    %v4812 = vpack.c.b16 %v2596, %v2592
    %v4813 = vpack.c.b16 %v2597, %v2593
    %v4814 = vpack.c.b16 %v2602, %v2598
    %v4815 = vpack.c.b16 %v2603, %v2599
    %v4816 = vpack.c.b16 %v2604, %v2600
    %v4817 = vpack.c.b16 %v2605, %v2601
    %v4818 = vpack.c.b16 %v2610, %v2606
    %v4819 = vpack.c.b16 %v2611, %v2607
    %v4820 = vpack.c.b16 %v2612, %v2608
    %v4821 = vpack.c.b16 %v2613, %v2609
    %v4822 = vpack.c.b16 %v2618, %v2614
    %v4823 = vpack.c.b16 %v2619, %v2615
    %v4824 = vpack.c.b16 %v2620, %v2616
    %v4825 = vpack.c.b16 %v2621, %v2617
    %v4826 = vpack.c.b16 %v2626, %v2622
    %v4827 = vpack.c.b16 %v2627, %v2623
    %v4828 = vpack.c.b16 %v2628, %v2624
    %v4829 = vpack.c.b16 %v2629, %v2625
    %v4830 = vpack.c.b16 %v2634, %v2630
    %v4831 = vpack.c.b16 %v2635, %v2631
    %v4832 = vpack.c.b16 %v2636, %v2632
    %v4833 = vpack.c.b16 %v2637, %v2633
    %v4834 = vpack.c.b16 %v2642, %v2638
    %v4835 = vpack.c.b16 %v2643, %v2639
    %v4836 = vpack.c.b16 %v2644, %v2640
    %v4837 = vpack.c.b16 %v2645, %v2641
    %v4838 = vpack.c.b16 %v2650, %v2646
    %v4839 = vpack.c.b16 %v2651, %v2647
    %v4840 = vpack.c.b16 %v2652, %v2648
    %v4841 = vpack.c.b16 %v2653, %v2649
    %v4842 = vpack.c.b16 %v2658, %v2654
    %v4843 = vpack.c.b16 %v2659, %v2655
    %v4844 = vpack.c.b16 %v2660, %v2656
    %v4845 = vpack.c.b16 %v2661, %v2657
    %v4846 = vpack.c.b16 %v2666, %v2662
    %v4847 = vpack.c.b16 %v2667, %v2663
    %v4848 = vpack.c.b16 %v2668, %v2664
    %v4849 = vpack.c.b16 %v2669, %v2665
    %v4850 = vpack.c.b16 %v2674, %v2670
    %v4851 = vpack.c.b16 %v2675, %v2671
    %v4852 = vpack.c.b16 %v2676, %v2672
    %v4853 = vpack.c.b16 %v2677, %v2673
    %v4854 = vpack.c.b16 %v2682, %v2678
    %v4855 = vpack.c.b16 %v2683, %v2679
    %v4856 = vpack.c.b16 %v2684, %v2680
    %v4857 = vpack.c.b16 %v2685, %v2681
    %v4858 = vpack.c.b16 %v2690, %v2686
    %v4859 = vpack.c.b16 %v2691, %v2687
    %v4860 = vpack.c.b16 %v2692, %v2688
    %v4861 = vpack.c.b16 %v2693, %v2689
    %v4862 = vpack.c.b16 %v2698, %v2694
    %v4863 = vpack.c.b16 %v2699, %v2695
    %v4864 = vpack.c.b16 %v2700, %v2696
    %v4865 = vpack.c.b16 %v2701, %v2697
    %v4866 = vpack.c.b16 %v2706, %v2702
    %v4867 = vpack.c.b16 %v2707, %v2703
    %v4868 = vpack.c.b16 %v2708, %v2704
    %v4869 = vpack.c.b16 %v2709, %v2705
    %v4870 = vpack.c.b16 %v2714, %v2710
    %v4871 = vpack.c.b16 %v2715, %v2711
    %v4872 = vpack.c.b16 %v2716, %v2712
    %v4873 = vpack.c.b16 %v2717, %v2713
    %v4874 = vpack.c.b16 %v2722, %v2718
    %v4875 = vpack.c.b16 %v2723, %v2719
    %v4876 = vpack.c.b16 %v2724, %v2720
    %v4877 = vpack.c.b16 %v2725, %v2721
    %v4878 = vpack.c.b16 %v2730, %v2726
    %v4879 = vpack.c.b16 %v2731, %v2727
    %v4880 = vpack.c.b16 %v2732, %v2728
    %v4881 = vpack.c.b16 %v2733, %v2729
    %v4882 = vpack.c.b16 %v2738, %v2734
    %v4883 = vpack.c.b16 %v2739, %v2735
    %v4884 = vpack.c.b16 %v2740, %v2736
    %v4885 = vpack.c.b16 %v2741, %v2737
    %v4886 = vpack.c.b16 %v2746, %v2742
    %v4887 = vpack.c.b16 %v2747, %v2743
    %v4888 = vpack.c.b16 %v2748, %v2744
    %v4889 = vpack.c.b16 %v2749, %v2745
    %v4890 = vpack.c.b16 %v2754, %v2750
    %v4891 = vpack.c.b16 %v2755, %v2751
    %v4892 = vpack.c.b16 %v2756, %v2752
    %v4893 = vpack.c.b16 %v2757, %v2753
    %v4894 = vpack.c.b16 %v2762, %v2758
    %v4895 = vpack.c.b16 %v2763, %v2759
    %v4896 = vpack.c.b16 %v2764, %v2760
    %v4897 = vpack.c.b16 %v2765, %v2761
    %v4898 = vpack.c.b16 %v2770, %v2766
    %v4899 = vpack.c.b16 %v2771, %v2767
    %v4900 = vpack.c.b16 %v2772, %v2768
    %v4901 = vpack.c.b16 %v2773, %v2769
    %v4902 = vpack.c.b16 %v2778, %v2774
    %v4903 = vpack.c.b16 %v2779, %v2775
    %v4904 = vpack.c.b16 %v2780, %v2776
    %v4905 = vpack.c.b16 %v2781, %v2777
    %v4906 = vpack.c.b16 %v2786, %v2782
    %v4907 = vpack.c.b16 %v2787, %v2783
    %v4908 = vpack.c.b16 %v2788, %v2784
    %v4909 = vpack.c.b16 %v2789, %v2785
    %v4910 = vpack.c.b16 %v2794, %v2790
    %v4911 = vpack.c.b16 %v2795, %v2791
    %v4912 = vpack.c.b16 %v2796, %v2792
    %v4913 = vpack.c.b16 %v2797, %v2793
    %v4914 = vpack.c.b16 %v2802, %v2798
    %v4915 = vpack.c.b16 %v2803, %v2799
    %v4916 = vpack.c.b16 %v2804, %v2800
    %v4917 = vpack.c.b16 %v2805, %v2801
    %v4918 = vpack.c.b16 %v2810, %v2806
    %v4919 = vpack.c.b16 %v2811, %v2807
    %v4920 = vpack.c.b16 %v2812, %v2808
    %v4921 = vpack.c.b16 %v2813, %v2809
    %v4922 = vpack.c.b16 %v2818, %v2814
    %v4923 = vpack.c.b16 %v2819, %v2815
    %v4924 = vpack.c.b16 %v2820, %v2816
    %v4925 = vpack.c.b16 %v2821, %v2817
    %v4926 = vpack.c.b16 %v2826, %v2822
    %v4927 = vpack.c.b16 %v2827, %v2823
    %v4928 = vpack.c.b16 %v2828, %v2824
    %v4929 = vpack.c.b16 %v2829, %v2825
    %v4930 = vpack.c.b16 %v2834, %v2830
    %v4931 = vpack.c.b16 %v2835, %v2831
    %v4932 = vpack.c.b16 %v2836, %v2832
    %v4933 = vpack.c.b16 %v2837, %v2833
    %v4934 = vpack.c.b16 %v2842, %v2838
    %v4935 = vpack.c.b16 %v2843, %v2839
    %v4936 = vpack.c.b16 %v2844, %v2840
    %v4937 = vpack.c.b16 %v2845, %v2841
    %v4938 = vpack.c.b16 %v2850, %v2846
    %v4939 = vpack.c.b16 %v2851, %v2847
    %v4940 = vpack.c.b16 %v2852, %v2848
    %v4941 = vpack.c.b16 %v2853, %v2849
    %v4942 = vpack.c.b16 %v2858, %v2854
    %v4943 = vpack.c.b16 %v2859, %v2855
    %v4944 = vpack.c.b16 %v2860, %v2856
    %v4945 = vpack.c.b16 %v2861, %v2857
    %v4946 = vpack.c.b16 %v2866, %v2862
    %v4947 = vpack.c.b16 %v2867, %v2863
    %v4948 = vpack.c.b16 %v2868, %v2864
    %v4949 = vpack.c.b16 %v2869, %v2865
    %v4950 = vpack.c.b16 %v2874, %v2870
    %v4951 = vpack.c.b16 %v2875, %v2871
    %v4952 = vpack.c.b16 %v2876, %v2872
    %v4953 = vpack.c.b16 %v2877, %v2873
    %v4954 = vpack.c.b16 %v2882, %v2878
    %v4955 = vpack.c.b16 %v2883, %v2879
    %v4956 = vpack.c.b16 %v2884, %v2880
    %v4957 = vpack.c.b16 %v2885, %v2881
    %v4958 = vpack.c.b16 %v2890, %v2886
    %v4959 = vpack.c.b16 %v2891, %v2887
    %v4960 = vpack.c.b16 %v2892, %v2888
    %v4961 = vpack.c.b16 %v2893, %v2889
    %v4962 = vpack.c.b16 %v2898, %v2894
    %v4963 = vpack.c.b16 %v2899, %v2895
    %v4964 = vpack.c.b16 %v2900, %v2896
    %v4965 = vpack.c.b16 %v2901, %v2897
    %v4966 = vpack.c.b16 %v2906, %v2902
    %v4967 = vpack.c.b16 %v2907, %v2903
    %v4968 = vpack.c.b16 %v2908, %v2904
    %v4969 = vpack.c.b16 %v2909, %v2905
    %v4970 = vpack.c.b16 %v2914, %v2910
    %v4971 = vpack.c.b16 %v2915, %v2911
    %v4972 = vpack.c.b16 %v2916, %v2912
    %v4973 = vpack.c.b16 %v2917, %v2913
    %v4974 = vpack.c.b16 %v2922, %v2918
    %v4975 = vpack.c.b16 %v2923, %v2919
    %v4976 = vpack.c.b16 %v2924, %v2920
    %v4977 = vpack.c.b16 %v2925, %v2921
    %v4978 = vpack.c.b16 %v2930, %v2926
    %v4979 = vpack.c.b16 %v2931, %v2927
    %v4980 = vpack.c.b16 %v2932, %v2928
    %v4981 = vpack.c.b16 %v2933, %v2929
    %v4982 = vpack.c.b16 %v2938, %v2934
    %v4983 = vpack.c.b16 %v2939, %v2935
    %v4984 = vpack.c.b16 %v2940, %v2936
    %v4985 = vpack.c.b16 %v2941, %v2937
    %v4986 = vpack.c.b16 %v2946, %v2942
    %v4987 = vpack.c.b16 %v2947, %v2943
    %v4988 = vpack.c.b16 %v2948, %v2944
    %v4989 = vpack.c.b16 %v2949, %v2945
    %v4990 = vpack.c.b16 %v2954, %v2950
    %v4991 = vpack.c.b16 %v2955, %v2951
    %v4992 = vpack.c.b16 %v2956, %v2952
    %v4993 = vpack.c.b16 %v2957, %v2953
    %v4994 = vpack.c.b16 %v2962, %v2958
    %v4995 = vpack.c.b16 %v2963, %v2959
    %v4996 = vpack.c.b16 %v2964, %v2960
    %v4997 = vpack.c.b16 %v2965, %v2961
    %v4998 = vpack.c.b16 %v2970, %v2966
    %v4999 = vpack.c.b16 %v2971, %v2967
    %v5000 = vpack.c.b16 %v2972, %v2968
    %v5001 = vpack.c.b16 %v2973, %v2969
    %v5002 = vpack.c.b16 %v2978, %v2974
    %v5003 = vpack.c.b16 %v2979, %v2975
    %v5004 = vpack.c.b16 %v2980, %v2976
    %v5005 = vpack.c.b16 %v2981, %v2977
    %v5006 = vpack.c.b16 %v2986, %v2982
    %v5007 = vpack.c.b16 %v2987, %v2983
    %v5008 = vpack.c.b16 %v2988, %v2984
    %v5009 = vpack.c.b16 %v2989, %v2985
    %v5010 = vpack.c.b16 %v2994, %v2990
    %v5011 = vpack.c.b16 %v2995, %v2991
    %v5012 = vpack.c.b16 %v2996, %v2992
    %v5013 = vpack.c.b16 %v2997, %v2993
    %v5014 = vpack.c.b16 %v3002, %v2998
    %v5015 = vpack.c.b16 %v3003, %v2999
    %v5016 = vpack.c.b16 %v3004, %v3000
    %v5017 = vpack.c.b16 %v3005, %v3001
    %v5018 = vpack.c.b16 %v3010, %v3006
    %v5019 = vpack.c.b16 %v3011, %v3007
    %v5020 = vpack.c.b16 %v3012, %v3008
    %v5021 = vpack.c.b16 %v3013, %v3009
    %v5022 = vpack.c.b16 %v3018, %v3014
    %v5023 = vpack.c.b16 %v3019, %v3015
    %v5024 = vpack.c.b16 %v3020, %v3016
    %v5025 = vpack.c.b16 %v3021, %v3017
    %v5026 = vpack.c.b16 %v3026, %v3022
    %v5027 = vpack.c.b16 %v3027, %v3023
    %v5028 = vpack.c.b16 %v3028, %v3024
    %v5029 = vpack.c.b16 %v3029, %v3025
    %v5030 = vpack.c.b16 %v3034, %v3030
    %v5031 = vpack.c.b16 %v3035, %v3031
    %v5032 = vpack.c.b16 %v3036, %v3032
    %v5033 = vpack.c.b16 %v3037, %v3033
    %v5034 = vpack.c.b16 %v3042, %v3038
    %v5035 = vpack.c.b16 %v3043, %v3039
    %v5036 = vpack.c.b16 %v3044, %v3040
    %v5037 = vpack.c.b16 %v3045, %v3041
    %v5038 = vpack.c.b16 %v3050, %v3046
    %v5039 = vpack.c.b16 %v3051, %v3047
    %v5040 = vpack.c.b16 %v3052, %v3048
    %v5041 = vpack.c.b16 %v3053, %v3049
    %v5042 = vpack.c.b16 %v3058, %v3054
    %v5043 = vpack.c.b16 %v3059, %v3055
    %v5044 = vpack.c.b16 %v3060, %v3056
    %v5045 = vpack.c.b16 %v3061, %v3057
    %v5046 = vpack.c.b16 %v3066, %v3062
    %v5047 = vpack.c.b16 %v3067, %v3063
    %v5048 = vpack.c.b16 %v3068, %v3064
    %v5049 = vpack.c.b16 %v3069, %v3065
    %v5050 = vpack.c.b16 %v3074, %v3070
    %v5051 = vpack.c.b16 %v3075, %v3071
    %v5052 = vpack.c.b16 %v3076, %v3072
    %v5053 = vpack.c.b16 %v3077, %v3073
    %v5054 = vpack.c.b16 %v3082, %v3078
    %v5055 = vpack.c.b16 %v3083, %v3079
    %v5056 = vpack.c.b16 %v3084, %v3080
    %v5057 = vpack.c.b16 %v3085, %v3081
    %v5058 = vpack.c.b16 %v3090, %v3086
    %v5059 = vpack.c.b16 %v3091, %v3087
    %v5060 = vpack.c.b16 %v3092, %v3088
    %v5061 = vpack.c.b16 %v3093, %v3089
    %v5062 = vpack.c.b16 %v3098, %v3094
    %v5063 = vpack.c.b16 %v3099, %v3095
    %v5064 = vpack.c.b16 %v3100, %v3096
    %v5065 = vpack.c.b16 %v3101, %v3097
    %v5066 = vpack.c.b16 %v3106, %v3102
    %v5067 = vpack.c.b16 %v3107, %v3103
    %v5068 = vpack.c.b16 %v3108, %v3104
    %v5069 = vpack.c.b16 %v3109, %v3105
    %v5070 = vpack.c.b16 %v3114, %v3110
    %v5071 = vpack.c.b16 %v3115, %v3111
    %v5072 = vpack.c.b16 %v3116, %v3112
    %v5073 = vpack.c.b16 %v3117, %v3113
    %v5074 = vpack.c.b16 %v3122, %v3118
    %v5075 = vpack.c.b16 %v3123, %v3119
    %v5076 = vpack.c.b16 %v3124, %v3120
    %v5077 = vpack.c.b16 %v3125, %v3121
    %v5078 = vpack.c.b16 %v3130, %v3126
    %v5079 = vpack.c.b16 %v3131, %v3127
    %v5080 = vpack.c.b16 %v3132, %v3128
    %v5081 = vpack.c.b16 %v3133, %v3129
    %v5082 = vpack.c.b16 %v3138, %v3134
    %v5083 = vpack.c.b16 %v3139, %v3135
    %v5084 = vpack.c.b16 %v3140, %v3136
    %v5085 = vpack.c.b16 %v3141, %v3137
    %v5086 = vpack.c.b16 %v3146, %v3142
    %v5087 = vpack.c.b16 %v3147, %v3143
    %v5088 = vpack.c.b16 %v3148, %v3144
    %v5089 = vpack.c.b16 %v3149, %v3145
    %v5090 = vpack.c.b16 %v3154, %v3150
    %v5091 = vpack.c.b16 %v3155, %v3151
    %v5092 = vpack.c.b16 %v3156, %v3152
    %v5093 = vpack.c.b16 %v3157, %v3153
    %v5094 = vpack.c.b16 %v3162, %v3158
    %v5095 = vpack.c.b16 %v3163, %v3159
    %v5096 = vpack.c.b16 %v3164, %v3160
    %v5097 = vpack.c.b16 %v3165, %v3161
    %v5098 = vpack.c.b16 %v3170, %v3166
    %v5099 = vpack.c.b16 %v3171, %v3167
    %v5100 = vpack.c.b16 %v3172, %v3168
    %v5101 = vpack.c.b16 %v3173, %v3169
    %v5102 = vpack.c.b16 %v3178, %v3174
    %v5103 = vpack.c.b16 %v3179, %v3175
    %v5104 = vpack.c.b16 %v3180, %v3176
    %v5105 = vpack.c.b16 %v3181, %v3177
    %v5106 = vpack.c.b16 %v3186, %v3182
    %v5107 = vpack.c.b16 %v3187, %v3183
    %v5108 = vpack.c.b16 %v3188, %v3184
    %v5109 = vpack.c.b16 %v3189, %v3185
    %v5110 = vpack.c.b16 %v3194, %v3190
    %v5111 = vpack.c.b16 %v3195, %v3191
    %v5112 = vpack.c.b16 %v3196, %v3192
    %v5113 = vpack.c.b16 %v3197, %v3193
    %v5114 = vpack.c.b16 %v3202, %v3198
    %v5115 = vpack.c.b16 %v3203, %v3199
    %v5116 = vpack.c.b16 %v3204, %v3200
    %v5117 = vpack.c.b16 %v3205, %v3201
    %v5118 = vpack.c.b16 %v3210, %v3206
    %v5119 = vpack.c.b16 %v3211, %v3207
    %v5120 = vpack.c.b16 %v3212, %v3208
    %v5121 = vpack.c.b16 %v3213, %v3209
    %v5122 = vpack.c.b16 %v3218, %v3214
    %v5123 = vpack.c.b16 %v3219, %v3215
    %v5124 = vpack.c.b16 %v3220, %v3216
    %v5125 = vpack.c.b16 %v3221, %v3217
    %v5126 = vpack.c.b16 %v3226, %v3222
    %v5127 = vpack.c.b16 %v3227, %v3223
    %v5128 = vpack.c.b16 %v3228, %v3224
    %v5129 = vpack.c.b16 %v3229, %v3225
    %v5130 = vpack.c.b16 %v3234, %v3230
    %v5131 = vpack.c.b16 %v3235, %v3231
    %v5132 = vpack.c.b16 %v3236, %v3232
    %v5133 = vpack.c.b16 %v3237, %v3233
    %v5134 = vpack.c.b16 %v3242, %v3238
    %v5135 = vpack.c.b16 %v3243, %v3239
    %v5136 = vpack.c.b16 %v3244, %v3240
    %v5137 = vpack.c.b16 %v3245, %v3241
    %v5138 = vpack.c.b16 %v3250, %v3246
    %v5139 = vpack.c.b16 %v3251, %v3247
    %v5140 = vpack.c.b16 %v3252, %v3248
    %v5141 = vpack.c.b16 %v3253, %v3249
    %v5142 = vpack.c.b16 %v3258, %v3254
    %v5143 = vpack.c.b16 %v3259, %v3255
    %v5144 = vpack.c.b16 %v3260, %v3256
    %v5145 = vpack.c.b16 %v3261, %v3257
    %v5146 = vpack.c.b16 %v3266, %v3262
    %v5147 = vpack.c.b16 %v3267, %v3263
    %v5148 = vpack.c.b16 %v3268, %v3264
    %v5149 = vpack.c.b16 %v3269, %v3265
    %v5150 = vpack.c.b16 %v3274, %v3270
    %v5151 = vpack.c.b16 %v3275, %v3271
    %v5152 = vpack.c.b16 %v3276, %v3272
    %v5153 = vpack.c.b16 %v3277, %v3273
    %v5154 = vpack.c.b16 %v3282, %v3278
    %v5155 = vpack.c.b16 %v3283, %v3279
    %v5156 = vpack.c.b16 %v3284, %v3280
    %v5157 = vpack.c.b16 %v3285, %v3281
    %v5158 = vpack.c.b16 %v3290, %v3286
    %v5159 = vpack.c.b16 %v3291, %v3287
    %v5160 = vpack.c.b16 %v3292, %v3288
    %v5161 = vpack.c.b16 %v3293, %v3289
    %v5162 = vpack.c.b16 %v3298, %v3294
    %v5163 = vpack.c.b16 %v3299, %v3295
    %v5164 = vpack.c.b16 %v3300, %v3296
    %v5165 = vpack.c.b16 %v3301, %v3297
    %v5166 = vpack.c.b16 %v3306, %v3302
    %v5167 = vpack.c.b16 %v3307, %v3303
    %v5168 = vpack.c.b16 %v3308, %v3304
    %v5169 = vpack.c.b16 %v3309, %v3305
    %v5170 = vpack.c.b16 %v3314, %v3310
    %v5171 = vpack.c.b16 %v3315, %v3311
    %v5172 = vpack.c.b16 %v3316, %v3312
    %v5173 = vpack.c.b16 %v3317, %v3313
    %v5174 = vpack.c.b16 %v3322, %v3318
    %v5175 = vpack.c.b16 %v3323, %v3319
    %v5176 = vpack.c.b16 %v3324, %v3320
    %v5177 = vpack.c.b16 %v3325, %v3321
    %v5178 = vpack.c.b16 %v3330, %v3326
    %v5179 = vpack.c.b16 %v3331, %v3327
    %v5180 = vpack.c.b16 %v3332, %v3328
    %v5181 = vpack.c.b16 %v3333, %v3329
    %v5182 = vpack.c.b16 %v3338, %v3334
    %v5183 = vpack.c.b16 %v3339, %v3335
    %v5184 = vpack.c.b16 %v3340, %v3336
    %v5185 = vpack.c.b16 %v3341, %v3337
    %v5186 = vpack.c.b16 %v3346, %v3342
    %v5187 = vpack.c.b16 %v3347, %v3343
    %v5188 = vpack.c.b16 %v3348, %v3344
    %v5189 = vpack.c.b16 %v3349, %v3345
    %v5190 = vpack.c.b16 %v3354, %v3350
    %v5191 = vpack.c.b16 %v3355, %v3351
    %v5192 = vpack.c.b16 %v3356, %v3352
    %v5193 = vpack.c.b16 %v3357, %v3353
    %v5194 = vpack.c.b16 %v3362, %v3358
    %v5195 = vpack.c.b16 %v3363, %v3359
    %v5196 = vpack.c.b16 %v3364, %v3360
    %v5197 = vpack.c.b16 %v3365, %v3361
    %v5198 = vpack.c.b16 %v3370, %v3366
    %v5199 = vpack.c.b16 %v3371, %v3367
    %v5200 = vpack.c.b16 %v3372, %v3368
    %v5201 = vpack.c.b16 %v3373, %v3369
    %v5202 = vpack.c.b16 %v3378, %v3374
    %v5203 = vpack.c.b16 %v3379, %v3375
    %v5204 = vpack.c.b16 %v3380, %v3376
    %v5205 = vpack.c.b16 %v3381, %v3377
    %v5206 = vpack.c.b16 %v3386, %v3382
    %v5207 = vpack.c.b16 %v3387, %v3383
    %v5208 = vpack.c.b16 %v3388, %v3384
    %v5209 = vpack.c.b16 %v3389, %v3385
    %v5210 = vpack.c.b16 %v3394, %v3390
    %v5211 = vpack.c.b16 %v3395, %v3391
    %v5212 = vpack.c.b16 %v3396, %v3392
    %v5213 = vpack.c.b16 %v3397, %v3393
    %v5214 = vpack.c.b16 %v3402, %v3398
    %v5215 = vpack.c.b16 %v3403, %v3399
    %v5216 = vpack.c.b16 %v3404, %v3400
    %v5217 = vpack.c.b16 %v3405, %v3401
    %v5218 = vpack.c.b16 %v3410, %v3406
    %v5219 = vpack.c.b16 %v3411, %v3407
    %v5220 = vpack.c.b16 %v3412, %v3408
    %v5221 = vpack.c.b16 %v3413, %v3409
    %v5222 = vpack.c.b16 %v3418, %v3414
    %v5223 = vpack.c.b16 %v3419, %v3415
    %v5224 = vpack.c.b16 %v3420, %v3416
    %v5225 = vpack.c.b16 %v3421, %v3417
    %v5226 = vpack.c.b16 %v3426, %v3422
    %v5227 = vpack.c.b16 %v3427, %v3423
    %v5228 = vpack.c.b16 %v3428, %v3424
    %v5229 = vpack.c.b16 %v3429, %v3425
    %v5230 = vpack.c.b16 %v3434, %v3430
    %v5231 = vpack.c.b16 %v3435, %v3431
    %v5232 = vpack.c.b16 %v3436, %v3432
    %v5233 = vpack.c.b16 %v3437, %v3433
    %v5234 = vpack.c.b16 %v3442, %v3438
    %v5235 = vpack.c.b16 %v3443, %v3439
    %v5236 = vpack.c.b16 %v3444, %v3440
    %v5237 = vpack.c.b16 %v3445, %v3441
    %v5238 = vpack.c.b16 %v3450, %v3446
    %v5239 = vpack.c.b16 %v3451, %v3447
    %v5240 = vpack.c.b16 %v3452, %v3448
    %v5241 = vpack.c.b16 %v3453, %v3449
    %v5242 = vpack.c.b16 %v3458, %v3454
    %v5243 = vpack.c.b16 %v3459, %v3455
    %v5244 = vpack.c.b16 %v3460, %v3456
    %v5245 = vpack.c.b16 %v3461, %v3457
    %v5246 = vpack.c.b16 %v3466, %v3462
    %v5247 = vpack.c.b16 %v3467, %v3463
    %v5248 = vpack.c.b16 %v3468, %v3464
    %v5249 = vpack.c.b16 %v3469, %v3465
    %v5250 = vpack.c.b16 %v3474, %v3470
    %v5251 = vpack.c.b16 %v3475, %v3471
    %v5252 = vpack.c.b16 %v3476, %v3472
    %v5253 = vpack.c.b16 %v3477, %v3473
    %v5254 = vpack.c.b16 %v3482, %v3478
    %v5255 = vpack.c.b16 %v3483, %v3479
    %v5256 = vpack.c.b16 %v3484, %v3480
    %v5257 = vpack.c.b16 %v3485, %v3481
    %v5258 = vpack.c.b16 %v3490, %v3486
    %v5259 = vpack.c.b16 %v3491, %v3487
    %v5260 = vpack.c.b16 %v3492, %v3488
    %v5261 = vpack.c.b16 %v3493, %v3489
    %v5262 = vpack.c.b16 %v3498, %v3494
    %v5263 = vpack.c.b16 %v3499, %v3495
    %v5264 = vpack.c.b16 %v3500, %v3496
    %v5265 = vpack.c.b16 %v3501, %v3497
    %v5266 = vpack.c.b16 %v3506, %v3502
    %v5267 = vpack.c.b16 %v3507, %v3503
    %v5268 = vpack.c.b16 %v3508, %v3504
    %v5269 = vpack.c.b16 %v3509, %v3505
    %v5270 = vpack.c.b16 %v3514, %v3510
    %v5271 = vpack.c.b16 %v3515, %v3511
    %v5272 = vpack.c.b16 %v3516, %v3512
    %v5273 = vpack.c.b16 %v3517, %v3513
    %v5274 = vpack.c.b16 %v3522, %v3518
    %v5275 = vpack.c.b16 %v3523, %v3519
    %v5276 = vpack.c.b16 %v3524, %v3520
    %v5277 = vpack.c.b16 %v3525, %v3521
    %v5278 = vpack.c.b16 %v3530, %v3526
    %v5279 = vpack.c.b16 %v3531, %v3527
    %v5280 = vpack.c.b16 %v3532, %v3528
    %v5281 = vpack.c.b16 %v3533, %v3529
    %v5282 = vpack.c.b16 %v3538, %v3534
    %v5283 = vpack.c.b16 %v3539, %v3535
    %v5284 = vpack.c.b16 %v3540, %v3536
    %v5285 = vpack.c.b16 %v3541, %v3537
    %v5286 = vpack.c.b16 %v3546, %v3542
    %v5287 = vpack.c.b16 %v3547, %v3543
    %v5288 = vpack.c.b16 %v3548, %v3544
    %v5289 = vpack.c.b16 %v3549, %v3545
    %v5290 = vpack.c.b16 %v3554, %v3550
    %v5291 = vpack.c.b16 %v3555, %v3551
    %v5292 = vpack.c.b16 %v3556, %v3552
    %v5293 = vpack.c.b16 %v3557, %v3553
    %v5294 = vpack.c.b16 %v3562, %v3558
    %v5295 = vpack.c.b16 %v3563, %v3559
    %v5296 = vpack.c.b16 %v3564, %v3560
    %v5297 = vpack.c.b16 %v3565, %v3561
    %v5298 = vpack.c.b16 %v3570, %v3566
    %v5299 = vpack.c.b16 %v3571, %v3567
    %v5300 = vpack.c.b16 %v3572, %v3568
    %v5301 = vpack.c.b16 %v3573, %v3569
    %v5302 = vpack.c.b16 %v3578, %v3574
    %v5303 = vpack.c.b16 %v3579, %v3575
    %v5304 = vpack.c.b16 %v3580, %v3576
    %v5305 = vpack.c.b16 %v3581, %v3577
    %v5306 = vpack.c.b16 %v3586, %v3582
    %v5307 = vpack.c.b16 %v3587, %v3583
    %v5308 = vpack.c.b16 %v3588, %v3584
    %v5309 = vpack.c.b16 %v3589, %v3585
    %v5310 = vpack.c.b16 %v3594, %v3590
    %v5311 = vpack.c.b16 %v3595, %v3591
    %v5312 = vpack.c.b16 %v3596, %v3592
    %v5313 = vpack.c.b16 %v3597, %v3593
    %v5314 = vpack.c.b16 %v3602, %v3598
    %v5315 = vpack.c.b16 %v3603, %v3599
    %v5316 = vpack.c.b16 %v3604, %v3600
    %v5317 = vpack.c.b16 %v3605, %v3601
    %v5318 = vpack.c.b16 %v3610, %v3606
    %v5319 = vpack.c.b16 %v3611, %v3607
    %v5320 = vpack.c.b16 %v3612, %v3608
    %v5321 = vpack.c.b16 %v3613, %v3609
    %v5322 = vpack.c.b16 %v3618, %v3614
    %v5323 = vpack.c.b16 %v3619, %v3615
    %v5324 = vpack.c.b16 %v3620, %v3616
    %v5325 = vpack.c.b16 %v3621, %v3617
    %v5326 = vpack.c.b16 %v3626, %v3622
    %v5327 = vpack.c.b16 %v3627, %v3623
    %v5328 = vpack.c.b16 %v3628, %v3624
    %v5329 = vpack.c.b16 %v3629, %v3625
    %v5330 = vpack.c.b16 %v3634, %v3630
    %v5331 = vpack.c.b16 %v3635, %v3631
    %v5332 = vpack.c.b16 %v3636, %v3632
    %v5333 = vpack.c.b16 %v3637, %v3633
    %v5334 = vpack.c.b16 %v3642, %v3638
    %v5335 = vpack.c.b16 %v3643, %v3639
    %v5336 = vpack.c.b16 %v3644, %v3640
    %v5337 = vpack.c.b16 %v3645, %v3641
    %v5338 = vpack.c.b16 %v3650, %v3646
    %v5339 = vpack.c.b16 %v3651, %v3647
    %v5340 = vpack.c.b16 %v3652, %v3648
    %v5341 = vpack.c.b16 %v3653, %v3649
    %v5342 = vpack.c.b16 %v3658, %v3654
    %v5343 = vpack.c.b16 %v3659, %v3655
    %v5344 = vpack.c.b16 %v3660, %v3656
    %v5345 = vpack.c.b16 %v3661, %v3657
    %v5346 = vpack.c.b16 %v3666, %v3662
    %v5347 = vpack.c.b16 %v3667, %v3663
    %v5348 = vpack.c.b16 %v3668, %v3664
    %v5349 = vpack.c.b16 %v3669, %v3665
    %v5350 = vpack.c.b16 %v3674, %v3670
    %v5351 = vpack.c.b16 %v3675, %v3671
    %v5352 = vpack.c.b16 %v3676, %v3672
    %v5353 = vpack.c.b16 %v3677, %v3673
    %v5354 = vpack.c.b16 %v3682, %v3678
    %v5355 = vpack.c.b16 %v3683, %v3679
    %v5356 = vpack.c.b16 %v3684, %v3680
    %v5357 = vpack.c.b16 %v3685, %v3681
    %v5358 = vpack.c.b16 %v3690, %v3686
    %v5359 = vpack.c.b16 %v3691, %v3687
    %v5360 = vpack.c.b16 %v3692, %v3688
    %v5361 = vpack.c.b16 %v3693, %v3689
    %v5362 = vpack.c.b16 %v3698, %v3694
    %v5363 = vpack.c.b16 %v3699, %v3695
    %v5364 = vpack.c.b16 %v3700, %v3696
    %v5365 = vpack.c.b16 %v3701, %v3697
    %v5366 = vpack.c.b16 %v3706, %v3702
    %v5367 = vpack.c.b16 %v3707, %v3703
    %v5368 = vpack.c.b16 %v3708, %v3704
    %v5369 = vpack.c.b16 %v3709, %v3705
    %v5370 = vpack.c.b16 %v3714, %v3710
    %v5371 = vpack.c.b16 %v3715, %v3711
    %v5372 = vpack.c.b16 %v3716, %v3712
    %v5373 = vpack.c.b16 %v3717, %v3713
    %v5374 = vpack.c.b16 %v3722, %v3718
    %v5375 = vpack.c.b16 %v3723, %v3719
    %v5376 = vpack.c.b16 %v3724, %v3720
    %v5377 = vpack.c.b16 %v3725, %v3721
    %v5378 = vpack.c.b16 %v3730, %v3726
    %v5379 = vpack.c.b16 %v3731, %v3727
    %v5380 = vpack.c.b16 %v3732, %v3728
    %v5381 = vpack.c.b16 %v3733, %v3729
    %v5382 = vpack.c.b16 %v3738, %v3734
    %v5383 = vpack.c.b16 %v3739, %v3735
    %v5384 = vpack.c.b16 %v3740, %v3736
    %v5385 = vpack.c.b16 %v3741, %v3737
    %v5386 = vpack.c.b16 %v3746, %v3742
    %v5387 = vpack.c.b16 %v3747, %v3743
    %v5388 = vpack.c.b16 %v3748, %v3744
    %v5389 = vpack.c.b16 %v3749, %v3745
    %v5390 = vpack.c.b16 %v3754, %v3750
    %v5391 = vpack.c.b16 %v3755, %v3751
    %v5392 = vpack.c.b16 %v3756, %v3752
    %v5393 = vpack.c.b16 %v3757, %v3753
    %v5394 = vpack.c.b16 %v3762, %v3758
    %v5395 = vpack.c.b16 %v3763, %v3759
    %v5396 = vpack.c.b16 %v3764, %v3760
    %v5397 = vpack.c.b16 %v3765, %v3761
    %v5398 = vpack.c.b16 %v3770, %v3766
    %v5399 = vpack.c.b16 %v3771, %v3767
    %v5400 = vpack.c.b16 %v3772, %v3768
    %v5401 = vpack.c.b16 %v3773, %v3769
    %v5402 = vpack.c.b16 %v3778, %v3774
    %v5403 = vpack.c.b16 %v3779, %v3775
    %v5404 = vpack.c.b16 %v3780, %v3776
    %v5405 = vpack.c.b16 %v3781, %v3777
    %v5406 = vpack.c.b16 %v3786, %v3782
    %v5407 = vpack.c.b16 %v3787, %v3783
    %v5408 = vpack.c.b16 %v3788, %v3784
    %v5409 = vpack.c.b16 %v3789, %v3785
    %v5410 = vpack.c.b16 %v3794, %v3790
    %v5411 = vpack.c.b16 %v3795, %v3791
    %v5412 = vpack.c.b16 %v3796, %v3792
    %v5413 = vpack.c.b16 %v3797, %v3793
    %v5414 = vpack.c.b16 %v3802, %v3798
    %v5415 = vpack.c.b16 %v3803, %v3799
    %v5416 = vpack.c.b16 %v3804, %v3800
    %v5417 = vpack.c.b16 %v3805, %v3801
    %v5418 = vpack.c.b16 %v3810, %v3806
    %v5419 = vpack.c.b16 %v3811, %v3807
    %v5420 = vpack.c.b16 %v3812, %v3808
    %v5421 = vpack.c.b16 %v3813, %v3809
    %v5422 = vpack.c.b16 %v3818, %v3814
    %v5423 = vpack.c.b16 %v3819, %v3815
    %v5424 = vpack.c.b16 %v3820, %v3816
    %v5425 = vpack.c.b16 %v3821, %v3817
    %v5426 = vpack.c.b16 %v3826, %v3822
    %v5427 = vpack.c.b16 %v3827, %v3823
    %v5428 = vpack.c.b16 %v3828, %v3824
    %v5429 = vpack.c.b16 %v3829, %v3825
    %v5430 = vpack.c.b16 %v3834, %v3830
    %v5431 = vpack.c.b16 %v3835, %v3831
    %v5432 = vpack.c.b16 %v3836, %v3832
    %v5433 = vpack.c.b16 %v3837, %v3833
    %v5434 = vpack.c.b16 %v3842, %v3838
    %v5435 = vpack.c.b16 %v3843, %v3839
    %v5436 = vpack.c.b16 %v3844, %v3840
    %v5437 = vpack.c.b16 %v3845, %v3841
    %v5438 = vpack.c.b16 %v3850, %v3846
    %v5439 = vpack.c.b16 %v3851, %v3847
    %v5440 = vpack.c.b16 %v3852, %v3848
    %v5441 = vpack.c.b16 %v3853, %v3849
    %v5442 = vpack.c.b16 %v3858, %v3854
    %v5443 = vpack.c.b16 %v3859, %v3855
    %v5444 = vpack.c.b16 %v3860, %v3856
    %v5445 = vpack.c.b16 %v3861, %v3857
    %v5446 = vpack.c.b16 %v3866, %v3862
    %v5447 = vpack.c.b16 %v3867, %v3863
    %v5448 = vpack.c.b16 %v3868, %v3864
    %v5449 = vpack.c.b16 %v3869, %v3865
    %v5450 = vpack.c.b16 %v3874, %v3870
    %v5451 = vpack.c.b16 %v3875, %v3871
    %v5452 = vpack.c.b16 %v3876, %v3872
    %v5453 = vpack.c.b16 %v3877, %v3873
    %v5454 = vpack.c.b16 %v3882, %v3878
    %v5455 = vpack.c.b16 %v3883, %v3879
    %v5456 = vpack.c.b16 %v3884, %v3880
    %v5457 = vpack.c.b16 %v3885, %v3881
    %v5458 = vpack.c.b16 %v3890, %v3886
    %v5459 = vpack.c.b16 %v3891, %v3887
    %v5460 = vpack.c.b16 %v3892, %v3888
    %v5461 = vpack.c.b16 %v3893, %v3889
    %v5462 = vpack.c.b16 %v3898, %v3894
    %v5463 = vpack.c.b16 %v3899, %v3895
    %v5464 = vpack.c.b16 %v3900, %v3896
    %v5465 = vpack.c.b16 %v3901, %v3897
    %v5466 = vpack.c.b16 %v3906, %v3902
    %v5467 = vpack.c.b16 %v3907, %v3903
    %v5468 = vpack.c.b16 %v3908, %v3904
    %v5469 = vpack.c.b16 %v3909, %v3905
    %v5470 = vpack.c.b16 %v3914, %v3910
    %v5471 = vpack.c.b16 %v3915, %v3911
    %v5472 = vpack.c.b16 %v3916, %v3912
    %v5473 = vpack.c.b16 %v3917, %v3913
    %v5474 = vpack.c.b16 %v3922, %v3918
    %v5475 = vpack.c.b16 %v3923, %v3919
    %v5476 = vpack.c.b16 %v3924, %v3920
    %v5477 = vpack.c.b16 %v3925, %v3921
    %v5478 = vpack.c.b16 %v3930, %v3926
    %v5479 = vpack.c.b16 %v3931, %v3927
    %v5480 = vpack.c.b16 %v3932, %v3928
    %v5481 = vpack.c.b16 %v3933, %v3929
    %v5482 = vpack.c.b16 %v3938, %v3934
    %v5483 = vpack.c.b16 %v3939, %v3935
    %v5484 = vpack.c.b16 %v3940, %v3936
    %v5485 = vpack.c.b16 %v3941, %v3937
    %v5486 = vpack.c.b16 %v3946, %v3942
    %v5487 = vpack.c.b16 %v3947, %v3943
    %v5488 = vpack.c.b16 %v3948, %v3944
    %v5489 = vpack.c.b16 %v3949, %v3945
    %v5490 = vpack.c.b16 %v3954, %v3950
    %v5491 = vpack.c.b16 %v3955, %v3951
    %v5492 = vpack.c.b16 %v3956, %v3952
    %v5493 = vpack.c.b16 %v3957, %v3953
    %v5494 = vpack.c.b16 %v3962, %v3958
    %v5495 = vpack.c.b16 %v3963, %v3959
    %v5496 = vpack.c.b16 %v3964, %v3960
    %v5497 = vpack.c.b16 %v3965, %v3961
    %v5498 = vpack.c.b16 %v3970, %v3966
    %v5499 = vpack.c.b16 %v3971, %v3967
    %v5500 = vpack.c.b16 %v3972, %v3968
    %v5501 = vpack.c.b16 %v3973, %v3969
    %v5502 = vpack.c.b16 %v3978, %v3974
    %v5503 = vpack.c.b16 %v3979, %v3975
    %v5504 = vpack.c.b16 %v3980, %v3976
    %v5505 = vpack.c.b16 %v3981, %v3977
    %v5506 = vpack.c.b16 %v3986, %v3982
    %v5507 = vpack.c.b16 %v3987, %v3983
    %v5508 = vpack.c.b16 %v3988, %v3984
    %v5509 = vpack.c.b16 %v3989, %v3985
    %v5510 = vpack.c.b16 %v3994, %v3990
    %v5511 = vpack.c.b16 %v3995, %v3991
    %v5512 = vpack.c.b16 %v3996, %v3992
    %v5513 = vpack.c.b16 %v3997, %v3993
    %v5514 = vpack.c.b16 %v4002, %v3998
    %v5515 = vpack.c.b16 %v4003, %v3999
    %v5516 = vpack.c.b16 %v4004, %v4000
    %v5517 = vpack.c.b16 %v4005, %v4001
    %v5518 = vpack.c.b16 %v4010, %v4006
    %v5519 = vpack.c.b16 %v4011, %v4007
    %v5520 = vpack.c.b16 %v4012, %v4008
    %v5521 = vpack.c.b16 %v4013, %v4009
    %v5522 = vpack.c.b16 %v4018, %v4014
    %v5523 = vpack.c.b16 %v4019, %v4015
    %v5524 = vpack.c.b16 %v4020, %v4016
    %v5525 = vpack.c.b16 %v4021, %v4017
    %v5526 = vpack.c.b16 %v4026, %v4022
    %v5527 = vpack.c.b16 %v4027, %v4023
    %v5528 = vpack.c.b16 %v4028, %v4024
    %v5529 = vpack.c.b16 %v4029, %v4025
    %v5530 = vpack.c.b16 %v4034, %v4030
    %v5531 = vpack.c.b16 %v4035, %v4031
    %v5532 = vpack.c.b16 %v4036, %v4032
    %v5533 = vpack.c.b16 %v4037, %v4033
    %v5534 = vpack.c.b16 %v4042, %v4038
    %v5535 = vpack.c.b16 %v4043, %v4039
    %v5536 = vpack.c.b16 %v4044, %v4040
    %v5537 = vpack.c.b16 %v4045, %v4041
    %v5538 = vpack.c.b16 %v4050, %v4046
    %v5539 = vpack.c.b16 %v4051, %v4047
    %v5540 = vpack.c.b16 %v4052, %v4048
    %v5541 = vpack.c.b16 %v4053, %v4049
    %v5542 = vpack.c.b16 %v4058, %v4054
    %v5543 = vpack.c.b16 %v4059, %v4055
    %v5544 = vpack.c.b16 %v4060, %v4056
    %v5545 = vpack.c.b16 %v4061, %v4057
    %v5546 = vpack.c.b16 %v4066, %v4062
    %v5547 = vpack.c.b16 %v4067, %v4063
    %v5548 = vpack.c.b16 %v4068, %v4064
    %v5549 = vpack.c.b16 %v4069, %v4065
    %v5550 = vpack.c.b16 %v4074, %v4070
    %v5551 = vpack.c.b16 %v4075, %v4071
    %v5552 = vpack.c.b16 %v4076, %v4072
    %v5553 = vpack.c.b16 %v4077, %v4073
    %v5554 = vpack.c.b16 %v4082, %v4078
    %v5555 = vpack.c.b16 %v4083, %v4079
    %v5556 = vpack.c.b16 %v4084, %v4080
    %v5557 = vpack.c.b16 %v4085, %v4081
    %v5558 = vpack.c.b16 %v4090, %v4086
    %v5559 = vpack.c.b16 %v4091, %v4087
    %v5560 = vpack.c.b16 %v4092, %v4088
    %v5561 = vpack.c.b16 %v4093, %v4089
    %v5562 = vpack.c.b16 %v4098, %v4094
    %v5563 = vpack.c.b16 %v4099, %v4095
    %v5564 = vpack.c.b16 %v4100, %v4096
    %v5565 = vpack.c.b16 %v4101, %v4097
    %v5566 = vpack.c.b16 %v4106, %v4102
    %v5567 = vpack.c.b16 %v4107, %v4103
    %v5568 = vpack.c.b16 %v4108, %v4104
    %v5569 = vpack.c.b16 %v4109, %v4105
    %v5570 = vpack.c.b16 %v4114, %v4110
    %v5571 = vpack.c.b16 %v4115, %v4111
    %v5572 = vpack.c.b16 %v4116, %v4112
    %v5573 = vpack.c.b16 %v4117, %v4113
    %v5574 = vpack.c.b16 %v4122, %v4118
    %v5575 = vpack.c.b16 %v4123, %v4119
    %v5576 = vpack.c.b16 %v4124, %v4120
    %v5577 = vpack.c.b16 %v4125, %v4121
    %v5578 = vpack.c.b16 %v4130, %v4126
    %v5579 = vpack.c.b16 %v4131, %v4127
    %v5580 = vpack.c.b16 %v4132, %v4128
    %v5581 = vpack.c.b16 %v4133, %v4129
    %v5582 = vpack.c.b16 %v4138, %v4134
    %v5583 = vpack.c.b16 %v4139, %v4135
    %v5584 = vpack.c.b16 %v4140, %v4136
    %v5585 = vpack.c.b16 %v4141, %v4137
    %v5586 = vpack.c.b16 %v4146, %v4142
    %v5587 = vpack.c.b16 %v4147, %v4143
    %v5588 = vpack.c.b16 %v4148, %v4144
    %v5589 = vpack.c.b16 %v4149, %v4145
    %v5590 = vpack.c.b16 %v4154, %v4150
    %v5591 = vpack.c.b16 %v4155, %v4151
    %v5592 = vpack.c.b16 %v4156, %v4152
    %v5593 = vpack.c.b16 %v4157, %v4153
    %v5594 = vpack.c.b16 %v4162, %v4158
    %v5595 = vpack.c.b16 %v4163, %v4159
    %v5596 = vpack.c.b16 %v4164, %v4160
    %v5597 = vpack.c.b16 %v4165, %v4161
    %v5598 = vpack.c.b16 %v4170, %v4166
    %v5599 = vpack.c.b16 %v4171, %v4167
    %v5600 = vpack.c.b16 %v4172, %v4168
    %v5601 = vpack.c.b16 %v4173, %v4169
    %v5602 = vpack.c.b16 %v4178, %v4174
    %v5603 = vpack.c.b16 %v4179, %v4175
    %v5604 = vpack.c.b16 %v4180, %v4176
    %v5605 = vpack.c.b16 %v4181, %v4177
    %v5606 = vpack.c.b16 %v4186, %v4182
    %v5607 = vpack.c.b16 %v4187, %v4183
    %v5608 = vpack.c.b16 %v4188, %v4184
    %v5609 = vpack.c.b16 %v4189, %v4185
    %v5610 = vpack.c.b16 %v4194, %v4190
    %v5611 = vpack.c.b16 %v4195, %v4191
    %v5612 = vpack.c.b16 %v4196, %v4192
    %v5613 = vpack.c.b16 %v4197, %v4193
    %v5614 = vpack.c.b16 %v4202, %v4198
    %v5615 = vpack.c.b16 %v4203, %v4199
    %v5616 = vpack.c.b16 %v4204, %v4200
    %v5617 = vpack.c.b16 %v4205, %v4201
    %v5618 = vpack.c.b16 %v4210, %v4206
    %v5619 = vpack.c.b16 %v4211, %v4207
    %v5620 = vpack.c.b16 %v4212, %v4208
    %v5621 = vpack.c.b16 %v4213, %v4209
    %v5622 = vpack.c.b16 %v4218, %v4214
    %v5623 = vpack.c.b16 %v4219, %v4215
    %v5624 = vpack.c.b16 %v4220, %v4216
    %v5625 = vpack.c.b16 %v4221, %v4217
    %v5626 = vpack.c.b16 %v4226, %v4222
    %v5627 = vpack.c.b16 %v4227, %v4223
    %v5628 = vpack.c.b16 %v4228, %v4224
    %v5629 = vpack.c.b16 %v4229, %v4225
    %v5630 = vpack.c.b16 %v4234, %v4230
    %v5631 = vpack.c.b16 %v4235, %v4231
    %v5632 = vpack.c.b16 %v4236, %v4232
    %v5633 = vpack.c.b16 %v4237, %v4233
    %v5634 = vpack.c.b16 %v4242, %v4238
    %v5635 = vpack.c.b16 %v4243, %v4239
    %v5636 = vpack.c.b16 %v4244, %v4240
    %v5637 = vpack.c.b16 %v4245, %v4241
    %v5638 = vpack.c.b16 %v4250, %v4246
    %v5639 = vpack.c.b16 %v4251, %v4247
    %v5640 = vpack.c.b16 %v4252, %v4248
    %v5641 = vpack.c.b16 %v4253, %v4249
    %v5642 = vpack.c.b16 %v4258, %v4254
    %v5643 = vpack.c.b16 %v4259, %v4255
    %v5644 = vpack.c.b16 %v4260, %v4256
    %v5645 = vpack.c.b16 %v4261, %v4257
    %v5646 = vpack.c.b16 %v4266, %v4262
    %v5647 = vpack.c.b16 %v4267, %v4263
    %v5648 = vpack.c.b16 %v4268, %v4264
    %v5649 = vpack.c.b16 %v4269, %v4265
    %v5650 = vpack.c.b16 %v4274, %v4270
    %v5651 = vpack.c.b16 %v4275, %v4271
    %v5652 = vpack.c.b16 %v4276, %v4272
    %v5653 = vpack.c.b16 %v4277, %v4273
    %v5654 = vpack.c.b16 %v4282, %v4278
    %v5655 = vpack.c.b16 %v4283, %v4279
    %v5656 = vpack.c.b16 %v4284, %v4280
    %v5657 = vpack.c.b16 %v4285, %v4281
    %v5658 = vpack.c.b16 %v4290, %v4286
    %v5659 = vpack.c.b16 %v4291, %v4287
    %v5660 = vpack.c.b16 %v4292, %v4288
    %v5661 = vpack.c.b16 %v4293, %v4289
    %v5662 = vpack.c.b16 %v4298, %v4294
    %v5663 = vpack.c.b16 %v4299, %v4295
    %v5664 = vpack.c.b16 %v4300, %v4296
    %v5665 = vpack.c.b16 %v4301, %v4297
    %v5666 = vpack.c.b16 %v4306, %v4302
    %v5667 = vpack.c.b16 %v4307, %v4303
    %v5668 = vpack.c.b16 %v4308, %v4304
    %v5669 = vpack.c.b16 %v4309, %v4305
    %v5670 = vpack.c.b16 %v4314, %v4310
    %v5671 = vpack.c.b16 %v4315, %v4311
    %v5672 = vpack.c.b16 %v4316, %v4312
    %v5673 = vpack.c.b16 %v4317, %v4313
    %v5674 = vpack.c.b16 %v4322, %v4318
    %v5675 = vpack.c.b16 %v4323, %v4319
    %v5676 = vpack.c.b16 %v4324, %v4320
    %v5677 = vpack.c.b16 %v4325, %v4321
    %v5678 = vpack.c.b16 %v4330, %v4326
    %v5679 = vpack.c.b16 %v4331, %v4327
    %v5680 = vpack.c.b16 %v4332, %v4328
    %v5681 = vpack.c.b16 %v4333, %v4329
    %v5682 = vpack.c.b16 %v4338, %v4334
    %v5683 = vpack.c.b16 %v4339, %v4335
    %v5684 = vpack.c.b16 %v4340, %v4336
    %v5685 = vpack.c.b16 %v4341, %v4337
    %v5686 = vpack.c.b16 %v4346, %v4342
    %v5687 = vpack.c.b16 %v4347, %v4343
    %v5688 = vpack.c.b16 %v4348, %v4344
    %v5689 = vpack.c.b16 %v4349, %v4345
    %v5690 = vpack.c.b16 %v4354, %v4350
    %v5691 = vpack.c.b16 %v4355, %v4351
    %v5692 = vpack.c.b16 %v4356, %v4352
    %v5693 = vpack.c.b16 %v4357, %v4353
    %v5694 = vpack.c.b16 %v4362, %v4358
    %v5695 = vpack.c.b16 %v4363, %v4359
    %v5696 = vpack.c.b16 %v4364, %v4360
    %v5697 = vpack.c.b16 %v4365, %v4361
    %v5698 = vpack.c.b16 %v4370, %v4366
    %v5699 = vpack.c.b16 %v4371, %v4367
    %v5700 = vpack.c.b16 %v4372, %v4368
    %v5701 = vpack.c.b16 %v4373, %v4369
    %v5702 = vpack.c.b16 %v4378, %v4374
    %v5703 = vpack.c.b16 %v4379, %v4375
    %v5704 = vpack.c.b16 %v4380, %v4376
    %v5705 = vpack.c.b16 %v4381, %v4377
    %v5706 = vpack.c.b16 %v4386, %v4382
    %v5707 = vpack.c.b16 %v4387, %v4383
    %v5708 = vpack.c.b16 %v4388, %v4384
    %v5709 = vpack.c.b16 %v4389, %v4385
    %v5710 = vpack.c.b16 %v4394, %v4390
    %v5711 = vpack.c.b16 %v4395, %v4391
    %v5712 = vpack.c.b16 %v4396, %v4392
    %v5713 = vpack.c.b16 %v4397, %v4393
    %v5714 = vpack.c.b16 %v4402, %v4398
    %v5715 = vpack.c.b16 %v4403, %v4399
    %v5716 = vpack.c.b16 %v4404, %v4400
    %v5717 = vpack.c.b16 %v4405, %v4401
    %v5718 = vpack.c.b16 %v4410, %v4406
    %v5719 = vpack.c.b16 %v4411, %v4407
    %v5720 = vpack.c.b16 %v4412, %v4408
    %v5721 = vpack.c.b16 %v4413, %v4409
    %v5722 = vpack.c.b16 %v4418, %v4414
    %v5723 = vpack.c.b16 %v4419, %v4415
    %v5724 = vpack.c.b16 %v4420, %v4416
    %v5725 = vpack.c.b16 %v4421, %v4417
    %v5726 = vpack.c.b16 %v4426, %v4422
    %v5727 = vpack.c.b16 %v4427, %v4423
    %v5728 = vpack.c.b16 %v4428, %v4424
    %v5729 = vpack.c.b16 %v4429, %v4425
    %v5730 = vpack.c.b16 %v4434, %v4430
    %v5731 = vpack.c.b16 %v4435, %v4431
    %v5732 = vpack.c.b16 %v4436, %v4432
    %v5733 = vpack.c.b16 %v4437, %v4433
    %v5734 = vpack.c.b16 %v4442, %v4438
    %v5735 = vpack.c.b16 %v4443, %v4439
    %v5736 = vpack.c.b16 %v4444, %v4440
    %v5737 = vpack.c.b16 %v4445, %v4441
    %v5738 = vpack.c.b16 %v4450, %v4446
    %v5739 = vpack.c.b16 %v4451, %v4447
    %v5740 = vpack.c.b16 %v4452, %v4448
    %v5741 = vpack.c.b16 %v4453, %v4449
    %v5742 = vpack.c.b16 %v4458, %v4454
    %v5743 = vpack.c.b16 %v4459, %v4455
    %v5744 = vpack.c.b16 %v4460, %v4456
    %v5745 = vpack.c.b16 %v4461, %v4457
    %v5746 = vpack.c.b16 %v4466, %v4462
    %v5747 = vpack.c.b16 %v4467, %v4463
    %v5748 = vpack.c.b16 %v4468, %v4464
    %v5749 = vpack.c.b16 %v4469, %v4465
    %v5750 = vpack.c.b16 %v4474, %v4470
    %v5751 = vpack.c.b16 %v4475, %v4471
    %v5752 = vpack.c.b16 %v4476, %v4472
    %v5753 = vpack.c.b16 %v4477, %v4473
    %v5754 = vpack.c.b16 %v4482, %v4478
    %v5755 = vpack.c.b16 %v4483, %v4479
    %v5756 = vpack.c.b16 %v4484, %v4480
    %v5757 = vpack.c.b16 %v4485, %v4481
    %v5758 = vpack.c.b16 %v4490, %v4486
    %v5759 = vpack.c.b16 %v4491, %v4487
    %v5760 = vpack.c.b16 %v4492, %v4488
    %v5761 = vpack.c.b16 %v4493, %v4489
    %v5762 = vpack.c.b16 %v4498, %v4494
    %v5763 = vpack.c.b16 %v4499, %v4495
    %v5764 = vpack.c.b16 %v4500, %v4496
    %v5765 = vpack.c.b16 %v4501, %v4497
    %v5766 = vpack.c.b16 %v4506, %v4502
    %v5767 = vpack.c.b16 %v4507, %v4503
    %v5768 = vpack.c.b16 %v4508, %v4504
    %v5769 = vpack.c.b16 %v4509, %v4505
    %v5770 = vpack.c.b16 %v4514, %v4510
    %v5771 = vpack.c.b16 %v4515, %v4511
    %v5772 = vpack.c.b16 %v4516, %v4512
    %v5773 = vpack.c.b16 %v4517, %v4513
    %v5774 = vpack.c.b16 %v4522, %v4518
    %v5775 = vpack.c.b16 %v4523, %v4519
    %v5776 = vpack.c.b16 %v4524, %v4520
    %v5777 = vpack.c.b16 %v4525, %v4521
    %v5778 = vpack.c.b16 %v4530, %v4526
    %v5779 = vpack.c.b16 %v4531, %v4527
    %v5780 = vpack.c.b16 %v4532, %v4528
    %v5781 = vpack.c.b16 %v4533, %v4529
    %v5782 = vpack.c.b16 %v4538, %v4534
    %v5783 = vpack.c.b16 %v4539, %v4535
    %v5784 = vpack.c.b16 %v4540, %v4536
    %v5785 = vpack.c.b16 %v4541, %v4537
    %v5786 = vpack.c.b16 %v4546, %v4542
    %v5787 = vpack.c.b16 %v4547, %v4543
    %v5788 = vpack.c.b16 %v4548, %v4544
    %v5789 = vpack.c.b16 %v4549, %v4545
    %v5790 = vpack.c.b16 %v4554, %v4550
    %v5791 = vpack.c.b16 %v4555, %v4551
    %v5792 = vpack.c.b16 %v4556, %v4552
    %v5793 = vpack.c.b16 %v4557, %v4553
    %v5794 = vpack.c.b16 %v4562, %v4558
    %v5795 = vpack.c.b16 %v4563, %v4559
    %v5796 = vpack.c.b16 %v4564, %v4560
    %v5797 = vpack.c.b16 %v4565, %v4561
    %v5798 = vpack.c.b16 %v4570, %v4566
    %v5799 = vpack.c.b16 %v4571, %v4567
    %v5800 = vpack.c.b16 %v4572, %v4568
    %v5801 = vpack.c.b16 %v4573, %v4569
    %v5802 = vpack.c.b16 %v4578, %v4574
    %v5803 = vpack.c.b16 %v4579, %v4575
    %v5804 = vpack.c.b16 %v4580, %v4576
    %v5805 = vpack.c.b16 %v4581, %v4577
    %v5806 = vpack.c.b16 %v4586, %v4582
    %v5807 = vpack.c.b16 %v4587, %v4583
    %v5808 = vpack.c.b16 %v4588, %v4584
    %v5809 = vpack.c.b16 %v4589, %v4585
    %v5810 = vpack.c.b16 %v4594, %v4590
    %v5811 = vpack.c.b16 %v4595, %v4591
    %v5812 = vpack.c.b16 %v4596, %v4592
    %v5813 = vpack.c.b16 %v4597, %v4593
    %v5814 = vpack.c.b16 %v4602, %v4598
    %v5815 = vpack.c.b16 %v4603, %v4599
    %v5816 = vpack.c.b16 %v4604, %v4600
    %v5817 = vpack.c.b16 %v4605, %v4601
    %v5818 = vpack.c.b16 %v4610, %v4606
    %v5819 = vpack.c.b16 %v4611, %v4607
    %v5820 = vpack.c.b16 %v4612, %v4608
    %v5821 = vpack.c.b16 %v4613, %v4609
    %v5822 = vpack.c.b16 %v4618, %v4614
    %v5823 = vpack.c.b16 %v4619, %v4615
    %v5824 = vpack.c.b16 %v4620, %v4616
    %v5825 = vpack.c.b16 %v4621, %v4617
    %v5826 = vpack.c.b16 %v4626, %v4622
    %v5827 = vpack.c.b16 %v4627, %v4623
    %v5828 = vpack.c.b16 %v4628, %v4624
    %v5829 = vpack.c.b16 %v4629, %v4625
    %v5830 = vpack.c.b16 %v4634, %v4630
    %v5831 = vpack.c.b16 %v4635, %v4631
    %v5832 = vpack.c.b16 %v4636, %v4632
    %v5833 = vpack.c.b16 %v4637, %v4633
    %v5834 = vpack.c.b16 %v4642, %v4638
    %v5835 = vpack.c.b16 %v4643, %v4639
    %v5836 = vpack.c.b16 %v4644, %v4640
    %v5837 = vpack.c.b16 %v4645, %v4641
    %v5838 = vpack.c.b16 %v4650, %v4646
    %v5839 = vpack.c.b16 %v4651, %v4647
    %v5840 = vpack.c.b16 %v4652, %v4648
    %v5841 = vpack.c.b16 %v4653, %v4649
    %v5842 = vpack.c.b16 %v4658, %v4654
    %v5843 = vpack.c.b16 %v4659, %v4655
    %v5844 = vpack.c.b16 %v4660, %v4656
    %v5845 = vpack.c.b16 %v4661, %v4657
    %v5846 = vpack.c.b16 %v4666, %v4662
    %v5847 = vpack.c.b16 %v4667, %v4663
    %v5848 = vpack.c.b16 %v4668, %v4664
    %v5849 = vpack.c.b16 %v4669, %v4665
    %v5850 = vpack.c.b16 %v4674, %v4670
    %v5851 = vpack.c.b16 %v4675, %v4671
    %v5852 = vpack.c.b16 %v4676, %v4672
    %v5853 = vpack.c.b16 %v4677, %v4673
    %v5854 = vpack.c.b16 %v4682, %v4678
    %v5855 = vpack.c.b16 %v4683, %v4679
    %v5856 = vpack.c.b16 %v4684, %v4680
    %v5857 = vpack.c.b16 %v4685, %v4681
    %v5858 = vpack.c.b16 %v4690, %v4686
    %v5859 = vpack.c.b16 %v4691, %v4687
    %v5860 = vpack.c.b16 %v4692, %v4688
    %v5861 = vpack.c.b16 %v4693, %v4689
    %v5862 = vpack.c.b16 %v4698, %v4694
    %v5863 = vpack.c.b16 %v4699, %v4695
    %v5864 = vpack.c.b16 %v4700, %v4696
    %v5865 = vpack.c.b16 %v4701, %v4697
    %v5866 = vpack.c.b16 %v4706, %v4702
    %v5867 = vpack.c.b16 %v4707, %v4703
    %v5868 = vpack.c.b16 %v4708, %v4704
    %v5869 = vpack.c.b16 %v4709, %v4705
    %v5870 = vpack.c.b16 %v4714, %v4710
    %v5871 = vpack.c.b16 %v4715, %v4711
    %v5872 = vpack.c.b16 %v4716, %v4712
    %v5873 = vpack.c.b16 %v4717, %v4713
    %v5874 = vpack.c.b16 %v4722, %v4718
    %v5875 = vpack.c.b16 %v4723, %v4719
    %v5876 = vpack.c.b16 %v4724, %v4720
    %v5877 = vpack.c.b16 %v4725, %v4721
    %7030 = vmatpush.bf16.msra.mxu0 %v4754
    %7031 = vmatpush.bf16.msra.mxu0 %v4750
    %7032 = vmatpush.bf16.msra.mxu0 %v4746
    %7033 = vmatpush.bf16.msra.mxu0 %v4742
    %7034 = vmatpush.bf16.msra.mxu0 %v4738
    %7035 = vmatpush.bf16.msra.mxu0 %v4734
    %7036 = vmatpush.bf16.msra.mxu0 %v4730
    %7037 = vmatpush.bf16.msra.mxu0 %v4726
    %7038 = vmatmul.bf16.gmra.mxu0 %v1190
    %v7039 = vpop.f32.mrf.mxu0
    %v7040 = vadd.f32 %v1180, %v7039
    %v7041 = vpop.f32.mrf.mxu0
    %7042 = vdwg.mxu0
    %7043 = vmatpush.bf16.msra.mxu0 %v4786
    %7044 = vmatpush.bf16.msra.mxu0 %v4782
    %7045 = vmatpush.bf16.msra.mxu0 %v4778
    %7046 = vmatpush.bf16.msra.mxu0 %v4774
    %7047 = vmatpush.bf16.msra.mxu0 %v4770
    %7048 = vmatpush.bf16.msra.mxu0 %v4766
    %7049 = vmatpush.bf16.msra.mxu0 %v4762
    %7050 = vmatpush.bf16.msra.mxu0 %v4758
    %7051 = vmatmul.bf16.gmra.mxu0 %v1191
    %v7052 = vpop.f32.mrf.mxu0
    %v7053 = vadd.f32 %v7040, %v7052
    %v7054 = vpop.f32.mrf.mxu0
    %7055 = vdwg.mxu0
    %7056 = vmatpush.bf16.msra.mxu0 %v4818
    %7057 = vmatpush.bf16.msra.mxu0 %v4814
    %7058 = vmatpush.bf16.msra.mxu0 %v4810
    %7059 = vmatpush.bf16.msra.mxu0 %v4806
    %7060 = vmatpush.bf16.msra.mxu0 %v4802
    %7061 = vmatpush.bf16.msra.mxu0 %v4798
    %7062 = vmatpush.bf16.msra.mxu0 %v4794
    %7063 = vmatpush.bf16.msra.mxu0 %v4790
    %7064 = vmatmul.bf16.gmra.mxu0 %v1192
    %v7065 = vpop.f32.mrf.mxu0
    %v7066 = vadd.f32 %v7053, %v7065
    %v7067 = vpop.f32.mrf.mxu0
    %7068 = vdwg.mxu0
    %7069 = vmatpush.bf16.msra.mxu0 %v4850
    %7070 = vmatpush.bf16.msra.mxu0 %v4846
    %7071 = vmatpush.bf16.msra.mxu0 %v4842
    %7072 = vmatpush.bf16.msra.mxu0 %v4838
    %7073 = vmatpush.bf16.msra.mxu0 %v4834
    %7074 = vmatpush.bf16.msra.mxu0 %v4830
    %7075 = vmatpush.bf16.msra.mxu0 %v4826
    %7076 = vmatpush.bf16.msra.mxu0 %v4822
    %7077 = vmatmul.bf16.gmra.mxu0 %v1193
    %v7078 = vpop.f32.mrf.mxu0
    %v7079 = vadd.f32 %v7066, %v7078
    %v7080 = vpop.f32.mrf.mxu0
    %7081 = vdwg.mxu0
    %7082 = vmatpush.bf16.msra.mxu0 %v4882
    %7083 = vmatpush.bf16.msra.mxu0 %v4878
    %7084 = vmatpush.bf16.msra.mxu0 %v4874
    %7085 = vmatpush.bf16.msra.mxu0 %v4870
    %7086 = vmatpush.bf16.msra.mxu0 %v4866
    %7087 = vmatpush.bf16.msra.mxu0 %v4862
    %7088 = vmatpush.bf16.msra.mxu0 %v4858
    %7089 = vmatpush.bf16.msra.mxu0 %v4854
    %7090 = vmatmul.bf16.gmra.mxu0 %v1194
    %v7091 = vpop.f32.mrf.mxu0
    %v7092 = vadd.f32 %v7079, %v7091
    %v7093 = vpop.f32.mrf.mxu0
    %7094 = vdwg.mxu0
    %7095 = vmatpush.bf16.msra.mxu0 %v4914
    %7096 = vmatpush.bf16.msra.mxu0 %v4910
    %7097 = vmatpush.bf16.msra.mxu0 %v4906
    %7098 = vmatpush.bf16.msra.mxu0 %v4902
    %7099 = vmatpush.bf16.msra.mxu0 %v4898
    %7100 = vmatpush.bf16.msra.mxu0 %v4894
    %7101 = vmatpush.bf16.msra.mxu0 %v4890
    %7102 = vmatpush.bf16.msra.mxu0 %v4886
    %7103 = vmatmul.bf16.gmra.mxu0 %v1195
    %v7104 = vpop.f32.mrf.mxu0
    %v7105 = vadd.f32 %v7092, %v7104
    %v7106 = vpop.f32.mrf.mxu0
    %7107 = vdwg.mxu0
    %7108 = vmatpush.bf16.msra.mxu0 %v4946
    %7109 = vmatpush.bf16.msra.mxu0 %v4942
    %7110 = vmatpush.bf16.msra.mxu0 %v4938
    %7111 = vmatpush.bf16.msra.mxu0 %v4934
    %7112 = vmatpush.bf16.msra.mxu0 %v4930
    %7113 = vmatpush.bf16.msra.mxu0 %v4926
    %7114 = vmatpush.bf16.msra.mxu0 %v4922
    %7115 = vmatpush.bf16.msra.mxu0 %v4918
    %7116 = vmatmul.bf16.gmra.mxu0 %v1196
    %v7117 = vpop.f32.mrf.mxu0
    %v7118 = vadd.f32 %v7105, %v7117
    %v7119 = vpop.f32.mrf.mxu0
    %7120 = vdwg.mxu0
    %7121 = vmatpush.bf16.msra.mxu0 %v4978
    %7122 = vmatpush.bf16.msra.mxu0 %v4974
    %7123 = vmatpush.bf16.msra.mxu0 %v4970
    %7124 = vmatpush.bf16.msra.mxu0 %v4966
    %7125 = vmatpush.bf16.msra.mxu0 %v4962
    %7126 = vmatpush.bf16.msra.mxu0 %v4958
    %7127 = vmatpush.bf16.msra.mxu0 %v4954
    %7128 = vmatpush.bf16.msra.mxu0 %v4950
    %7129 = vmatmul.bf16.gmra.mxu0 %v1197
    %v7130 = vpop.f32.mrf.mxu0
    %v7131 = vadd.f32 %v7118, %v7130
    %v7132 = vpop.f32.mrf.mxu0
    %7133 = vdwg.mxu0
    %7134 = vmatpush.bf16.msra.mxu0 %v5010
    %7135 = vmatpush.bf16.msra.mxu0 %v5006
    %7136 = vmatpush.bf16.msra.mxu0 %v5002
    %7137 = vmatpush.bf16.msra.mxu0 %v4998
    %7138 = vmatpush.bf16.msra.mxu0 %v4994
    %7139 = vmatpush.bf16.msra.mxu0 %v4990
    %7140 = vmatpush.bf16.msra.mxu0 %v4986
    %7141 = vmatpush.bf16.msra.mxu0 %v4982
    %7142 = vmatmul.bf16.gmra.mxu0 %v1200
    %v7143 = vpop.f32.mrf.mxu0
    %v7144 = vadd.f32 %v7131, %v7143
    %v7145 = vpop.f32.mrf.mxu0
    %7146 = vdwg.mxu0
    %7147 = vmatpush.bf16.msra.mxu0 %v5042
    %7148 = vmatpush.bf16.msra.mxu0 %v5038
    %7149 = vmatpush.bf16.msra.mxu0 %v5034
    %7150 = vmatpush.bf16.msra.mxu0 %v5030
    %7151 = vmatpush.bf16.msra.mxu0 %v5026
    %7152 = vmatpush.bf16.msra.mxu0 %v5022
    %7153 = vmatpush.bf16.msra.mxu0 %v5018
    %7154 = vmatpush.bf16.msra.mxu0 %v5014
    %7155 = vmatmul.bf16.gmra.mxu0 %v1201
    %v7156 = vpop.f32.mrf.mxu0
    %v7157 = vadd.f32 %v7144, %v7156
    %v7158 = vpop.f32.mrf.mxu0
    %7159 = vdwg.mxu0
    %7160 = vmatpush.bf16.msra.mxu0 %v5074
    %7161 = vmatpush.bf16.msra.mxu0 %v5070
    %7162 = vmatpush.bf16.msra.mxu0 %v5066
    %7163 = vmatpush.bf16.msra.mxu0 %v5062
    %7164 = vmatpush.bf16.msra.mxu0 %v5058
    %7165 = vmatpush.bf16.msra.mxu0 %v5054
    %7166 = vmatpush.bf16.msra.mxu0 %v5050
    %7167 = vmatpush.bf16.msra.mxu0 %v5046
    %7168 = vmatmul.bf16.gmra.mxu0 %v1202
    %v7169 = vpop.f32.mrf.mxu0
    %v7170 = vadd.f32 %v7157, %v7169
    %v7171 = vpop.f32.mrf.mxu0
    %7172 = vdwg.mxu0
    %7173 = vmatpush.bf16.msra.mxu0 %v5106
    %7174 = vmatpush.bf16.msra.mxu0 %v5102
    %7175 = vmatpush.bf16.msra.mxu0 %v5098
    %7176 = vmatpush.bf16.msra.mxu0 %v5094
    %7177 = vmatpush.bf16.msra.mxu0 %v5090
    %7178 = vmatpush.bf16.msra.mxu0 %v5086
    %7179 = vmatpush.bf16.msra.mxu0 %v5082
    %7180 = vmatpush.bf16.msra.mxu0 %v5078
    %7181 = vmatmul.bf16.gmra.mxu0 %v1203
    %v7182 = vpop.f32.mrf.mxu0
    %v7183 = vadd.f32 %v7170, %v7182
    %v7184 = vpop.f32.mrf.mxu0
    %7185 = vdwg.mxu0
    %7186 = vmatpush.bf16.msra.mxu0 %v5138
    %7187 = vmatpush.bf16.msra.mxu0 %v5134
    %7188 = vmatpush.bf16.msra.mxu0 %v5130
    %7189 = vmatpush.bf16.msra.mxu0 %v5126
    %7190 = vmatpush.bf16.msra.mxu0 %v5122
    %7191 = vmatpush.bf16.msra.mxu0 %v5118
    %7192 = vmatpush.bf16.msra.mxu0 %v5114
    %7193 = vmatpush.bf16.msra.mxu0 %v5110
    %7194 = vmatmul.bf16.gmra.mxu0 %v1204
    %v7195 = vpop.f32.mrf.mxu0
    %v7196 = vadd.f32 %v7183, %v7195
    %v7197 = vpop.f32.mrf.mxu0
    %7198 = vdwg.mxu0
    %7199 = vmatpush.bf16.msra.mxu0 %v5170
    %7200 = vmatpush.bf16.msra.mxu0 %v5166
    %7201 = vmatpush.bf16.msra.mxu0 %v5162
    %7202 = vmatpush.bf16.msra.mxu0 %v5158
    %7203 = vmatpush.bf16.msra.mxu0 %v5154
    %7204 = vmatpush.bf16.msra.mxu0 %v5150
    %7205 = vmatpush.bf16.msra.mxu0 %v5146
    %7206 = vmatpush.bf16.msra.mxu0 %v5142
    %7207 = vmatmul.bf16.gmra.mxu0 %v1205
    %v7208 = vpop.f32.mrf.mxu0
    %v7209 = vadd.f32 %v7196, %v7208
    %v7210 = vpop.f32.mrf.mxu0
    %7211 = vdwg.mxu0
    %7212 = vmatpush.bf16.msra.mxu0 %v5202
    %7213 = vmatpush.bf16.msra.mxu0 %v5198
    %7214 = vmatpush.bf16.msra.mxu0 %v5194
    %7215 = vmatpush.bf16.msra.mxu0 %v5190
    %7216 = vmatpush.bf16.msra.mxu0 %v5186
    %7217 = vmatpush.bf16.msra.mxu0 %v5182
    %7218 = vmatpush.bf16.msra.mxu0 %v5178
    %7219 = vmatpush.bf16.msra.mxu0 %v5174
    %7220 = vmatmul.bf16.gmra.mxu0 %v1206
    %v7221 = vpop.f32.mrf.mxu0
    %v7222 = vadd.f32 %v7209, %v7221
    %v7223 = vpop.f32.mrf.mxu0
    %7224 = vdwg.mxu0
    %7225 = vmatpush.bf16.msra.mxu0 %v5234
    %7226 = vmatpush.bf16.msra.mxu0 %v5230
    %7227 = vmatpush.bf16.msra.mxu0 %v5226
    %7228 = vmatpush.bf16.msra.mxu0 %v5222
    %7229 = vmatpush.bf16.msra.mxu0 %v5218
    %7230 = vmatpush.bf16.msra.mxu0 %v5214
    %7231 = vmatpush.bf16.msra.mxu0 %v5210
    %7232 = vmatpush.bf16.msra.mxu0 %v5206
    %7233 = vmatmul.bf16.gmra.mxu0 %v1207
    %v7234 = vpop.f32.mrf.mxu0
    %v7235 = vadd.f32 %v7222, %v7234
    %v7236 = vpop.f32.mrf.mxu0
    %7237 = vdwg.mxu0
    %7238 = vmatpush.bf16.msra.mxu0 %v5266
    %7239 = vmatpush.bf16.msra.mxu0 %v5262
    %7240 = vmatpush.bf16.msra.mxu0 %v5258
    %7241 = vmatpush.bf16.msra.mxu0 %v5254
    %7242 = vmatpush.bf16.msra.mxu0 %v5250
    %7243 = vmatpush.bf16.msra.mxu0 %v5246
    %7244 = vmatpush.bf16.msra.mxu0 %v5242
    %7245 = vmatpush.bf16.msra.mxu0 %v5238
    %7246 = vmatmul.bf16.gmra.mxu0 %v1210
    %v7247 = vpop.f32.mrf.mxu0
    %v7248 = vadd.f32 %v7235, %v7247
    %v7249 = vpop.f32.mrf.mxu0
    %7250 = vdwg.mxu0
    %7251 = vmatpush.bf16.msra.mxu0 %v5298
    %7252 = vmatpush.bf16.msra.mxu0 %v5294
    %7253 = vmatpush.bf16.msra.mxu0 %v5290
    %7254 = vmatpush.bf16.msra.mxu0 %v5286
    %7255 = vmatpush.bf16.msra.mxu0 %v5282
    %7256 = vmatpush.bf16.msra.mxu0 %v5278
    %7257 = vmatpush.bf16.msra.mxu0 %v5274
    %7258 = vmatpush.bf16.msra.mxu0 %v5270
    %7259 = vmatmul.bf16.gmra.mxu0 %v1211
    %v7260 = vpop.f32.mrf.mxu0
    %v7261 = vadd.f32 %v7248, %v7260
    %v7262 = vpop.f32.mrf.mxu0
    %7263 = vdwg.mxu0
    %7264 = vmatpush.bf16.msra.mxu0 %v5330
    %7265 = vmatpush.bf16.msra.mxu0 %v5326
    %7266 = vmatpush.bf16.msra.mxu0 %v5322
    %7267 = vmatpush.bf16.msra.mxu0 %v5318
    %7268 = vmatpush.bf16.msra.mxu0 %v5314
    %7269 = vmatpush.bf16.msra.mxu0 %v5310
    %7270 = vmatpush.bf16.msra.mxu0 %v5306
    %7271 = vmatpush.bf16.msra.mxu0 %v5302
    %7272 = vmatmul.bf16.gmra.mxu0 %v1212
    %v7273 = vpop.f32.mrf.mxu0
    %v7274 = vadd.f32 %v7261, %v7273
    %v7275 = vpop.f32.mrf.mxu0
    %7276 = vdwg.mxu0
    %7277 = vmatpush.bf16.msra.mxu0 %v5362
    %7278 = vmatpush.bf16.msra.mxu0 %v5358
    %7279 = vmatpush.bf16.msra.mxu0 %v5354
    %7280 = vmatpush.bf16.msra.mxu0 %v5350
    %7281 = vmatpush.bf16.msra.mxu0 %v5346
    %7282 = vmatpush.bf16.msra.mxu0 %v5342
    %7283 = vmatpush.bf16.msra.mxu0 %v5338
    %7284 = vmatpush.bf16.msra.mxu0 %v5334
    %7285 = vmatmul.bf16.gmra.mxu0 %v1213
    %v7286 = vpop.f32.mrf.mxu0
    %v7287 = vadd.f32 %v7274, %v7286
    %v7288 = vpop.f32.mrf.mxu0
    %7289 = vdwg.mxu0
    %7290 = vmatpush.bf16.msra.mxu0 %v5394
    %7291 = vmatpush.bf16.msra.mxu0 %v5390
    %7292 = vmatpush.bf16.msra.mxu0 %v5386
    %7293 = vmatpush.bf16.msra.mxu0 %v5382
    %7294 = vmatpush.bf16.msra.mxu0 %v5378
    %7295 = vmatpush.bf16.msra.mxu0 %v5374
    %7296 = vmatpush.bf16.msra.mxu0 %v5370
    %7297 = vmatpush.bf16.msra.mxu0 %v5366
    %7298 = vmatmul.bf16.gmra.mxu0 %v1214
    %v7299 = vpop.f32.mrf.mxu0
    %v7300 = vadd.f32 %v7287, %v7299
    %v7301 = vpop.f32.mrf.mxu0
    %7302 = vdwg.mxu0
    %7303 = vmatpush.bf16.msra.mxu0 %v5426
    %7304 = vmatpush.bf16.msra.mxu0 %v5422
    %7305 = vmatpush.bf16.msra.mxu0 %v5418
    %7306 = vmatpush.bf16.msra.mxu0 %v5414
    %7307 = vmatpush.bf16.msra.mxu0 %v5410
    %7308 = vmatpush.bf16.msra.mxu0 %v5406
    %7309 = vmatpush.bf16.msra.mxu0 %v5402
    %7310 = vmatpush.bf16.msra.mxu0 %v5398
    %7311 = vmatmul.bf16.gmra.mxu0 %v1215
    %v7312 = vpop.f32.mrf.mxu0
    %v7313 = vadd.f32 %v7300, %v7312
    %v7314 = vpop.f32.mrf.mxu0
    %7315 = vdwg.mxu0
    %7316 = vmatpush.bf16.msra.mxu0 %v5458
    %7317 = vmatpush.bf16.msra.mxu0 %v5454
    %7318 = vmatpush.bf16.msra.mxu0 %v5450
    %7319 = vmatpush.bf16.msra.mxu0 %v5446
    %7320 = vmatpush.bf16.msra.mxu0 %v5442
    %7321 = vmatpush.bf16.msra.mxu0 %v5438
    %7322 = vmatpush.bf16.msra.mxu0 %v5434
    %7323 = vmatpush.bf16.msra.mxu0 %v5430
    %7324 = vmatmul.bf16.gmra.mxu0 %v1216
    %v7325 = vpop.f32.mrf.mxu0
    %v7326 = vadd.f32 %v7313, %v7325
    %v7327 = vpop.f32.mrf.mxu0
    %7328 = vdwg.mxu0
    %7329 = vmatpush.bf16.msra.mxu0 %v5490
    %7330 = vmatpush.bf16.msra.mxu0 %v5486
    %7331 = vmatpush.bf16.msra.mxu0 %v5482
    %7332 = vmatpush.bf16.msra.mxu0 %v5478
    %7333 = vmatpush.bf16.msra.mxu0 %v5474
    %7334 = vmatpush.bf16.msra.mxu0 %v5470
    %7335 = vmatpush.bf16.msra.mxu0 %v5466
    %7336 = vmatpush.bf16.msra.mxu0 %v5462
    %7337 = vmatmul.bf16.gmra.mxu0 %v1217
    %v7338 = vpop.f32.mrf.mxu0
    %v7339 = vadd.f32 %v7326, %v7338
    %v7340 = vpop.f32.mrf.mxu0
    %7341 = vdwg.mxu0
    %7342 = vmatpush.bf16.msra.mxu0 %v5522
    %7343 = vmatpush.bf16.msra.mxu0 %v5518
    %7344 = vmatpush.bf16.msra.mxu0 %v5514
    %7345 = vmatpush.bf16.msra.mxu0 %v5510
    %7346 = vmatpush.bf16.msra.mxu0 %v5506
    %7347 = vmatpush.bf16.msra.mxu0 %v5502
    %7348 = vmatpush.bf16.msra.mxu0 %v5498
    %7349 = vmatpush.bf16.msra.mxu0 %v5494
    %7350 = vmatmul.bf16.gmra.mxu0 %v1220
    %v7351 = vpop.f32.mrf.mxu0
    %v7352 = vadd.f32 %v7339, %v7351
    %v7353 = vpop.f32.mrf.mxu0
    %7354 = vdwg.mxu0
    %7355 = vmatpush.bf16.msra.mxu0 %v5554
    %7356 = vmatpush.bf16.msra.mxu0 %v5550
    %7357 = vmatpush.bf16.msra.mxu0 %v5546
    %7358 = vmatpush.bf16.msra.mxu0 %v5542
    %7359 = vmatpush.bf16.msra.mxu0 %v5538
    %7360 = vmatpush.bf16.msra.mxu0 %v5534
    %7361 = vmatpush.bf16.msra.mxu0 %v5530
    %7362 = vmatpush.bf16.msra.mxu0 %v5526
    %7363 = vmatmul.bf16.gmra.mxu0 %v1221
    %v7364 = vpop.f32.mrf.mxu0
    %v7365 = vadd.f32 %v7352, %v7364
    %v7366 = vpop.f32.mrf.mxu0
    %7367 = vdwg.mxu0
    %7368 = vmatpush.bf16.msra.mxu0 %v5586
    %7369 = vmatpush.bf16.msra.mxu0 %v5582
    %7370 = vmatpush.bf16.msra.mxu0 %v5578
    %7371 = vmatpush.bf16.msra.mxu0 %v5574
    %7372 = vmatpush.bf16.msra.mxu0 %v5570
    %7373 = vmatpush.bf16.msra.mxu0 %v5566
    %7374 = vmatpush.bf16.msra.mxu0 %v5562
    %7375 = vmatpush.bf16.msra.mxu0 %v5558
    %7376 = vmatmul.bf16.gmra.mxu0 %v1222
    %v7377 = vpop.f32.mrf.mxu0
    %v7378 = vadd.f32 %v7365, %v7377
    %v7379 = vpop.f32.mrf.mxu0
    %7380 = vdwg.mxu0
    %7381 = vmatpush.bf16.msra.mxu0 %v5618
    %7382 = vmatpush.bf16.msra.mxu0 %v5614
    %7383 = vmatpush.bf16.msra.mxu0 %v5610
    %7384 = vmatpush.bf16.msra.mxu0 %v5606
    %7385 = vmatpush.bf16.msra.mxu0 %v5602
    %7386 = vmatpush.bf16.msra.mxu0 %v5598
    %7387 = vmatpush.bf16.msra.mxu0 %v5594
    %7388 = vmatpush.bf16.msra.mxu0 %v5590
    %7389 = vmatmul.bf16.gmra.mxu0 %v1223
    %v7390 = vpop.f32.mrf.mxu0
    %v7391 = vadd.f32 %v7378, %v7390
    %v7392 = vpop.f32.mrf.mxu0
    %7393 = vdwg.mxu0
    %7394 = vmatpush.bf16.msra.mxu0 %v5650
    %7395 = vmatpush.bf16.msra.mxu0 %v5646
    %7396 = vmatpush.bf16.msra.mxu0 %v5642
    %7397 = vmatpush.bf16.msra.mxu0 %v5638
    %7398 = vmatpush.bf16.msra.mxu0 %v5634
    %7399 = vmatpush.bf16.msra.mxu0 %v5630
    %7400 = vmatpush.bf16.msra.mxu0 %v5626
    %7401 = vmatpush.bf16.msra.mxu0 %v5622
    %7402 = vmatmul.bf16.gmra.mxu0 %v1224
    %v7403 = vpop.f32.mrf.mxu0
    %v7404 = vadd.f32 %v7391, %v7403
    %v7405 = vpop.f32.mrf.mxu0
    %7406 = vdwg.mxu0
    %7407 = vmatpush.bf16.msra.mxu0 %v5682
    %7408 = vmatpush.bf16.msra.mxu0 %v5678
    %7409 = vmatpush.bf16.msra.mxu0 %v5674
    %7410 = vmatpush.bf16.msra.mxu0 %v5670
    %7411 = vmatpush.bf16.msra.mxu0 %v5666
    %7412 = vmatpush.bf16.msra.mxu0 %v5662
    %7413 = vmatpush.bf16.msra.mxu0 %v5658
    %7414 = vmatpush.bf16.msra.mxu0 %v5654
    %7415 = vmatmul.bf16.gmra.mxu0 %v1225
    %v7416 = vpop.f32.mrf.mxu0
    %v7417 = vadd.f32 %v7404, %v7416
    %v7418 = vpop.f32.mrf.mxu0
    %7419 = vdwg.mxu0
    %7420 = vmatpush.bf16.msra.mxu0 %v5714
    %7421 = vmatpush.bf16.msra.mxu0 %v5710
    %7422 = vmatpush.bf16.msra.mxu0 %v5706
    %7423 = vmatpush.bf16.msra.mxu0 %v5702
    %7424 = vmatpush.bf16.msra.mxu0 %v5698
    %7425 = vmatpush.bf16.msra.mxu0 %v5694
    %7426 = vmatpush.bf16.msra.mxu0 %v5690
    %7427 = vmatpush.bf16.msra.mxu0 %v5686
    %7428 = vmatmul.bf16.gmra.mxu0 %v1226
    %v7429 = vpop.f32.mrf.mxu0
    %v7430 = vadd.f32 %v7417, %v7429
    %v7431 = vpop.f32.mrf.mxu0
    %7432 = vdwg.mxu0
    %7433 = vmatpush.bf16.msra.mxu0 %v5746
    %7434 = vmatpush.bf16.msra.mxu0 %v5742
    %7435 = vmatpush.bf16.msra.mxu0 %v5738
    %7436 = vmatpush.bf16.msra.mxu0 %v5734
    %7437 = vmatpush.bf16.msra.mxu0 %v5730
    %7438 = vmatpush.bf16.msra.mxu0 %v5726
    %7439 = vmatpush.bf16.msra.mxu0 %v5722
    %7440 = vmatpush.bf16.msra.mxu0 %v5718
    %7441 = vmatmul.bf16.gmra.mxu0 %v1227
    %v7442 = vpop.f32.mrf.mxu0
    %v7443 = vadd.f32 %v7430, %v7442
    %v7444 = vpop.f32.mrf.mxu0
    %7445 = vdwg.mxu0
    %7446 = vmatpush.bf16.msra.mxu0 %v5778
    %7447 = vmatpush.bf16.msra.mxu0 %v5774
    %7448 = vmatpush.bf16.msra.mxu0 %v5770
    %7449 = vmatpush.bf16.msra.mxu0 %v5766
    %7450 = vmatpush.bf16.msra.mxu0 %v5762
    %7451 = vmatpush.bf16.msra.mxu0 %v5758
    %7452 = vmatpush.bf16.msra.mxu0 %v5754
    %7453 = vmatpush.bf16.msra.mxu0 %v5750
    %7454 = vmatmul.bf16.gmra.mxu0 %v1230
    %v7455 = vpop.f32.mrf.mxu0
    %v7456 = vadd.f32 %v7443, %v7455
    %v7457 = vpop.f32.mrf.mxu0
    %7458 = vdwg.mxu0
    %7459 = vmatpush.bf16.msra.mxu0 %v5810
    %7460 = vmatpush.bf16.msra.mxu0 %v5806
    %7461 = vmatpush.bf16.msra.mxu0 %v5802
    %7462 = vmatpush.bf16.msra.mxu0 %v5798
    %7463 = vmatpush.bf16.msra.mxu0 %v5794
    %7464 = vmatpush.bf16.msra.mxu0 %v5790
    %7465 = vmatpush.bf16.msra.mxu0 %v5786
    %7466 = vmatpush.bf16.msra.mxu0 %v5782
    %7467 = vmatmul.bf16.gmra.mxu0 %v1231
    %v7468 = vpop.f32.mrf.mxu0
    %v7469 = vadd.f32 %v7456, %v7468
    %v7470 = vpop.f32.mrf.mxu0
    %7471 = vdwg.mxu0
    %7472 = vmatpush.bf16.msra.mxu0 %v5842
    %7473 = vmatpush.bf16.msra.mxu0 %v5838
    %7474 = vmatpush.bf16.msra.mxu0 %v5834
    %7475 = vmatpush.bf16.msra.mxu0 %v5830
    %7476 = vmatpush.bf16.msra.mxu0 %v5826
    %7477 = vmatpush.bf16.msra.mxu0 %v5822
    %7478 = vmatpush.bf16.msra.mxu0 %v5818
    %7479 = vmatpush.bf16.msra.mxu0 %v5814
    %7480 = vmatmul.bf16.gmra.mxu0 %v1232
    %v7481 = vpop.f32.mrf.mxu0
    %v7482 = vadd.f32 %v7469, %v7481
    %v7483 = vpop.f32.mrf.mxu0
    %7484 = vdwg.mxu0
    %7485 = vmatpush.bf16.msra.mxu0 %v5874
    %7486 = vmatpush.bf16.msra.mxu0 %v5870
    %7487 = vmatpush.bf16.msra.mxu0 %v5866
    %7488 = vmatpush.bf16.msra.mxu0 %v5862
    %7489 = vmatpush.bf16.msra.mxu0 %v5858
    %7490 = vmatpush.bf16.msra.mxu0 %v5854
    %7491 = vmatpush.bf16.msra.mxu0 %v5850
    %7492 = vmatpush.bf16.msra.mxu0 %v5846
    %7493 = vmatmul.bf16.gmra.mxu0 %v1233
    %v7494 = vpop.f32.mrf.mxu0
    %v7495 = vadd.f32 %v7482, %v7494
    %v7496 = vpop.f32.mrf.mxu0
    %7497 = vdwg.mxu0
    %7498 = vmatpush.bf16.msra.mxu0 %v4755
    %7499 = vmatpush.bf16.msra.mxu0 %v4751
    %7500 = vmatpush.bf16.msra.mxu0 %v4747
    %7501 = vmatpush.bf16.msra.mxu0 %v4743
    %7502 = vmatpush.bf16.msra.mxu0 %v4739
    %7503 = vmatpush.bf16.msra.mxu0 %v4735
    %7504 = vmatpush.bf16.msra.mxu0 %v4731
    %7505 = vmatpush.bf16.msra.mxu0 %v4727
    %7506 = vmatmul.bf16.gmra.mxu0 %v1190
    %v7507 = vpop.f32.mrf.mxu0
    %v7508 = vadd.f32 %v1181, %v7507
    %v7509 = vpop.f32.mrf.mxu0
    %7510 = vdwg.mxu0
    %7511 = vmatpush.bf16.msra.mxu0 %v4787
    %7512 = vmatpush.bf16.msra.mxu0 %v4783
    %7513 = vmatpush.bf16.msra.mxu0 %v4779
    %7514 = vmatpush.bf16.msra.mxu0 %v4775
    %7515 = vmatpush.bf16.msra.mxu0 %v4771
    %7516 = vmatpush.bf16.msra.mxu0 %v4767
    %7517 = vmatpush.bf16.msra.mxu0 %v4763
    %7518 = vmatpush.bf16.msra.mxu0 %v4759
    %7519 = vmatmul.bf16.gmra.mxu0 %v1191
    %v7520 = vpop.f32.mrf.mxu0
    %v7521 = vadd.f32 %v7508, %v7520
    %v7522 = vpop.f32.mrf.mxu0
    %7523 = vdwg.mxu0
    %7524 = vmatpush.bf16.msra.mxu0 %v4819
    %7525 = vmatpush.bf16.msra.mxu0 %v4815
    %7526 = vmatpush.bf16.msra.mxu0 %v4811
    %7527 = vmatpush.bf16.msra.mxu0 %v4807
    %7528 = vmatpush.bf16.msra.mxu0 %v4803
    %7529 = vmatpush.bf16.msra.mxu0 %v4799
    %7530 = vmatpush.bf16.msra.mxu0 %v4795
    %7531 = vmatpush.bf16.msra.mxu0 %v4791
    %7532 = vmatmul.bf16.gmra.mxu0 %v1192
    %v7533 = vpop.f32.mrf.mxu0
    %v7534 = vadd.f32 %v7521, %v7533
    %v7535 = vpop.f32.mrf.mxu0
    %7536 = vdwg.mxu0
    %7537 = vmatpush.bf16.msra.mxu0 %v4851
    %7538 = vmatpush.bf16.msra.mxu0 %v4847
    %7539 = vmatpush.bf16.msra.mxu0 %v4843
    %7540 = vmatpush.bf16.msra.mxu0 %v4839
    %7541 = vmatpush.bf16.msra.mxu0 %v4835
    %7542 = vmatpush.bf16.msra.mxu0 %v4831
    %7543 = vmatpush.bf16.msra.mxu0 %v4827
    %7544 = vmatpush.bf16.msra.mxu0 %v4823
    %7545 = vmatmul.bf16.gmra.mxu0 %v1193
    %v7546 = vpop.f32.mrf.mxu0
    %v7547 = vadd.f32 %v7534, %v7546
    %v7548 = vpop.f32.mrf.mxu0
    %7549 = vdwg.mxu0
    %7550 = vmatpush.bf16.msra.mxu0 %v4883
    %7551 = vmatpush.bf16.msra.mxu0 %v4879
    %7552 = vmatpush.bf16.msra.mxu0 %v4875
    %7553 = vmatpush.bf16.msra.mxu0 %v4871
    %7554 = vmatpush.bf16.msra.mxu0 %v4867
    %7555 = vmatpush.bf16.msra.mxu0 %v4863
    %7556 = vmatpush.bf16.msra.mxu0 %v4859
    %7557 = vmatpush.bf16.msra.mxu0 %v4855
    %7558 = vmatmul.bf16.gmra.mxu0 %v1194
    %v7559 = vpop.f32.mrf.mxu0
    %v7560 = vadd.f32 %v7547, %v7559
    %v7561 = vpop.f32.mrf.mxu0
    %7562 = vdwg.mxu0
    %7563 = vmatpush.bf16.msra.mxu0 %v4915
    %7564 = vmatpush.bf16.msra.mxu0 %v4911
    %7565 = vmatpush.bf16.msra.mxu0 %v4907
    %7566 = vmatpush.bf16.msra.mxu0 %v4903
    %7567 = vmatpush.bf16.msra.mxu0 %v4899
    %7568 = vmatpush.bf16.msra.mxu0 %v4895
    %7569 = vmatpush.bf16.msra.mxu0 %v4891
    %7570 = vmatpush.bf16.msra.mxu0 %v4887
    %7571 = vmatmul.bf16.gmra.mxu0 %v1195
    %v7572 = vpop.f32.mrf.mxu0
    %v7573 = vadd.f32 %v7560, %v7572
    %v7574 = vpop.f32.mrf.mxu0
    %7575 = vdwg.mxu0
    %7576 = vmatpush.bf16.msra.mxu0 %v4947
    %7577 = vmatpush.bf16.msra.mxu0 %v4943
    %7578 = vmatpush.bf16.msra.mxu0 %v4939
    %7579 = vmatpush.bf16.msra.mxu0 %v4935
    %7580 = vmatpush.bf16.msra.mxu0 %v4931
    %7581 = vmatpush.bf16.msra.mxu0 %v4927
    %7582 = vmatpush.bf16.msra.mxu0 %v4923
    %7583 = vmatpush.bf16.msra.mxu0 %v4919
    %7584 = vmatmul.bf16.gmra.mxu0 %v1196
    %v7585 = vpop.f32.mrf.mxu0
    %v7586 = vadd.f32 %v7573, %v7585
    %v7587 = vpop.f32.mrf.mxu0
    %7588 = vdwg.mxu0
    %7589 = vmatpush.bf16.msra.mxu0 %v4979
    %7590 = vmatpush.bf16.msra.mxu0 %v4975
    %7591 = vmatpush.bf16.msra.mxu0 %v4971
    %7592 = vmatpush.bf16.msra.mxu0 %v4967
    %7593 = vmatpush.bf16.msra.mxu0 %v4963
    %7594 = vmatpush.bf16.msra.mxu0 %v4959
    %7595 = vmatpush.bf16.msra.mxu0 %v4955
    %7596 = vmatpush.bf16.msra.mxu0 %v4951
    %7597 = vmatmul.bf16.gmra.mxu0 %v1197
    %v7598 = vpop.f32.mrf.mxu0
    %v7599 = vadd.f32 %v7586, %v7598
    %v7600 = vpop.f32.mrf.mxu0
    %7601 = vdwg.mxu0
    %7602 = vmatpush.bf16.msra.mxu0 %v5011
    %7603 = vmatpush.bf16.msra.mxu0 %v5007
    %7604 = vmatpush.bf16.msra.mxu0 %v5003
    %7605 = vmatpush.bf16.msra.mxu0 %v4999
    %7606 = vmatpush.bf16.msra.mxu0 %v4995
    %7607 = vmatpush.bf16.msra.mxu0 %v4991
    %7608 = vmatpush.bf16.msra.mxu0 %v4987
    %7609 = vmatpush.bf16.msra.mxu0 %v4983
    %7610 = vmatmul.bf16.gmra.mxu0 %v1200
    %v7611 = vpop.f32.mrf.mxu0
    %v7612 = vadd.f32 %v7599, %v7611
    %v7613 = vpop.f32.mrf.mxu0
    %7614 = vdwg.mxu0
    %7615 = vmatpush.bf16.msra.mxu0 %v5043
    %7616 = vmatpush.bf16.msra.mxu0 %v5039
    %7617 = vmatpush.bf16.msra.mxu0 %v5035
    %7618 = vmatpush.bf16.msra.mxu0 %v5031
    %7619 = vmatpush.bf16.msra.mxu0 %v5027
    %7620 = vmatpush.bf16.msra.mxu0 %v5023
    %7621 = vmatpush.bf16.msra.mxu0 %v5019
    %7622 = vmatpush.bf16.msra.mxu0 %v5015
    %7623 = vmatmul.bf16.gmra.mxu0 %v1201
    %v7624 = vpop.f32.mrf.mxu0
    %v7625 = vadd.f32 %v7612, %v7624
    %v7626 = vpop.f32.mrf.mxu0
    %7627 = vdwg.mxu0
    %7628 = vmatpush.bf16.msra.mxu0 %v5075
    %7629 = vmatpush.bf16.msra.mxu0 %v5071
    %7630 = vmatpush.bf16.msra.mxu0 %v5067
    %7631 = vmatpush.bf16.msra.mxu0 %v5063
    %7632 = vmatpush.bf16.msra.mxu0 %v5059
    %7633 = vmatpush.bf16.msra.mxu0 %v5055
    %7634 = vmatpush.bf16.msra.mxu0 %v5051
    %7635 = vmatpush.bf16.msra.mxu0 %v5047
    %7636 = vmatmul.bf16.gmra.mxu0 %v1202
    %v7637 = vpop.f32.mrf.mxu0
    %v7638 = vadd.f32 %v7625, %v7637
    %v7639 = vpop.f32.mrf.mxu0
    %7640 = vdwg.mxu0
    %7641 = vmatpush.bf16.msra.mxu0 %v5107
    %7642 = vmatpush.bf16.msra.mxu0 %v5103
    %7643 = vmatpush.bf16.msra.mxu0 %v5099
    %7644 = vmatpush.bf16.msra.mxu0 %v5095
    %7645 = vmatpush.bf16.msra.mxu0 %v5091
    %7646 = vmatpush.bf16.msra.mxu0 %v5087
    %7647 = vmatpush.bf16.msra.mxu0 %v5083
    %7648 = vmatpush.bf16.msra.mxu0 %v5079
    %7649 = vmatmul.bf16.gmra.mxu0 %v1203
    %v7650 = vpop.f32.mrf.mxu0
    %v7651 = vadd.f32 %v7638, %v7650
    %v7652 = vpop.f32.mrf.mxu0
    %7653 = vdwg.mxu0
    %7654 = vmatpush.bf16.msra.mxu0 %v5139
    %7655 = vmatpush.bf16.msra.mxu0 %v5135
    %7656 = vmatpush.bf16.msra.mxu0 %v5131
    %7657 = vmatpush.bf16.msra.mxu0 %v5127
    %7658 = vmatpush.bf16.msra.mxu0 %v5123
    %7659 = vmatpush.bf16.msra.mxu0 %v5119
    %7660 = vmatpush.bf16.msra.mxu0 %v5115
    %7661 = vmatpush.bf16.msra.mxu0 %v5111
    %7662 = vmatmul.bf16.gmra.mxu0 %v1204
    %v7663 = vpop.f32.mrf.mxu0
    %v7664 = vadd.f32 %v7651, %v7663
    %v7665 = vpop.f32.mrf.mxu0
    %7666 = vdwg.mxu0
    %7667 = vmatpush.bf16.msra.mxu0 %v5171
    %7668 = vmatpush.bf16.msra.mxu0 %v5167
    %7669 = vmatpush.bf16.msra.mxu0 %v5163
    %7670 = vmatpush.bf16.msra.mxu0 %v5159
    %7671 = vmatpush.bf16.msra.mxu0 %v5155
    %7672 = vmatpush.bf16.msra.mxu0 %v5151
    %7673 = vmatpush.bf16.msra.mxu0 %v5147
    %7674 = vmatpush.bf16.msra.mxu0 %v5143
    %7675 = vmatmul.bf16.gmra.mxu0 %v1205
    %v7676 = vpop.f32.mrf.mxu0
    %v7677 = vadd.f32 %v7664, %v7676
    %v7678 = vpop.f32.mrf.mxu0
    %7679 = vdwg.mxu0
    %7680 = vmatpush.bf16.msra.mxu0 %v5203
    %7681 = vmatpush.bf16.msra.mxu0 %v5199
    %7682 = vmatpush.bf16.msra.mxu0 %v5195
    %7683 = vmatpush.bf16.msra.mxu0 %v5191
    %7684 = vmatpush.bf16.msra.mxu0 %v5187
    %7685 = vmatpush.bf16.msra.mxu0 %v5183
    %7686 = vmatpush.bf16.msra.mxu0 %v5179
    %7687 = vmatpush.bf16.msra.mxu0 %v5175
    %7688 = vmatmul.bf16.gmra.mxu0 %v1206
    %v7689 = vpop.f32.mrf.mxu0
    %v7690 = vadd.f32 %v7677, %v7689
    %v7691 = vpop.f32.mrf.mxu0
    %7692 = vdwg.mxu0
    %7693 = vmatpush.bf16.msra.mxu0 %v5235
    %7694 = vmatpush.bf16.msra.mxu0 %v5231
    %7695 = vmatpush.bf16.msra.mxu0 %v5227
    %7696 = vmatpush.bf16.msra.mxu0 %v5223
    %7697 = vmatpush.bf16.msra.mxu0 %v5219
    %7698 = vmatpush.bf16.msra.mxu0 %v5215
    %7699 = vmatpush.bf16.msra.mxu0 %v5211
    %7700 = vmatpush.bf16.msra.mxu0 %v5207
    %7701 = vmatmul.bf16.gmra.mxu0 %v1207
    %v7702 = vpop.f32.mrf.mxu0
    %v7703 = vadd.f32 %v7690, %v7702
    %v7704 = vpop.f32.mrf.mxu0
    %7705 = vdwg.mxu0
    %7706 = vmatpush.bf16.msra.mxu0 %v5267
    %7707 = vmatpush.bf16.msra.mxu0 %v5263
    %7708 = vmatpush.bf16.msra.mxu0 %v5259
    %7709 = vmatpush.bf16.msra.mxu0 %v5255
    %7710 = vmatpush.bf16.msra.mxu0 %v5251
    %7711 = vmatpush.bf16.msra.mxu0 %v5247
    %7712 = vmatpush.bf16.msra.mxu0 %v5243
    %7713 = vmatpush.bf16.msra.mxu0 %v5239
    %7714 = vmatmul.bf16.gmra.mxu0 %v1210
    %v7715 = vpop.f32.mrf.mxu0
    %v7716 = vadd.f32 %v7703, %v7715
    %v7717 = vpop.f32.mrf.mxu0
    %7718 = vdwg.mxu0
    %7719 = vmatpush.bf16.msra.mxu0 %v5299
    %7720 = vmatpush.bf16.msra.mxu0 %v5295
    %7721 = vmatpush.bf16.msra.mxu0 %v5291
    %7722 = vmatpush.bf16.msra.mxu0 %v5287
    %7723 = vmatpush.bf16.msra.mxu0 %v5283
    %7724 = vmatpush.bf16.msra.mxu0 %v5279
    %7725 = vmatpush.bf16.msra.mxu0 %v5275
    %7726 = vmatpush.bf16.msra.mxu0 %v5271
    %7727 = vmatmul.bf16.gmra.mxu0 %v1211
    %v7728 = vpop.f32.mrf.mxu0
    %v7729 = vadd.f32 %v7716, %v7728
    %v7730 = vpop.f32.mrf.mxu0
    %7731 = vdwg.mxu0
    %7732 = vmatpush.bf16.msra.mxu0 %v5331
    %7733 = vmatpush.bf16.msra.mxu0 %v5327
    %7734 = vmatpush.bf16.msra.mxu0 %v5323
    %7735 = vmatpush.bf16.msra.mxu0 %v5319
    %7736 = vmatpush.bf16.msra.mxu0 %v5315
    %7737 = vmatpush.bf16.msra.mxu0 %v5311
    %7738 = vmatpush.bf16.msra.mxu0 %v5307
    %7739 = vmatpush.bf16.msra.mxu0 %v5303
    %7740 = vmatmul.bf16.gmra.mxu0 %v1212
    %v7741 = vpop.f32.mrf.mxu0
    %v7742 = vadd.f32 %v7729, %v7741
    %v7743 = vpop.f32.mrf.mxu0
    %7744 = vdwg.mxu0
    %7745 = vmatpush.bf16.msra.mxu0 %v5363
    %7746 = vmatpush.bf16.msra.mxu0 %v5359
    %7747 = vmatpush.bf16.msra.mxu0 %v5355
    %7748 = vmatpush.bf16.msra.mxu0 %v5351
    %7749 = vmatpush.bf16.msra.mxu0 %v5347
    %7750 = vmatpush.bf16.msra.mxu0 %v5343
    %7751 = vmatpush.bf16.msra.mxu0 %v5339
    %7752 = vmatpush.bf16.msra.mxu0 %v5335
    %7753 = vmatmul.bf16.gmra.mxu0 %v1213
    %v7754 = vpop.f32.mrf.mxu0
    %v7755 = vadd.f32 %v7742, %v7754
    %v7756 = vpop.f32.mrf.mxu0
    %7757 = vdwg.mxu0
    %7758 = vmatpush.bf16.msra.mxu0 %v5395
    %7759 = vmatpush.bf16.msra.mxu0 %v5391
    %7760 = vmatpush.bf16.msra.mxu0 %v5387
    %7761 = vmatpush.bf16.msra.mxu0 %v5383
    %7762 = vmatpush.bf16.msra.mxu0 %v5379
    %7763 = vmatpush.bf16.msra.mxu0 %v5375
    %7764 = vmatpush.bf16.msra.mxu0 %v5371
    %7765 = vmatpush.bf16.msra.mxu0 %v5367
    %7766 = vmatmul.bf16.gmra.mxu0 %v1214
    %v7767 = vpop.f32.mrf.mxu0
    %v7768 = vadd.f32 %v7755, %v7767
    %v7769 = vpop.f32.mrf.mxu0
    %7770 = vdwg.mxu0
    %7771 = vmatpush.bf16.msra.mxu0 %v5427
    %7772 = vmatpush.bf16.msra.mxu0 %v5423
    %7773 = vmatpush.bf16.msra.mxu0 %v5419
    %7774 = vmatpush.bf16.msra.mxu0 %v5415
    %7775 = vmatpush.bf16.msra.mxu0 %v5411
    %7776 = vmatpush.bf16.msra.mxu0 %v5407
    %7777 = vmatpush.bf16.msra.mxu0 %v5403
    %7778 = vmatpush.bf16.msra.mxu0 %v5399
    %7779 = vmatmul.bf16.gmra.mxu0 %v1215
    %v7780 = vpop.f32.mrf.mxu0
    %v7781 = vadd.f32 %v7768, %v7780
    %v7782 = vpop.f32.mrf.mxu0
    %7783 = vdwg.mxu0
    %7784 = vmatpush.bf16.msra.mxu0 %v5459
    %7785 = vmatpush.bf16.msra.mxu0 %v5455
    %7786 = vmatpush.bf16.msra.mxu0 %v5451
    %7787 = vmatpush.bf16.msra.mxu0 %v5447
    %7788 = vmatpush.bf16.msra.mxu0 %v5443
    %7789 = vmatpush.bf16.msra.mxu0 %v5439
    %7790 = vmatpush.bf16.msra.mxu0 %v5435
    %7791 = vmatpush.bf16.msra.mxu0 %v5431
    %7792 = vmatmul.bf16.gmra.mxu0 %v1216
    %v7793 = vpop.f32.mrf.mxu0
    %v7794 = vadd.f32 %v7781, %v7793
    %v7795 = vpop.f32.mrf.mxu0
    %7796 = vdwg.mxu0
    %7797 = vmatpush.bf16.msra.mxu0 %v5491
    %7798 = vmatpush.bf16.msra.mxu0 %v5487
    %7799 = vmatpush.bf16.msra.mxu0 %v5483
    %7800 = vmatpush.bf16.msra.mxu0 %v5479
    %7801 = vmatpush.bf16.msra.mxu0 %v5475
    %7802 = vmatpush.bf16.msra.mxu0 %v5471
    %7803 = vmatpush.bf16.msra.mxu0 %v5467
    %7804 = vmatpush.bf16.msra.mxu0 %v5463
    %7805 = vmatmul.bf16.gmra.mxu0 %v1217
    %v7806 = vpop.f32.mrf.mxu0
    %v7807 = vadd.f32 %v7794, %v7806
    %v7808 = vpop.f32.mrf.mxu0
    %7809 = vdwg.mxu0
    %7810 = vmatpush.bf16.msra.mxu0 %v5523
    %7811 = vmatpush.bf16.msra.mxu0 %v5519
    %7812 = vmatpush.bf16.msra.mxu0 %v5515
    %7813 = vmatpush.bf16.msra.mxu0 %v5511
    %7814 = vmatpush.bf16.msra.mxu0 %v5507
    %7815 = vmatpush.bf16.msra.mxu0 %v5503
    %7816 = vmatpush.bf16.msra.mxu0 %v5499
    %7817 = vmatpush.bf16.msra.mxu0 %v5495
    %7818 = vmatmul.bf16.gmra.mxu0 %v1220
    %v7819 = vpop.f32.mrf.mxu0
    %v7820 = vadd.f32 %v7807, %v7819
    %v7821 = vpop.f32.mrf.mxu0
    %7822 = vdwg.mxu0
    %7823 = vmatpush.bf16.msra.mxu0 %v5555
    %7824 = vmatpush.bf16.msra.mxu0 %v5551
    %7825 = vmatpush.bf16.msra.mxu0 %v5547
    %7826 = vmatpush.bf16.msra.mxu0 %v5543
    %7827 = vmatpush.bf16.msra.mxu0 %v5539
    %7828 = vmatpush.bf16.msra.mxu0 %v5535
    %7829 = vmatpush.bf16.msra.mxu0 %v5531
    %7830 = vmatpush.bf16.msra.mxu0 %v5527
    %7831 = vmatmul.bf16.gmra.mxu0 %v1221
    %v7832 = vpop.f32.mrf.mxu0
    %v7833 = vadd.f32 %v7820, %v7832
    %v7834 = vpop.f32.mrf.mxu0
    %7835 = vdwg.mxu0
    %7836 = vmatpush.bf16.msra.mxu0 %v5587
    %7837 = vmatpush.bf16.msra.mxu0 %v5583
    %7838 = vmatpush.bf16.msra.mxu0 %v5579
    %7839 = vmatpush.bf16.msra.mxu0 %v5575
    %7840 = vmatpush.bf16.msra.mxu0 %v5571
    %7841 = vmatpush.bf16.msra.mxu0 %v5567
    %7842 = vmatpush.bf16.msra.mxu0 %v5563
    %7843 = vmatpush.bf16.msra.mxu0 %v5559
    %7844 = vmatmul.bf16.gmra.mxu0 %v1222
    %v7845 = vpop.f32.mrf.mxu0
    %v7846 = vadd.f32 %v7833, %v7845
    %v7847 = vpop.f32.mrf.mxu0
    %7848 = vdwg.mxu0
    %7849 = vmatpush.bf16.msra.mxu0 %v5619
    %7850 = vmatpush.bf16.msra.mxu0 %v5615
    %7851 = vmatpush.bf16.msra.mxu0 %v5611
    %7852 = vmatpush.bf16.msra.mxu0 %v5607
    %7853 = vmatpush.bf16.msra.mxu0 %v5603
    %7854 = vmatpush.bf16.msra.mxu0 %v5599
    %7855 = vmatpush.bf16.msra.mxu0 %v5595
    %7856 = vmatpush.bf16.msra.mxu0 %v5591
    %7857 = vmatmul.bf16.gmra.mxu0 %v1223
    %v7858 = vpop.f32.mrf.mxu0
    %v7859 = vadd.f32 %v7846, %v7858
    %v7860 = vpop.f32.mrf.mxu0
    %7861 = vdwg.mxu0
    %7862 = vmatpush.bf16.msra.mxu0 %v5651
    %7863 = vmatpush.bf16.msra.mxu0 %v5647
    %7864 = vmatpush.bf16.msra.mxu0 %v5643
    %7865 = vmatpush.bf16.msra.mxu0 %v5639
    %7866 = vmatpush.bf16.msra.mxu0 %v5635
    %7867 = vmatpush.bf16.msra.mxu0 %v5631
    %7868 = vmatpush.bf16.msra.mxu0 %v5627
    %7869 = vmatpush.bf16.msra.mxu0 %v5623
    %7870 = vmatmul.bf16.gmra.mxu0 %v1224
    %v7871 = vpop.f32.mrf.mxu0
    %v7872 = vadd.f32 %v7859, %v7871
    %v7873 = vpop.f32.mrf.mxu0
    %7874 = vdwg.mxu0
    %7875 = vmatpush.bf16.msra.mxu0 %v5683
    %7876 = vmatpush.bf16.msra.mxu0 %v5679
    %7877 = vmatpush.bf16.msra.mxu0 %v5675
    %7878 = vmatpush.bf16.msra.mxu0 %v5671
    %7879 = vmatpush.bf16.msra.mxu0 %v5667
    %7880 = vmatpush.bf16.msra.mxu0 %v5663
    %7881 = vmatpush.bf16.msra.mxu0 %v5659
    %7882 = vmatpush.bf16.msra.mxu0 %v5655
    %7883 = vmatmul.bf16.gmra.mxu0 %v1225
    %v7884 = vpop.f32.mrf.mxu0
    %v7885 = vadd.f32 %v7872, %v7884
    %v7886 = vpop.f32.mrf.mxu0
    %7887 = vdwg.mxu0
    %7888 = vmatpush.bf16.msra.mxu0 %v5715
    %7889 = vmatpush.bf16.msra.mxu0 %v5711
    %7890 = vmatpush.bf16.msra.mxu0 %v5707
    %7891 = vmatpush.bf16.msra.mxu0 %v5703
    %7892 = vmatpush.bf16.msra.mxu0 %v5699
    %7893 = vmatpush.bf16.msra.mxu0 %v5695
    %7894 = vmatpush.bf16.msra.mxu0 %v5691
    %7895 = vmatpush.bf16.msra.mxu0 %v5687
    %7896 = vmatmul.bf16.gmra.mxu0 %v1226
    %v7897 = vpop.f32.mrf.mxu0
    %v7898 = vadd.f32 %v7885, %v7897
    %v7899 = vpop.f32.mrf.mxu0
    %7900 = vdwg.mxu0
    %7901 = vmatpush.bf16.msra.mxu0 %v5747
    %7902 = vmatpush.bf16.msra.mxu0 %v5743
    %7903 = vmatpush.bf16.msra.mxu0 %v5739
    %7904 = vmatpush.bf16.msra.mxu0 %v5735
    %7905 = vmatpush.bf16.msra.mxu0 %v5731
    %7906 = vmatpush.bf16.msra.mxu0 %v5727
    %7907 = vmatpush.bf16.msra.mxu0 %v5723
    %7908 = vmatpush.bf16.msra.mxu0 %v5719
    %7909 = vmatmul.bf16.gmra.mxu0 %v1227
    %v7910 = vpop.f32.mrf.mxu0
    %v7911 = vadd.f32 %v7898, %v7910
    %v7912 = vpop.f32.mrf.mxu0
    %7913 = vdwg.mxu0
    %7914 = vmatpush.bf16.msra.mxu0 %v5779
    %7915 = vmatpush.bf16.msra.mxu0 %v5775
    %7916 = vmatpush.bf16.msra.mxu0 %v5771
    %7917 = vmatpush.bf16.msra.mxu0 %v5767
    %7918 = vmatpush.bf16.msra.mxu0 %v5763
    %7919 = vmatpush.bf16.msra.mxu0 %v5759
    %7920 = vmatpush.bf16.msra.mxu0 %v5755
    %7921 = vmatpush.bf16.msra.mxu0 %v5751
    %7922 = vmatmul.bf16.gmra.mxu0 %v1230
    %v7923 = vpop.f32.mrf.mxu0
    %v7924 = vadd.f32 %v7911, %v7923
    %v7925 = vpop.f32.mrf.mxu0
    %7926 = vdwg.mxu0
    %7927 = vmatpush.bf16.msra.mxu0 %v5811
    %7928 = vmatpush.bf16.msra.mxu0 %v5807
    %7929 = vmatpush.bf16.msra.mxu0 %v5803
    %7930 = vmatpush.bf16.msra.mxu0 %v5799
    %7931 = vmatpush.bf16.msra.mxu0 %v5795
    %7932 = vmatpush.bf16.msra.mxu0 %v5791
    %7933 = vmatpush.bf16.msra.mxu0 %v5787
    %7934 = vmatpush.bf16.msra.mxu0 %v5783
    %7935 = vmatmul.bf16.gmra.mxu0 %v1231
    %v7936 = vpop.f32.mrf.mxu0
    %v7937 = vadd.f32 %v7924, %v7936
    %v7938 = vpop.f32.mrf.mxu0
    %7939 = vdwg.mxu0
    %7940 = vmatpush.bf16.msra.mxu0 %v5843
    %7941 = vmatpush.bf16.msra.mxu0 %v5839
    %7942 = vmatpush.bf16.msra.mxu0 %v5835
    %7943 = vmatpush.bf16.msra.mxu0 %v5831
    %7944 = vmatpush.bf16.msra.mxu0 %v5827
    %7945 = vmatpush.bf16.msra.mxu0 %v5823
    %7946 = vmatpush.bf16.msra.mxu0 %v5819
    %7947 = vmatpush.bf16.msra.mxu0 %v5815
    %7948 = vmatmul.bf16.gmra.mxu0 %v1232
    %v7949 = vpop.f32.mrf.mxu0
    %v7950 = vadd.f32 %v7937, %v7949
    %v7951 = vpop.f32.mrf.mxu0
    %7952 = vdwg.mxu0
    %7953 = vmatpush.bf16.msra.mxu0 %v5875
    %7954 = vmatpush.bf16.msra.mxu0 %v5871
    %7955 = vmatpush.bf16.msra.mxu0 %v5867
    %7956 = vmatpush.bf16.msra.mxu0 %v5863
    %7957 = vmatpush.bf16.msra.mxu0 %v5859
    %7958 = vmatpush.bf16.msra.mxu0 %v5855
    %7959 = vmatpush.bf16.msra.mxu0 %v5851
    %7960 = vmatpush.bf16.msra.mxu0 %v5847
    %7961 = vmatmul.bf16.gmra.mxu0 %v1233
    %v7962 = vpop.f32.mrf.mxu0
    %v7963 = vadd.f32 %v7950, %v7962
    %v7964 = vpop.f32.mrf.mxu0
    %7965 = vdwg.mxu0
    %7966 = vmatpush.bf16.msra.mxu0 %v4756
    %7967 = vmatpush.bf16.msra.mxu0 %v4752
    %7968 = vmatpush.bf16.msra.mxu0 %v4748
    %7969 = vmatpush.bf16.msra.mxu0 %v4744
    %7970 = vmatpush.bf16.msra.mxu0 %v4740
    %7971 = vmatpush.bf16.msra.mxu0 %v4736
    %7972 = vmatpush.bf16.msra.mxu0 %v4732
    %7973 = vmatpush.bf16.msra.mxu0 %v4728
    %7974 = vmatmul.bf16.gmra.mxu0 %v1190
    %v7975 = vpop.f32.mrf.mxu0
    %v7976 = vadd.f32 %v1182, %v7975
    %v7977 = vpop.f32.mrf.mxu0
    %7978 = vdwg.mxu0
    %7979 = vmatpush.bf16.msra.mxu0 %v4788
    %7980 = vmatpush.bf16.msra.mxu0 %v4784
    %7981 = vmatpush.bf16.msra.mxu0 %v4780
    %7982 = vmatpush.bf16.msra.mxu0 %v4776
    %7983 = vmatpush.bf16.msra.mxu0 %v4772
    %7984 = vmatpush.bf16.msra.mxu0 %v4768
    %7985 = vmatpush.bf16.msra.mxu0 %v4764
    %7986 = vmatpush.bf16.msra.mxu0 %v4760
    %7987 = vmatmul.bf16.gmra.mxu0 %v1191
    %v7988 = vpop.f32.mrf.mxu0
    %v7989 = vadd.f32 %v7976, %v7988
    %v7990 = vpop.f32.mrf.mxu0
    %7991 = vdwg.mxu0
    %7992 = vmatpush.bf16.msra.mxu0 %v4820
    %7993 = vmatpush.bf16.msra.mxu0 %v4816
    %7994 = vmatpush.bf16.msra.mxu0 %v4812
    %7995 = vmatpush.bf16.msra.mxu0 %v4808
    %7996 = vmatpush.bf16.msra.mxu0 %v4804
    %7997 = vmatpush.bf16.msra.mxu0 %v4800
    %7998 = vmatpush.bf16.msra.mxu0 %v4796
    %7999 = vmatpush.bf16.msra.mxu0 %v4792
    %8000 = vmatmul.bf16.gmra.mxu0 %v1192
    %v8001 = vpop.f32.mrf.mxu0
    %v8002 = vadd.f32 %v7989, %v8001
    %v8003 = vpop.f32.mrf.mxu0
    %8004 = vdwg.mxu0
    %8005 = vmatpush.bf16.msra.mxu0 %v4852
    %8006 = vmatpush.bf16.msra.mxu0 %v4848
    %8007 = vmatpush.bf16.msra.mxu0 %v4844
    %8008 = vmatpush.bf16.msra.mxu0 %v4840
    %8009 = vmatpush.bf16.msra.mxu0 %v4836
    %8010 = vmatpush.bf16.msra.mxu0 %v4832
    %8011 = vmatpush.bf16.msra.mxu0 %v4828
    %8012 = vmatpush.bf16.msra.mxu0 %v4824
    %8013 = vmatmul.bf16.gmra.mxu0 %v1193
    %v8014 = vpop.f32.mrf.mxu0
    %v8015 = vadd.f32 %v8002, %v8014
    %v8016 = vpop.f32.mrf.mxu0
    %8017 = vdwg.mxu0
    %8018 = vmatpush.bf16.msra.mxu0 %v4884
    %8019 = vmatpush.bf16.msra.mxu0 %v4880
    %8020 = vmatpush.bf16.msra.mxu0 %v4876
    %8021 = vmatpush.bf16.msra.mxu0 %v4872
    %8022 = vmatpush.bf16.msra.mxu0 %v4868
    %8023 = vmatpush.bf16.msra.mxu0 %v4864
    %8024 = vmatpush.bf16.msra.mxu0 %v4860
    %8025 = vmatpush.bf16.msra.mxu0 %v4856
    %8026 = vmatmul.bf16.gmra.mxu0 %v1194
    %v8027 = vpop.f32.mrf.mxu0
    %v8028 = vadd.f32 %v8015, %v8027
    %v8029 = vpop.f32.mrf.mxu0
    %8030 = vdwg.mxu0
    %8031 = vmatpush.bf16.msra.mxu0 %v4916
    %8032 = vmatpush.bf16.msra.mxu0 %v4912
    %8033 = vmatpush.bf16.msra.mxu0 %v4908
    %8034 = vmatpush.bf16.msra.mxu0 %v4904
    %8035 = vmatpush.bf16.msra.mxu0 %v4900
    %8036 = vmatpush.bf16.msra.mxu0 %v4896
    %8037 = vmatpush.bf16.msra.mxu0 %v4892
    %8038 = vmatpush.bf16.msra.mxu0 %v4888
    %8039 = vmatmul.bf16.gmra.mxu0 %v1195
    %v8040 = vpop.f32.mrf.mxu0
    %v8041 = vadd.f32 %v8028, %v8040
    %v8042 = vpop.f32.mrf.mxu0
    %8043 = vdwg.mxu0
    %8044 = vmatpush.bf16.msra.mxu0 %v4948
    %8045 = vmatpush.bf16.msra.mxu0 %v4944
    %8046 = vmatpush.bf16.msra.mxu0 %v4940
    %8047 = vmatpush.bf16.msra.mxu0 %v4936
    %8048 = vmatpush.bf16.msra.mxu0 %v4932
    %8049 = vmatpush.bf16.msra.mxu0 %v4928
    %8050 = vmatpush.bf16.msra.mxu0 %v4924
    %8051 = vmatpush.bf16.msra.mxu0 %v4920
    %8052 = vmatmul.bf16.gmra.mxu0 %v1196
    %v8053 = vpop.f32.mrf.mxu0
    %v8054 = vadd.f32 %v8041, %v8053
    %v8055 = vpop.f32.mrf.mxu0
    %8056 = vdwg.mxu0
    %8057 = vmatpush.bf16.msra.mxu0 %v4980
    %8058 = vmatpush.bf16.msra.mxu0 %v4976
    %8059 = vmatpush.bf16.msra.mxu0 %v4972
    %8060 = vmatpush.bf16.msra.mxu0 %v4968
    %8061 = vmatpush.bf16.msra.mxu0 %v4964
    %8062 = vmatpush.bf16.msra.mxu0 %v4960
    %8063 = vmatpush.bf16.msra.mxu0 %v4956
    %8064 = vmatpush.bf16.msra.mxu0 %v4952
    %8065 = vmatmul.bf16.gmra.mxu0 %v1197
    %v8066 = vpop.f32.mrf.mxu0
    %v8067 = vadd.f32 %v8054, %v8066
    %v8068 = vpop.f32.mrf.mxu0
    %8069 = vdwg.mxu0
    %8070 = vmatpush.bf16.msra.mxu0 %v5012
    %8071 = vmatpush.bf16.msra.mxu0 %v5008
    %8072 = vmatpush.bf16.msra.mxu0 %v5004
    %8073 = vmatpush.bf16.msra.mxu0 %v5000
    %8074 = vmatpush.bf16.msra.mxu0 %v4996
    %8075 = vmatpush.bf16.msra.mxu0 %v4992
    %8076 = vmatpush.bf16.msra.mxu0 %v4988
    %8077 = vmatpush.bf16.msra.mxu0 %v4984
    %8078 = vmatmul.bf16.gmra.mxu0 %v1200
    %v8079 = vpop.f32.mrf.mxu0
    %v8080 = vadd.f32 %v8067, %v8079
    %v8081 = vpop.f32.mrf.mxu0
    %8082 = vdwg.mxu0
    %8083 = vmatpush.bf16.msra.mxu0 %v5044
    %8084 = vmatpush.bf16.msra.mxu0 %v5040
    %8085 = vmatpush.bf16.msra.mxu0 %v5036
    %8086 = vmatpush.bf16.msra.mxu0 %v5032
    %8087 = vmatpush.bf16.msra.mxu0 %v5028
    %8088 = vmatpush.bf16.msra.mxu0 %v5024
    %8089 = vmatpush.bf16.msra.mxu0 %v5020
    %8090 = vmatpush.bf16.msra.mxu0 %v5016
    %8091 = vmatmul.bf16.gmra.mxu0 %v1201
    %v8092 = vpop.f32.mrf.mxu0
    %v8093 = vadd.f32 %v8080, %v8092
    %v8094 = vpop.f32.mrf.mxu0
    %8095 = vdwg.mxu0
    %8096 = vmatpush.bf16.msra.mxu0 %v5076
    %8097 = vmatpush.bf16.msra.mxu0 %v5072
    %8098 = vmatpush.bf16.msra.mxu0 %v5068
    %8099 = vmatpush.bf16.msra.mxu0 %v5064
    %8100 = vmatpush.bf16.msra.mxu0 %v5060
    %8101 = vmatpush.bf16.msra.mxu0 %v5056
    %8102 = vmatpush.bf16.msra.mxu0 %v5052
    %8103 = vmatpush.bf16.msra.mxu0 %v5048
    %8104 = vmatmul.bf16.gmra.mxu0 %v1202
    %v8105 = vpop.f32.mrf.mxu0
    %v8106 = vadd.f32 %v8093, %v8105
    %v8107 = vpop.f32.mrf.mxu0
    %8108 = vdwg.mxu0
    %8109 = vmatpush.bf16.msra.mxu0 %v5108
    %8110 = vmatpush.bf16.msra.mxu0 %v5104
    %8111 = vmatpush.bf16.msra.mxu0 %v5100
    %8112 = vmatpush.bf16.msra.mxu0 %v5096
    %8113 = vmatpush.bf16.msra.mxu0 %v5092
    %8114 = vmatpush.bf16.msra.mxu0 %v5088
    %8115 = vmatpush.bf16.msra.mxu0 %v5084
    %8116 = vmatpush.bf16.msra.mxu0 %v5080
    %8117 = vmatmul.bf16.gmra.mxu0 %v1203
    %v8118 = vpop.f32.mrf.mxu0
    %v8119 = vadd.f32 %v8106, %v8118
    %v8120 = vpop.f32.mrf.mxu0
    %8121 = vdwg.mxu0
    %8122 = vmatpush.bf16.msra.mxu0 %v5140
    %8123 = vmatpush.bf16.msra.mxu0 %v5136
    %8124 = vmatpush.bf16.msra.mxu0 %v5132
    %8125 = vmatpush.bf16.msra.mxu0 %v5128
    %8126 = vmatpush.bf16.msra.mxu0 %v5124
    %8127 = vmatpush.bf16.msra.mxu0 %v5120
    %8128 = vmatpush.bf16.msra.mxu0 %v5116
    %8129 = vmatpush.bf16.msra.mxu0 %v5112
    %8130 = vmatmul.bf16.gmra.mxu0 %v1204
    %v8131 = vpop.f32.mrf.mxu0
    %v8132 = vadd.f32 %v8119, %v8131
    %v8133 = vpop.f32.mrf.mxu0
    %8134 = vdwg.mxu0
    %8135 = vmatpush.bf16.msra.mxu0 %v5172
    %8136 = vmatpush.bf16.msra.mxu0 %v5168
    %8137 = vmatpush.bf16.msra.mxu0 %v5164
    %8138 = vmatpush.bf16.msra.mxu0 %v5160
    %8139 = vmatpush.bf16.msra.mxu0 %v5156
    %8140 = vmatpush.bf16.msra.mxu0 %v5152
    %8141 = vmatpush.bf16.msra.mxu0 %v5148
    %8142 = vmatpush.bf16.msra.mxu0 %v5144
    %8143 = vmatmul.bf16.gmra.mxu0 %v1205
    %v8144 = vpop.f32.mrf.mxu0
    %v8145 = vadd.f32 %v8132, %v8144
    %v8146 = vpop.f32.mrf.mxu0
    %8147 = vdwg.mxu0
    %8148 = vmatpush.bf16.msra.mxu0 %v5204
    %8149 = vmatpush.bf16.msra.mxu0 %v5200
    %8150 = vmatpush.bf16.msra.mxu0 %v5196
    %8151 = vmatpush.bf16.msra.mxu0 %v5192
    %8152 = vmatpush.bf16.msra.mxu0 %v5188
    %8153 = vmatpush.bf16.msra.mxu0 %v5184
    %8154 = vmatpush.bf16.msra.mxu0 %v5180
    %8155 = vmatpush.bf16.msra.mxu0 %v5176
    %8156 = vmatmul.bf16.gmra.mxu0 %v1206
    %v8157 = vpop.f32.mrf.mxu0
    %v8158 = vadd.f32 %v8145, %v8157
    %v8159 = vpop.f32.mrf.mxu0
    %8160 = vdwg.mxu0
    %8161 = vmatpush.bf16.msra.mxu0 %v5236
    %8162 = vmatpush.bf16.msra.mxu0 %v5232
    %8163 = vmatpush.bf16.msra.mxu0 %v5228
    %8164 = vmatpush.bf16.msra.mxu0 %v5224
    %8165 = vmatpush.bf16.msra.mxu0 %v5220
    %8166 = vmatpush.bf16.msra.mxu0 %v5216
    %8167 = vmatpush.bf16.msra.mxu0 %v5212
    %8168 = vmatpush.bf16.msra.mxu0 %v5208
    %8169 = vmatmul.bf16.gmra.mxu0 %v1207
    %v8170 = vpop.f32.mrf.mxu0
    %v8171 = vadd.f32 %v8158, %v8170
    %v8172 = vpop.f32.mrf.mxu0
    %8173 = vdwg.mxu0
    %8174 = vmatpush.bf16.msra.mxu0 %v5268
    %8175 = vmatpush.bf16.msra.mxu0 %v5264
    %8176 = vmatpush.bf16.msra.mxu0 %v5260
    %8177 = vmatpush.bf16.msra.mxu0 %v5256
    %8178 = vmatpush.bf16.msra.mxu0 %v5252
    %8179 = vmatpush.bf16.msra.mxu0 %v5248
    %8180 = vmatpush.bf16.msra.mxu0 %v5244
    %8181 = vmatpush.bf16.msra.mxu0 %v5240
    %8182 = vmatmul.bf16.gmra.mxu0 %v1210
    %v8183 = vpop.f32.mrf.mxu0
    %v8184 = vadd.f32 %v8171, %v8183
    %v8185 = vpop.f32.mrf.mxu0
    %8186 = vdwg.mxu0
    %8187 = vmatpush.bf16.msra.mxu0 %v5300
    %8188 = vmatpush.bf16.msra.mxu0 %v5296
    %8189 = vmatpush.bf16.msra.mxu0 %v5292
    %8190 = vmatpush.bf16.msra.mxu0 %v5288
    %8191 = vmatpush.bf16.msra.mxu0 %v5284
    %8192 = vmatpush.bf16.msra.mxu0 %v5280
    %8193 = vmatpush.bf16.msra.mxu0 %v5276
    %8194 = vmatpush.bf16.msra.mxu0 %v5272
    %8195 = vmatmul.bf16.gmra.mxu0 %v1211
    %v8196 = vpop.f32.mrf.mxu0
    %v8197 = vadd.f32 %v8184, %v8196
    %v8198 = vpop.f32.mrf.mxu0
    %8199 = vdwg.mxu0
    %8200 = vmatpush.bf16.msra.mxu0 %v5332
    %8201 = vmatpush.bf16.msra.mxu0 %v5328
    %8202 = vmatpush.bf16.msra.mxu0 %v5324
    %8203 = vmatpush.bf16.msra.mxu0 %v5320
    %8204 = vmatpush.bf16.msra.mxu0 %v5316
    %8205 = vmatpush.bf16.msra.mxu0 %v5312
    %8206 = vmatpush.bf16.msra.mxu0 %v5308
    %8207 = vmatpush.bf16.msra.mxu0 %v5304
    %8208 = vmatmul.bf16.gmra.mxu0 %v1212
    %v8209 = vpop.f32.mrf.mxu0
    %v8210 = vadd.f32 %v8197, %v8209
    %v8211 = vpop.f32.mrf.mxu0
    %8212 = vdwg.mxu0
    %8213 = vmatpush.bf16.msra.mxu0 %v5364
    %8214 = vmatpush.bf16.msra.mxu0 %v5360
    %8215 = vmatpush.bf16.msra.mxu0 %v5356
    %8216 = vmatpush.bf16.msra.mxu0 %v5352
    %8217 = vmatpush.bf16.msra.mxu0 %v5348
    %8218 = vmatpush.bf16.msra.mxu0 %v5344
    %8219 = vmatpush.bf16.msra.mxu0 %v5340
    %8220 = vmatpush.bf16.msra.mxu0 %v5336
    %8221 = vmatmul.bf16.gmra.mxu0 %v1213
    %v8222 = vpop.f32.mrf.mxu0
    %v8223 = vadd.f32 %v8210, %v8222
    %v8224 = vpop.f32.mrf.mxu0
    %8225 = vdwg.mxu0
    %8226 = vmatpush.bf16.msra.mxu0 %v5396
    %8227 = vmatpush.bf16.msra.mxu0 %v5392
    %8228 = vmatpush.bf16.msra.mxu0 %v5388
    %8229 = vmatpush.bf16.msra.mxu0 %v5384
    %8230 = vmatpush.bf16.msra.mxu0 %v5380
    %8231 = vmatpush.bf16.msra.mxu0 %v5376
    %8232 = vmatpush.bf16.msra.mxu0 %v5372
    %8233 = vmatpush.bf16.msra.mxu0 %v5368
    %8234 = vmatmul.bf16.gmra.mxu0 %v1214
    %v8235 = vpop.f32.mrf.mxu0
    %v8236 = vadd.f32 %v8223, %v8235
    %v8237 = vpop.f32.mrf.mxu0
    %8238 = vdwg.mxu0
    %8239 = vmatpush.bf16.msra.mxu0 %v5428
    %8240 = vmatpush.bf16.msra.mxu0 %v5424
    %8241 = vmatpush.bf16.msra.mxu0 %v5420
    %8242 = vmatpush.bf16.msra.mxu0 %v5416
    %8243 = vmatpush.bf16.msra.mxu0 %v5412
    %8244 = vmatpush.bf16.msra.mxu0 %v5408
    %8245 = vmatpush.bf16.msra.mxu0 %v5404
    %8246 = vmatpush.bf16.msra.mxu0 %v5400
    %8247 = vmatmul.bf16.gmra.mxu0 %v1215
    %v8248 = vpop.f32.mrf.mxu0
    %v8249 = vadd.f32 %v8236, %v8248
    %v8250 = vpop.f32.mrf.mxu0
    %8251 = vdwg.mxu0
    %8252 = vmatpush.bf16.msra.mxu0 %v5460
    %8253 = vmatpush.bf16.msra.mxu0 %v5456
    %8254 = vmatpush.bf16.msra.mxu0 %v5452
    %8255 = vmatpush.bf16.msra.mxu0 %v5448
    %8256 = vmatpush.bf16.msra.mxu0 %v5444
    %8257 = vmatpush.bf16.msra.mxu0 %v5440
    %8258 = vmatpush.bf16.msra.mxu0 %v5436
    %8259 = vmatpush.bf16.msra.mxu0 %v5432
    %8260 = vmatmul.bf16.gmra.mxu0 %v1216
    %v8261 = vpop.f32.mrf.mxu0
    %v8262 = vadd.f32 %v8249, %v8261
    %v8263 = vpop.f32.mrf.mxu0
    %8264 = vdwg.mxu0
    %8265 = vmatpush.bf16.msra.mxu0 %v5492
    %8266 = vmatpush.bf16.msra.mxu0 %v5488
    %8267 = vmatpush.bf16.msra.mxu0 %v5484
    %8268 = vmatpush.bf16.msra.mxu0 %v5480
    %8269 = vmatpush.bf16.msra.mxu0 %v5476
    %8270 = vmatpush.bf16.msra.mxu0 %v5472
    %8271 = vmatpush.bf16.msra.mxu0 %v5468
    %8272 = vmatpush.bf16.msra.mxu0 %v5464
    %8273 = vmatmul.bf16.gmra.mxu0 %v1217
    %v8274 = vpop.f32.mrf.mxu0
    %v8275 = vadd.f32 %v8262, %v8274
    %v8276 = vpop.f32.mrf.mxu0
    %8277 = vdwg.mxu0
    %8278 = vmatpush.bf16.msra.mxu0 %v5524
    %8279 = vmatpush.bf16.msra.mxu0 %v5520
    %8280 = vmatpush.bf16.msra.mxu0 %v5516
    %8281 = vmatpush.bf16.msra.mxu0 %v5512
    %8282 = vmatpush.bf16.msra.mxu0 %v5508
    %8283 = vmatpush.bf16.msra.mxu0 %v5504
    %8284 = vmatpush.bf16.msra.mxu0 %v5500
    %8285 = vmatpush.bf16.msra.mxu0 %v5496
    %8286 = vmatmul.bf16.gmra.mxu0 %v1220
    %v8287 = vpop.f32.mrf.mxu0
    %v8288 = vadd.f32 %v8275, %v8287
    %v8289 = vpop.f32.mrf.mxu0
    %8290 = vdwg.mxu0
    %8291 = vmatpush.bf16.msra.mxu0 %v5556
    %8292 = vmatpush.bf16.msra.mxu0 %v5552
    %8293 = vmatpush.bf16.msra.mxu0 %v5548
    %8294 = vmatpush.bf16.msra.mxu0 %v5544
    %8295 = vmatpush.bf16.msra.mxu0 %v5540
    %8296 = vmatpush.bf16.msra.mxu0 %v5536
    %8297 = vmatpush.bf16.msra.mxu0 %v5532
    %8298 = vmatpush.bf16.msra.mxu0 %v5528
    %8299 = vmatmul.bf16.gmra.mxu0 %v1221
    %v8300 = vpop.f32.mrf.mxu0
    %v8301 = vadd.f32 %v8288, %v8300
    %v8302 = vpop.f32.mrf.mxu0
    %8303 = vdwg.mxu0
    %8304 = vmatpush.bf16.msra.mxu0 %v5588
    %8305 = vmatpush.bf16.msra.mxu0 %v5584
    %8306 = vmatpush.bf16.msra.mxu0 %v5580
    %8307 = vmatpush.bf16.msra.mxu0 %v5576
    %8308 = vmatpush.bf16.msra.mxu0 %v5572
    %8309 = vmatpush.bf16.msra.mxu0 %v5568
    %8310 = vmatpush.bf16.msra.mxu0 %v5564
    %8311 = vmatpush.bf16.msra.mxu0 %v5560
    %8312 = vmatmul.bf16.gmra.mxu0 %v1222
    %v8313 = vpop.f32.mrf.mxu0
    %v8314 = vadd.f32 %v8301, %v8313
    %v8315 = vpop.f32.mrf.mxu0
    %8316 = vdwg.mxu0
    %8317 = vmatpush.bf16.msra.mxu0 %v5620
    %8318 = vmatpush.bf16.msra.mxu0 %v5616
    %8319 = vmatpush.bf16.msra.mxu0 %v5612
    %8320 = vmatpush.bf16.msra.mxu0 %v5608
    %8321 = vmatpush.bf16.msra.mxu0 %v5604
    %8322 = vmatpush.bf16.msra.mxu0 %v5600
    %8323 = vmatpush.bf16.msra.mxu0 %v5596
    %8324 = vmatpush.bf16.msra.mxu0 %v5592
    %8325 = vmatmul.bf16.gmra.mxu0 %v1223
    %v8326 = vpop.f32.mrf.mxu0
    %v8327 = vadd.f32 %v8314, %v8326
    %v8328 = vpop.f32.mrf.mxu0
    %8329 = vdwg.mxu0
    %8330 = vmatpush.bf16.msra.mxu0 %v5652
    %8331 = vmatpush.bf16.msra.mxu0 %v5648
    %8332 = vmatpush.bf16.msra.mxu0 %v5644
    %8333 = vmatpush.bf16.msra.mxu0 %v5640
    %8334 = vmatpush.bf16.msra.mxu0 %v5636
    %8335 = vmatpush.bf16.msra.mxu0 %v5632
    %8336 = vmatpush.bf16.msra.mxu0 %v5628
    %8337 = vmatpush.bf16.msra.mxu0 %v5624
    %8338 = vmatmul.bf16.gmra.mxu0 %v1224
    %v8339 = vpop.f32.mrf.mxu0
    %v8340 = vadd.f32 %v8327, %v8339
    %v8341 = vpop.f32.mrf.mxu0
    %8342 = vdwg.mxu0
    %8343 = vmatpush.bf16.msra.mxu0 %v5684
    %8344 = vmatpush.bf16.msra.mxu0 %v5680
    %8345 = vmatpush.bf16.msra.mxu0 %v5676
    %8346 = vmatpush.bf16.msra.mxu0 %v5672
    %8347 = vmatpush.bf16.msra.mxu0 %v5668
    %8348 = vmatpush.bf16.msra.mxu0 %v5664
    %8349 = vmatpush.bf16.msra.mxu0 %v5660
    %8350 = vmatpush.bf16.msra.mxu0 %v5656
    %8351 = vmatmul.bf16.gmra.mxu0 %v1225
    %v8352 = vpop.f32.mrf.mxu0
    %v8353 = vadd.f32 %v8340, %v8352
    %v8354 = vpop.f32.mrf.mxu0
    %8355 = vdwg.mxu0
    %8356 = vmatpush.bf16.msra.mxu0 %v5716
    %8357 = vmatpush.bf16.msra.mxu0 %v5712
    %8358 = vmatpush.bf16.msra.mxu0 %v5708
    %8359 = vmatpush.bf16.msra.mxu0 %v5704
    %8360 = vmatpush.bf16.msra.mxu0 %v5700
    %8361 = vmatpush.bf16.msra.mxu0 %v5696
    %8362 = vmatpush.bf16.msra.mxu0 %v5692
    %8363 = vmatpush.bf16.msra.mxu0 %v5688
    %8364 = vmatmul.bf16.gmra.mxu0 %v1226
    %v8365 = vpop.f32.mrf.mxu0
    %v8366 = vadd.f32 %v8353, %v8365
    %v8367 = vpop.f32.mrf.mxu0
    %8368 = vdwg.mxu0
    %8369 = vmatpush.bf16.msra.mxu0 %v5748
    %8370 = vmatpush.bf16.msra.mxu0 %v5744
    %8371 = vmatpush.bf16.msra.mxu0 %v5740
    %8372 = vmatpush.bf16.msra.mxu0 %v5736
    %8373 = vmatpush.bf16.msra.mxu0 %v5732
    %8374 = vmatpush.bf16.msra.mxu0 %v5728
    %8375 = vmatpush.bf16.msra.mxu0 %v5724
    %8376 = vmatpush.bf16.msra.mxu0 %v5720
    %8377 = vmatmul.bf16.gmra.mxu0 %v1227
    %v8378 = vpop.f32.mrf.mxu0
    %v8379 = vadd.f32 %v8366, %v8378
    %v8380 = vpop.f32.mrf.mxu0
    %8381 = vdwg.mxu0
    %8382 = vmatpush.bf16.msra.mxu0 %v5780
    %8383 = vmatpush.bf16.msra.mxu0 %v5776
    %8384 = vmatpush.bf16.msra.mxu0 %v5772
    %8385 = vmatpush.bf16.msra.mxu0 %v5768
    %8386 = vmatpush.bf16.msra.mxu0 %v5764
    %8387 = vmatpush.bf16.msra.mxu0 %v5760
    %8388 = vmatpush.bf16.msra.mxu0 %v5756
    %8389 = vmatpush.bf16.msra.mxu0 %v5752
    %8390 = vmatmul.bf16.gmra.mxu0 %v1230
    %v8391 = vpop.f32.mrf.mxu0
    %v8392 = vadd.f32 %v8379, %v8391
    %v8393 = vpop.f32.mrf.mxu0
    %8394 = vdwg.mxu0
    %8395 = vmatpush.bf16.msra.mxu0 %v5812
    %8396 = vmatpush.bf16.msra.mxu0 %v5808
    %8397 = vmatpush.bf16.msra.mxu0 %v5804
    %8398 = vmatpush.bf16.msra.mxu0 %v5800
    %8399 = vmatpush.bf16.msra.mxu0 %v5796
    %8400 = vmatpush.bf16.msra.mxu0 %v5792
    %8401 = vmatpush.bf16.msra.mxu0 %v5788
    %8402 = vmatpush.bf16.msra.mxu0 %v5784
    %8403 = vmatmul.bf16.gmra.mxu0 %v1231
    %v8404 = vpop.f32.mrf.mxu0
    %v8405 = vadd.f32 %v8392, %v8404
    %v8406 = vpop.f32.mrf.mxu0
    %8407 = vdwg.mxu0
    %8408 = vmatpush.bf16.msra.mxu0 %v5844
    %8409 = vmatpush.bf16.msra.mxu0 %v5840
    %8410 = vmatpush.bf16.msra.mxu0 %v5836
    %8411 = vmatpush.bf16.msra.mxu0 %v5832
    %8412 = vmatpush.bf16.msra.mxu0 %v5828
    %8413 = vmatpush.bf16.msra.mxu0 %v5824
    %8414 = vmatpush.bf16.msra.mxu0 %v5820
    %8415 = vmatpush.bf16.msra.mxu0 %v5816
    %8416 = vmatmul.bf16.gmra.mxu0 %v1232
    %v8417 = vpop.f32.mrf.mxu0
    %v8418 = vadd.f32 %v8405, %v8417
    %v8419 = vpop.f32.mrf.mxu0
    %8420 = vdwg.mxu0
    %8421 = vmatpush.bf16.msra.mxu0 %v5876
    %8422 = vmatpush.bf16.msra.mxu0 %v5872
    %8423 = vmatpush.bf16.msra.mxu0 %v5868
    %8424 = vmatpush.bf16.msra.mxu0 %v5864
    %8425 = vmatpush.bf16.msra.mxu0 %v5860
    %8426 = vmatpush.bf16.msra.mxu0 %v5856
    %8427 = vmatpush.bf16.msra.mxu0 %v5852
    %8428 = vmatpush.bf16.msra.mxu0 %v5848
    %8429 = vmatmul.bf16.gmra.mxu0 %v1233
    %v8430 = vpop.f32.mrf.mxu0
    %v8431 = vadd.f32 %v8418, %v8430
    %v8432 = vpop.f32.mrf.mxu0
    %8433 = vdwg.mxu0
    %8434 = vmatpush.bf16.msra.mxu0 %v4757
    %8435 = vmatpush.bf16.msra.mxu0 %v4753
    %8436 = vmatpush.bf16.msra.mxu0 %v4749
    %8437 = vmatpush.bf16.msra.mxu0 %v4745
    %8438 = vmatpush.bf16.msra.mxu0 %v4741
    %8439 = vmatpush.bf16.msra.mxu0 %v4737
    %8440 = vmatpush.bf16.msra.mxu0 %v4733
    %8441 = vmatpush.bf16.msra.mxu0 %v4729
    %8442 = vmatmul.bf16.gmra.mxu0 %v1190
    %v8443 = vpop.f32.mrf.mxu0
    %v8444 = vadd.f32 %v1183, %v8443
    %v8445 = vpop.f32.mrf.mxu0
    %8446 = vdwg.mxu0
    %8447 = vmatpush.bf16.msra.mxu0 %v4789
    %8448 = vmatpush.bf16.msra.mxu0 %v4785
    %8449 = vmatpush.bf16.msra.mxu0 %v4781
    %8450 = vmatpush.bf16.msra.mxu0 %v4777
    %8451 = vmatpush.bf16.msra.mxu0 %v4773
    %8452 = vmatpush.bf16.msra.mxu0 %v4769
    %8453 = vmatpush.bf16.msra.mxu0 %v4765
    %8454 = vmatpush.bf16.msra.mxu0 %v4761
    %8455 = vmatmul.bf16.gmra.mxu0 %v1191
    %v8456 = vpop.f32.mrf.mxu0
    %v8457 = vadd.f32 %v8444, %v8456
    %v8458 = vpop.f32.mrf.mxu0
    %8459 = vdwg.mxu0
    %8460 = vmatpush.bf16.msra.mxu0 %v4821
    %8461 = vmatpush.bf16.msra.mxu0 %v4817
    %8462 = vmatpush.bf16.msra.mxu0 %v4813
    %8463 = vmatpush.bf16.msra.mxu0 %v4809
    %8464 = vmatpush.bf16.msra.mxu0 %v4805
    %8465 = vmatpush.bf16.msra.mxu0 %v4801
    %8466 = vmatpush.bf16.msra.mxu0 %v4797
    %8467 = vmatpush.bf16.msra.mxu0 %v4793
    %8468 = vmatmul.bf16.gmra.mxu0 %v1192
    %v8469 = vpop.f32.mrf.mxu0
    %v8470 = vadd.f32 %v8457, %v8469
    %v8471 = vpop.f32.mrf.mxu0
    %8472 = vdwg.mxu0
    %8473 = vmatpush.bf16.msra.mxu0 %v4853
    %8474 = vmatpush.bf16.msra.mxu0 %v4849
    %8475 = vmatpush.bf16.msra.mxu0 %v4845
    %8476 = vmatpush.bf16.msra.mxu0 %v4841
    %8477 = vmatpush.bf16.msra.mxu0 %v4837
    %8478 = vmatpush.bf16.msra.mxu0 %v4833
    %8479 = vmatpush.bf16.msra.mxu0 %v4829
    %8480 = vmatpush.bf16.msra.mxu0 %v4825
    %8481 = vmatmul.bf16.gmra.mxu0 %v1193
    %v8482 = vpop.f32.mrf.mxu0
    %v8483 = vadd.f32 %v8470, %v8482
    %v8484 = vpop.f32.mrf.mxu0
    %8485 = vdwg.mxu0
    %8486 = vmatpush.bf16.msra.mxu0 %v4885
    %8487 = vmatpush.bf16.msra.mxu0 %v4881
    %8488 = vmatpush.bf16.msra.mxu0 %v4877
    %8489 = vmatpush.bf16.msra.mxu0 %v4873
    %8490 = vmatpush.bf16.msra.mxu0 %v4869
    %8491 = vmatpush.bf16.msra.mxu0 %v4865
    %8492 = vmatpush.bf16.msra.mxu0 %v4861
    %8493 = vmatpush.bf16.msra.mxu0 %v4857
    %8494 = vmatmul.bf16.gmra.mxu0 %v1194
    %v8495 = vpop.f32.mrf.mxu0
    %v8496 = vadd.f32 %v8483, %v8495
    %v8497 = vpop.f32.mrf.mxu0
    %8498 = vdwg.mxu0
    %8499 = vmatpush.bf16.msra.mxu0 %v4917
    %8500 = vmatpush.bf16.msra.mxu0 %v4913
    %8501 = vmatpush.bf16.msra.mxu0 %v4909
    %8502 = vmatpush.bf16.msra.mxu0 %v4905
    %8503 = vmatpush.bf16.msra.mxu0 %v4901
    %8504 = vmatpush.bf16.msra.mxu0 %v4897
    %8505 = vmatpush.bf16.msra.mxu0 %v4893
    %8506 = vmatpush.bf16.msra.mxu0 %v4889
    %8507 = vmatmul.bf16.gmra.mxu0 %v1195
    %v8508 = vpop.f32.mrf.mxu0
    %v8509 = vadd.f32 %v8496, %v8508
    %v8510 = vpop.f32.mrf.mxu0
    %8511 = vdwg.mxu0
    %8512 = vmatpush.bf16.msra.mxu0 %v4949
    %8513 = vmatpush.bf16.msra.mxu0 %v4945
    %8514 = vmatpush.bf16.msra.mxu0 %v4941
    %8515 = vmatpush.bf16.msra.mxu0 %v4937
    %8516 = vmatpush.bf16.msra.mxu0 %v4933
    %8517 = vmatpush.bf16.msra.mxu0 %v4929
    %8518 = vmatpush.bf16.msra.mxu0 %v4925
    %8519 = vmatpush.bf16.msra.mxu0 %v4921
    %8520 = vmatmul.bf16.gmra.mxu0 %v1196
    %v8521 = vpop.f32.mrf.mxu0
    %v8522 = vadd.f32 %v8509, %v8521
    %v8523 = vpop.f32.mrf.mxu0
    %8524 = vdwg.mxu0
    %8525 = vmatpush.bf16.msra.mxu0 %v4981
    %8526 = vmatpush.bf16.msra.mxu0 %v4977
    %8527 = vmatpush.bf16.msra.mxu0 %v4973
    %8528 = vmatpush.bf16.msra.mxu0 %v4969
    %8529 = vmatpush.bf16.msra.mxu0 %v4965
    %8530 = vmatpush.bf16.msra.mxu0 %v4961
    %8531 = vmatpush.bf16.msra.mxu0 %v4957
    %8532 = vmatpush.bf16.msra.mxu0 %v4953
    %8533 = vmatmul.bf16.gmra.mxu0 %v1197
    %v8534 = vpop.f32.mrf.mxu0
    %v8535 = vadd.f32 %v8522, %v8534
    %v8536 = vpop.f32.mrf.mxu0
    %8537 = vdwg.mxu0
    %8538 = vmatpush.bf16.msra.mxu0 %v5013
    %8539 = vmatpush.bf16.msra.mxu0 %v5009
    %8540 = vmatpush.bf16.msra.mxu0 %v5005
    %8541 = vmatpush.bf16.msra.mxu0 %v5001
    %8542 = vmatpush.bf16.msra.mxu0 %v4997
    %8543 = vmatpush.bf16.msra.mxu0 %v4993
    %8544 = vmatpush.bf16.msra.mxu0 %v4989
    %8545 = vmatpush.bf16.msra.mxu0 %v4985
    %8546 = vmatmul.bf16.gmra.mxu0 %v1200
    %v8547 = vpop.f32.mrf.mxu0
    %v8548 = vadd.f32 %v8535, %v8547
    %v8549 = vpop.f32.mrf.mxu0
    %8550 = vdwg.mxu0
    %8551 = vmatpush.bf16.msra.mxu0 %v5045
    %8552 = vmatpush.bf16.msra.mxu0 %v5041
    %8553 = vmatpush.bf16.msra.mxu0 %v5037
    %8554 = vmatpush.bf16.msra.mxu0 %v5033
    %8555 = vmatpush.bf16.msra.mxu0 %v5029
    %8556 = vmatpush.bf16.msra.mxu0 %v5025
    %8557 = vmatpush.bf16.msra.mxu0 %v5021
    %8558 = vmatpush.bf16.msra.mxu0 %v5017
    %8559 = vmatmul.bf16.gmra.mxu0 %v1201
    %v8560 = vpop.f32.mrf.mxu0
    %v8561 = vadd.f32 %v8548, %v8560
    %v8562 = vpop.f32.mrf.mxu0
    %8563 = vdwg.mxu0
    %8564 = vmatpush.bf16.msra.mxu0 %v5077
    %8565 = vmatpush.bf16.msra.mxu0 %v5073
    %8566 = vmatpush.bf16.msra.mxu0 %v5069
    %8567 = vmatpush.bf16.msra.mxu0 %v5065
    %8568 = vmatpush.bf16.msra.mxu0 %v5061
    %8569 = vmatpush.bf16.msra.mxu0 %v5057
    %8570 = vmatpush.bf16.msra.mxu0 %v5053
    %8571 = vmatpush.bf16.msra.mxu0 %v5049
    %8572 = vmatmul.bf16.gmra.mxu0 %v1202
    %v8573 = vpop.f32.mrf.mxu0
    %v8574 = vadd.f32 %v8561, %v8573
    %v8575 = vpop.f32.mrf.mxu0
    %8576 = vdwg.mxu0
    %8577 = vmatpush.bf16.msra.mxu0 %v5109
    %8578 = vmatpush.bf16.msra.mxu0 %v5105
    %8579 = vmatpush.bf16.msra.mxu0 %v5101
    %8580 = vmatpush.bf16.msra.mxu0 %v5097
    %8581 = vmatpush.bf16.msra.mxu0 %v5093
    %8582 = vmatpush.bf16.msra.mxu0 %v5089
    %8583 = vmatpush.bf16.msra.mxu0 %v5085
    %8584 = vmatpush.bf16.msra.mxu0 %v5081
    %8585 = vmatmul.bf16.gmra.mxu0 %v1203
    %v8586 = vpop.f32.mrf.mxu0
    %v8587 = vadd.f32 %v8574, %v8586
    %v8588 = vpop.f32.mrf.mxu0
    %8589 = vdwg.mxu0
    %8590 = vmatpush.bf16.msra.mxu0 %v5141
    %8591 = vmatpush.bf16.msra.mxu0 %v5137
    %8592 = vmatpush.bf16.msra.mxu0 %v5133
    %8593 = vmatpush.bf16.msra.mxu0 %v5129
    %8594 = vmatpush.bf16.msra.mxu0 %v5125
    %8595 = vmatpush.bf16.msra.mxu0 %v5121
    %8596 = vmatpush.bf16.msra.mxu0 %v5117
    %8597 = vmatpush.bf16.msra.mxu0 %v5113
    %8598 = vmatmul.bf16.gmra.mxu0 %v1204
    %v8599 = vpop.f32.mrf.mxu0
    %v8600 = vadd.f32 %v8587, %v8599
    %v8601 = vpop.f32.mrf.mxu0
    %8602 = vdwg.mxu0
    %8603 = vmatpush.bf16.msra.mxu0 %v5173
    %8604 = vmatpush.bf16.msra.mxu0 %v5169
    %8605 = vmatpush.bf16.msra.mxu0 %v5165
    %8606 = vmatpush.bf16.msra.mxu0 %v5161
    %8607 = vmatpush.bf16.msra.mxu0 %v5157
    %8608 = vmatpush.bf16.msra.mxu0 %v5153
    %8609 = vmatpush.bf16.msra.mxu0 %v5149
    %8610 = vmatpush.bf16.msra.mxu0 %v5145
    %8611 = vmatmul.bf16.gmra.mxu0 %v1205
    %v8612 = vpop.f32.mrf.mxu0
    %v8613 = vadd.f32 %v8600, %v8612
    %v8614 = vpop.f32.mrf.mxu0
    %8615 = vdwg.mxu0
    %8616 = vmatpush.bf16.msra.mxu0 %v5205
    %8617 = vmatpush.bf16.msra.mxu0 %v5201
    %8618 = vmatpush.bf16.msra.mxu0 %v5197
    %8619 = vmatpush.bf16.msra.mxu0 %v5193
    %8620 = vmatpush.bf16.msra.mxu0 %v5189
    %8621 = vmatpush.bf16.msra.mxu0 %v5185
    %8622 = vmatpush.bf16.msra.mxu0 %v5181
    %8623 = vmatpush.bf16.msra.mxu0 %v5177
    %8624 = vmatmul.bf16.gmra.mxu0 %v1206
    %v8625 = vpop.f32.mrf.mxu0
    %v8626 = vadd.f32 %v8613, %v8625
    %v8627 = vpop.f32.mrf.mxu0
    %8628 = vdwg.mxu0
    %8629 = vmatpush.bf16.msra.mxu0 %v5237
    %8630 = vmatpush.bf16.msra.mxu0 %v5233
    %8631 = vmatpush.bf16.msra.mxu0 %v5229
    %8632 = vmatpush.bf16.msra.mxu0 %v5225
    %8633 = vmatpush.bf16.msra.mxu0 %v5221
    %8634 = vmatpush.bf16.msra.mxu0 %v5217
    %8635 = vmatpush.bf16.msra.mxu0 %v5213
    %8636 = vmatpush.bf16.msra.mxu0 %v5209
    %8637 = vmatmul.bf16.gmra.mxu0 %v1207
    %v8638 = vpop.f32.mrf.mxu0
    %v8639 = vadd.f32 %v8626, %v8638
    %v8640 = vpop.f32.mrf.mxu0
    %8641 = vdwg.mxu0
    %8642 = vmatpush.bf16.msra.mxu0 %v5269
    %8643 = vmatpush.bf16.msra.mxu0 %v5265
    %8644 = vmatpush.bf16.msra.mxu0 %v5261
    %8645 = vmatpush.bf16.msra.mxu0 %v5257
    %8646 = vmatpush.bf16.msra.mxu0 %v5253
    %8647 = vmatpush.bf16.msra.mxu0 %v5249
    %8648 = vmatpush.bf16.msra.mxu0 %v5245
    %8649 = vmatpush.bf16.msra.mxu0 %v5241
    %8650 = vmatmul.bf16.gmra.mxu0 %v1210
    %v8651 = vpop.f32.mrf.mxu0
    %v8652 = vadd.f32 %v8639, %v8651
    %v8653 = vpop.f32.mrf.mxu0
    %8654 = vdwg.mxu0
    %8655 = vmatpush.bf16.msra.mxu0 %v5301
    %8656 = vmatpush.bf16.msra.mxu0 %v5297
    %8657 = vmatpush.bf16.msra.mxu0 %v5293
    %8658 = vmatpush.bf16.msra.mxu0 %v5289
    %8659 = vmatpush.bf16.msra.mxu0 %v5285
    %8660 = vmatpush.bf16.msra.mxu0 %v5281
    %8661 = vmatpush.bf16.msra.mxu0 %v5277
    %8662 = vmatpush.bf16.msra.mxu0 %v5273
    %8663 = vmatmul.bf16.gmra.mxu0 %v1211
    %v8664 = vpop.f32.mrf.mxu0
    %v8665 = vadd.f32 %v8652, %v8664
    %v8666 = vpop.f32.mrf.mxu0
    %8667 = vdwg.mxu0
    %8668 = vmatpush.bf16.msra.mxu0 %v5333
    %8669 = vmatpush.bf16.msra.mxu0 %v5329
    %8670 = vmatpush.bf16.msra.mxu0 %v5325
    %8671 = vmatpush.bf16.msra.mxu0 %v5321
    %8672 = vmatpush.bf16.msra.mxu0 %v5317
    %8673 = vmatpush.bf16.msra.mxu0 %v5313
    %8674 = vmatpush.bf16.msra.mxu0 %v5309
    %8675 = vmatpush.bf16.msra.mxu0 %v5305
    %8676 = vmatmul.bf16.gmra.mxu0 %v1212
    %v8677 = vpop.f32.mrf.mxu0
    %v8678 = vadd.f32 %v8665, %v8677
    %v8679 = vpop.f32.mrf.mxu0
    %8680 = vdwg.mxu0
    %8681 = vmatpush.bf16.msra.mxu0 %v5365
    %8682 = vmatpush.bf16.msra.mxu0 %v5361
    %8683 = vmatpush.bf16.msra.mxu0 %v5357
    %8684 = vmatpush.bf16.msra.mxu0 %v5353
    %8685 = vmatpush.bf16.msra.mxu0 %v5349
    %8686 = vmatpush.bf16.msra.mxu0 %v5345
    %8687 = vmatpush.bf16.msra.mxu0 %v5341
    %8688 = vmatpush.bf16.msra.mxu0 %v5337
    %8689 = vmatmul.bf16.gmra.mxu0 %v1213
    %v8690 = vpop.f32.mrf.mxu0
    %v8691 = vadd.f32 %v8678, %v8690
    %v8692 = vpop.f32.mrf.mxu0
    %8693 = vdwg.mxu0
    %8694 = vmatpush.bf16.msra.mxu0 %v5397
    %8695 = vmatpush.bf16.msra.mxu0 %v5393
    %8696 = vmatpush.bf16.msra.mxu0 %v5389
    %8697 = vmatpush.bf16.msra.mxu0 %v5385
    %8698 = vmatpush.bf16.msra.mxu0 %v5381
    %8699 = vmatpush.bf16.msra.mxu0 %v5377
    %8700 = vmatpush.bf16.msra.mxu0 %v5373
    %8701 = vmatpush.bf16.msra.mxu0 %v5369
    %8702 = vmatmul.bf16.gmra.mxu0 %v1214
    %v8703 = vpop.f32.mrf.mxu0
    %v8704 = vadd.f32 %v8691, %v8703
    %v8705 = vpop.f32.mrf.mxu0
    %8706 = vdwg.mxu0
    %8707 = vmatpush.bf16.msra.mxu0 %v5429
    %8708 = vmatpush.bf16.msra.mxu0 %v5425
    %8709 = vmatpush.bf16.msra.mxu0 %v5421
    %8710 = vmatpush.bf16.msra.mxu0 %v5417
    %8711 = vmatpush.bf16.msra.mxu0 %v5413
    %8712 = vmatpush.bf16.msra.mxu0 %v5409
    %8713 = vmatpush.bf16.msra.mxu0 %v5405
    %8714 = vmatpush.bf16.msra.mxu0 %v5401
    %8715 = vmatmul.bf16.gmra.mxu0 %v1215
    %v8716 = vpop.f32.mrf.mxu0
    %v8717 = vadd.f32 %v8704, %v8716
    %v8718 = vpop.f32.mrf.mxu0
    %8719 = vdwg.mxu0
    %8720 = vmatpush.bf16.msra.mxu0 %v5461
    %8721 = vmatpush.bf16.msra.mxu0 %v5457
    %8722 = vmatpush.bf16.msra.mxu0 %v5453
    %8723 = vmatpush.bf16.msra.mxu0 %v5449
    %8724 = vmatpush.bf16.msra.mxu0 %v5445
    %8725 = vmatpush.bf16.msra.mxu0 %v5441
    %8726 = vmatpush.bf16.msra.mxu0 %v5437
    %8727 = vmatpush.bf16.msra.mxu0 %v5433
    %8728 = vmatmul.bf16.gmra.mxu0 %v1216
    %v8729 = vpop.f32.mrf.mxu0
    %v8730 = vadd.f32 %v8717, %v8729
    %v8731 = vpop.f32.mrf.mxu0
    %8732 = vdwg.mxu0
    %8733 = vmatpush.bf16.msra.mxu0 %v5493
    %8734 = vmatpush.bf16.msra.mxu0 %v5489
    %8735 = vmatpush.bf16.msra.mxu0 %v5485
    %8736 = vmatpush.bf16.msra.mxu0 %v5481
    %8737 = vmatpush.bf16.msra.mxu0 %v5477
    %8738 = vmatpush.bf16.msra.mxu0 %v5473
    %8739 = vmatpush.bf16.msra.mxu0 %v5469
    %8740 = vmatpush.bf16.msra.mxu0 %v5465
    %8741 = vmatmul.bf16.gmra.mxu0 %v1217
    %v8742 = vpop.f32.mrf.mxu0
    %v8743 = vadd.f32 %v8730, %v8742
    %v8744 = vpop.f32.mrf.mxu0
    %8745 = vdwg.mxu0
    %8746 = vmatpush.bf16.msra.mxu0 %v5525
    %8747 = vmatpush.bf16.msra.mxu0 %v5521
    %8748 = vmatpush.bf16.msra.mxu0 %v5517
    %8749 = vmatpush.bf16.msra.mxu0 %v5513
    %8750 = vmatpush.bf16.msra.mxu0 %v5509
    %8751 = vmatpush.bf16.msra.mxu0 %v5505
    %8752 = vmatpush.bf16.msra.mxu0 %v5501
    %8753 = vmatpush.bf16.msra.mxu0 %v5497
    %8754 = vmatmul.bf16.gmra.mxu0 %v1220
    %v8755 = vpop.f32.mrf.mxu0
    %v8756 = vadd.f32 %v8743, %v8755
    %v8757 = vpop.f32.mrf.mxu0
    %8758 = vdwg.mxu0
    %8759 = vmatpush.bf16.msra.mxu0 %v5557
    %8760 = vmatpush.bf16.msra.mxu0 %v5553
    %8761 = vmatpush.bf16.msra.mxu0 %v5549
    %8762 = vmatpush.bf16.msra.mxu0 %v5545
    %8763 = vmatpush.bf16.msra.mxu0 %v5541
    %8764 = vmatpush.bf16.msra.mxu0 %v5537
    %8765 = vmatpush.bf16.msra.mxu0 %v5533
    %8766 = vmatpush.bf16.msra.mxu0 %v5529
    %8767 = vmatmul.bf16.gmra.mxu0 %v1221
    %v8768 = vpop.f32.mrf.mxu0
    %v8769 = vadd.f32 %v8756, %v8768
    %v8770 = vpop.f32.mrf.mxu0
    %8771 = vdwg.mxu0
    %8772 = vmatpush.bf16.msra.mxu0 %v5589
    %8773 = vmatpush.bf16.msra.mxu0 %v5585
    %8774 = vmatpush.bf16.msra.mxu0 %v5581
    %8775 = vmatpush.bf16.msra.mxu0 %v5577
    %8776 = vmatpush.bf16.msra.mxu0 %v5573
    %8777 = vmatpush.bf16.msra.mxu0 %v5569
    %8778 = vmatpush.bf16.msra.mxu0 %v5565
    %8779 = vmatpush.bf16.msra.mxu0 %v5561
    %8780 = vmatmul.bf16.gmra.mxu0 %v1222
    %v8781 = vpop.f32.mrf.mxu0
    %v8782 = vadd.f32 %v8769, %v8781
    %v8783 = vpop.f32.mrf.mxu0
    %8784 = vdwg.mxu0
    %8785 = vmatpush.bf16.msra.mxu0 %v5621
    %8786 = vmatpush.bf16.msra.mxu0 %v5617
    %8787 = vmatpush.bf16.msra.mxu0 %v5613
    %8788 = vmatpush.bf16.msra.mxu0 %v5609
    %8789 = vmatpush.bf16.msra.mxu0 %v5605
    %8790 = vmatpush.bf16.msra.mxu0 %v5601
    %8791 = vmatpush.bf16.msra.mxu0 %v5597
    %8792 = vmatpush.bf16.msra.mxu0 %v5593
    %8793 = vmatmul.bf16.gmra.mxu0 %v1223
    %v8794 = vpop.f32.mrf.mxu0
    %v8795 = vadd.f32 %v8782, %v8794
    %v8796 = vpop.f32.mrf.mxu0
    %8797 = vdwg.mxu0
    %8798 = vmatpush.bf16.msra.mxu0 %v5653
    %8799 = vmatpush.bf16.msra.mxu0 %v5649
    %8800 = vmatpush.bf16.msra.mxu0 %v5645
    %8801 = vmatpush.bf16.msra.mxu0 %v5641
    %8802 = vmatpush.bf16.msra.mxu0 %v5637
    %8803 = vmatpush.bf16.msra.mxu0 %v5633
    %8804 = vmatpush.bf16.msra.mxu0 %v5629
    %8805 = vmatpush.bf16.msra.mxu0 %v5625
    %8806 = vmatmul.bf16.gmra.mxu0 %v1224
    %v8807 = vpop.f32.mrf.mxu0
    %v8808 = vadd.f32 %v8795, %v8807
    %v8809 = vpop.f32.mrf.mxu0
    %8810 = vdwg.mxu0
    %8811 = vmatpush.bf16.msra.mxu0 %v5685
    %8812 = vmatpush.bf16.msra.mxu0 %v5681
    %8813 = vmatpush.bf16.msra.mxu0 %v5677
    %8814 = vmatpush.bf16.msra.mxu0 %v5673
    %8815 = vmatpush.bf16.msra.mxu0 %v5669
    %8816 = vmatpush.bf16.msra.mxu0 %v5665
    %8817 = vmatpush.bf16.msra.mxu0 %v5661
    %8818 = vmatpush.bf16.msra.mxu0 %v5657
    %8819 = vmatmul.bf16.gmra.mxu0 %v1225
    %v8820 = vpop.f32.mrf.mxu0
    %v8821 = vadd.f32 %v8808, %v8820
    %v8822 = vpop.f32.mrf.mxu0
    %8823 = vdwg.mxu0
    %8824 = vmatpush.bf16.msra.mxu0 %v5717
    %8825 = vmatpush.bf16.msra.mxu0 %v5713
    %8826 = vmatpush.bf16.msra.mxu0 %v5709
    %8827 = vmatpush.bf16.msra.mxu0 %v5705
    %8828 = vmatpush.bf16.msra.mxu0 %v5701
    %8829 = vmatpush.bf16.msra.mxu0 %v5697
    %8830 = vmatpush.bf16.msra.mxu0 %v5693
    %8831 = vmatpush.bf16.msra.mxu0 %v5689
    %8832 = vmatmul.bf16.gmra.mxu0 %v1226
    %v8833 = vpop.f32.mrf.mxu0
    %v8834 = vadd.f32 %v8821, %v8833
    %v8835 = vpop.f32.mrf.mxu0
    %8836 = vdwg.mxu0
    %8837 = vmatpush.bf16.msra.mxu0 %v5749
    %8838 = vmatpush.bf16.msra.mxu0 %v5745
    %8839 = vmatpush.bf16.msra.mxu0 %v5741
    %8840 = vmatpush.bf16.msra.mxu0 %v5737
    %8841 = vmatpush.bf16.msra.mxu0 %v5733
    %8842 = vmatpush.bf16.msra.mxu0 %v5729
    %8843 = vmatpush.bf16.msra.mxu0 %v5725
    %8844 = vmatpush.bf16.msra.mxu0 %v5721
    %8845 = vmatmul.bf16.gmra.mxu0 %v1227
    %v8846 = vpop.f32.mrf.mxu0
    %v8847 = vadd.f32 %v8834, %v8846
    %v8848 = vpop.f32.mrf.mxu0
    %8849 = vdwg.mxu0
    %8850 = vmatpush.bf16.msra.mxu0 %v5781
    %8851 = vmatpush.bf16.msra.mxu0 %v5777
    %8852 = vmatpush.bf16.msra.mxu0 %v5773
    %8853 = vmatpush.bf16.msra.mxu0 %v5769
    %8854 = vmatpush.bf16.msra.mxu0 %v5765
    %8855 = vmatpush.bf16.msra.mxu0 %v5761
    %8856 = vmatpush.bf16.msra.mxu0 %v5757
    %8857 = vmatpush.bf16.msra.mxu0 %v5753
    %8858 = vmatmul.bf16.gmra.mxu0 %v1230
    %v8859 = vpop.f32.mrf.mxu0
    %v8860 = vadd.f32 %v8847, %v8859
    %v8861 = vpop.f32.mrf.mxu0
    %8862 = vdwg.mxu0
    %8863 = vmatpush.bf16.msra.mxu0 %v5813
    %8864 = vmatpush.bf16.msra.mxu0 %v5809
    %8865 = vmatpush.bf16.msra.mxu0 %v5805
    %8866 = vmatpush.bf16.msra.mxu0 %v5801
    %8867 = vmatpush.bf16.msra.mxu0 %v5797
    %8868 = vmatpush.bf16.msra.mxu0 %v5793
    %8869 = vmatpush.bf16.msra.mxu0 %v5789
    %8870 = vmatpush.bf16.msra.mxu0 %v5785
    %8871 = vmatmul.bf16.gmra.mxu0 %v1231
    %v8872 = vpop.f32.mrf.mxu0
    %v8873 = vadd.f32 %v8860, %v8872
    %v8874 = vpop.f32.mrf.mxu0
    %8875 = vdwg.mxu0
    %8876 = vmatpush.bf16.msra.mxu0 %v5845
    %8877 = vmatpush.bf16.msra.mxu0 %v5841
    %8878 = vmatpush.bf16.msra.mxu0 %v5837
    %8879 = vmatpush.bf16.msra.mxu0 %v5833
    %8880 = vmatpush.bf16.msra.mxu0 %v5829
    %8881 = vmatpush.bf16.msra.mxu0 %v5825
    %8882 = vmatpush.bf16.msra.mxu0 %v5821
    %8883 = vmatpush.bf16.msra.mxu0 %v5817
    %8884 = vmatmul.bf16.gmra.mxu0 %v1232
    %v8885 = vpop.f32.mrf.mxu0
    %v8886 = vadd.f32 %v8873, %v8885
    %v8887 = vpop.f32.mrf.mxu0
    %8888 = vdwg.mxu0
    %8889 = vmatpush.bf16.msra.mxu0 %v5877
    %8890 = vmatpush.bf16.msra.mxu0 %v5873
    %8891 = vmatpush.bf16.msra.mxu0 %v5869
    %8892 = vmatpush.bf16.msra.mxu0 %v5865
    %8893 = vmatpush.bf16.msra.mxu0 %v5861
    %8894 = vmatpush.bf16.msra.mxu0 %v5857
    %8895 = vmatpush.bf16.msra.mxu0 %v5853
    %8896 = vmatpush.bf16.msra.mxu0 %v5849
    %8897 = vmatmul.bf16.gmra.mxu0 %v1233
    %v8898 = vpop.f32.mrf.mxu0
    %v8899 = vadd.f32 %v8886, %v8898
    %v8900 = vpop.f32.mrf.mxu0
    %8901 = vdwg.mxu0
    %v8902 = vmax.f32 %v7495, 0.0
    %v8903 = vmax.f32 %v7963, 0.0
    %v8904 = vmax.f32 %v8431, 0.0
    %v8905 = vmax.f32 %v8899, 0.0
    %v8906 = vpack.c.bf16 %v8902, %v8902
    %v8907 = vpack.c.bf16 %v8903, %v8903
    %v8908 = vpack.c.bf16 %v8904, %v8904
    %v8909 = vpack.c.bf16 %v8905, %v8905
    %v8910 = vld [vmem:[%s3] sm:$0xf]
    %v8911 = vld [vmem:[%s3 + $0x4] sm:$0xf]
    %v8912 = vld [vmem:[%s3 + $0x8] sm:$0xf]
    %v8913 = vld [vmem:[%s3 + $0xc] sm:$0xf]
    %v8914 = vld [vmem:[%s3 + $0x10] sm:$0xf]
    %v8915 = vld [vmem:[%s3 + $0x14] sm:$0xf]
    %v8916 = vld [vmem:[%s3 + $0x18] sm:$0xf]
    %v8917 = vld [vmem:[%s3 + $0x1c] sm:$0xf]
    %v8918 = vld [vmem:[%s3 + $0x20] sm:$0xf]
    %v8919 = vld [vmem:[%s3 + $0x24] sm:$0xf]
    %v8920 = vld [vmem:[%s3 + $0x28] sm:$0xf]
    %v8921 = vld [vmem:[%s3 + $0x2c] sm:$0xf]
    %v8922 = vld [vmem:[%s3 + $0x30] sm:$0xf]
    %v8923 = vld [vmem:[%s3 + $0x34] sm:$0xf]
    %v8924 = vld [vmem:[%s3 + $0x38] sm:$0xf]
    %v8925 = vld [vmem:[%s3 + $0x3c] sm:$0xf]
    %v8926 = vld [vmem:[%s3 + $0x40] sm:$0xf]
    %v8927 = vld [vmem:[%s3 + $0x44] sm:$0xf]
    %v8928 = vld [vmem:[%s3 + $0x48] sm:$0xf]
    %v8929 = vld [vmem:[%s3 + $0x4c] sm:$0xf]
    %v8930 = vld [vmem:[%s3 + $0x50] sm:$0xf]
    %v8931 = vld [vmem:[%s3 + $0x54] sm:$0xf]
    %v8932 = vld [vmem:[%s3 + $0x58] sm:$0xf]
    %v8933 = vld [vmem:[%s3 + $0x5c] sm:$0xf]
    %v8934 = vld [vmem:[%s3 + $0x60] sm:$0xf]
    %v8935 = vld [vmem:[%s3 + $0x64] sm:$0xf]
    %v8936 = vld [vmem:[%s3 + $0x68] sm:$0xf]
    %v8937 = vld [vmem:[%s3 + $0x6c] sm:$0xf]
    %v8938 = vld [vmem:[%s3 + $0x70] sm:$0xf]
    %v8939 = vld [vmem:[%s3 + $0x74] sm:$0xf]
    %v8940 = vld [vmem:[%s3 + $0x78] sm:$0xf]
    %v8941 = vld [vmem:[%s3 + $0x7c] sm:$0xf]
    %v8942 = vld [vmem:[%s3 + $0x80] sm:$0xf]
    %v8943 = vld [vmem:[%s3 + $0x84] sm:$0xf]
    %v8944 = vld [vmem:[%s3 + $0x88] sm:$0xf]
    %v8945 = vld [vmem:[%s3 + $0x8c] sm:$0xf]
    %v8946 = vld [vmem:[%s3 + $0x90] sm:$0xf]
    %v8947 = vld [vmem:[%s3 + $0x94] sm:$0xf]
    %v8948 = vld [vmem:[%s3 + $0x98] sm:$0xf]
    %v8949 = vld [vmem:[%s3 + $0x9c] sm:$0xf]
    %v8950 = vld [vmem:[%s3 + $0xa0] sm:$0xf]
    %v8951 = vld [vmem:[%s3 + $0xa4] sm:$0xf]
    %v8952 = vld [vmem:[%s3 + $0xa8] sm:$0xf]
    %v8953 = vld [vmem:[%s3 + $0xac] sm:$0xf]
    %v8954 = vld [vmem:[%s3 + $0xb0] sm:$0xf]
    %v8955 = vld [vmem:[%s3 + $0xb4] sm:$0xf]
    %v8956 = vld [vmem:[%s3 + $0xb8] sm:$0xf]
    %v8957 = vld [vmem:[%s3 + $0xbc] sm:$0xf]
    %v8958 = vld [vmem:[%s3 + $0xc0] sm:$0xf]
    %v8959 = vld [vmem:[%s3 + $0xc4] sm:$0xf]
    %v8960 = vld [vmem:[%s3 + $0xc8] sm:$0xf]
    %v8961 = vld [vmem:[%s3 + $0xcc] sm:$0xf]
    %v8962 = vld [vmem:[%s3 + $0xd0] sm:$0xf]
    %v8963 = vld [vmem:[%s3 + $0xd4] sm:$0xf]
    %v8964 = vld [vmem:[%s3 + $0xd8] sm:$0xf]
    %v8965 = vld [vmem:[%s3 + $0xdc] sm:$0xf]
    %v8966 = vld [vmem:[%s3 + $0xe0] sm:$0xf]
    %v8967 = vld [vmem:[%s3 + $0xe4] sm:$0xf]
    %v8968 = vld [vmem:[%s3 + $0xe8] sm:$0xf]
    %v8969 = vld [vmem:[%s3 + $0xec] sm:$0xf]
    %v8970 = vld [vmem:[%s3 + $0xf0] sm:$0xf]
    %v8971 = vld [vmem:[%s3 + $0xf4] sm:$0xf]
    %v8972 = vld [vmem:[%s3 + $0xf8] sm:$0xf]
    %v8973 = vld [vmem:[%s3 + $0xfc] sm:$0xf]
    %v8974 = vld [vmem:[%s4] sm:$0x1]
    %v8976 = vperm.slane %v8974, 0
    %v9042 = vunpack.c.l.b16 %v8910
    %v9043 = vunpack.c.l.b16 %v8911
    %v9044 = vunpack.c.l.b16 %v8912
    %v9045 = vunpack.c.l.b16 %v8913
    %v9046 = vunpack.c.l.b16 %v8914
    %v9047 = vunpack.c.l.b16 %v8915
    %v9048 = vunpack.c.l.b16 %v8916
    %v9049 = vunpack.c.l.b16 %v8917
    %v9050 = vunpack.c.l.b16 %v8918
    %v9051 = vunpack.c.l.b16 %v8919
    %v9052 = vunpack.c.l.b16 %v8920
    %v9053 = vunpack.c.l.b16 %v8921
    %v9054 = vunpack.c.l.b16 %v8922
    %v9055 = vunpack.c.l.b16 %v8923
    %v9056 = vunpack.c.l.b16 %v8924
    %v9057 = vunpack.c.l.b16 %v8925
    %v9058 = vunpack.c.l.b16 %v8926
    %v9059 = vunpack.c.l.b16 %v8927
    %v9060 = vunpack.c.l.b16 %v8928
    %v9061 = vunpack.c.l.b16 %v8929
    %v9062 = vunpack.c.l.b16 %v8930
    %v9063 = vunpack.c.l.b16 %v8931
    %v9064 = vunpack.c.l.b16 %v8932
    %v9065 = vunpack.c.l.b16 %v8933
    %v9066 = vunpack.c.l.b16 %v8934
    %v9067 = vunpack.c.l.b16 %v8935
    %v9068 = vunpack.c.l.b16 %v8936
    %v9069 = vunpack.c.l.b16 %v8937
    %v9070 = vunpack.c.l.b16 %v8938
    %v9071 = vunpack.c.l.b16 %v8939
    %v9072 = vunpack.c.l.b16 %v8940
    %v9073 = vunpack.c.l.b16 %v8941
    %v9074 = vunpack.c.l.b16 %v8942
    %v9075 = vunpack.c.l.b16 %v8943
    %v9076 = vunpack.c.l.b16 %v8944
    %v9077 = vunpack.c.l.b16 %v8945
    %v9078 = vunpack.c.l.b16 %v8946
    %v9079 = vunpack.c.l.b16 %v8947
    %v9080 = vunpack.c.l.b16 %v8948
    %v9081 = vunpack.c.l.b16 %v8949
    %v9082 = vunpack.c.l.b16 %v8950
    %v9083 = vunpack.c.l.b16 %v8951
    %v9084 = vunpack.c.l.b16 %v8952
    %v9085 = vunpack.c.l.b16 %v8953
    %v9086 = vunpack.c.l.b16 %v8954
    %v9087 = vunpack.c.l.b16 %v8955
    %v9088 = vunpack.c.l.b16 %v8956
    %v9089 = vunpack.c.l.b16 %v8957
    %v9090 = vunpack.c.l.b16 %v8958
    %v9091 = vunpack.c.l.b16 %v8959
    %v9092 = vunpack.c.l.b16 %v8960
    %v9093 = vunpack.c.l.b16 %v8961
    %v9094 = vunpack.c.l.b16 %v8962
    %v9095 = vunpack.c.l.b16 %v8963
    %v9096 = vunpack.c.l.b16 %v8964
    %v9097 = vunpack.c.l.b16 %v8965
    %v9098 = vunpack.c.l.b16 %v8966
    %v9099 = vunpack.c.l.b16 %v8967
    %v9100 = vunpack.c.l.b16 %v8968
    %v9101 = vunpack.c.l.b16 %v8969
    %v9102 = vunpack.c.l.b16 %v8970
    %v9103 = vunpack.c.l.b16 %v8971
    %v9104 = vunpack.c.l.b16 %v8972
    %v9105 = vunpack.c.l.b16 %v8973
    %v9106 = vpack.c.b16 %v9043, %v9042
    %v9107 = vpack.c.b16 %v9045, %v9044
    %v9108 = vpack.c.b16 %v9047, %v9046
    %v9109 = vpack.c.b16 %v9049, %v9048
    %v9110 = vpack.c.b16 %v9051, %v9050
    %v9111 = vpack.c.b16 %v9053, %v9052
    %v9112 = vpack.c.b16 %v9055, %v9054
    %v9113 = vpack.c.b16 %v9057, %v9056
    %v9114 = vpack.c.b16 %v9059, %v9058
    %v9115 = vpack.c.b16 %v9061, %v9060
    %v9116 = vpack.c.b16 %v9063, %v9062
    %v9117 = vpack.c.b16 %v9065, %v9064
    %v9118 = vpack.c.b16 %v9067, %v9066
    %v9119 = vpack.c.b16 %v9069, %v9068
    %v9120 = vpack.c.b16 %v9071, %v9070
    %v9121 = vpack.c.b16 %v9073, %v9072
    %v9122 = vpack.c.b16 %v9075, %v9074
    %v9123 = vpack.c.b16 %v9077, %v9076
    %v9124 = vpack.c.b16 %v9079, %v9078
    %v9125 = vpack.c.b16 %v9081, %v9080
    %v9126 = vpack.c.b16 %v9083, %v9082
    %v9127 = vpack.c.b16 %v9085, %v9084
    %v9128 = vpack.c.b16 %v9087, %v9086
    %v9129 = vpack.c.b16 %v9089, %v9088
    %v9130 = vpack.c.b16 %v9091, %v9090
    %v9131 = vpack.c.b16 %v9093, %v9092
    %v9132 = vpack.c.b16 %v9095, %v9094
    %v9133 = vpack.c.b16 %v9097, %v9096
    %v9134 = vpack.c.b16 %v9099, %v9098
    %v9135 = vpack.c.b16 %v9101, %v9100
    %v9136 = vpack.c.b16 %v9103, %v9102
    %v9137 = vpack.c.b16 %v9105, %v9104
    %9170 = vmatpush.bf16.msra.mxu0 %v9113
    %9171 = vmatpush.bf16.msra.mxu0 %v9112
    %9172 = vmatpush.bf16.msra.mxu0 %v9111
    %9173 = vmatpush.bf16.msra.mxu0 %v9110
    %9174 = vmatpush.bf16.msra.mxu0 %v9109
    %9175 = vmatpush.bf16.msra.mxu0 %v9108
    %9176 = vmatpush.bf16.msra.mxu0 %v9107
    %9177 = vmatpush.bf16.msra.mxu0 %v9106
    %9178 = vmatmul.bf16.gmra.mxu0 %v8906
    %v9179 = vpop.f32.mrf.mxu0
    %v9180 = vadd.f32 %v8976, %v9179
    %v9181 = vpop.f32.mrf.mxu0
    %9182 = vdwg.mxu0
    %9183 = vmatpush.bf16.msra.mxu0 %v9121
    %9184 = vmatpush.bf16.msra.mxu0 %v9120
    %9185 = vmatpush.bf16.msra.mxu0 %v9119
    %9186 = vmatpush.bf16.msra.mxu0 %v9118
    %9187 = vmatpush.bf16.msra.mxu0 %v9117
    %9188 = vmatpush.bf16.msra.mxu0 %v9116
    %9189 = vmatpush.bf16.msra.mxu0 %v9115
    %9190 = vmatpush.bf16.msra.mxu0 %v9114
    %9191 = vmatmul.bf16.gmra.mxu0 %v8907
    %v9192 = vpop.f32.mrf.mxu0
    %v9193 = vadd.f32 %v9180, %v9192
    %v9194 = vpop.f32.mrf.mxu0
    %9195 = vdwg.mxu0
    %9196 = vmatpush.bf16.msra.mxu0 %v9129
    %9197 = vmatpush.bf16.msra.mxu0 %v9128
    %9198 = vmatpush.bf16.msra.mxu0 %v9127
    %9199 = vmatpush.bf16.msra.mxu0 %v9126
    %9200 = vmatpush.bf16.msra.mxu0 %v9125
    %9201 = vmatpush.bf16.msra.mxu0 %v9124
    %9202 = vmatpush.bf16.msra.mxu0 %v9123
    %9203 = vmatpush.bf16.msra.mxu0 %v9122
    %9204 = vmatmul.bf16.gmra.mxu0 %v8908
    %v9205 = vpop.f32.mrf.mxu0
    %v9206 = vadd.f32 %v9193, %v9205
    %v9207 = vpop.f32.mrf.mxu0
    %9208 = vdwg.mxu0
    %9209 = vmatpush.bf16.msra.mxu0 %v9137
    %9210 = vmatpush.bf16.msra.mxu0 %v9136
    %9211 = vmatpush.bf16.msra.mxu0 %v9135
    %9212 = vmatpush.bf16.msra.mxu0 %v9134
    %9213 = vmatpush.bf16.msra.mxu0 %v9133
    %9214 = vmatpush.bf16.msra.mxu0 %v9132
    %9215 = vmatpush.bf16.msra.mxu0 %v9131
    %9216 = vmatpush.bf16.msra.mxu0 %v9130
    %9217 = vmatmul.bf16.gmra.mxu0 %v8909
    %v9218 = vpop.f32.mrf.mxu0
    %v9219 = vadd.f32 %v9206, %v9218
    %v9220 = vpop.f32.mrf.mxu0
    %9221 = vdwg.mxu0
    %9222 = vst [vmem:[#allocation2] sm:$0x3] %v9219
    // Predicated region
    $region22: #{cnn2_forward.5} parent=1 // pred_check
      _
    $region23: #{cnn2_forward.5} parent=1 // pred_check_branch
      %9224 = sbr.rel (0) target = $region25
    $region24: #{cnn2_forward.5} parent=1 // pred_region
      %9226 = vsyncadd [#allocation3], 0
      %s9228 = sshll.u32 [#allocation2], 4
      %s9229 = int_to_ptr.vmem [resolvable:$true] %s9228
      %s9230 = sshll.u32 %s5, 4
      %s9231 = int_to_ptr.hbm [resolvable:$true] %s9230
      %9233 = dma.vmem_to_hbm [thread:$0]  %s9229, 32, %s9231, [#allocation3]
    $region25: #{cnn2_forward.5} parent=1 // pred_fallthru
      _
    // Predicated region
    $region26: #{cnn2_forward.5} parent=1 // pred_check
      _
    $region27: #{cnn2_forward.5} parent=1 // pred_check_branch
      %9235 = sbr.rel (0) target = $region29
    $region28: #{cnn2_forward.5} parent=1 // pred_region
      %9237 = dma.done [#allocation3], 32
    $region29: #{cnn2_forward.5} parent=1 // pred_fallthru
      _
    %9238 = vsyncpa [#allocation3], 1

</llo_original>
